<compile_context>
chip_gen: v6e
topology: v6e:2x2x1
jax: 0.10.0
libtpu: 0.0.40
codegen_flags: <defaults>
</compile_context>

<pallas_src>
import math

import numpy as np
import jax
import jax.numpy as jnp
from jax.experimental import pallas as pl
from jax.experimental.pallas import tpu as pltpu

NC = 8        # detection classes  (names)
NC_IN = 2     # drivable-area classes (names_in)
NA = 3        # anchors per scale
NO = NC + 5   # outputs per anchor

# block_cfg[0] = [det_out_idx, ll_seg_out_idx, in_seg_out_idx]
BLOCK_CFG = [
    [4, 6, 8],
    [-1, "Conv",   [3, 8, 3, 2]],        # 0  backbone
    [-1, "Conv",   [8, 16, 3, 2]],       # 1
    [-1, "Conv",   [16, 16, 1, 1]],      # 2  (saved: feeds both seg heads)
    [-1, "Conv",   [16, 16, 3, 2]],      # 3
    [-1, "Detect", [NC, 16]],            # 4  detect head (single scale)
    [2,  "Conv",   [16, 8, 3, 1]],       # 5  ll-seg branch
    [-1, "Conv",   [8, NC_IN, 1, 1]],    # 6  ll-seg out  -> sigmoid (fused)
    [2,  "Conv",   [16, 8, 3, 1]],       # 7  in-seg branch
    [-1, "Conv",   [8, NC_IN, 1, 1]],    # 8  in-seg out
]
DET_OUT_IDX, LL_SEG_OUT_IDX, IN_SEG_OUT_IDX = BLOCK_CFG[0]


# ---------------------------------------------------------------------------
# Static (shape-only) helpers built host-side.
# ---------------------------------------------------------------------------
def _gather_mats(H, W, k, stride):
    """0/1 gather matrices G[t, q, p]: output pixel q pulls input pixel p for
    kernel tap t (dy*k+dx).  Out-of-bounds taps -> all-zero row == zero pad."""
    pad = k // 2
    Ho = (H + 2 * pad - k) // stride + 1
    Wo = (W + 2 * pad - k) // stride + 1
    g = np.zeros((k * k, Ho * Wo, H * W), np.float32)
    for dy in range(k):
        for dx in range(k):
            t = dy * k + dx
            for ho in range(Ho):
                hi = ho * stride + dy - pad
                if hi < 0 or hi >= H:
                    continue
                for wo in range(Wo):
                    wi = wo * stride + dx - pad
                    if 0 <= wi < W:
                        g[t, ho * Wo + wo, hi * W + wi] = 1.0
    return g, Ho, Wo


def _im2col(x_nhwc, k, stride):
    """XLA-side im2col, used only for layer 0 (input already lives in HBM)."""
    pad = k // 2
    B, H, W, C = x_nhwc.shape
    Ho = (H + 2 * pad - k) // stride + 1
    Wo = (W + 2 * pad - k) // stride + 1
    xp = jnp.pad(x_nhwc, ((0, 0), (pad, pad), (pad, pad), (0, 0)))
    cols = []
    for dy in range(k):
        for dx in range(k):
            cols.append(xp[:, dy:dy + Ho * stride:stride,
                            dx:dx + Wo * stride:stride, :])
    cols = jnp.concatenate(cols, axis=-1)            # (B, Ho, Wo, k*k*C) (dy,dx,c)
    return cols.reshape(B, Ho * Wo, k * k * C), Ho, Wo


def _conv_taps(w):
    """(Cout, Cin, k, k) -> (k*k, Cin, Cout), tap index t = dy*k + dx."""
    cout, cin, k, _ = w.shape
    return jnp.transpose(w, (2, 3, 1, 0)).reshape(k * k, cin, cout)


def _conv_1x1(w):
    """(Cout, Cin, 1, 1) -> (Cin, Cout)."""
    return jnp.transpose(w[:, :, 0, 0])


# ---------------------------------------------------------------------------
# The fused Pallas kernel: one grid step == one batch element, all layers.
# Activations live in vregs/VMEM as (H*W, C) row matrices.
# ---------------------------------------------------------------------------
def _mcnet_kernel(cols0_ref, w0_ref, b0_ref,
                  g1_ref, w1_ref, b1_ref,
                  w2_ref, b2_ref,
                  g3_ref, w3_ref, b3_ref,
                  wd_ref, bd_ref,
                  g57_ref, w57_ref, b57_ref,
                  w6_ref, b6_ref, w8_ref, b8_ref,
                  det_ref, ll_ref, ins_ref):
    f32 = jnp.float32
    bf16 = jnp.bfloat16

    def mm(a, w):
        return jnp.dot(a, w, preferred_element_type=f32)

    def hswish(v):                                   # YOLOP Conv activation
        return v * jnp.clip(v + 3.0, 0.0, 6.0) * (1.0 / 6.0)

    def conv3x3(a_bf, g_ref, w_ref, b_ref):
        # sum over the 9 taps of (gather matmul) @ (per-tap weight)
        acc = b_ref[...]
        for t in range(9):
            gat = mm(g_ref[t], a_bf).astype(bf16)    # 0/1 selection -> lossless cast
            acc = acc + mm(gat, w_ref[t])
        return acc

    # ---- backbone ---------------------------------------------------------
    a0 = hswish(mm(cols0_ref[0], w0_ref[...]) + b0_ref[...]).astype(bf16)  # (H0W0, 8)
    a1 = hswish(conv3x3(a0, g1_ref, w1_ref, b1_ref)).astype(bf16)          # (H1W1, 16)
    a2 = hswish(mm(a1, w2_ref[...]) + b2_ref[...]).astype(bf16)            # (H1W1, 16) "cache[2]"
    a3 = hswish(conv3x3(a2, g3_ref, w3_ref, b3_ref)).astype(bf16)          # (H3W3, 16)

    # ---- Detect head (training-mode layout), emitted per anchor -----------
    for a in range(NA):
        det_ref[0, a, :, :] = mm(a3, wd_ref[a]) + bd_ref[a]                # (H3W3, NO)

    # ---- both seg branches, batched (layers 5 & 7 share input + geometry) -
    a57 = hswish(conv3x3(a2, g57_ref, w57_ref, b57_ref)).astype(bf16)      # (H1W1, 16)
    ll_logits = mm(a57, w6_ref[...]) + b6_ref[...]                         # (H1W1, 2)
    in_logits = mm(a57, w8_ref[...]) + b8_ref[...]                         # (H1W1, 2)
    # fused ll-seg sigmoid (EUP exp + approximate reciprocal)
    ll_ref[0] = pl.reciprocal(1.0 + jnp.exp(-ll_logits), approx=True)
    ins_ref[0] = in_logits


# ---------------------------------------------------------------------------
# MCnet.forward (fused)
# ---------------------------------------------------------------------------
def mcnet_forward(params, x_nchw):
    B, _, H, W = x_nchw.shape
    bf = jnp.bfloat16
    x = jnp.transpose(x_nchw, (0, 2, 3, 1))          # NCHW -> NHWC

    # layer-0 im2col in XLA (input is the only HBM-resident activation).
    cols0, H0, W0 = _im2col(x, 3, 2)
    cols0 = cols0.astype(bf)

    # static gather matrices (shape-only constants, bf16 0/1 entries)
    g1_np, H1, W1 = _gather_mats(H0, W0, 3, 2)       # layer 1 : 3x3 s2
    g3_np, H3, W3 = _gather_mats(H1, W1, 3, 2)       # layer 3 : 3x3 s2
    g57_np, _, _ = _gather_mats(H1, W1, 3, 1)        # layers 5 & 7 : 3x3 s1
    g1 = jnp.asarray(g1_np, bf)
    g3 = jnp.asarray(g3_np, bf)
    g57 = jnp.asarray(g57_np, bf)

    # weights (bf16 for the MXU; biases stay f32 for the f32 epilogue)
    w0 = _conv_taps(params[0]["w"]).reshape(9 * 3, 8).astype(bf)        # (27, 8)
    b0 = params[0]["b"].reshape(1, -1)
    w1 = _conv_taps(params[1]["w"]).astype(bf)                          # (9, 8, 16)
    b1 = params[1]["b"].reshape(1, -1)
    w2 = _conv_1x1(params[2]["w"]).astype(bf)                           # (16, 16)
    b2 = params[2]["b"].reshape(1, -1)
    w3 = _conv_taps(params[3]["w"]).astype(bf)                          # (9, 16, 16)
    b3 = params[3]["b"].reshape(1, -1)

    wd2 = _conv_1x1(params[4]["w"])                                     # (16, NA*NO)
    wd = jnp.transpose(wd2.reshape(16, NA, NO), (1, 0, 2)).astype(bf)   # (NA, 16, NO)
    bd = params[4]["b"].reshape(NA, 1, NO)

    # batch layers 5 & 7 (same input, same geometry) along Cout
    w5 = _conv_taps(params[5]["w"])                                     # (9, 16, 8)
    w7 = _conv_taps(params[7]["w"])                                     # (9, 16, 8)
    w57 = jnp.concatenate([w5, w7], axis=-1).astype(bf)                 # (9, 16, 16)
    b57 = jnp.concatenate([params[5]["b"], params[7]["b"]]).reshape(1, -1)

    # 1x1 seg-out heads, zero-extended to act on the fused 16-channel a57
    w6 = _conv_1x1(params[6]["w"])                                      # (8, 2)
    w8 = _conv_1x1(params[8]["w"])                                      # (8, 2)
    zz = jnp.zeros_like(w6)
    w6z = jnp.concatenate([w6, zz], axis=0).astype(bf)                  # acts on a57[:, :8]
    w8z = jnp.concatenate([zz, w8], axis=0).astype(bf)                  # acts on a57[:, 8:]
    b6 = params[6]["b"].reshape(1, -1)
    b8 = params[8]["b"].reshape(1, -1)

    hw0, hw1, hw3 = H0 * W0, H1 * W1, H3 * W3
    const3 = lambda b: (0, 0, 0)
    const2 = lambda b: (0, 0)

    in_specs = [
        pl.BlockSpec((1, hw0, 27), lambda b: (b, 0, 0)),                 # cols0
        pl.BlockSpec((27, 8), const2),      pl.BlockSpec((1, 8), const2),
        pl.BlockSpec((9, hw1, hw0), const3), pl.BlockSpec((9, 8, 16), const3),
        pl.BlockSpec((1, 16), const2),
        pl.BlockSpec((16, 16), const2),     pl.BlockSpec((1, 16), const2),
        pl.BlockSpec((9, hw3, hw1), const3), pl.BlockSpec((9, 16, 16), const3),
        pl.BlockSpec((1, 16), const2),
        pl.BlockSpec((NA, 16, NO), const3), pl.BlockSpec((NA, 1, NO), const3),
        pl.BlockSpec((9, hw1, hw1), const3), pl.BlockSpec((9, 16, 16), const3),
        pl.BlockSpec((1, 16), const2),
        pl.BlockSpec((16, NC_IN), const2),  pl.BlockSpec((1, NC_IN), const2),
        pl.BlockSpec((16, NC_IN), const2),  pl.BlockSpec((1, NC_IN), const2),
    ]
    out_specs = (
        pl.BlockSpec((1, NA, hw3, NO), lambda b: (b, 0, 0, 0)),
        pl.BlockSpec((1, hw1, NC_IN), lambda b: (b, 0, 0)),
        pl.BlockSpec((1, hw1, NC_IN), lambda b: (b, 0, 0)),
    )
    out_shape = (
        jax.ShapeDtypeStruct((B, NA, hw3, NO), jnp.float32),
        jax.ShapeDtypeStruct((B, hw1, NC_IN), jnp.float32),
        jax.ShapeDtypeStruct((B, hw1, NC_IN), jnp.float32),
    )

    det_flat, ll_flat, ins_flat = pl.pallas_call(
        _mcnet_kernel,
        out_shape=out_shape,
        grid=(B,),
        in_specs=in_specs,
        out_specs=out_specs,
        compiler_params=pltpu.CompilerParams(
            dimension_semantics=("parallel",)),      # batch shards across TCs
    )(cols0, w0, b0, g1, w1, b1, w2, b2, g3, w3, b3,
      wd, bd, g57, w57, b57, w6z, b6, w8z, b8)

    # free metadata reshapes / tiny transposes back to the PyTorch layouts
    det = det_flat.reshape(B, NA, H3, W3, NO)                      # (B,na,ny,nx,no)
    ll = jnp.transpose(ll_flat.reshape(B, H1, W1, NC_IN), (0, 3, 1, 2))   # NCHW
    ins = jnp.transpose(ins_flat.reshape(B, H1, W1, NC_IN), (0, 3, 1, 2))  # NCHW
    # MCnet.forward output ordering: [det_out, sigmoid(ll_seg), ins_out]
    return [[det], ll, ins]


# ---------------------------------------------------------------------------
# Deterministic parameter init (identity BN folded; Detect bias like
# MCnet._initialize_biases with stride s = 8 for the single scale).
# ---------------------------------------------------------------------------
def init_params(key):
    params = {}
    bn_scale = 1.0 / math.sqrt(1.0 + 1e-3)   # gamma=1, beta=0, mean=0, var=1, eps=1e-3
    for i, (from_, btype, args) in enumerate(BLOCK_CFG[1:]):
        k_i = jax.random.fold_in(key, i)
        if btype == "Conv":
            cin, cout, ksz, _s = args
            w = 0.1 * jax.random.normal(k_i, (cout, cin, ksz, ksz), jnp.float32)
            params[i] = {"w": w * bn_scale, "b": jnp.zeros((cout,), jnp.float32)}
        elif btype == "Detect":
            nc_, cin = args
            w = 0.1 * jax.random.normal(k_i, (NA * NO, cin, 1, 1), jnp.float32)
            s = 8.0                              # 128-px init image -> 16x16 feature
            b = jnp.zeros((NA, NO), jnp.float32)
            b = b.at[:, 4].add(math.log(8.0 / (640.0 / s) ** 2))
            b = b.at[:, 5:].add(math.log(0.6 / (nc_ - 0.99)))
            params[i] = {"w": w, "b": b.reshape(-1)}
    return params
    # TODO(synk): Detect inference-mode anchor/grid decode is not exercised by
    # MCnet.forward in training mode and is intentionally omitted.


if __name__ == "__main__":
    key = jax.random.PRNGKey(0)
    params = init_params(key)
    x = jax.random.normal(jax.random.fold_in(key, 999), (2, 3, 32, 32), jnp.float32)

    fwd = jax.jit(mcnet_forward)
    out = fwd(params, x)
    jax.block_until_ready(jax.tree_util.tree_leaves(out))

    det = out[0][0]
    assert det.shape == (2, NA, 4, 4, NO)
    assert out[1].shape == (2, NC_IN, 8, 8)
    assert out[2].shape == (2, NC_IN, 8, 8)
    assert bool(jnp.isfinite(det).all())
    assert bool(jnp.isfinite(out[1]).all()) and bool(jnp.isfinite(out[2]).all())
    print("KERNEL_OK")
</pallas_src>

<mosaic_0001>
module attributes {stable_mosaic.version = 11 : i64} {
  func.func @_mcnet_kernel(%arg0: i32, %arg1: memref<1x256x27xbf16, #tpu.memory_space<vmem>>, %arg2: memref<27x8xbf16, #tpu.memory_space<vmem>>, %arg3: memref<1x8xf32, #tpu.memory_space<vmem>>, %arg4: memref<9x64x256xbf16, #tpu.memory_space<vmem>>, %arg5: memref<9x8x16xbf16, #tpu.memory_space<vmem>>, %arg6: memref<1x16xf32, #tpu.memory_space<vmem>>, %arg7: memref<16x16xbf16, #tpu.memory_space<vmem>>, %arg8: memref<1x16xf32, #tpu.memory_space<vmem>>, %arg9: memref<9x16x64xbf16, #tpu.memory_space<vmem>>, %arg10: memref<9x16x16xbf16, #tpu.memory_space<vmem>>, %arg11: memref<1x16xf32, #tpu.memory_space<vmem>>, %arg12: memref<3x16x13xbf16, #tpu.memory_space<vmem>>, %arg13: memref<3x1x13xf32, #tpu.memory_space<vmem>>, %arg14: memref<9x64x64xbf16, #tpu.memory_space<vmem>>, %arg15: memref<9x16x16xbf16, #tpu.memory_space<vmem>>, %arg16: memref<1x16xf32, #tpu.memory_space<vmem>>, %arg17: memref<16x2xbf16, #tpu.memory_space<vmem>>, %arg18: memref<1x2xf32, #tpu.memory_space<vmem>>, %arg19: memref<16x2xbf16, #tpu.memory_space<vmem>>, %arg20: memref<1x2xf32, #tpu.memory_space<vmem>>, %arg21: memref<1x3x16x13xf32, #tpu.memory_space<vmem>>, %arg22: memref<1x64x2xf32, #tpu.memory_space<vmem>>, %arg23: memref<1x64x2xf32, #tpu.memory_space<vmem>>) attributes {dimension_semantics = [#tpu.dimension_semantics<parallel>], iteration_bounds = array<i64: 2>, scalar_prefetch = 0 : i64, scratch_operands = 0 : i64, tpu.core_type = #tpu.core_type<tc>, window_params = [{transform_indices = @transform_0, window_bounds = array<i64: 1, 256, 27>}, {pipeline_mode = #tpu.pipeline_mode<synchronous>, transform_indices = @transform_1, window_bounds = array<i64: 27, 8>}, {pipeline_mode = #tpu.pipeline_mode<synchronous>, transform_indices = @transform_2, window_bounds = array<i64: 1, 8>}, {pipeline_mode = #tpu.pipeline_mode<synchronous>, transform_indices = @transform_3, window_bounds = array<i64: 9, 64, 256>}, {pipeline_mode = #tpu.pipeline_mode<synchronous>, transform_indices = @transform_4, window_bounds = array<i64: 9, 8, 16>}, {pipeline_mode = #tpu.pipeline_mode<synchronous>, transform_indices = @transform_5, window_bounds = array<i64: 1, 16>}, {pipeline_mode = #tpu.pipeline_mode<synchronous>, transform_indices = @transform_6, window_bounds = array<i64: 16, 16>}, {pipeline_mode = #tpu.pipeline_mode<synchronous>, transform_indices = @transform_7, window_bounds = array<i64: 1, 16>}, {pipeline_mode = #tpu.pipeline_mode<synchronous>, transform_indices = @transform_8, window_bounds = array<i64: 9, 16, 64>}, {pipeline_mode = #tpu.pipeline_mode<synchronous>, transform_indices = @transform_9, window_bounds = array<i64: 9, 16, 16>}, {pipeline_mode = #tpu.pipeline_mode<synchronous>, transform_indices = @transform_10, window_bounds = array<i64: 1, 16>}, {pipeline_mode = #tpu.pipeline_mode<synchronous>, transform_indices = @transform_11, window_bounds = array<i64: 3, 16, 13>}, {pipeline_mode = #tpu.pipeline_mode<synchronous>, transform_indices = @transform_12, window_bounds = array<i64: 3, 1, 13>}, {pipeline_mode = #tpu.pipeline_mode<synchronous>, transform_indices = @transform_13, window_bounds = array<i64: 9, 64, 64>}, {pipeline_mode = #tpu.pipeline_mode<synchronous>, transform_indices = @transform_14, window_bounds = array<i64: 9, 16, 16>}, {pipeline_mode = #tpu.pipeline_mode<synchronous>, transform_indices = @transform_15, window_bounds = array<i64: 1, 16>}, {pipeline_mode = #tpu.pipeline_mode<synchronous>, transform_indices = @transform_16, window_bounds = array<i64: 16, 2>}, {pipeline_mode = #tpu.pipeline_mode<synchronous>, transform_indices = @transform_17, window_bounds = array<i64: 1, 2>}, {pipeline_mode = #tpu.pipeline_mode<synchronous>, transform_indices = @transform_18, window_bounds = array<i64: 16, 2>}, {pipeline_mode = #tpu.pipeline_mode<synchronous>, transform_indices = @transform_19, window_bounds = array<i64: 1, 2>}, {transform_indices = @transform_20, window_bounds = array<i64: 1, 3, 16, 13>}, {transform_indices = @transform_21, window_bounds = array<i64: 1, 64, 2>}, {transform_indices = @transform_22, window_bounds = array<i64: 1, 64, 2>}]} {
    %c0 = arith.constant 0 : index
    %c0_0 = arith.constant 0 : index
    %c0_1 = arith.constant 0 : index
    %0 = vector.load %arg1[%c0, %c0_0, %c0_1] : memref<1x256x27xbf16, #tpu.memory_space<vmem>>, vector<1x256x27xbf16>
    %1 = vector.shape_cast %0 : vector<1x256x27xbf16> to vector<256x27xbf16>
    %c0_2 = arith.constant 0 : index
    %c0_3 = arith.constant 0 : index
    %2 = vector.load %arg2[%c0_2, %c0_3] : memref<27x8xbf16, #tpu.memory_space<vmem>>, vector<27x8xbf16>
    %cst = arith.constant dense<0.000000e+00> : vector<256x8xf32>
    %3 = tpu.matmul %1, %2, %cst {dimension_numbers = #tpu.dot_dimension_numbers<[1], [0], [0], [1], [0, 0, 1, 1], [], []>} : vector<256x27xbf16>, vector<27x8xbf16>, vector<256x8xf32> -> vector<256x8xf32>
    %c0_4 = arith.constant 0 : index
    %c0_5 = arith.constant 0 : index
    %4 = vector.load %arg3[%c0_4, %c0_5] : memref<1x8xf32, #tpu.memory_space<vmem>>, vector<1x8xf32>
    %5 = vector.broadcast %4 : vector<1x8xf32> to vector<256x8xf32>
    %6 = arith.addf %3, %5 : vector<256x8xf32>
    %cst_6 = arith.constant 3.000000e+00 : f32
    %7 = vector.broadcast %cst_6 : f32 to vector<256x8xf32>
    %8 = arith.addf %6, %7 : vector<256x8xf32>
    %cst_7 = arith.constant 0.000000e+00 : f32
    %cst_8 = arith.constant 6.000000e+00 : f32
    %9 = vector.broadcast %cst_7 : f32 to vector<256x8xf32>
    %10 = arith.maximumf %9, %8 : vector<256x8xf32>
    %11 = vector.broadcast %cst_8 : f32 to vector<256x8xf32>
    %12 = arith.minimumf %11, %10 : vector<256x8xf32>
    %13 = arith.mulf %6, %12 : vector<256x8xf32>
    %cst_9 = arith.constant 0.166666672 : f32
    %14 = vector.broadcast %cst_9 : f32 to vector<256x8xf32>
    %15 = arith.mulf %13, %14 : vector<256x8xf32>
    %16 = arith.truncf %15 : vector<256x8xf32> to vector<256x8xbf16>
    %c0_10 = arith.constant 0 : index
    %c0_11 = arith.constant 0 : index
    %17 = vector.load %arg6[%c0_10, %c0_11] : memref<1x16xf32, #tpu.memory_space<vmem>>, vector<1x16xf32>
    %c0_12 = arith.constant 0 : index
    %c0_13 = arith.constant 0 : index
    %c0_14 = arith.constant 0 : index
    %18 = vector.load %arg4[%c0_12, %c0_13, %c0_14] : memref<9x64x256xbf16, #tpu.memory_space<vmem>>, vector<1x64x256xbf16>
    %19 = vector.shape_cast %18 : vector<1x64x256xbf16> to vector<64x256xbf16>
    %cst_15 = arith.constant dense<0.000000e+00> : vector<64x8xf32>
    %20 = tpu.matmul %19, %16, %cst_15 {dimension_numbers = #tpu.dot_dimension_numbers<[1], [0], [0], [1], [0, 0, 1, 1], [], []>} : vector<64x256xbf16>, vector<256x8xbf16>, vector<64x8xf32> -> vector<64x8xf32>
    %21 = arith.truncf %20 : vector<64x8xf32> to vector<64x8xbf16>
    %c0_16 = arith.constant 0 : index
    %c0_17 = arith.constant 0 : index
    %c0_18 = arith.constant 0 : index
    %22 = vector.load %arg5[%c0_16, %c0_17, %c0_18] : memref<9x8x16xbf16, #tpu.memory_space<vmem>>, vector<1x8x16xbf16>
    %23 = vector.shape_cast %22 : vector<1x8x16xbf16> to vector<8x16xbf16>
    %cst_19 = arith.constant dense<0.000000e+00> : vector<64x16xf32>
    %24 = tpu.matmul %21, %23, %cst_19 {dimension_numbers = #tpu.dot_dimension_numbers<[1], [0], [0], [1], [0, 0, 1, 1], [], []>} : vector<64x8xbf16>, vector<8x16xbf16>, vector<64x16xf32> -> vector<64x16xf32>
    %25 = vector.broadcast %17 : vector<1x16xf32> to vector<64x16xf32>
    %26 = arith.addf %25, %24 : vector<64x16xf32>
    %c1 = arith.constant 1 : index
    %c0_20 = arith.constant 0 : index
    %c0_21 = arith.constant 0 : index
    %27 = vector.load %arg4[%c1, %c0_20, %c0_21] : memref<9x64x256xbf16, #tpu.memory_space<vmem>>, vector<1x64x256xbf16>
    %28 = vector.shape_cast %27 : vector<1x64x256xbf16> to vector<64x256xbf16>
    %cst_22 = arith.constant dense<0.000000e+00> : vector<64x8xf32>
    %29 = tpu.matmul %28, %16, %cst_22 {dimension_numbers = #tpu.dot_dimension_numbers<[1], [0], [0], [1], [0, 0, 1, 1], [], []>} : vector<64x256xbf16>, vector<256x8xbf16>, vector<64x8xf32> -> vector<64x8xf32>
    %30 = arith.truncf %29 : vector<64x8xf32> to vector<64x8xbf16>
    %c1_23 = arith.constant 1 : index
    %c0_24 = arith.constant 0 : index
    %c0_25 = arith.constant 0 : index
    %31 = vector.load %arg5[%c1_23, %c0_24, %c0_25] : memref<9x8x16xbf16, #tpu.memory_space<vmem>>, vector<1x8x16xbf16>
    %32 = vector.shape_cast %31 : vector<1x8x16xbf16> to vector<8x16xbf16>
    %cst_26 = arith.constant dense<0.000000e+00> : vector<64x16xf32>
    %33 = tpu.matmul %30, %32, %cst_26 {dimension_numbers = #tpu.dot_dimension_numbers<[1], [0], [0], [1], [0, 0, 1, 1], [], []>} : vector<64x8xbf16>, vector<8x16xbf16>, vector<64x16xf32> -> vector<64x16xf32>
    %34 = arith.addf %26, %33 : vector<64x16xf32>
    %c2 = arith.constant 2 : index
    %c0_27 = arith.constant 0 : index
    %c0_28 = arith.constant 0 : index
    %35 = vector.load %arg4[%c2, %c0_27, %c0_28] : memref<9x64x256xbf16, #tpu.memory_space<vmem>>, vector<1x64x256xbf16>
    %36 = vector.shape_cast %35 : vector<1x64x256xbf16> to vector<64x256xbf16>
    %cst_29 = arith.constant dense<0.000000e+00> : vector<64x8xf32>
    %37 = tpu.matmul %36, %16, %cst_29 {dimension_numbers = #tpu.dot_dimension_numbers<[1], [0], [0], [1], [0, 0, 1, 1], [], []>} : vector<64x256xbf16>, vector<256x8xbf16>, vector<64x8xf32> -> vector<64x8xf32>
    %38 = arith.truncf %37 : vector<64x8xf32> to vector<64x8xbf16>
    %c2_30 = arith.constant 2 : index
    %c0_31 = arith.constant 0 : index
    %c0_32 = arith.constant 0 : index
    %39 = vector.load %arg5[%c2_30, %c0_31, %c0_32] : memref<9x8x16xbf16, #tpu.memory_space<vmem>>, vector<1x8x16xbf16>
    %40 = vector.shape_cast %39 : vector<1x8x16xbf16> to vector<8x16xbf16>
    %cst_33 = arith.constant dense<0.000000e+00> : vector<64x16xf32>
    %41 = tpu.matmul %38, %40, %cst_33 {dimension_numbers = #tpu.dot_dimension_numbers<[1], [0], [0], [1], [0, 0, 1, 1], [], []>} : vector<64x8xbf16>, vector<8x16xbf16>, vector<64x16xf32> -> vector<64x16xf32>
    %42 = arith.addf %34, %41 : vector<64x16xf32>
    %c3 = arith.constant 3 : index
    %c0_34 = arith.constant 0 : index
    %c0_35 = arith.constant 0 : index
    %43 = vector.load %arg4[%c3, %c0_34, %c0_35] : memref<9x64x256xbf16, #tpu.memory_space<vmem>>, vector<1x64x256xbf16>
    %44 = vector.shape_cast %43 : vector<1x64x256xbf16> to vector<64x256xbf16>
    %cst_36 = arith.constant dense<0.000000e+00> : vector<64x8xf32>
    %45 = tpu.matmul %44, %16, %cst_36 {dimension_numbers = #tpu.dot_dimension_numbers<[1], [0], [0], [1], [0, 0, 1, 1], [], []>} : vector<64x256xbf16>, vector<256x8xbf16>, vector<64x8xf32> -> vector<64x8xf32>
    %46 = arith.truncf %45 : vector<64x8xf32> to vector<64x8xbf16>
    %c3_37 = arith.constant 3 : index
    %c0_38 = arith.constant 0 : index
    %c0_39 = arith.constant 0 : index
    %47 = vector.load %arg5[%c3_37, %c0_38, %c0_39] : memref<9x8x16xbf16, #tpu.memory_space<vmem>>, vector<1x8x16xbf16>
    %48 = vector.shape_cast %47 : vector<1x8x16xbf16> to vector<8x16xbf16>
    %cst_40 = arith.constant dense<0.000000e+00> : vector<64x16xf32>
    %49 = tpu.matmul %46, %48, %cst_40 {dimension_numbers = #tpu.dot_dimension_numbers<[1], [0], [0], [1], [0, 0, 1, 1], [], []>} : vector<64x8xbf16>, vector<8x16xbf16>, vector<64x16xf32> -> vector<64x16xf32>
    %50 = arith.addf %42, %49 : vector<64x16xf32>
    %c4 = arith.constant 4 : index
    %c0_41 = arith.constant 0 : index
    %c0_42 = arith.constant 0 : index
    %51 = vector.load %arg4[%c4, %c0_41, %c0_42] : memref<9x64x256xbf16, #tpu.memory_space<vmem>>, vector<1x64x256xbf16>
    %52 = vector.shape_cast %51 : vector<1x64x256xbf16> to vector<64x256xbf16>
    %cst_43 = arith.constant dense<0.000000e+00> : vector<64x8xf32>
    %53 = tpu.matmul %52, %16, %cst_43 {dimension_numbers = #tpu.dot_dimension_numbers<[1], [0], [0], [1], [0, 0, 1, 1], [], []>} : vector<64x256xbf16>, vector<256x8xbf16>, vector<64x8xf32> -> vector<64x8xf32>
    %54 = arith.truncf %53 : vector<64x8xf32> to vector<64x8xbf16>
    %c4_44 = arith.constant 4 : index
    %c0_45 = arith.constant 0 : index
    %c0_46 = arith.constant 0 : index
    %55 = vector.load %arg5[%c4_44, %c0_45, %c0_46] : memref<9x8x16xbf16, #tpu.memory_space<vmem>>, vector<1x8x16xbf16>
    %56 = vector.shape_cast %55 : vector<1x8x16xbf16> to vector<8x16xbf16>
    %cst_47 = arith.constant dense<0.000000e+00> : vector<64x16xf32>
    %57 = tpu.matmul %54, %56, %cst_47 {dimension_numbers = #tpu.dot_dimension_numbers<[1], [0], [0], [1], [0, 0, 1, 1], [], []>} : vector<64x8xbf16>, vector<8x16xbf16>, vector<64x16xf32> -> vector<64x16xf32>
    %58 = arith.addf %50, %57 : vector<64x16xf32>
    %c5 = arith.constant 5 : index
    %c0_48 = arith.constant 0 : index
    %c0_49 = arith.constant 0 : index
    %59 = vector.load %arg4[%c5, %c0_48, %c0_49] : memref<9x64x256xbf16, #tpu.memory_space<vmem>>, vector<1x64x256xbf16>
    %60 = vector.shape_cast %59 : vector<1x64x256xbf16> to vector<64x256xbf16>
    %cst_50 = arith.constant dense<0.000000e+00> : vector<64x8xf32>
    %61 = tpu.matmul %60, %16, %cst_50 {dimension_numbers = #tpu.dot_dimension_numbers<[1], [0], [0], [1], [0, 0, 1, 1], [], []>} : vector<64x256xbf16>, vector<256x8xbf16>, vector<64x8xf32> -> vector<64x8xf32>
    %62 = arith.truncf %61 : vector<64x8xf32> to vector<64x8xbf16>
    %c5_51 = arith.constant 5 : index
    %c0_52 = arith.constant 0 : index
    %c0_53 = arith.constant 0 : index
    %63 = vector.load %arg5[%c5_51, %c0_52, %c0_53] : memref<9x8x16xbf16, #tpu.memory_space<vmem>>, vector<1x8x16xbf16>
    %64 = vector.shape_cast %63 : vector<1x8x16xbf16> to vector<8x16xbf16>
    %cst_54 = arith.constant dense<0.000000e+00> : vector<64x16xf32>
    %65 = tpu.matmul %62, %64, %cst_54 {dimension_numbers = #tpu.dot_dimension_numbers<[1], [0], [0], [1], [0, 0, 1, 1], [], []>} : vector<64x8xbf16>, vector<8x16xbf16>, vector<64x16xf32> -> vector<64x16xf32>
    %66 = arith.addf %58, %65 : vector<64x16xf32>
    %c6 = arith.constant 6 : index
    %c0_55 = arith.constant 0 : index
    %c0_56 = arith.constant 0 : index
    %67 = vector.load %arg4[%c6, %c0_55, %c0_56] : memref<9x64x256xbf16, #tpu.memory_space<vmem>>, vector<1x64x256xbf16>
    %68 = vector.shape_cast %67 : vector<1x64x256xbf16> to vector<64x256xbf16>
    %cst_57 = arith.constant dense<0.000000e+00> : vector<64x8xf32>
    %69 = tpu.matmul %68, %16, %cst_57 {dimension_numbers = #tpu.dot_dimension_numbers<[1], [0], [0], [1], [0, 0, 1, 1], [], []>} : vector<64x256xbf16>, vector<256x8xbf16>, vector<64x8xf32> -> vector<64x8xf32>
    %70 = arith.truncf %69 : vector<64x8xf32> to vector<64x8xbf16>
    %c6_58 = arith.constant 6 : index
    %c0_59 = arith.constant 0 : index
    %c0_60 = arith.constant 0 : index
    %71 = vector.load %arg5[%c6_58, %c0_59, %c0_60] : memref<9x8x16xbf16, #tpu.memory_space<vmem>>, vector<1x8x16xbf16>
    %72 = vector.shape_cast %71 : vector<1x8x16xbf16> to vector<8x16xbf16>
    %cst_61 = arith.constant dense<0.000000e+00> : vector<64x16xf32>
    %73 = tpu.matmul %70, %72, %cst_61 {dimension_numbers = #tpu.dot_dimension_numbers<[1], [0], [0], [1], [0, 0, 1, 1], [], []>} : vector<64x8xbf16>, vector<8x16xbf16>, vector<64x16xf32> -> vector<64x16xf32>
    %74 = arith.addf %66, %73 : vector<64x16xf32>
    %c7 = arith.constant 7 : index
    %c0_62 = arith.constant 0 : index
    %c0_63 = arith.constant 0 : index
    %75 = vector.load %arg4[%c7, %c0_62, %c0_63] : memref<9x64x256xbf16, #tpu.memory_space<vmem>>, vector<1x64x256xbf16>
    %76 = vector.shape_cast %75 : vector<1x64x256xbf16> to vector<64x256xbf16>
    %cst_64 = arith.constant dense<0.000000e+00> : vector<64x8xf32>
    %77 = tpu.matmul %76, %16, %cst_64 {dimension_numbers = #tpu.dot_dimension_numbers<[1], [0], [0], [1], [0, 0, 1, 1], [], []>} : vector<64x256xbf16>, vector<256x8xbf16>, vector<64x8xf32> -> vector<64x8xf32>
    %78 = arith.truncf %77 : vector<64x8xf32> to vector<64x8xbf16>
    %c7_65 = arith.constant 7 : index
    %c0_66 = arith.constant 0 : index
    %c0_67 = arith.constant 0 : index
    %79 = vector.load %arg5[%c7_65, %c0_66, %c0_67] : memref<9x8x16xbf16, #tpu.memory_space<vmem>>, vector<1x8x16xbf16>
    %80 = vector.shape_cast %79 : vector<1x8x16xbf16> to vector<8x16xbf16>
    %cst_68 = arith.constant dense<0.000000e+00> : vector<64x16xf32>
    %81 = tpu.matmul %78, %80, %cst_68 {dimension_numbers = #tpu.dot_dimension_numbers<[1], [0], [0], [1], [0, 0, 1, 1], [], []>} : vector<64x8xbf16>, vector<8x16xbf16>, vector<64x16xf32> -> vector<64x16xf32>
    %82 = arith.addf %74, %81 : vector<64x16xf32>
    %c8 = arith.constant 8 : index
    %c0_69 = arith.constant 0 : index
    %c0_70 = arith.constant 0 : index
    %83 = vector.load %arg4[%c8, %c0_69, %c0_70] : memref<9x64x256xbf16, #tpu.memory_space<vmem>>, vector<1x64x256xbf16>
    %84 = vector.shape_cast %83 : vector<1x64x256xbf16> to vector<64x256xbf16>
    %cst_71 = arith.constant dense<0.000000e+00> : vector<64x8xf32>
    %85 = tpu.matmul %84, %16, %cst_71 {dimension_numbers = #tpu.dot_dimension_numbers<[1], [0], [0], [1], [0, 0, 1, 1], [], []>} : vector<64x256xbf16>, vector<256x8xbf16>, vector<64x8xf32> -> vector<64x8xf32>
    %86 = arith.truncf %85 : vector<64x8xf32> to vector<64x8xbf16>
    %c8_72 = arith.constant 8 : index
    %c0_73 = arith.constant 0 : index
    %c0_74 = arith.constant 0 : index
    %87 = vector.load %arg5[%c8_72, %c0_73, %c0_74] : memref<9x8x16xbf16, #tpu.memory_space<vmem>>, vector<1x8x16xbf16>
    %88 = vector.shape_cast %87 : vector<1x8x16xbf16> to vector<8x16xbf16>
    %cst_75 = arith.constant dense<0.000000e+00> : vector<64x16xf32>
    %89 = tpu.matmul %86, %88, %cst_75 {dimension_numbers = #tpu.dot_dimension_numbers<[1], [0], [0], [1], [0, 0, 1, 1], [], []>} : vector<64x8xbf16>, vector<8x16xbf16>, vector<64x16xf32> -> vector<64x16xf32>
    %90 = arith.addf %82, %89 : vector<64x16xf32>
    %cst_76 = arith.constant 3.000000e+00 : f32
    %91 = vector.broadcast %cst_76 : f32 to vector<64x16xf32>
    %92 = arith.addf %90, %91 : vector<64x16xf32>
    %cst_77 = arith.constant 0.000000e+00 : f32
    %cst_78 = arith.constant 6.000000e+00 : f32
    %93 = vector.broadcast %cst_77 : f32 to vector<64x16xf32>
    %94 = arith.maximumf %93, %92 : vector<64x16xf32>
    %95 = vector.broadcast %cst_78 : f32 to vector<64x16xf32>
    %96 = arith.minimumf %95, %94 : vector<64x16xf32>
    %97 = arith.mulf %90, %96 : vector<64x16xf32>
    %cst_79 = arith.constant 0.166666672 : f32
    %98 = vector.broadcast %cst_79 : f32 to vector<64x16xf32>
    %99 = arith.mulf %97, %98 : vector<64x16xf32>
    %100 = arith.truncf %99 : vector<64x16xf32> to vector<64x16xbf16>
    %c0_80 = arith.constant 0 : index
    %c0_81 = arith.constant 0 : index
    %101 = vector.load %arg7[%c0_80, %c0_81] : memref<16x16xbf16, #tpu.memory_space<vmem>>, vector<16x16xbf16>
    %cst_82 = arith.constant dense<0.000000e+00> : vector<64x16xf32>
    %102 = tpu.matmul %100, %101, %cst_82 {dimension_numbers = #tpu.dot_dimension_numbers<[1], [0], [0], [1], [0, 0, 1, 1], [], []>} : vector<64x16xbf16>, vector<16x16xbf16>, vector<64x16xf32> -> vector<64x16xf32>
    %c0_83 = arith.constant 0 : index
    %c0_84 = arith.constant 0 : index
    %103 = vector.load %arg8[%c0_83, %c0_84] : memref<1x16xf32, #tpu.memory_space<vmem>>, vector<1x16xf32>
    %104 = vector.broadcast %103 : vector<1x16xf32> to vector<64x16xf32>
    %105 = arith.addf %102, %104 : vector<64x16xf32>
    %cst_85 = arith.constant 3.000000e+00 : f32
    %106 = vector.broadcast %cst_85 : f32 to vector<64x16xf32>
    %107 = arith.addf %105, %106 : vector<64x16xf32>
    %cst_86 = arith.constant 0.000000e+00 : f32
    %cst_87 = arith.constant 6.000000e+00 : f32
    %108 = vector.broadcast %cst_86 : f32 to vector<64x16xf32>
    %109 = arith.maximumf %108, %107 : vector<64x16xf32>
    %110 = vector.broadcast %cst_87 : f32 to vector<64x16xf32>
    %111 = arith.minimumf %110, %109 : vector<64x16xf32>
    %112 = arith.mulf %105, %111 : vector<64x16xf32>
    %cst_88 = arith.constant 0.166666672 : f32
    %113 = vector.broadcast %cst_88 : f32 to vector<64x16xf32>
    %114 = arith.mulf %112, %113 : vector<64x16xf32>
    %115 = arith.truncf %114 : vector<64x16xf32> to vector<64x16xbf16>
    %c0_89 = arith.constant 0 : index
    %c0_90 = arith.constant 0 : index
    %116 = vector.load %arg11[%c0_89, %c0_90] : memref<1x16xf32, #tpu.memory_space<vmem>>, vector<1x16xf32>
    %c0_91 = arith.constant 0 : index
    %c0_92 = arith.constant 0 : index
    %c0_93 = arith.constant 0 : index
    %117 = vector.load %arg9[%c0_91, %c0_92, %c0_93] : memref<9x16x64xbf16, #tpu.memory_space<vmem>>, vector<1x16x64xbf16>
    %118 = vector.shape_cast %117 : vector<1x16x64xbf16> to vector<16x64xbf16>
    %cst_94 = arith.constant dense<0.000000e+00> : vector<16x16xf32>
    %119 = tpu.matmul %118, %115, %cst_94 {dimension_numbers = #tpu.dot_dimension_numbers<[1], [0], [0], [1], [0, 0, 1, 1], [], []>} : vector<16x64xbf16>, vector<64x16xbf16>, vector<16x16xf32> -> vector<16x16xf32>
    %120 = arith.truncf %119 : vector<16x16xf32> to vector<16x16xbf16>
    %c0_95 = arith.constant 0 : index
    %c0_96 = arith.constant 0 : index
    %c0_97 = arith.constant 0 : index
    %121 = vector.load %arg10[%c0_95, %c0_96, %c0_97] : memref<9x16x16xbf16, #tpu.memory_space<vmem>>, vector<1x16x16xbf16>
    %122 = vector.shape_cast %121 : vector<1x16x16xbf16> to vector<16x16xbf16>
    %cst_98 = arith.constant dense<0.000000e+00> : vector<16x16xf32>
    %123 = tpu.matmul %120, %122, %cst_98 {dimension_numbers = #tpu.dot_dimension_numbers<[1], [0], [0], [1], [0, 0, 1, 1], [], []>} : vector<16x16xbf16>, vector<16x16xbf16>, vector<16x16xf32> -> vector<16x16xf32>
    %124 = vector.broadcast %116 : vector<1x16xf32> to vector<16x16xf32>
    %125 = arith.addf %124, %123 : vector<16x16xf32>
    %c1_99 = arith.constant 1 : index
    %c0_100 = arith.constant 0 : index
    %c0_101 = arith.constant 0 : index
    %126 = vector.load %arg9[%c1_99, %c0_100, %c0_101] : memref<9x16x64xbf16, #tpu.memory_space<vmem>>, vector<1x16x64xbf16>
    %127 = vector.shape_cast %126 : vector<1x16x64xbf16> to vector<16x64xbf16>
    %cst_102 = arith.constant dense<0.000000e+00> : vector<16x16xf32>
    %128 = tpu.matmul %127, %115, %cst_102 {dimension_numbers = #tpu.dot_dimension_numbers<[1], [0], [0], [1], [0, 0, 1, 1], [], []>} : vector<16x64xbf16>, vector<64x16xbf16>, vector<16x16xf32> -> vector<16x16xf32>
    %129 = arith.truncf %128 : vector<16x16xf32> to vector<16x16xbf16>
    %c1_103 = arith.constant 1 : index
    %c0_104 = arith.constant 0 : index
    %c0_105 = arith.constant 0 : index
    %130 = vector.load %arg10[%c1_103, %c0_104, %c0_105] : memref<9x16x16xbf16, #tpu.memory_space<vmem>>, vector<1x16x16xbf16>
    %131 = vector.shape_cast %130 : vector<1x16x16xbf16> to vector<16x16xbf16>
    %cst_106 = arith.constant dense<0.000000e+00> : vector<16x16xf32>
    %132 = tpu.matmul %129, %131, %cst_106 {dimension_numbers = #tpu.dot_dimension_numbers<[1], [0], [0], [1], [0, 0, 1, 1], [], []>} : vector<16x16xbf16>, vector<16x16xbf16>, vector<16x16xf32> -> vector<16x16xf32>
    %133 = arith.addf %125, %132 : vector<16x16xf32>
    %c2_107 = arith.constant 2 : index
    %c0_108 = arith.constant 0 : index
    %c0_109 = arith.constant 0 : index
    %134 = vector.load %arg9[%c2_107, %c0_108, %c0_109] : memref<9x16x64xbf16, #tpu.memory_space<vmem>>, vector<1x16x64xbf16>
    %135 = vector.shape_cast %134 : vector<1x16x64xbf16> to vector<16x64xbf16>
    %cst_110 = arith.constant dense<0.000000e+00> : vector<16x16xf32>
    %136 = tpu.matmul %135, %115, %cst_110 {dimension_numbers = #tpu.dot_dimension_numbers<[1], [0], [0], [1], [0, 0, 1, 1], [], []>} : vector<16x64xbf16>, vector<64x16xbf16>, vector<16x16xf32> -> vector<16x16xf32>
    %137 = arith.truncf %136 : vector<16x16xf32> to vector<16x16xbf16>
    %c2_111 = arith.constant 2 : index
    %c0_112 = arith.constant 0 : index
    %c0_113 = arith.constant 0 : index
    %138 = vector.load %arg10[%c2_111, %c0_112, %c0_113] : memref<9x16x16xbf16, #tpu.memory_space<vmem>>, vector<1x16x16xbf16>
    %139 = vector.shape_cast %138 : vector<1x16x16xbf16> to vector<16x16xbf16>
    %cst_114 = arith.constant dense<0.000000e+00> : vector<16x16xf32>
    %140 = tpu.matmul %137, %139, %cst_114 {dimension_numbers = #tpu.dot_dimension_numbers<[1], [0], [0], [1], [0, 0, 1, 1], [], []>} : vector<16x16xbf16>, vector<16x16xbf16>, vector<16x16xf32> -> vector<16x16xf32>
    %141 = arith.addf %133, %140 : vector<16x16xf32>
    %c3_115 = arith.constant 3 : index
    %c0_116 = arith.constant 0 : index
    %c0_117 = arith.constant 0 : index
    %142 = vector.load %arg9[%c3_115, %c0_116, %c0_117] : memref<9x16x64xbf16, #tpu.memory_space<vmem>>, vector<1x16x64xbf16>
    %143 = vector.shape_cast %142 : vector<1x16x64xbf16> to vector<16x64xbf16>
    %cst_118 = arith.constant dense<0.000000e+00> : vector<16x16xf32>
    %144 = tpu.matmul %143, %115, %cst_118 {dimension_numbers = #tpu.dot_dimension_numbers<[1], [0], [0], [1], [0, 0, 1, 1], [], []>} : vector<16x64xbf16>, vector<64x16xbf16>, vector<16x16xf32> -> vector<16x16xf32>
    %145 = arith.truncf %144 : vector<16x16xf32> to vector<16x16xbf16>
    %c3_119 = arith.constant 3 : index
    %c0_120 = arith.constant 0 : index
    %c0_121 = arith.constant 0 : index
    %146 = vector.load %arg10[%c3_119, %c0_120, %c0_121] : memref<9x16x16xbf16, #tpu.memory_space<vmem>>, vector<1x16x16xbf16>
    %147 = vector.shape_cast %146 : vector<1x16x16xbf16> to vector<16x16xbf16>
    %cst_122 = arith.constant dense<0.000000e+00> : vector<16x16xf32>
    %148 = tpu.matmul %145, %147, %cst_122 {dimension_numbers = #tpu.dot_dimension_numbers<[1], [0], [0], [1], [0, 0, 1, 1], [], []>} : vector<16x16xbf16>, vector<16x16xbf16>, vector<16x16xf32> -> vector<16x16xf32>
    %149 = arith.addf %141, %148 : vector<16x16xf32>
    %c4_123 = arith.constant 4 : index
    %c0_124 = arith.constant 0 : index
    %c0_125 = arith.constant 0 : index
    %150 = vector.load %arg9[%c4_123, %c0_124, %c0_125] : memref<9x16x64xbf16, #tpu.memory_space<vmem>>, vector<1x16x64xbf16>
    %151 = vector.shape_cast %150 : vector<1x16x64xbf16> to vector<16x64xbf16>
    %cst_126 = arith.constant dense<0.000000e+00> : vector<16x16xf32>
    %152 = tpu.matmul %151, %115, %cst_126 {dimension_numbers = #tpu.dot_dimension_numbers<[1], [0], [0], [1], [0, 0, 1, 1], [], []>} : vector<16x64xbf16>, vector<64x16xbf16>, vector<16x16xf32> -> vector<16x16xf32>
    %153 = arith.truncf %152 : vector<16x16xf32> to vector<16x16xbf16>
    %c4_127 = arith.constant 4 : index
    %c0_128 = arith.constant 0 : index
    %c0_129 = arith.constant 0 : index
    %154 = vector.load %arg10[%c4_127, %c0_128, %c0_129] : memref<9x16x16xbf16, #tpu.memory_space<vmem>>, vector<1x16x16xbf16>
    %155 = vector.shape_cast %154 : vector<1x16x16xbf16> to vector<16x16xbf16>
    %cst_130 = arith.constant dense<0.000000e+00> : vector<16x16xf32>
    %156 = tpu.matmul %153, %155, %cst_130 {dimension_numbers = #tpu.dot_dimension_numbers<[1], [0], [0], [1], [0, 0, 1, 1], [], []>} : vector<16x16xbf16>, vector<16x16xbf16>, vector<16x16xf32> -> vector<16x16xf32>
    %157 = arith.addf %149, %156 : vector<16x16xf32>
    %c5_131 = arith.constant 5 : index
    %c0_132 = arith.constant 0 : index
    %c0_133 = arith.constant 0 : index
    %158 = vector.load %arg9[%c5_131, %c0_132, %c0_133] : memref<9x16x64xbf16, #tpu.memory_space<vmem>>, vector<1x16x64xbf16>
    %159 = vector.shape_cast %158 : vector<1x16x64xbf16> to vector<16x64xbf16>
    %cst_134 = arith.constant dense<0.000000e+00> : vector<16x16xf32>
    %160 = tpu.matmul %159, %115, %cst_134 {dimension_numbers = #tpu.dot_dimension_numbers<[1], [0], [0], [1], [0, 0, 1, 1], [], []>} : vector<16x64xbf16>, vector<64x16xbf16>, vector<16x16xf32> -> vector<16x16xf32>
    %161 = arith.truncf %160 : vector<16x16xf32> to vector<16x16xbf16>
    %c5_135 = arith.constant 5 : index
    %c0_136 = arith.constant 0 : index
    %c0_137 = arith.constant 0 : index
    %162 = vector.load %arg10[%c5_135, %c0_136, %c0_137] : memref<9x16x16xbf16, #tpu.memory_space<vmem>>, vector<1x16x16xbf16>
    %163 = vector.shape_cast %162 : vector<1x16x16xbf16> to vector<16x16xbf16>
    %cst_138 = arith.constant dense<0.000000e+00> : vector<16x16xf32>
    %164 = tpu.matmul %161, %163, %cst_138 {dimension_numbers = #tpu.dot_dimension_numbers<[1], [0], [0], [1], [0, 0, 1, 1], [], []>} : vector<16x16xbf16>, vector<16x16xbf16>, vector<16x16xf32> -> vector<16x16xf32>
    %165 = arith.addf %157, %164 : vector<16x16xf32>
    %c6_139 = arith.constant 6 : index
    %c0_140 = arith.constant 0 : index
    %c0_141 = arith.constant 0 : index
    %166 = vector.load %arg9[%c6_139, %c0_140, %c0_141] : memref<9x16x64xbf16, #tpu.memory_space<vmem>>, vector<1x16x64xbf16>
    %167 = vector.shape_cast %166 : vector<1x16x64xbf16> to vector<16x64xbf16>
    %cst_142 = arith.constant dense<0.000000e+00> : vector<16x16xf32>
    %168 = tpu.matmul %167, %115, %cst_142 {dimension_numbers = #tpu.dot_dimension_numbers<[1], [0], [0], [1], [0, 0, 1, 1], [], []>} : vector<16x64xbf16>, vector<64x16xbf16>, vector<16x16xf32> -> vector<16x16xf32>
    %169 = arith.truncf %168 : vector<16x16xf32> to vector<16x16xbf16>
    %c6_143 = arith.constant 6 : index
    %c0_144 = arith.constant 0 : index
    %c0_145 = arith.constant 0 : index
    %170 = vector.load %arg10[%c6_143, %c0_144, %c0_145] : memref<9x16x16xbf16, #tpu.memory_space<vmem>>, vector<1x16x16xbf16>
    %171 = vector.shape_cast %170 : vector<1x16x16xbf16> to vector<16x16xbf16>
    %cst_146 = arith.constant dense<0.000000e+00> : vector<16x16xf32>
    %172 = tpu.matmul %169, %171, %cst_146 {dimension_numbers = #tpu.dot_dimension_numbers<[1], [0], [0], [1], [0, 0, 1, 1], [], []>} : vector<16x16xbf16>, vector<16x16xbf16>, vector<16x16xf32> -> vector<16x16xf32>
    %173 = arith.addf %165, %172 : vector<16x16xf32>
    %c7_147 = arith.constant 7 : index
    %c0_148 = arith.constant 0 : index
    %c0_149 = arith.constant 0 : index
    %174 = vector.load %arg9[%c7_147, %c0_148, %c0_149] : memref<9x16x64xbf16, #tpu.memory_space<vmem>>, vector<1x16x64xbf16>
    %175 = vector.shape_cast %174 : vector<1x16x64xbf16> to vector<16x64xbf16>
    %cst_150 = arith.constant dense<0.000000e+00> : vector<16x16xf32>
    %176 = tpu.matmul %175, %115, %cst_150 {dimension_numbers = #tpu.dot_dimension_numbers<[1], [0], [0], [1], [0, 0, 1, 1], [], []>} : vector<16x64xbf16>, vector<64x16xbf16>, vector<16x16xf32> -> vector<16x16xf32>
    %177 = arith.truncf %176 : vector<16x16xf32> to vector<16x16xbf16>
    %c7_151 = arith.constant 7 : index
    %c0_152 = arith.constant 0 : index
    %c0_153 = arith.constant 0 : index
    %178 = vector.load %arg10[%c7_151, %c0_152, %c0_153] : memref<9x16x16xbf16, #tpu.memory_space<vmem>>, vector<1x16x16xbf16>
    %179 = vector.shape_cast %178 : vector<1x16x16xbf16> to vector<16x16xbf16>
    %cst_154 = arith.constant dense<0.000000e+00> : vector<16x16xf32>
    %180 = tpu.matmul %177, %179, %cst_154 {dimension_numbers = #tpu.dot_dimension_numbers<[1], [0], [0], [1], [0, 0, 1, 1], [], []>} : vector<16x16xbf16>, vector<16x16xbf16>, vector<16x16xf32> -> vector<16x16xf32>
    %181 = arith.addf %173, %180 : vector<16x16xf32>
    %c8_155 = arith.constant 8 : index
    %c0_156 = arith.constant 0 : index
    %c0_157 = arith.constant 0 : index
    %182 = vector.load %arg9[%c8_155, %c0_156, %c0_157] : memref<9x16x64xbf16, #tpu.memory_space<vmem>>, vector<1x16x64xbf16>
    %183 = vector.shape_cast %182 : vector<1x16x64xbf16> to vector<16x64xbf16>
    %cst_158 = arith.constant dense<0.000000e+00> : vector<16x16xf32>
    %184 = tpu.matmul %183, %115, %cst_158 {dimension_numbers = #tpu.dot_dimension_numbers<[1], [0], [0], [1], [0, 0, 1, 1], [], []>} : vector<16x64xbf16>, vector<64x16xbf16>, vector<16x16xf32> -> vector<16x16xf32>
    %185 = arith.truncf %184 : vector<16x16xf32> to vector<16x16xbf16>
    %c8_159 = arith.constant 8 : index
    %c0_160 = arith.constant 0 : index
    %c0_161 = arith.constant 0 : index
    %186 = vector.load %arg10[%c8_159, %c0_160, %c0_161] : memref<9x16x16xbf16, #tpu.memory_space<vmem>>, vector<1x16x16xbf16>
    %187 = vector.shape_cast %186 : vector<1x16x16xbf16> to vector<16x16xbf16>
    %cst_162 = arith.constant dense<0.000000e+00> : vector<16x16xf32>
    %188 = tpu.matmul %185, %187, %cst_162 {dimension_numbers = #tpu.dot_dimension_numbers<[1], [0], [0], [1], [0, 0, 1, 1], [], []>} : vector<16x16xbf16>, vector<16x16xbf16>, vector<16x16xf32> -> vector<16x16xf32>
    %189 = arith.addf %181, %188 : vector<16x16xf32>
    %cst_163 = arith.constant 3.000000e+00 : f32
    %190 = vector.broadcast %cst_163 : f32 to vector<16x16xf32>
    %191 = arith.addf %189, %190 : vector<16x16xf32>
    %cst_164 = arith.constant 0.000000e+00 : f32
    %cst_165 = arith.constant 6.000000e+00 : f32
    %192 = vector.broadcast %cst_164 : f32 to vector<16x16xf32>
    %193 = arith.maximumf %192, %191 : vector<16x16xf32>
    %194 = vector.broadcast %cst_165 : f32 to vector<16x16xf32>
    %195 = arith.minimumf %194, %193 : vector<16x16xf32>
    %196 = arith.mulf %189, %195 : vector<16x16xf32>
    %cst_166 = arith.constant 0.166666672 : f32
    %197 = vector.broadcast %cst_166 : f32 to vector<16x16xf32>
    %198 = arith.mulf %196, %197 : vector<16x16xf32>
    %199 = arith.truncf %198 : vector<16x16xf32> to vector<16x16xbf16>
    %c0_167 = arith.constant 0 : index
    %c0_168 = arith.constant 0 : index
    %c0_169 = arith.constant 0 : index
    %200 = vector.load %arg12[%c0_167, %c0_168, %c0_169] : memref<3x16x13xbf16, #tpu.memory_space<vmem>>, vector<1x16x13xbf16>
    %201 = vector.shape_cast %200 : vector<1x16x13xbf16> to vector<16x13xbf16>
    %cst_170 = arith.constant dense<0.000000e+00> : vector<16x13xf32>
    %202 = tpu.matmul %199, %201, %cst_170 {dimension_numbers = #tpu.dot_dimension_numbers<[1], [0], [0], [1], [0, 0, 1, 1], [], []>} : vector<16x16xbf16>, vector<16x13xbf16>, vector<16x13xf32> -> vector<16x13xf32>
    %c0_171 = arith.constant 0 : index
    %c0_172 = arith.constant 0 : index
    %c0_173 = arith.constant 0 : index
    %203 = vector.load %arg13[%c0_171, %c0_172, %c0_173] : memref<3x1x13xf32, #tpu.memory_space<vmem>>, vector<1x1x13xf32>
    %204 = vector.shape_cast %203 : vector<1x1x13xf32> to vector<1x13xf32>
    %205 = vector.broadcast %204 : vector<1x13xf32> to vector<16x13xf32>
    %206 = arith.addf %202, %205 : vector<16x13xf32>
    %c0_174 = arith.constant 0 : index
    %c0_175 = arith.constant 0 : index
    %c0_176 = arith.constant 0 : index
    %c0_177 = arith.constant 0 : index
    %207 = vector.load %arg21[%c0_174, %c0_175, %c0_176, %c0_177] : memref<1x3x16x13xf32, #tpu.memory_space<vmem>>, vector<1x1x16x13xf32>
    %208 = vector.shape_cast %207 : vector<1x1x16x13xf32> to vector<16x13xf32>
    %209 = vector.shape_cast %206 : vector<16x13xf32> to vector<1x1x16x13xf32>
    tpu.vector_store %arg21[%c0_174, %c0_175, %c0_176, %c0_177], %209 {strides = array<i32>} : memref<1x3x16x13xf32, #tpu.memory_space<vmem>>, vector<1x1x16x13xf32>,
    %c1_178 = arith.constant 1 : index
    %c0_179 = arith.constant 0 : index
    %c0_180 = arith.constant 0 : index
    %210 = vector.load %arg12[%c1_178, %c0_179, %c0_180] : memref<3x16x13xbf16, #tpu.memory_space<vmem>>, vector<1x16x13xbf16>
    %211 = vector.shape_cast %210 : vector<1x16x13xbf16> to vector<16x13xbf16>
    %cst_181 = arith.constant dense<0.000000e+00> : vector<16x13xf32>
    %212 = tpu.matmul %199, %211, %cst_181 {dimension_numbers = #tpu.dot_dimension_numbers<[1], [0], [0], [1], [0, 0, 1, 1], [], []>} : vector<16x16xbf16>, vector<16x13xbf16>, vector<16x13xf32> -> vector<16x13xf32>
    %c1_182 = arith.constant 1 : index
    %c0_183 = arith.constant 0 : index
    %c0_184 = arith.constant 0 : index
    %213 = vector.load %arg13[%c1_182, %c0_183, %c0_184] : memref<3x1x13xf32, #tpu.memory_space<vmem>>, vector<1x1x13xf32>
    %214 = vector.shape_cast %213 : vector<1x1x13xf32> to vector<1x13xf32>
    %215 = vector.broadcast %214 : vector<1x13xf32> to vector<16x13xf32>
    %216 = arith.addf %212, %215 : vector<16x13xf32>
    %c0_185 = arith.constant 0 : index
    %c1_186 = arith.constant 1 : index
    %c0_187 = arith.constant 0 : index
    %c0_188 = arith.constant 0 : index
    %217 = vector.load %arg21[%c0_185, %c1_186, %c0_187, %c0_188] : memref<1x3x16x13xf32, #tpu.memory_space<vmem>>, vector<1x1x16x13xf32>
    %218 = vector.shape_cast %217 : vector<1x1x16x13xf32> to vector<16x13xf32>
    %219 = vector.shape_cast %216 : vector<16x13xf32> to vector<1x1x16x13xf32>
    tpu.vector_store %arg21[%c0_185, %c1_186, %c0_187, %c0_188], %219 {strides = array<i32>} : memref<1x3x16x13xf32, #tpu.memory_space<vmem>>, vector<1x1x16x13xf32>,
    %c2_189 = arith.constant 2 : index
    %c0_190 = arith.constant 0 : index
    %c0_191 = arith.constant 0 : index
    %220 = vector.load %arg12[%c2_189, %c0_190, %c0_191] : memref<3x16x13xbf16, #tpu.memory_space<vmem>>, vector<1x16x13xbf16>
    %221 = vector.shape_cast %220 : vector<1x16x13xbf16> to vector<16x13xbf16>
    %cst_192 = arith.constant dense<0.000000e+00> : vector<16x13xf32>
    %222 = tpu.matmul %199, %221, %cst_192 {dimension_numbers = #tpu.dot_dimension_numbers<[1], [0], [0], [1], [0, 0, 1, 1], [], []>} : vector<16x16xbf16>, vector<16x13xbf16>, vector<16x13xf32> -> vector<16x13xf32>
    %c2_193 = arith.constant 2 : index
    %c0_194 = arith.constant 0 : index
    %c0_195 = arith.constant 0 : index
    %223 = vector.load %arg13[%c2_193, %c0_194, %c0_195] : memref<3x1x13xf32, #tpu.memory_space<vmem>>, vector<1x1x13xf32>
    %224 = vector.shape_cast %223 : vector<1x1x13xf32> to vector<1x13xf32>
    %225 = vector.broadcast %224 : vector<1x13xf32> to vector<16x13xf32>
    %226 = arith.addf %222, %225 : vector<16x13xf32>
    %c0_196 = arith.constant 0 : index
    %c2_197 = arith.constant 2 : index
    %c0_198 = arith.constant 0 : index
    %c0_199 = arith.constant 0 : index
    %227 = vector.load %arg21[%c0_196, %c2_197, %c0_198, %c0_199] : memref<1x3x16x13xf32, #tpu.memory_space<vmem>>, vector<1x1x16x13xf32>
    %228 = vector.shape_cast %227 : vector<1x1x16x13xf32> to vector<16x13xf32>
    %229 = vector.shape_cast %226 : vector<16x13xf32> to vector<1x1x16x13xf32>
    tpu.vector_store %arg21[%c0_196, %c2_197, %c0_198, %c0_199], %229 {strides = array<i32>} : memref<1x3x16x13xf32, #tpu.memory_space<vmem>>, vector<1x1x16x13xf32>,
    %c0_200 = arith.constant 0 : index
    %c0_201 = arith.constant 0 : index
    %230 = vector.load %arg16[%c0_200, %c0_201] : memref<1x16xf32, #tpu.memory_space<vmem>>, vector<1x16xf32>
    %c0_202 = arith.constant 0 : index
    %c0_203 = arith.constant 0 : index
    %c0_204 = arith.constant 0 : index
    %231 = vector.load %arg14[%c0_202, %c0_203, %c0_204] : memref<9x64x64xbf16, #tpu.memory_space<vmem>>, vector<1x64x64xbf16>
    %232 = vector.shape_cast %231 : vector<1x64x64xbf16> to vector<64x64xbf16>
    %cst_205 = arith.constant dense<0.000000e+00> : vector<64x16xf32>
    %233 = tpu.matmul %232, %115, %cst_205 {dimension_numbers = #tpu.dot_dimension_numbers<[1], [0], [0], [1], [0, 0, 1, 1], [], []>} : vector<64x64xbf16>, vector<64x16xbf16>, vector<64x16xf32> -> vector<64x16xf32>
    %234 = arith.truncf %233 : vector<64x16xf32> to vector<64x16xbf16>
    %c0_206 = arith.constant 0 : index
    %c0_207 = arith.constant 0 : index
    %c0_208 = arith.constant 0 : index
    %235 = vector.load %arg15[%c0_206, %c0_207, %c0_208] : memref<9x16x16xbf16, #tpu.memory_space<vmem>>, vector<1x16x16xbf16>
    %236 = vector.shape_cast %235 : vector<1x16x16xbf16> to vector<16x16xbf16>
    %cst_209 = arith.constant dense<0.000000e+00> : vector<64x16xf32>
    %237 = tpu.matmul %234, %236, %cst_209 {dimension_numbers = #tpu.dot_dimension_numbers<[1], [0], [0], [1], [0, 0, 1, 1], [], []>} : vector<64x16xbf16>, vector<16x16xbf16>, vector<64x16xf32> -> vector<64x16xf32>
    %238 = vector.broadcast %230 : vector<1x16xf32> to vector<64x16xf32>
    %239 = arith.addf %238, %237 : vector<64x16xf32>
    %c1_210 = arith.constant 1 : index
    %c0_211 = arith.constant 0 : index
    %c0_212 = arith.constant 0 : index
    %240 = vector.load %arg14[%c1_210, %c0_211, %c0_212] : memref<9x64x64xbf16, #tpu.memory_space<vmem>>, vector<1x64x64xbf16>
    %241 = vector.shape_cast %240 : vector<1x64x64xbf16> to vector<64x64xbf16>
    %cst_213 = arith.constant dense<0.000000e+00> : vector<64x16xf32>
    %242 = tpu.matmul %241, %115, %cst_213 {dimension_numbers = #tpu.dot_dimension_numbers<[1], [0], [0], [1], [0, 0, 1, 1], [], []>} : vector<64x64xbf16>, vector<64x16xbf16>, vector<64x16xf32> -> vector<64x16xf32>
    %243 = arith.truncf %242 : vector<64x16xf32> to vector<64x16xbf16>
    %c1_214 = arith.constant 1 : index
    %c0_215 = arith.constant 0 : index
    %c0_216 = arith.constant 0 : index
    %244 = vector.load %arg15[%c1_214, %c0_215, %c0_216] : memref<9x16x16xbf16, #tpu.memory_space<vmem>>, vector<1x16x16xbf16>
    %245 = vector.shape_cast %244 : vector<1x16x16xbf16> to vector<16x16xbf16>
    %cst_217 = arith.constant dense<0.000000e+00> : vector<64x16xf32>
    %246 = tpu.matmul %243, %245, %cst_217 {dimension_numbers = #tpu.dot_dimension_numbers<[1], [0], [0], [1], [0, 0, 1, 1], [], []>} : vector<64x16xbf16>, vector<16x16xbf16>, vector<64x16xf32> -> vector<64x16xf32>
    %247 = arith.addf %239, %246 : vector<64x16xf32>
    %c2_218 = arith.constant 2 : index
    %c0_219 = arith.constant 0 : index
    %c0_220 = arith.constant 0 : index
    %248 = vector.load %arg14[%c2_218, %c0_219, %c0_220] : memref<9x64x64xbf16, #tpu.memory_space<vmem>>, vector<1x64x64xbf16>
    %249 = vector.shape_cast %248 : vector<1x64x64xbf16> to vector<64x64xbf16>
    %cst_221 = arith.constant dense<0.000000e+00> : vector<64x16xf32>
    %250 = tpu.matmul %249, %115, %cst_221 {dimension_numbers = #tpu.dot_dimension_numbers<[1], [0], [0], [1], [0, 0, 1, 1], [], []>} : vector<64x64xbf16>, vector<64x16xbf16>, vector<64x16xf32> -> vector<64x16xf32>
    %251 = arith.truncf %250 : vector<64x16xf32> to vector<64x16xbf16>
    %c2_222 = arith.constant 2 : index
    %c0_223 = arith.constant 0 : index
    %c0_224 = arith.constant 0 : index
    %252 = vector.load %arg15[%c2_222, %c0_223, %c0_224] : memref<9x16x16xbf16, #tpu.memory_space<vmem>>, vector<1x16x16xbf16>
    %253 = vector.shape_cast %252 : vector<1x16x16xbf16> to vector<16x16xbf16>
    %cst_225 = arith.constant dense<0.000000e+00> : vector<64x16xf32>
    %254 = tpu.matmul %251, %253, %cst_225 {dimension_numbers = #tpu.dot_dimension_numbers<[1], [0], [0], [1], [0, 0, 1, 1], [], []>} : vector<64x16xbf16>, vector<16x16xbf16>, vector<64x16xf32> -> vector<64x16xf32>
    %255 = arith.addf %247, %254 : vector<64x16xf32>
    %c3_226 = arith.constant 3 : index
    %c0_227 = arith.constant 0 : index
    %c0_228 = arith.constant 0 : index
    %256 = vector.load %arg14[%c3_226, %c0_227, %c0_228] : memref<9x64x64xbf16, #tpu.memory_space<vmem>>, vector<1x64x64xbf16>
    %257 = vector.shape_cast %256 : vector<1x64x64xbf16> to vector<64x64xbf16>
    %cst_229 = arith.constant dense<0.000000e+00> : vector<64x16xf32>
    %258 = tpu.matmul %257, %115, %cst_229 {dimension_numbers = #tpu.dot_dimension_numbers<[1], [0], [0], [1], [0, 0, 1, 1], [], []>} : vector<64x64xbf16>, vector<64x16xbf16>, vector<64x16xf32> -> vector<64x16xf32>
    %259 = arith.truncf %258 : vector<64x16xf32> to vector<64x16xbf16>
    %c3_230 = arith.constant 3 : index
    %c0_231 = arith.constant 0 : index
    %c0_232 = arith.constant 0 : index
    %260 = vector.load %arg15[%c3_230, %c0_231, %c0_232] : memref<9x16x16xbf16, #tpu.memory_space<vmem>>, vector<1x16x16xbf16>
    %261 = vector.shape_cast %260 : vector<1x16x16xbf16> to vector<16x16xbf16>
    %cst_233 = arith.constant dense<0.000000e+00> : vector<64x16xf32>
    %262 = tpu.matmul %259, %261, %cst_233 {dimension_numbers = #tpu.dot_dimension_numbers<[1], [0], [0], [1], [0, 0, 1, 1], [], []>} : vector<64x16xbf16>, vector<16x16xbf16>, vector<64x16xf32> -> vector<64x16xf32>
    %263 = arith.addf %255, %262 : vector<64x16xf32>
    %c4_234 = arith.constant 4 : index
    %c0_235 = arith.constant 0 : index
    %c0_236 = arith.constant 0 : index
    %264 = vector.load %arg14[%c4_234, %c0_235, %c0_236] : memref<9x64x64xbf16, #tpu.memory_space<vmem>>, vector<1x64x64xbf16>
    %265 = vector.shape_cast %264 : vector<1x64x64xbf16> to vector<64x64xbf16>
    %cst_237 = arith.constant dense<0.000000e+00> : vector<64x16xf32>
    %266 = tpu.matmul %265, %115, %cst_237 {dimension_numbers = #tpu.dot_dimension_numbers<[1], [0], [0], [1], [0, 0, 1, 1], [], []>} : vector<64x64xbf16>, vector<64x16xbf16>, vector<64x16xf32> -> vector<64x16xf32>
    %267 = arith.truncf %266 : vector<64x16xf32> to vector<64x16xbf16>
    %c4_238 = arith.constant 4 : index
    %c0_239 = arith.constant 0 : index
    %c0_240 = arith.constant 0 : index
    %268 = vector.load %arg15[%c4_238, %c0_239, %c0_240] : memref<9x16x16xbf16, #tpu.memory_space<vmem>>, vector<1x16x16xbf16>
    %269 = vector.shape_cast %268 : vector<1x16x16xbf16> to vector<16x16xbf16>
    %cst_241 = arith.constant dense<0.000000e+00> : vector<64x16xf32>
    %270 = tpu.matmul %267, %269, %cst_241 {dimension_numbers = #tpu.dot_dimension_numbers<[1], [0], [0], [1], [0, 0, 1, 1], [], []>} : vector<64x16xbf16>, vector<16x16xbf16>, vector<64x16xf32> -> vector<64x16xf32>
    %271 = arith.addf %263, %270 : vector<64x16xf32>
    %c5_242 = arith.constant 5 : index
    %c0_243 = arith.constant 0 : index
    %c0_244 = arith.constant 0 : index
    %272 = vector.load %arg14[%c5_242, %c0_243, %c0_244] : memref<9x64x64xbf16, #tpu.memory_space<vmem>>, vector<1x64x64xbf16>
    %273 = vector.shape_cast %272 : vector<1x64x64xbf16> to vector<64x64xbf16>
    %cst_245 = arith.constant dense<0.000000e+00> : vector<64x16xf32>
    %274 = tpu.matmul %273, %115, %cst_245 {dimension_numbers = #tpu.dot_dimension_numbers<[1], [0], [0], [1], [0, 0, 1, 1], [], []>} : vector<64x64xbf16>, vector<64x16xbf16>, vector<64x16xf32> -> vector<64x16xf32>
    %275 = arith.truncf %274 : vector<64x16xf32> to vector<64x16xbf16>
    %c5_246 = arith.constant 5 : index
    %c0_247 = arith.constant 0 : index
    %c0_248 = arith.constant 0 : index
    %276 = vector.load %arg15[%c5_246, %c0_247, %c0_248] : memref<9x16x16xbf16, #tpu.memory_space<vmem>>, vector<1x16x16xbf16>
    %277 = vector.shape_cast %276 : vector<1x16x16xbf16> to vector<16x16xbf16>
    %cst_249 = arith.constant dense<0.000000e+00> : vector<64x16xf32>
    %278 = tpu.matmul %275, %277, %cst_249 {dimension_numbers = #tpu.dot_dimension_numbers<[1], [0], [0], [1], [0, 0, 1, 1], [], []>} : vector<64x16xbf16>, vector<16x16xbf16>, vector<64x16xf32> -> vector<64x16xf32>
    %279 = arith.addf %271, %278 : vector<64x16xf32>
    %c6_250 = arith.constant 6 : index
    %c0_251 = arith.constant 0 : index
    %c0_252 = arith.constant 0 : index
    %280 = vector.load %arg14[%c6_250, %c0_251, %c0_252] : memref<9x64x64xbf16, #tpu.memory_space<vmem>>, vector<1x64x64xbf16>
    %281 = vector.shape_cast %280 : vector<1x64x64xbf16> to vector<64x64xbf16>
    %cst_253 = arith.constant dense<0.000000e+00> : vector<64x16xf32>
    %282 = tpu.matmul %281, %115, %cst_253 {dimension_numbers = #tpu.dot_dimension_numbers<[1], [0], [0], [1], [0, 0, 1, 1], [], []>} : vector<64x64xbf16>, vector<64x16xbf16>, vector<64x16xf32> -> vector<64x16xf32>
    %283 = arith.truncf %282 : vector<64x16xf32> to vector<64x16xbf16>
    %c6_254 = arith.constant 6 : index
    %c0_255 = arith.constant 0 : index
    %c0_256 = arith.constant 0 : index
    %284 = vector.load %arg15[%c6_254, %c0_255, %c0_256] : memref<9x16x16xbf16, #tpu.memory_space<vmem>>, vector<1x16x16xbf16>
    %285 = vector.shape_cast %284 : vector<1x16x16xbf16> to vector<16x16xbf16>
    %cst_257 = arith.constant dense<0.000000e+00> : vector<64x16xf32>
    %286 = tpu.matmul %283, %285, %cst_257 {dimension_numbers = #tpu.dot_dimension_numbers<[1], [0], [0], [1], [0, 0, 1, 1], [], []>} : vector<64x16xbf16>, vector<16x16xbf16>, vector<64x16xf32> -> vector<64x16xf32>
    %287 = arith.addf %279, %286 : vector<64x16xf32>
    %c7_258 = arith.constant 7 : index
    %c0_259 = arith.constant 0 : index
    %c0_260 = arith.constant 0 : index
    %288 = vector.load %arg14[%c7_258, %c0_259, %c0_260] : memref<9x64x64xbf16, #tpu.memory_space<vmem>>, vector<1x64x64xbf16>
    %289 = vector.shape_cast %288 : vector<1x64x64xbf16> to vector<64x64xbf16>
    %cst_261 = arith.constant dense<0.000000e+00> : vector<64x16xf32>
    %290 = tpu.matmul %289, %115, %cst_261 {dimension_numbers = #tpu.dot_dimension_numbers<[1], [0], [0], [1], [0, 0, 1, 1], [], []>} : vector<64x64xbf16>, vector<64x16xbf16>, vector<64x16xf32> -> vector<64x16xf32>
    %291 = arith.truncf %290 : vector<64x16xf32> to vector<64x16xbf16>
    %c7_262 = arith.constant 7 : index
    %c0_263 = arith.constant 0 : index
    %c0_264 = arith.constant 0 : index
    %292 = vector.load %arg15[%c7_262, %c0_263, %c0_264] : memref<9x16x16xbf16, #tpu.memory_space<vmem>>, vector<1x16x16xbf16>
    %293 = vector.shape_cast %292 : vector<1x16x16xbf16> to vector<16x16xbf16>
    %cst_265 = arith.constant dense<0.000000e+00> : vector<64x16xf32>
    %294 = tpu.matmul %291, %293, %cst_265 {dimension_numbers = #tpu.dot_dimension_numbers<[1], [0], [0], [1], [0, 0, 1, 1], [], []>} : vector<64x16xbf16>, vector<16x16xbf16>, vector<64x16xf32> -> vector<64x16xf32>
    %295 = arith.addf %287, %294 : vector<64x16xf32>
    %c8_266 = arith.constant 8 : index
    %c0_267 = arith.constant 0 : index
    %c0_268 = arith.constant 0 : index
    %296 = vector.load %arg14[%c8_266, %c0_267, %c0_268] : memref<9x64x64xbf16, #tpu.memory_space<vmem>>, vector<1x64x64xbf16>
    %297 = vector.shape_cast %296 : vector<1x64x64xbf16> to vector<64x64xbf16>
    %cst_269 = arith.constant dense<0.000000e+00> : vector<64x16xf32>
    %298 = tpu.matmul %297, %115, %cst_269 {dimension_numbers = #tpu.dot_dimension_numbers<[1], [0], [0], [1], [0, 0, 1, 1], [], []>} : vector<64x64xbf16>, vector<64x16xbf16>, vector<64x16xf32> -> vector<64x16xf32>
    %299 = arith.truncf %298 : vector<64x16xf32> to vector<64x16xbf16>
    %c8_270 = arith.constant 8 : index
    %c0_271 = arith.constant 0 : index
    %c0_272 = arith.constant 0 : index
    %300 = vector.load %arg15[%c8_270, %c0_271, %c0_272] : memref<9x16x16xbf16, #tpu.memory_space<vmem>>, vector<1x16x16xbf16>
    %301 = vector.shape_cast %300 : vector<1x16x16xbf16> to vector<16x16xbf16>
    %cst_273 = arith.constant dense<0.000000e+00> : vector<64x16xf32>
    %302 = tpu.matmul %299, %301, %cst_273 {dimension_numbers = #tpu.dot_dimension_numbers<[1], [0], [0], [1], [0, 0, 1, 1], [], []>} : vector<64x16xbf16>, vector<16x16xbf16>, vector<64x16xf32> -> vector<64x16xf32>
    %303 = arith.addf %295, %302 : vector<64x16xf32>
    %cst_274 = arith.constant 3.000000e+00 : f32
    %304 = vector.broadcast %cst_274 : f32 to vector<64x16xf32>
    %305 = arith.addf %303, %304 : vector<64x16xf32>
    %cst_275 = arith.constant 0.000000e+00 : f32
    %cst_276 = arith.constant 6.000000e+00 : f32
    %306 = vector.broadcast %cst_275 : f32 to vector<64x16xf32>
    %307 = arith.maximumf %306, %305 : vector<64x16xf32>
    %308 = vector.broadcast %cst_276 : f32 to vector<64x16xf32>
    %309 = arith.minimumf %308, %307 : vector<64x16xf32>
    %310 = arith.mulf %303, %309 : vector<64x16xf32>
    %cst_277 = arith.constant 0.166666672 : f32
    %311 = vector.broadcast %cst_277 : f32 to vector<64x16xf32>
    %312 = arith.mulf %310, %311 : vector<64x16xf32>
    %313 = arith.truncf %312 : vector<64x16xf32> to vector<64x16xbf16>
    %c0_278 = arith.constant 0 : index
    %c0_279 = arith.constant 0 : index
    %314 = vector.load %arg17[%c0_278, %c0_279] : memref<16x2xbf16, #tpu.memory_space<vmem>>, vector<16x2xbf16>
    %cst_280 = arith.constant dense<0.000000e+00> : vector<64x2xf32>
    %315 = tpu.matmul %313, %314, %cst_280 {dimension_numbers = #tpu.dot_dimension_numbers<[1], [0], [0], [1], [0, 0, 1, 1], [], []>} : vector<64x16xbf16>, vector<16x2xbf16>, vector<64x2xf32> -> vector<64x2xf32>
    %c0_281 = arith.constant 0 : index
    %c0_282 = arith.constant 0 : index
    %316 = vector.load %arg18[%c0_281, %c0_282] : memref<1x2xf32, #tpu.memory_space<vmem>>, vector<1x2xf32>
    %317 = vector.broadcast %316 : vector<1x2xf32> to vector<64x2xf32>
    %318 = arith.addf %315, %317 : vector<64x2xf32>
    %c0_283 = arith.constant 0 : index
    %c0_284 = arith.constant 0 : index
    %319 = vector.load %arg19[%c0_283, %c0_284] : memref<16x2xbf16, #tpu.memory_space<vmem>>, vector<16x2xbf16>
    %cst_285 = arith.constant dense<0.000000e+00> : vector<64x2xf32>
    %320 = tpu.matmul %313, %319, %cst_285 {dimension_numbers = #tpu.dot_dimension_numbers<[1], [0], [0], [1], [0, 0, 1, 1], [], []>} : vector<64x16xbf16>, vector<16x2xbf16>, vector<64x2xf32> -> vector<64x2xf32>
    %c0_286 = arith.constant 0 : index
    %c0_287 = arith.constant 0 : index
    %321 = vector.load %arg20[%c0_286, %c0_287] : memref<1x2xf32, #tpu.memory_space<vmem>>, vector<1x2xf32>
    %322 = vector.broadcast %321 : vector<1x2xf32> to vector<64x2xf32>
    %323 = arith.addf %320, %322 : vector<64x2xf32>
    %cst_288 = arith.constant 0.000000e+00 : f32
    %324 = vector.broadcast %cst_288 : f32 to vector<64x2xf32>
    %325 = arith.subf %324, %318 : vector<64x2xf32>
    %326 = math.exp %325 : vector<64x2xf32>
    %cst_289 = arith.constant 1.000000e+00 : f32
    %327 = vector.broadcast %cst_289 : f32 to vector<64x2xf32>
    %328 = arith.addf %327, %326 : vector<64x2xf32>
    %329 = tpu.reciprocal %328 {approx = true} : vector<64x2xf32> -> vector<64x2xf32>
    %c0_290 = arith.constant 0 : index
    %c0_291 = arith.constant 0 : index
    %c0_292 = arith.constant 0 : index
    %330 = vector.load %arg22[%c0_290, %c0_291, %c0_292] : memref<1x64x2xf32, #tpu.memory_space<vmem>>, vector<1x64x2xf32>
    %331 = vector.shape_cast %330 : vector<1x64x2xf32> to vector<64x2xf32>
    %332 = vector.shape_cast %329 : vector<64x2xf32> to vector<1x64x2xf32>
    tpu.vector_store %arg22[%c0_290, %c0_291, %c0_292], %332 {strides = array<i32>} : memref<1x64x2xf32, #tpu.memory_space<vmem>>, vector<1x64x2xf32>,
    %c0_293 = arith.constant 0 : index
    %c0_294 = arith.constant 0 : index
    %c0_295 = arith.constant 0 : index
    %333 = vector.load %arg23[%c0_293, %c0_294, %c0_295] : memref<1x64x2xf32, #tpu.memory_space<vmem>>, vector<1x64x2xf32>
    %334 = vector.shape_cast %333 : vector<1x64x2xf32> to vector<64x2xf32>
    %335 = vector.shape_cast %323 : vector<64x2xf32> to vector<1x64x2xf32>
    tpu.vector_store %arg23[%c0_293, %c0_294, %c0_295], %335 {strides = array<i32>} : memref<1x64x2xf32, #tpu.memory_space<vmem>>, vector<1x64x2xf32>,
    return
  }
  func.func @transform_0(%arg0: i32) -> (i32, i32, i32) {
    %c0_i32 = arith.constant 0 : i32
    %c0_i32_0 = arith.constant 0 : i32
    %c0_i32_1 = arith.constant 0 : i32
    return %arg0, %c0_i32, %c0_i32_0 : i32, i32, i32
  }
  func.func @transform_1(%arg0: i32) -> (i32, i32) {
    %c0_i32 = arith.constant 0 : i32
    %c0_i32_0 = arith.constant 0 : i32
    %c0_i32_1 = arith.constant 0 : i32
    return %c0_i32, %c0_i32_0 : i32, i32
  }
  func.func @transform_2(%arg0: i32) -> (i32, i32) {
    %c0_i32 = arith.constant 0 : i32
    %c0_i32_0 = arith.constant 0 : i32
    %c0_i32_1 = arith.constant 0 : i32
    return %c0_i32, %c0_i32_0 : i32, i32
  }
  func.func @transform_3(%arg0: i32) -> (i32, i32, i32) {
    %c0_i32 = arith.constant 0 : i32
    %c0_i32_0 = arith.constant 0 : i32
    %c0_i32_1 = arith.constant 0 : i32
    %c0_i32_2 = arith.constant 0 : i32
    return %c0_i32, %c0_i32_0, %c0_i32_1 : i32, i32, i32
  }
  func.func @transform_4(%arg0: i32) -> (i32, i32, i32) {
    %c0_i32 = arith.constant 0 : i32
    %c0_i32_0 = arith.constant 0 : i32
    %c0_i32_1 = arith.constant 0 : i32
    %c0_i32_2 = arith.constant 0 : i32
    return %c0_i32, %c0_i32_0, %c0_i32_1 : i32, i32, i32
  }
  func.func @transform_5(%arg0: i32) -> (i32, i32) {
    %c0_i32 = arith.constant 0 : i32
    %c0_i32_0 = arith.constant 0 : i32
    %c0_i32_1 = arith.constant 0 : i32
    return %c0_i32, %c0_i32_0 : i32, i32
  }
  func.func @transform_6(%arg0: i32) -> (i32, i32) {
    %c0_i32 = arith.constant 0 : i32
    %c0_i32_0 = arith.constant 0 : i32
    %c0_i32_1 = arith.constant 0 : i32
    return %c0_i32, %c0_i32_0 : i32, i32
  }
  func.func @transform_7(%arg0: i32) -> (i32, i32) {
    %c0_i32 = arith.constant 0 : i32
    %c0_i32_0 = arith.constant 0 : i32
    %c0_i32_1 = arith.constant 0 : i32
    return %c0_i32, %c0_i32_0 : i32, i32
  }
  func.func @transform_8(%arg0: i32) -> (i32, i32, i32) {
    %c0_i32 = arith.constant 0 : i32
    %c0_i32_0 = arith.constant 0 : i32
    %c0_i32_1 = arith.constant 0 : i32
    %c0_i32_2 = arith.constant 0 : i32
    return %c0_i32, %c0_i32_0, %c0_i32_1 : i32, i32, i32
  }
  func.func @transform_9(%arg0: i32) -> (i32, i32, i32) {
    %c0_i32 = arith.constant 0 : i32
    %c0_i32_0 = arith.constant 0 : i32
    %c0_i32_1 = arith.constant 0 : i32
    %c0_i32_2 = arith.constant 0 : i32
    return %c0_i32, %c0_i32_0, %c0_i32_1 : i32, i32, i32
  }
  func.func @transform_10(%arg0: i32) -> (i32, i32) {
    %c0_i32 = arith.constant 0 : i32
    %c0_i32_0 = arith.constant 0 : i32
    %c0_i32_1 = arith.constant 0 : i32
    return %c0_i32, %c0_i32_0 : i32, i32
  }
  func.func @transform_11(%arg0: i32) -> (i32, i32, i32) {
    %c0_i32 = arith.constant 0 : i32
    %c0_i32_0 = arith.constant 0 : i32
    %c0_i32_1 = arith.constant 0 : i32
    %c0_i32_2 = arith.constant 0 : i32
    return %c0_i32, %c0_i32_0, %c0_i32_1 : i32, i32, i32
  }
  func.func @transform_12(%arg0: i32) -> (i32, i32, i32) {
    %c0_i32 = arith.constant 0 : i32
    %c0_i32_0 = arith.constant 0 : i32
    %c0_i32_1 = arith.constant 0 : i32
    %c0_i32_2 = arith.constant 0 : i32
    return %c0_i32, %c0_i32_0, %c0_i32_1 : i32, i32, i32
  }
  func.func @transform_13(%arg0: i32) -> (i32, i32, i32) {
    %c0_i32 = arith.constant 0 : i32
    %c0_i32_0 = arith.constant 0 : i32
    %c0_i32_1 = arith.constant 0 : i32
    %c0_i32_2 = arith.constant 0 : i32
    return %c0_i32, %c0_i32_0, %c0_i32_1 : i32, i32, i32
  }
  func.func @transform_14(%arg0: i32) -> (i32, i32, i32) {
    %c0_i32 = arith.constant 0 : i32
    %c0_i32_0 = arith.constant 0 : i32
    %c0_i32_1 = arith.constant 0 : i32
    %c0_i32_2 = arith.constant 0 : i32
    return %c0_i32, %c0_i32_0, %c0_i32_1 : i32, i32, i32
  }
  func.func @transform_15(%arg0: i32) -> (i32, i32) {
    %c0_i32 = arith.constant 0 : i32
    %c0_i32_0 = arith.constant 0 : i32
    %c0_i32_1 = arith.constant 0 : i32
    return %c0_i32, %c0_i32_0 : i32, i32
  }
  func.func @transform_16(%arg0: i32) -> (i32, i32) {
    %c0_i32 = arith.constant 0 : i32
    %c0_i32_0 = arith.constant 0 : i32
    %c0_i32_1 = arith.constant 0 : i32
    return %c0_i32, %c0_i32_0 : i32, i32
  }
  func.func @transform_17(%arg0: i32) -> (i32, i32) {
    %c0_i32 = arith.constant 0 : i32
    %c0_i32_0 = arith.constant 0 : i32
    %c0_i32_1 = arith.constant 0 : i32
    return %c0_i32, %c0_i32_0 : i32, i32
  }
  func.func @transform_18(%arg0: i32) -> (i32, i32) {
    %c0_i32 = arith.constant 0 : i32
    %c0_i32_0 = arith.constant 0 : i32
    %c0_i32_1 = arith.constant 0 : i32
    return %c0_i32, %c0_i32_0 : i32, i32
  }
  func.func @transform_19(%arg0: i32) -> (i32, i32) {
    %c0_i32 = arith.constant 0 : i32
    %c0_i32_0 = arith.constant 0 : i32
    %c0_i32_1 = arith.constant 0 : i32
    return %c0_i32, %c0_i32_0 : i32, i32
  }
  func.func @transform_20(%arg0: i32) -> (i32, i32, i32, i32) {
    %c0_i32 = arith.constant 0 : i32
    %c0_i32_0 = arith.constant 0 : i32
    %c0_i32_1 = arith.constant 0 : i32
    %c0_i32_2 = arith.constant 0 : i32
    return %arg0, %c0_i32, %c0_i32_0, %c0_i32_1 : i32, i32, i32, i32
  }
  func.func @transform_21(%arg0: i32) -> (i32, i32, i32) {
    %c0_i32 = arith.constant 0 : i32
    %c0_i32_0 = arith.constant 0 : i32
    %c0_i32_1 = arith.constant 0 : i32
    return %arg0, %c0_i32, %c0_i32_0 : i32, i32, i32
  }
  func.func @transform_22(%arg0: i32) -> (i32, i32, i32) {
    %c0_i32 = arith.constant 0 : i32
    %c0_i32_0 = arith.constant 0 : i32
    %c0_i32_1 = arith.constant 0 : i32
    return %arg0, %c0_i32, %c0_i32_0 : i32, i32, i32
  }
}

</mosaic_0001>

<llo_original>
// kernel: mcnet_forward.1
$region0: #{mcnet_forward.1}
  #allocation0 [shape = 'u32[]', space=smem, size = 0x4, offset = 0x4, fixed_abs, tag = 'smem constant byte address 0x4 - core index']
  #allocation1 [shape = 'u32[144,128]{1,0:T(1,128)}', space=vmem, size = 0x12000, scoped, tag = 'internal scratch']
  %s0 = inlined_call_operand.vmem [shape: bf16[2,256,27], index: 0, kind: input, shape index: {}]
  %s1 = inlined_call_operand.vmem [shape: bf16[27,8], index: 1, kind: input, shape index: {}]
  %s2 = inlined_call_operand.vmem [shape: f32[1,8], index: 2, kind: input, shape index: {}]
  %s3 = inlined_call_operand.vmem [shape: bf16[9,64,256], index: 3, kind: input, shape index: {}]
  %s4 = inlined_call_operand.vmem [shape: bf16[9,8,16], index: 4, kind: input, shape index: {}]
  %s5 = inlined_call_operand.vmem [shape: f32[1,16], index: 5, kind: input, shape index: {}]
  %s6 = inlined_call_operand.vmem [shape: bf16[16,16], index: 6, kind: input, shape index: {}]
  %s7 = inlined_call_operand.vmem [shape: f32[1,16], index: 7, kind: input, shape index: {}]
  %s8 = inlined_call_operand.vmem [shape: bf16[9,16,64], index: 8, kind: input, shape index: {}]
  %s9 = inlined_call_operand.vmem [shape: bf16[9,16,16], index: 9, kind: input, shape index: {}]
  %s10 = inlined_call_operand.vmem [shape: f32[1,16], index: 10, kind: input, shape index: {}]
  %s11 = inlined_call_operand.vmem [shape: bf16[3,16,13], index: 11, kind: input, shape index: {}]
  %s12 = inlined_call_operand.vmem [shape: f32[3,1,13], index: 12, kind: input, shape index: {}]
  %s13 = inlined_call_operand.vmem [shape: bf16[9,64,64], index: 13, kind: input, shape index: {}]
  %s14 = inlined_call_operand.vmem [shape: bf16[9,16,16], index: 14, kind: input, shape index: {}]
  %s15 = inlined_call_operand.vmem [shape: f32[1,16], index: 15, kind: input, shape index: {}]
  %s16 = inlined_call_operand.vmem [shape: bf16[16,2], index: 16, kind: input, shape index: {}]
  %s17 = inlined_call_operand.vmem [shape: f32[1,2], index: 17, kind: input, shape index: {}]
  %s18 = inlined_call_operand.vmem [shape: bf16[16,2], index: 18, kind: input, shape index: {}]
  %s19 = inlined_call_operand.vmem [shape: f32[1,2], index: 19, kind: input, shape index: {}]
  %s20 = inlined_call_operand.hbm [shape: f32[2,3,16,13], index: 20, kind: output, shape index: {0}]
  %s21 = inlined_call_operand.vmem [shape: f32[2,64,2], index: 21, kind: output, shape index: {1}]
  %s22 = inlined_call_operand.vmem [shape: f32[2,64,2], index: 22, kind: output, shape index: {2}]
  %23 = xla_tuple %s20, %s21, %s22
  %s24 = sld [smem:[#allocation0]]
  $region129: #{mcnet_forward.1} parent=0
    _
  %s26 = ssub.s32 1, %s24
  %s27 = scalar_select 0, %s26, %s24
  $region1: #{mcnet_forward.1} parent=0
    #allocation2 [shape = 'u8[49152]{0}', space=vmem, size = 0xc000, scoped, tag = 'output window, operand 0']
    #allocation3 [shape = 's32[2]{0}', space=sflag, size = 0x8, scoped, tag = 'scoped memory for mcnet_forward.1']
    %28 = vsyncpa [#allocation3], 0
    %s29 = scalar_lea.sflag [#allocation3], 1
    %30 = vsyncpa %s29, 0
    loop: start=0, step=1, limit=4
    $region2: #{mcnet_forward.1} parent=1 // loop_pre_header
      _
    $region3: #{mcnet_forward.1} parent=1 // loop_header
      %s32 = sphi 0, %s36
      %p33 = scmp.ge.s32.totalorder %s32, 4
      %s42 = sphi 0, %s44
      %s45 = sphi 0, %s42
      %s46 = sphi 0, %s45
      %s62 = sphi 0, %s46
      %s66 = sphi 0, %s66
      %s68 = sphi 0, %s66
      %s69 = sphi 0, %s68
      %s83 = sphi 0, %s69
      %s87 = sphi 0, %s87
      %s89 = sphi 0, %s87
      %s90 = sphi 0, %s89
      %s104 = sphi 0, %s90
      %s108 = sphi 0, %s108
      %s110 = sphi 0, %s108
      %s111 = sphi 0, %s110
      %s125 = sphi 0, %s111
      %s129 = sphi 0, %s129
      %s131 = sphi 0, %s129
      %s132 = sphi 0, %s131
      %s146 = sphi 0, %s132
      %s150 = sphi 0, %s150
      %s152 = sphi 0, %s150
      %s153 = sphi 0, %s152
      %s167 = sphi 0, %s153
      %s171 = sphi 0, %s171
      %s173 = sphi 0, %s171
      %s174 = sphi 0, %s173
      %s188 = sphi 0, %s174
      %s192 = sphi 0, %s192
      %s194 = sphi 0, %s192
      %s195 = sphi 0, %s194
      %s209 = sphi 0, %s195
      %s213 = sphi 0, %s213
      %s215 = sphi 0, %s213
      %s216 = sphi 0, %s215
      %s230 = sphi 0, %s216
      %s234 = sphi 0, %s234
      %s236 = sphi 0, %s234
      %s237 = sphi 0, %s236
      %s251 = sphi 0, %s237
      %s255 = sphi 0, %s255
      %s257 = sphi 0, %s255
      %s258 = sphi 0, %s257
      %s272 = sphi 0, %s258
      %s276 = sphi 0, %s276
      %s278 = sphi 0, %s276
      %s279 = sphi 0, %s278
      %s293 = sphi 0, %s279
      %s297 = sphi 0, %s297
      %s299 = sphi 0, %s297
      %s300 = sphi 0, %s299
      %s314 = sphi 0, %s300
      %s318 = sphi 0, %s318
      %s320 = sphi 0, %s318
      %s321 = sphi 0, %s320
      %s335 = sphi 0, %s321
      %s339 = sphi 0, %s339
      %s341 = sphi 0, %s339
      %s342 = sphi 0, %s341
      %s356 = sphi 0, %s342
      %s360 = sphi 0, %s360
      %s362 = sphi 0, %s360
      %s363 = sphi 0, %s362
      %s377 = sphi 0, %s363
      %s381 = sphi 0, %s381
      %s383 = sphi 0, %s381
      %s384 = sphi 0, %s383
      %s398 = sphi 0, %s384
      %s402 = sphi 0, %s402
      %s404 = sphi 0, %s402
      %s405 = sphi 0, %s404
      %s419 = sphi 0, %s405
      %s423 = sphi 0, %s423
      %s425 = sphi 0, %s423
      %s426 = sphi 0, %s425
      %s440 = sphi 0, %s426
      %s444 = sphi 0, %s444
      %s446 = sphi 0, %s444
      %s447 = sphi 0, %s446
      %s461 = sphi 0, %s447
      %s467 = sphi 0, %s469
      %s470 = sphi 0, %s467
      %s471 = sphi 0, %s470
      %s487 = sphi 0, %s471
      %s493 = sphi 0, %s495
      %s496 = sphi 0, %s493
      %s497 = sphi 0, %s496
      %s513 = sphi 0, %s497
      %s519 = sphi 0, %s521
      %s522 = sphi 0, %s519
      %s523 = sphi 0, %s522
      %s539 = sphi 0, %s523
    $region4: #{mcnet_forward.1} parent=1 // loop_header_branch
      %35 = sbr.rel (%p33) target = $region8
    $region5: #{mcnet_forward.1} parent=1 // loop_body
      %s37 = ssub.s32 %s32, 1
      %s38 = ssub.s32 %s32, 2
      %s39 = sadd.s32 %s32, 1
      %s40 = ssub.s32 %s32, %s39
      %p41 = scmp.eq.s32.totalorder %s40, 0
      %s43 = sadd.s32 %s42, 1
      %s44 = scalar_select %p41, %s42, %s43
      %p47 = pneg %p41
      %p48 = scmp.eq.s32.totalorder %s32, 1
      %p49 = por %p47, %p48
      %p50 = scmp.ne.s32.totalorder %s42, %s45
      %p51 = scmp.eq.s32.totalorder %s32, 0
      %p52 = por %p50, %p51
      %p53 = scmp.ne.s32.totalorder %s42, %s45
      %p54 = scmp.eq.s32.totalorder %s37, 1
      %p55 = por %p53, %p54
      %p56 = scmp.ne.s32.totalorder %s45, %s46
      %p57 = scmp.eq.s32.totalorder %s37, 0
      %p58 = por %p56, %p57
      %p59 = scmp.ne.s32.totalorder %s45, %s46
      %p60 = scmp.eq.s32.totalorder %s38, 1
      %p61 = por %p59, %p60
      %p63 = scmp.ne.s32.totalorder %s46, %s62
      %p64 = scmp.eq.s32.totalorder %s38, 0
      %p65 = por %p63, %p64
      %s67 = sadd.s32 %s66, 1
      %p70 = scmp.eq.s32.totalorder %s32, 1
      %p71 = scmp.ne.s32.totalorder %s66, %s68
      %p72 = scmp.eq.s32.totalorder %s32, 0
      %p73 = por %p71, %p72
      %p74 = scmp.ne.s32.totalorder %s66, %s68
      %p75 = scmp.eq.s32.totalorder %s37, 1
      %p76 = por %p74, %p75
      %p77 = scmp.ne.s32.totalorder %s68, %s69
      %p78 = scmp.eq.s32.totalorder %s37, 0
      %p79 = por %p77, %p78
      %p80 = scmp.ne.s32.totalorder %s68, %s69
      %p81 = scmp.eq.s32.totalorder %s38, 1
      %p82 = por %p80, %p81
      %p84 = scmp.ne.s32.totalorder %s69, %s83
      %p85 = scmp.eq.s32.totalorder %s38, 0
      %p86 = por %p84, %p85
      %s88 = sadd.s32 %s87, 1
      %p91 = scmp.eq.s32.totalorder %s32, 1
      %p92 = scmp.ne.s32.totalorder %s87, %s89
      %p93 = scmp.eq.s32.totalorder %s32, 0
      %p94 = por %p92, %p93
      %p95 = scmp.ne.s32.totalorder %s87, %s89
      %p96 = scmp.eq.s32.totalorder %s37, 1
      %p97 = por %p95, %p96
      %p98 = scmp.ne.s32.totalorder %s89, %s90
      %p99 = scmp.eq.s32.totalorder %s37, 0
      %p100 = por %p98, %p99
      %p101 = scmp.ne.s32.totalorder %s89, %s90
      %p102 = scmp.eq.s32.totalorder %s38, 1
      %p103 = por %p101, %p102
      %p105 = scmp.ne.s32.totalorder %s90, %s104
      %p106 = scmp.eq.s32.totalorder %s38, 0
      %p107 = por %p105, %p106
      %s109 = sadd.s32 %s108, 1
      %p112 = scmp.eq.s32.totalorder %s32, 1
      %p113 = scmp.ne.s32.totalorder %s108, %s110
      %p114 = scmp.eq.s32.totalorder %s32, 0
      %p115 = por %p113, %p114
      %p116 = scmp.ne.s32.totalorder %s108, %s110
      %p117 = scmp.eq.s32.totalorder %s37, 1
      %p118 = por %p116, %p117
      %p119 = scmp.ne.s32.totalorder %s110, %s111
      %p120 = scmp.eq.s32.totalorder %s37, 0
      %p121 = por %p119, %p120
      %p122 = scmp.ne.s32.totalorder %s110, %s111
      %p123 = scmp.eq.s32.totalorder %s38, 1
      %p124 = por %p122, %p123
      %p126 = scmp.ne.s32.totalorder %s111, %s125
      %p127 = scmp.eq.s32.totalorder %s38, 0
      %p128 = por %p126, %p127
      %s130 = sadd.s32 %s129, 1
      %p133 = scmp.eq.s32.totalorder %s32, 1
      %p134 = scmp.ne.s32.totalorder %s129, %s131
      %p135 = scmp.eq.s32.totalorder %s32, 0
      %p136 = por %p134, %p135
      %p137 = scmp.ne.s32.totalorder %s129, %s131
      %p138 = scmp.eq.s32.totalorder %s37, 1
      %p139 = por %p137, %p138
      %p140 = scmp.ne.s32.totalorder %s131, %s132
      %p141 = scmp.eq.s32.totalorder %s37, 0
      %p142 = por %p140, %p141
      %p143 = scmp.ne.s32.totalorder %s131, %s132
      %p144 = scmp.eq.s32.totalorder %s38, 1
      %p145 = por %p143, %p144
      %p147 = scmp.ne.s32.totalorder %s132, %s146
      %p148 = scmp.eq.s32.totalorder %s38, 0
      %p149 = por %p147, %p148
      %s151 = sadd.s32 %s150, 1
      %p154 = scmp.eq.s32.totalorder %s32, 1
      %p155 = scmp.ne.s32.totalorder %s150, %s152
      %p156 = scmp.eq.s32.totalorder %s32, 0
      %p157 = por %p155, %p156
      %p158 = scmp.ne.s32.totalorder %s150, %s152
      %p159 = scmp.eq.s32.totalorder %s37, 1
      %p160 = por %p158, %p159
      %p161 = scmp.ne.s32.totalorder %s152, %s153
      %p162 = scmp.eq.s32.totalorder %s37, 0
      %p163 = por %p161, %p162
      %p164 = scmp.ne.s32.totalorder %s152, %s153
      %p165 = scmp.eq.s32.totalorder %s38, 1
      %p166 = por %p164, %p165
      %p168 = scmp.ne.s32.totalorder %s153, %s167
      %p169 = scmp.eq.s32.totalorder %s38, 0
      %p170 = por %p168, %p169
      %s172 = sadd.s32 %s171, 1
      %p175 = scmp.eq.s32.totalorder %s32, 1
      %p176 = scmp.ne.s32.totalorder %s171, %s173
      %p177 = scmp.eq.s32.totalorder %s32, 0
      %p178 = por %p176, %p177
      %p179 = scmp.ne.s32.totalorder %s171, %s173
      %p180 = scmp.eq.s32.totalorder %s37, 1
      %p181 = por %p179, %p180
      %p182 = scmp.ne.s32.totalorder %s173, %s174
      %p183 = scmp.eq.s32.totalorder %s37, 0
      %p184 = por %p182, %p183
      %p185 = scmp.ne.s32.totalorder %s173, %s174
      %p186 = scmp.eq.s32.totalorder %s38, 1
      %p187 = por %p185, %p186
      %p189 = scmp.ne.s32.totalorder %s174, %s188
      %p190 = scmp.eq.s32.totalorder %s38, 0
      %p191 = por %p189, %p190
      %s193 = sadd.s32 %s192, 1
      %p196 = scmp.eq.s32.totalorder %s32, 1
      %p197 = scmp.ne.s32.totalorder %s192, %s194
      %p198 = scmp.eq.s32.totalorder %s32, 0
      %p199 = por %p197, %p198
      %p200 = scmp.ne.s32.totalorder %s192, %s194
      %p201 = scmp.eq.s32.totalorder %s37, 1
      %p202 = por %p200, %p201
      %p203 = scmp.ne.s32.totalorder %s194, %s195
      %p204 = scmp.eq.s32.totalorder %s37, 0
      %p205 = por %p203, %p204
      %p206 = scmp.ne.s32.totalorder %s194, %s195
      %p207 = scmp.eq.s32.totalorder %s38, 1
      %p208 = por %p206, %p207
      %p210 = scmp.ne.s32.totalorder %s195, %s209
      %p211 = scmp.eq.s32.totalorder %s38, 0
      %p212 = por %p210, %p211
      %s214 = sadd.s32 %s213, 1
      %p217 = scmp.eq.s32.totalorder %s32, 1
      %p218 = scmp.ne.s32.totalorder %s213, %s215
      %p219 = scmp.eq.s32.totalorder %s32, 0
      %p220 = por %p218, %p219
      %p221 = scmp.ne.s32.totalorder %s213, %s215
      %p222 = scmp.eq.s32.totalorder %s37, 1
      %p223 = por %p221, %p222
      %p224 = scmp.ne.s32.totalorder %s215, %s216
      %p225 = scmp.eq.s32.totalorder %s37, 0
      %p226 = por %p224, %p225
      %p227 = scmp.ne.s32.totalorder %s215, %s216
      %p228 = scmp.eq.s32.totalorder %s38, 1
      %p229 = por %p227, %p228
      %p231 = scmp.ne.s32.totalorder %s216, %s230
      %p232 = scmp.eq.s32.totalorder %s38, 0
      %p233 = por %p231, %p232
      %s235 = sadd.s32 %s234, 1
      %p238 = scmp.eq.s32.totalorder %s32, 1
      %p239 = scmp.ne.s32.totalorder %s234, %s236
      %p240 = scmp.eq.s32.totalorder %s32, 0
      %p241 = por %p239, %p240
      %p242 = scmp.ne.s32.totalorder %s234, %s236
      %p243 = scmp.eq.s32.totalorder %s37, 1
      %p244 = por %p242, %p243
      %p245 = scmp.ne.s32.totalorder %s236, %s237
      %p246 = scmp.eq.s32.totalorder %s37, 0
      %p247 = por %p245, %p246
      %p248 = scmp.ne.s32.totalorder %s236, %s237
      %p249 = scmp.eq.s32.totalorder %s38, 1
      %p250 = por %p248, %p249
      %p252 = scmp.ne.s32.totalorder %s237, %s251
      %p253 = scmp.eq.s32.totalorder %s38, 0
      %p254 = por %p252, %p253
      %s256 = sadd.s32 %s255, 1
      %p259 = scmp.eq.s32.totalorder %s32, 1
      %p260 = scmp.ne.s32.totalorder %s255, %s257
      %p261 = scmp.eq.s32.totalorder %s32, 0
      %p262 = por %p260, %p261
      %p263 = scmp.ne.s32.totalorder %s255, %s257
      %p264 = scmp.eq.s32.totalorder %s37, 1
      %p265 = por %p263, %p264
      %p266 = scmp.ne.s32.totalorder %s257, %s258
      %p267 = scmp.eq.s32.totalorder %s37, 0
      %p268 = por %p266, %p267
      %p269 = scmp.ne.s32.totalorder %s257, %s258
      %p270 = scmp.eq.s32.totalorder %s38, 1
      %p271 = por %p269, %p270
      %p273 = scmp.ne.s32.totalorder %s258, %s272
      %p274 = scmp.eq.s32.totalorder %s38, 0
      %p275 = por %p273, %p274
      %s277 = sadd.s32 %s276, 1
      %p280 = scmp.eq.s32.totalorder %s32, 1
      %p281 = scmp.ne.s32.totalorder %s276, %s278
      %p282 = scmp.eq.s32.totalorder %s32, 0
      %p283 = por %p281, %p282
      %p284 = scmp.ne.s32.totalorder %s276, %s278
      %p285 = scmp.eq.s32.totalorder %s37, 1
      %p286 = por %p284, %p285
      %p287 = scmp.ne.s32.totalorder %s278, %s279
      %p288 = scmp.eq.s32.totalorder %s37, 0
      %p289 = por %p287, %p288
      %p290 = scmp.ne.s32.totalorder %s278, %s279
      %p291 = scmp.eq.s32.totalorder %s38, 1
      %p292 = por %p290, %p291
      %p294 = scmp.ne.s32.totalorder %s279, %s293
      %p295 = scmp.eq.s32.totalorder %s38, 0
      %p296 = por %p294, %p295
      %s298 = sadd.s32 %s297, 1
      %p301 = scmp.eq.s32.totalorder %s32, 1
      %p302 = scmp.ne.s32.totalorder %s297, %s299
      %p303 = scmp.eq.s32.totalorder %s32, 0
      %p304 = por %p302, %p303
      %p305 = scmp.ne.s32.totalorder %s297, %s299
      %p306 = scmp.eq.s32.totalorder %s37, 1
      %p307 = por %p305, %p306
      %p308 = scmp.ne.s32.totalorder %s299, %s300
      %p309 = scmp.eq.s32.totalorder %s37, 0
      %p310 = por %p308, %p309
      %p311 = scmp.ne.s32.totalorder %s299, %s300
      %p312 = scmp.eq.s32.totalorder %s38, 1
      %p313 = por %p311, %p312
      %p315 = scmp.ne.s32.totalorder %s300, %s314
      %p316 = scmp.eq.s32.totalorder %s38, 0
      %p317 = por %p315, %p316
      %s319 = sadd.s32 %s318, 1
      %p322 = scmp.eq.s32.totalorder %s32, 1
      %p323 = scmp.ne.s32.totalorder %s318, %s320
      %p324 = scmp.eq.s32.totalorder %s32, 0
      %p325 = por %p323, %p324
      %p326 = scmp.ne.s32.totalorder %s318, %s320
      %p327 = scmp.eq.s32.totalorder %s37, 1
      %p328 = por %p326, %p327
      %p329 = scmp.ne.s32.totalorder %s320, %s321
      %p330 = scmp.eq.s32.totalorder %s37, 0
      %p331 = por %p329, %p330
      %p332 = scmp.ne.s32.totalorder %s320, %s321
      %p333 = scmp.eq.s32.totalorder %s38, 1
      %p334 = por %p332, %p333
      %p336 = scmp.ne.s32.totalorder %s321, %s335
      %p337 = scmp.eq.s32.totalorder %s38, 0
      %p338 = por %p336, %p337
      %s340 = sadd.s32 %s339, 1
      %p343 = scmp.eq.s32.totalorder %s32, 1
      %p344 = scmp.ne.s32.totalorder %s339, %s341
      %p345 = scmp.eq.s32.totalorder %s32, 0
      %p346 = por %p344, %p345
      %p347 = scmp.ne.s32.totalorder %s339, %s341
      %p348 = scmp.eq.s32.totalorder %s37, 1
      %p349 = por %p347, %p348
      %p350 = scmp.ne.s32.totalorder %s341, %s342
      %p351 = scmp.eq.s32.totalorder %s37, 0
      %p352 = por %p350, %p351
      %p353 = scmp.ne.s32.totalorder %s341, %s342
      %p354 = scmp.eq.s32.totalorder %s38, 1
      %p355 = por %p353, %p354
      %p357 = scmp.ne.s32.totalorder %s342, %s356
      %p358 = scmp.eq.s32.totalorder %s38, 0
      %p359 = por %p357, %p358
      %s361 = sadd.s32 %s360, 1
      %p364 = scmp.eq.s32.totalorder %s32, 1
      %p365 = scmp.ne.s32.totalorder %s360, %s362
      %p366 = scmp.eq.s32.totalorder %s32, 0
      %p367 = por %p365, %p366
      %p368 = scmp.ne.s32.totalorder %s360, %s362
      %p369 = scmp.eq.s32.totalorder %s37, 1
      %p370 = por %p368, %p369
      %p371 = scmp.ne.s32.totalorder %s362, %s363
      %p372 = scmp.eq.s32.totalorder %s37, 0
      %p373 = por %p371, %p372
      %p374 = scmp.ne.s32.totalorder %s362, %s363
      %p375 = scmp.eq.s32.totalorder %s38, 1
      %p376 = por %p374, %p375
      %p378 = scmp.ne.s32.totalorder %s363, %s377
      %p379 = scmp.eq.s32.totalorder %s38, 0
      %p380 = por %p378, %p379
      %s382 = sadd.s32 %s381, 1
      %p385 = scmp.eq.s32.totalorder %s32, 1
      %p386 = scmp.ne.s32.totalorder %s381, %s383
      %p387 = scmp.eq.s32.totalorder %s32, 0
      %p388 = por %p386, %p387
      %p389 = scmp.ne.s32.totalorder %s381, %s383
      %p390 = scmp.eq.s32.totalorder %s37, 1
      %p391 = por %p389, %p390
      %p392 = scmp.ne.s32.totalorder %s383, %s384
      %p393 = scmp.eq.s32.totalorder %s37, 0
      %p394 = por %p392, %p393
      %p395 = scmp.ne.s32.totalorder %s383, %s384
      %p396 = scmp.eq.s32.totalorder %s38, 1
      %p397 = por %p395, %p396
      %p399 = scmp.ne.s32.totalorder %s384, %s398
      %p400 = scmp.eq.s32.totalorder %s38, 0
      %p401 = por %p399, %p400
      %s403 = sadd.s32 %s402, 1
      %p406 = scmp.eq.s32.totalorder %s32, 1
      %p407 = scmp.ne.s32.totalorder %s402, %s404
      %p408 = scmp.eq.s32.totalorder %s32, 0
      %p409 = por %p407, %p408
      %p410 = scmp.ne.s32.totalorder %s402, %s404
      %p411 = scmp.eq.s32.totalorder %s37, 1
      %p412 = por %p410, %p411
      %p413 = scmp.ne.s32.totalorder %s404, %s405
      %p414 = scmp.eq.s32.totalorder %s37, 0
      %p415 = por %p413, %p414
      %p416 = scmp.ne.s32.totalorder %s404, %s405
      %p417 = scmp.eq.s32.totalorder %s38, 1
      %p418 = por %p416, %p417
      %p420 = scmp.ne.s32.totalorder %s405, %s419
      %p421 = scmp.eq.s32.totalorder %s38, 0
      %p422 = por %p420, %p421
      %s424 = sadd.s32 %s423, 1
      %p427 = scmp.eq.s32.totalorder %s32, 1
      %p428 = scmp.ne.s32.totalorder %s423, %s425
      %p429 = scmp.eq.s32.totalorder %s32, 0
      %p430 = por %p428, %p429
      %p431 = scmp.ne.s32.totalorder %s423, %s425
      %p432 = scmp.eq.s32.totalorder %s37, 1
      %p433 = por %p431, %p432
      %p434 = scmp.ne.s32.totalorder %s425, %s426
      %p435 = scmp.eq.s32.totalorder %s37, 0
      %p436 = por %p434, %p435
      %p437 = scmp.ne.s32.totalorder %s425, %s426
      %p438 = scmp.eq.s32.totalorder %s38, 1
      %p439 = por %p437, %p438
      %p441 = scmp.ne.s32.totalorder %s426, %s440
      %p442 = scmp.eq.s32.totalorder %s38, 0
      %p443 = por %p441, %p442
      %s445 = sadd.s32 %s444, 1
      %p448 = scmp.eq.s32.totalorder %s32, 1
      %p449 = scmp.ne.s32.totalorder %s444, %s446
      %p450 = scmp.eq.s32.totalorder %s32, 0
      %p451 = por %p449, %p450
      %p452 = scmp.ne.s32.totalorder %s444, %s446
      %p453 = scmp.eq.s32.totalorder %s37, 1
      %p454 = por %p452, %p453
      %p455 = scmp.ne.s32.totalorder %s446, %s447
      %p456 = scmp.eq.s32.totalorder %s37, 0
      %p457 = por %p455, %p456
      %p458 = scmp.ne.s32.totalorder %s446, %s447
      %p459 = scmp.eq.s32.totalorder %s38, 1
      %p460 = por %p458, %p459
      %p462 = scmp.ne.s32.totalorder %s447, %s461
      %p463 = scmp.eq.s32.totalorder %s38, 0
      %p464 = por %p462, %p463
      %s465 = ssub.s32 %s32, %s39
      %p466 = scmp.eq.s32.totalorder %s465, 0
      %s468 = sadd.s32 %s467, 1
      %s469 = scalar_select %p466, %s467, %s468
      %p472 = pneg %p466
      %p473 = scmp.eq.s32.totalorder %s32, 1
      %p474 = por %p472, %p473
      %p475 = scmp.ne.s32.totalorder %s467, %s470
      %p476 = scmp.eq.s32.totalorder %s32, 0
      %p477 = por %p475, %p476
      %p478 = scmp.ne.s32.totalorder %s467, %s470
      %p479 = scmp.eq.s32.totalorder %s37, 1
      %p480 = por %p478, %p479
      %p481 = scmp.ne.s32.totalorder %s470, %s471
      %p482 = scmp.eq.s32.totalorder %s37, 0
      %p483 = por %p481, %p482
      %p484 = scmp.ne.s32.totalorder %s470, %s471
      %p485 = scmp.eq.s32.totalorder %s38, 1
      %p486 = por %p484, %p485
      %p488 = scmp.ne.s32.totalorder %s471, %s487
      %p489 = scmp.eq.s32.totalorder %s38, 0
      %p490 = por %p488, %p489
      %s491 = ssub.s32 %s32, %s39
      %p492 = scmp.eq.s32.totalorder %s491, 0
      %s494 = sadd.s32 %s493, 1
      %s495 = scalar_select %p492, %s493, %s494
      %p498 = pneg %p492
      %p499 = scmp.eq.s32.totalorder %s32, 1
      %p500 = por %p498, %p499
      %p501 = scmp.ne.s32.totalorder %s493, %s496
      %p502 = scmp.eq.s32.totalorder %s32, 0
      %p503 = por %p501, %p502
      %p504 = scmp.ne.s32.totalorder %s493, %s496
      %p505 = scmp.eq.s32.totalorder %s37, 1
      %p506 = por %p504, %p505
      %p507 = scmp.ne.s32.totalorder %s496, %s497
      %p508 = scmp.eq.s32.totalorder %s37, 0
      %p509 = por %p507, %p508
      %p510 = scmp.ne.s32.totalorder %s496, %s497
      %p511 = scmp.eq.s32.totalorder %s38, 1
      %p512 = por %p510, %p511
      %p514 = scmp.ne.s32.totalorder %s497, %s513
      %p515 = scmp.eq.s32.totalorder %s38, 0
      %p516 = por %p514, %p515
      %s517 = ssub.s32 %s32, %s39
      %p518 = scmp.eq.s32.totalorder %s517, 0
      %s520 = sadd.s32 %s519, 1
      %s521 = scalar_select %p518, %s519, %s520
      %p524 = pneg %p518
      %p525 = scmp.eq.s32.totalorder %s32, 1
      %p526 = por %p524, %p525
      %p527 = scmp.ne.s32.totalorder %s519, %s522
      %p528 = scmp.eq.s32.totalorder %s32, 0
      %p529 = por %p527, %p528
      %p530 = scmp.ne.s32.totalorder %s519, %s522
      %p531 = scmp.eq.s32.totalorder %s37, 1
      %p532 = por %p530, %p531
      %p533 = scmp.ne.s32.totalorder %s522, %s523
      %p534 = scmp.eq.s32.totalorder %s37, 0
      %p535 = por %p533, %p534
      %p536 = scmp.ne.s32.totalorder %s522, %s523
      %p537 = scmp.eq.s32.totalorder %s38, 1
      %p538 = por %p536, %p537
      %p540 = scmp.ne.s32.totalorder %s523, %s539
      %p541 = scmp.eq.s32.totalorder %s38, 0
      %p542 = por %p540, %p541
      %p543 = scmp.le.s32.totalorder 1, %s32
      %p544 = scmp.lt.s32.totalorder %s32, 3
      %p545 = pnand %p543, %p544
      %p546 = pneg %p545
      // Predicated region
      $region9: #{mcnet_forward.1} parent=5 // pred_check
        _
      $region10: #{mcnet_forward.1} parent=5 // pred_check_branch
        %548 = sbr.rel (%p545) target = $region12
      $region11: #{mcnet_forward.1} parent=5 // pred_region
        %s549 = ssub.s32 %s32, 1
        // Predicated region
        $region13: #{mcnet_forward.1} parent=11 // pred_check
          %p550 = pneg %p79
        $region14: #{mcnet_forward.1} parent=11 // pred_check_branch
          %552 = sbr.rel (%p550) target = $region16
        $region15: #{mcnet_forward.1} parent=11 // pred_region
          _
        $region16: #{mcnet_forward.1} parent=11 // pred_fallthru
          _
        // Predicated region
        $region17: #{mcnet_forward.1} parent=11 // pred_check
          %p553 = pneg %p100
        $region18: #{mcnet_forward.1} parent=11 // pred_check_branch
          %555 = sbr.rel (%p553) target = $region20
        $region19: #{mcnet_forward.1} parent=11 // pred_region
          _
        $region20: #{mcnet_forward.1} parent=11 // pred_fallthru
          _
        // Predicated region
        $region21: #{mcnet_forward.1} parent=11 // pred_check
          %p556 = pneg %p121
        $region22: #{mcnet_forward.1} parent=11 // pred_check_branch
          %558 = sbr.rel (%p556) target = $region24
        $region23: #{mcnet_forward.1} parent=11 // pred_region
          _
        $region24: #{mcnet_forward.1} parent=11 // pred_fallthru
          _
        // Predicated region
        $region25: #{mcnet_forward.1} parent=11 // pred_check
          %p559 = pneg %p142
        $region26: #{mcnet_forward.1} parent=11 // pred_check_branch
          %561 = sbr.rel (%p559) target = $region28
        $region27: #{mcnet_forward.1} parent=11 // pred_region
          _
        $region28: #{mcnet_forward.1} parent=11 // pred_fallthru
          _
        // Predicated region
        $region29: #{mcnet_forward.1} parent=11 // pred_check
          %p562 = pneg %p163
        $region30: #{mcnet_forward.1} parent=11 // pred_check_branch
          %564 = sbr.rel (%p562) target = $region32
        $region31: #{mcnet_forward.1} parent=11 // pred_region
          _
        $region32: #{mcnet_forward.1} parent=11 // pred_fallthru
          _
        // Predicated region
        $region33: #{mcnet_forward.1} parent=11 // pred_check
          %p565 = pneg %p184
        $region34: #{mcnet_forward.1} parent=11 // pred_check_branch
          %567 = sbr.rel (%p565) target = $region36
        $region35: #{mcnet_forward.1} parent=11 // pred_region
          _
        $region36: #{mcnet_forward.1} parent=11 // pred_fallthru
          _
        // Predicated region
        $region37: #{mcnet_forward.1} parent=11 // pred_check
          %p568 = pneg %p205
        $region38: #{mcnet_forward.1} parent=11 // pred_check_branch
          %570 = sbr.rel (%p568) target = $region40
        $region39: #{mcnet_forward.1} parent=11 // pred_region
          _
        $region40: #{mcnet_forward.1} parent=11 // pred_fallthru
          _
        // Predicated region
        $region41: #{mcnet_forward.1} parent=11 // pred_check
          %p571 = pneg %p226
        $region42: #{mcnet_forward.1} parent=11 // pred_check_branch
          %573 = sbr.rel (%p571) target = $region44
        $region43: #{mcnet_forward.1} parent=11 // pred_region
          _
        $region44: #{mcnet_forward.1} parent=11 // pred_fallthru
          _
        // Predicated region
        $region45: #{mcnet_forward.1} parent=11 // pred_check
          %p574 = pneg %p247
        $region46: #{mcnet_forward.1} parent=11 // pred_check_branch
          %576 = sbr.rel (%p574) target = $region48
        $region47: #{mcnet_forward.1} parent=11 // pred_region
          _
        $region48: #{mcnet_forward.1} parent=11 // pred_fallthru
          _
        // Predicated region
        $region49: #{mcnet_forward.1} parent=11 // pred_check
          %p577 = pneg %p268
        $region50: #{mcnet_forward.1} parent=11 // pred_check_branch
          %579 = sbr.rel (%p577) target = $region52
        $region51: #{mcnet_forward.1} parent=11 // pred_region
          _
        $region52: #{mcnet_forward.1} parent=11 // pred_fallthru
          _
        // Predicated region
        $region53: #{mcnet_forward.1} parent=11 // pred_check
          %p580 = pneg %p289
        $region54: #{mcnet_forward.1} parent=11 // pred_check_branch
          %582 = sbr.rel (%p580) target = $region56
        $region55: #{mcnet_forward.1} parent=11 // pred_region
          _
        $region56: #{mcnet_forward.1} parent=11 // pred_fallthru
          _
        // Predicated region
        $region57: #{mcnet_forward.1} parent=11 // pred_check
          %p583 = pneg %p310
        $region58: #{mcnet_forward.1} parent=11 // pred_check_branch
          %585 = sbr.rel (%p583) target = $region60
        $region59: #{mcnet_forward.1} parent=11 // pred_region
          _
        $region60: #{mcnet_forward.1} parent=11 // pred_fallthru
          _
        // Predicated region
        $region61: #{mcnet_forward.1} parent=11 // pred_check
          %p586 = pneg %p331
        $region62: #{mcnet_forward.1} parent=11 // pred_check_branch
          %588 = sbr.rel (%p586) target = $region64
        $region63: #{mcnet_forward.1} parent=11 // pred_region
          _
        $region64: #{mcnet_forward.1} parent=11 // pred_fallthru
          _
        // Predicated region
        $region65: #{mcnet_forward.1} parent=11 // pred_check
          %p589 = pneg %p352
        $region66: #{mcnet_forward.1} parent=11 // pred_check_branch
          %591 = sbr.rel (%p589) target = $region68
        $region67: #{mcnet_forward.1} parent=11 // pred_region
          _
        $region68: #{mcnet_forward.1} parent=11 // pred_fallthru
          _
        // Predicated region
        $region69: #{mcnet_forward.1} parent=11 // pred_check
          %p592 = pneg %p373
        $region70: #{mcnet_forward.1} parent=11 // pred_check_branch
          %594 = sbr.rel (%p592) target = $region72
        $region71: #{mcnet_forward.1} parent=11 // pred_region
          _
        $region72: #{mcnet_forward.1} parent=11 // pred_fallthru
          _
        // Predicated region
        $region73: #{mcnet_forward.1} parent=11 // pred_check
          %p595 = pneg %p394
        $region74: #{mcnet_forward.1} parent=11 // pred_check_branch
          %597 = sbr.rel (%p595) target = $region76
        $region75: #{mcnet_forward.1} parent=11 // pred_region
          _
        $region76: #{mcnet_forward.1} parent=11 // pred_fallthru
          _
        // Predicated region
        $region77: #{mcnet_forward.1} parent=11 // pred_check
          %p598 = pneg %p415
        $region78: #{mcnet_forward.1} parent=11 // pred_check_branch
          %600 = sbr.rel (%p598) target = $region80
        $region79: #{mcnet_forward.1} parent=11 // pred_region
          _
        $region80: #{mcnet_forward.1} parent=11 // pred_fallthru
          _
        // Predicated region
        $region81: #{mcnet_forward.1} parent=11 // pred_check
          %p601 = pneg %p436
        $region82: #{mcnet_forward.1} parent=11 // pred_check_branch
          %603 = sbr.rel (%p601) target = $region84
        $region83: #{mcnet_forward.1} parent=11 // pred_region
          _
        $region84: #{mcnet_forward.1} parent=11 // pred_fallthru
          _
        // Predicated region
        $region85: #{mcnet_forward.1} parent=11 // pred_check
          %p604 = pneg %p457
        $region86: #{mcnet_forward.1} parent=11 // pred_check_branch
          %606 = sbr.rel (%p604) target = $region88
        $region87: #{mcnet_forward.1} parent=11 // pred_region
          _
        $region88: #{mcnet_forward.1} parent=11 // pred_fallthru
          _
      $region12: #{mcnet_forward.1} parent=5 // pred_fallthru
        _
      %p607 = scmp.lt.s32.totalorder %s32, 2
      // Predicated region
      $region89: #{mcnet_forward.1} parent=5 // pred_check
        %p608 = pneg %p607
      $region90: #{mcnet_forward.1} parent=5 // pred_check_branch
        %610 = sbr.rel (%p608) target = $region92
      $region91: #{mcnet_forward.1} parent=5 // pred_region
        // Predicated region
        $region93: #{mcnet_forward.1} parent=91 // pred_check
          %p611 = pneg %p52
        $region94: #{mcnet_forward.1} parent=91 // pred_check_branch
          %613 = sbr.rel (%p611) target = $region96
        $region95: #{mcnet_forward.1} parent=91 // pred_region
          %p614 = scmp.lt.s32.totalorder %s32, 1
          %s615 = scalar_select %p614, %s32, 1
          %s616 = smul.addr %s615, 32
          %s617 = smul.addr %s616, 4
          %s618 = scalar_lea.vmem %s0, %s617
        $region96: #{mcnet_forward.1} parent=91 // pred_fallthru
          _
      $region92: #{mcnet_forward.1} parent=5 // pred_fallthru
        _
      %p619 = scmp.le.s32.totalorder 1, %s32
      %p620 = scmp.lt.s32.totalorder %s32, 3
      %p621 = pnand %p619, %p620
      %p622 = pneg %p621
      // Predicated region
      $region97: #{mcnet_forward.1} parent=5 // pred_check
        _
      $region98: #{mcnet_forward.1} parent=5 // pred_check_branch
        %624 = sbr.rel (%p621) target = $region100
      $region99: #{mcnet_forward.1} parent=5 // pred_region
        %s625 = ssub.s32 %s32, 1
        %p626 = scmp.lt.s32.totalorder %s37, 1
        %s627 = scalar_select %p626, %s37, 1
        %s628 = smul.addr %s627, 32
        %s629 = smul.addr %s628, 4
        %s630 = scalar_lea.vmem %s0, %s629
        %p631 = pneg %p58
        %p632 = pneg %p55
        %p633 = pneg %p79
        %p634 = pneg %p76
        %p635 = pneg %p100
        %p636 = pneg %p97
        %p637 = pneg %p121
        %p638 = pneg %p118
        %p639 = pneg %p142
        %p640 = pneg %p139
        %p641 = pneg %p163
        %p642 = pneg %p160
        %p643 = pneg %p184
        %p644 = pneg %p181
        %p645 = pneg %p205
        %p646 = pneg %p202
        %p647 = pneg %p226
        %p648 = pneg %p223
        %p649 = pneg %p247
        %p650 = pneg %p244
        %p651 = pneg %p268
        %p652 = pneg %p265
        %p653 = pneg %p289
        %p654 = pneg %p286
        %p655 = pneg %p310
        %p656 = pneg %p307
        %p657 = pneg %p331
        %p658 = pneg %p328
        %p659 = pneg %p352
        %p660 = pneg %p349
        %p661 = pneg %p373
        %p662 = pneg %p370
        %p663 = pneg %p394
        %p664 = pneg %p391
        %p665 = pneg %p415
        %p666 = pneg %p412
        %p667 = pneg %p436
        %p668 = pneg %p433
        %p669 = pneg %p457
        %p670 = pneg %p454
        %p671 = pneg %p483
        %p672 = pneg %p480
        %s673 = sand.u32 %s470, 1
        %s674 = scalar_lea.sflag [#allocation3], %s673
        %s675 = sand.u32 %s470, 1
        %s676 = smul.addr %s675, 48
        %s677 = scalar_lea.vmem [#allocation2], %s676
        %p678 = pneg %p509
        %p679 = pneg %p506
        %p680 = scmp.lt.s32.totalorder %s37, 1
        %s681 = scalar_select %p680, %s37, 1
        %s682 = smul.addr %s681, 8
        %s683 = smul.addr %s682, 8
        %s684 = scalar_lea.vmem %s21, %s683
        %p685 = pneg %p535
        %p686 = pneg %p532
        %p687 = scmp.lt.s32.totalorder %s37, 1
        %s688 = scalar_select %p687, %s37, 1
        %s689 = smul.addr %s688, 8
        %s690 = smul.addr %s689, 8
        %s691 = scalar_lea.vmem %s22, %s690
        %p692 = scmp.lt.s32.totalorder %s37, 1
        %s693 = scalar_select %p692, %s37, 1
        %s694 = smul.addr %s693, 32
        %s695 = smul.addr %s694, 4
        %s696 = scalar_lea.vmem %s0, %s695
        %p697 = scmp.lt.s32.totalorder %s37, 1
        %s698 = scalar_select %p697, %s37, 1
        %s699 = smul.addr %s698, 8
        %s700 = smul.addr %s699, 8
        %s701 = scalar_lea.vmem %s21, %s700
        %p702 = scmp.lt.s32.totalorder %s37, 1
        %s703 = scalar_select %p702, %s37, 1
        %s704 = smul.addr %s703, 8
        %s705 = smul.addr %s704, 8
        %s706 = scalar_lea.vmem %s22, %s705
        %v708 = vld [vmem:[%s696] sm:$0xf]
        %v709 = vld [vmem:[%s696 + $0x4] sm:$0xf]
        %v710 = vld [vmem:[%s696 + $0x8] sm:$0xf]
        %v711 = vld [vmem:[%s696 + $0xc] sm:$0xf]
        %v712 = vld [vmem:[%s696 + $0x10] sm:$0xf]
        %v713 = vld [vmem:[%s696 + $0x14] sm:$0xf]
        %v714 = vld [vmem:[%s696 + $0x18] sm:$0xf]
        %v715 = vld [vmem:[%s696 + $0x1c] sm:$0xf]
        %v716 = vld [vmem:[%s696 + $0x20] sm:$0xf]
        %v717 = vld [vmem:[%s696 + $0x24] sm:$0xf]
        %v718 = vld [vmem:[%s696 + $0x28] sm:$0xf]
        %v719 = vld [vmem:[%s696 + $0x2c] sm:$0xf]
        %v720 = vld [vmem:[%s696 + $0x30] sm:$0xf]
        %v721 = vld [vmem:[%s696 + $0x34] sm:$0xf]
        %v722 = vld [vmem:[%s696 + $0x38] sm:$0xf]
        %v723 = vld [vmem:[%s696 + $0x3c] sm:$0xf]
        %v724 = vld [vmem:[%s696 + $0x40] sm:$0xf]
        %v725 = vld [vmem:[%s696 + $0x44] sm:$0xf]
        %v726 = vld [vmem:[%s696 + $0x48] sm:$0xf]
        %v727 = vld [vmem:[%s696 + $0x4c] sm:$0xf]
        %v728 = vld [vmem:[%s696 + $0x50] sm:$0xf]
        %v729 = vld [vmem:[%s696 + $0x54] sm:$0xf]
        %v730 = vld [vmem:[%s696 + $0x58] sm:$0xf]
        %v731 = vld [vmem:[%s696 + $0x5c] sm:$0xf]
        %v732 = vld [vmem:[%s696 + $0x60] sm:$0xf]
        %v733 = vld [vmem:[%s696 + $0x64] sm:$0xf]
        %v734 = vld [vmem:[%s696 + $0x68] sm:$0xf]
        %v735 = vld [vmem:[%s696 + $0x6c] sm:$0xf]
        %v736 = vld [vmem:[%s696 + $0x70] sm:$0xf]
        %v737 = vld [vmem:[%s696 + $0x74] sm:$0xf]
        %v738 = vld [vmem:[%s696 + $0x78] sm:$0xf]
        %v739 = vld [vmem:[%s696 + $0x7c] sm:$0xf]
        %v740 = vld [vmem:[%s1] sm:$0xf]
        %v741 = vld [vmem:[%s1 + $0x4] sm:$0xf]
        %v742 = vld [vmem:[%s1 + $0x8] sm:$0xf]
        %v743 = vld [vmem:[%s1 + $0xc] sm:$0x3]
        %v744 = vld [vmem:[%s2] sm:$0x1]
        %v746 = vlaneseq
        %v747 = vshrl.u32 %v746, 7
        %v748 = vsub.s32 0, %v747
        %v749 = vrot.slane %v744, %v748
        %v783 = vunpack.c.l.b16 %v708
        %v784 = vunpack.c.l.b16 %v709
        %v785 = vunpack.c.l.b16 %v710
        %v786 = vunpack.c.l.b16 %v711
        %v787 = vunpack.c.l.b16 %v712
        %v788 = vunpack.c.l.b16 %v713
        %v789 = vunpack.c.l.b16 %v714
        %v790 = vunpack.c.l.b16 %v715
        %v791 = vunpack.c.l.b16 %v716
        %v792 = vunpack.c.l.b16 %v717
        %v793 = vunpack.c.l.b16 %v718
        %v794 = vunpack.c.l.b16 %v719
        %v795 = vunpack.c.l.b16 %v720
        %v796 = vunpack.c.l.b16 %v721
        %v797 = vunpack.c.l.b16 %v722
        %v798 = vunpack.c.l.b16 %v723
        %v799 = vunpack.c.l.b16 %v724
        %v800 = vunpack.c.l.b16 %v725
        %v801 = vunpack.c.l.b16 %v726
        %v802 = vunpack.c.l.b16 %v727
        %v803 = vunpack.c.l.b16 %v728
        %v804 = vunpack.c.l.b16 %v729
        %v805 = vunpack.c.l.b16 %v730
        %v806 = vunpack.c.l.b16 %v731
        %v807 = vunpack.c.l.b16 %v732
        %v808 = vunpack.c.l.b16 %v733
        %v809 = vunpack.c.l.b16 %v734
        %v810 = vunpack.c.l.b16 %v735
        %v811 = vunpack.c.l.b16 %v736
        %v812 = vunpack.c.l.b16 %v737
        %v813 = vunpack.c.l.b16 %v738
        %v814 = vunpack.c.l.b16 %v739
        %v815 = vpack.c.b16 %v784, %v783
        %v816 = vpack.c.b16 %v786, %v785
        %v817 = vpack.c.b16 %v788, %v787
        %v818 = vpack.c.b16 %v790, %v789
        %v819 = vpack.c.b16 %v792, %v791
        %v820 = vpack.c.b16 %v794, %v793
        %v821 = vpack.c.b16 %v796, %v795
        %v822 = vpack.c.b16 %v798, %v797
        %v823 = vpack.c.b16 %v800, %v799
        %v824 = vpack.c.b16 %v802, %v801
        %v825 = vpack.c.b16 %v804, %v803
        %v826 = vpack.c.b16 %v806, %v805
        %v827 = vpack.c.b16 %v808, %v807
        %v828 = vpack.c.b16 %v810, %v809
        %v829 = vpack.c.b16 %v812, %v811
        %v830 = vpack.c.b16 %v814, %v813
        %v835 = vunpack.c.l.b16 %v740
        %v836 = vunpack.c.l.b16 %v741
        %v837 = vunpack.c.l.b16 %v742
        %v838 = vunpack.c.l.b16 %v743
        %v839 = vpack.c.b16 %v836, %v835
        %v840 = vpack.c.b16 %v838, %v837
        %vm842 = vcmask 220160
        %v844 = vsel %vm842, %v815, 0
        %v847 = vsel %vm842, %v816, 0
        %v850 = vsel %vm842, %v817, 0
        %v853 = vsel %vm842, %v818, 0
        %v856 = vsel %vm842, %v819, 0
        %v859 = vsel %vm842, %v820, 0
        %v862 = vsel %vm842, %v821, 0
        %v865 = vsel %vm842, %v822, 0
        %v868 = vsel %vm842, %v823, 0
        %v871 = vsel %vm842, %v824, 0
        %v874 = vsel %vm842, %v825, 0
        %v877 = vsel %vm842, %v826, 0
        %v880 = vsel %vm842, %v827, 0
        %v883 = vsel %vm842, %v828, 0
        %v886 = vsel %vm842, %v829, 0
        %v889 = vsel %vm842, %v830, 0
        %vm891 = vcmask 1044480
        %vm892 = vcmask 1045504
        %v893 = vsel %vm891, 4294967295, 65535
        %v894 = vsel %vm892, %v893, 0
        %v896 = vand.u32 %v840, %v894
        %898 = vmatprep.subr.bf16.mxu0 0
        %899 = vmatpush1.bf16.msra.mxu0 0
        %900 = vmatprep.subr.bf16.mxu0 0
        %901 = vmatpush1.bf16.msra.mxu0 0
        %902 = vmatprep.subr.bf16.mxu0 0
        %903 = vmatpush1.bf16.msra.mxu0 0
        %904 = vmatprep.subr.bf16.mxu0 0
        %905 = vmatpush1.bf16.msra.mxu0 0
        %906 = vmatprep.subr.bf16.mxu0 0
        %907 = vmatpush1.bf16.msra.mxu0 0
        %908 = vmatprep.subr.bf16.mxu0 0
        %909 = vmatpush1.bf16.msra.mxu0 0
        %910 = vmatprep.subr.bf16.mxu0 0
        %911 = vmatpush1.bf16.msra.mxu0 %v896
        %912 = vmatprep.subr.bf16.mxu0 0
        %913 = vmatpush1.bf16.msra.mxu0 %v839
        %914 = vmatprep.subr.bf16.mxu0 0
        %915 = vmatpush2.bf16.msra.mxu0 0
        %916 = vmatprep.subr.bf16.mxu0 0
        %917 = vmatpush2.bf16.msra.mxu0 0
        %918 = vmatprep.subr.bf16.mxu0 0
        %919 = vmatpush2.bf16.msra.mxu0 0
        %920 = vmatprep.subr.bf16.mxu0 0
        %921 = vmatpush2.bf16.msra.mxu0 0
        %922 = vmatprep.subr.bf16.mxu0 0
        %923 = vmatpush2.bf16.msra.mxu0 0
        %924 = vmatprep.subr.bf16.mxu0 0
        %925 = vmatpush2.bf16.msra.mxu0 0
        %926 = vmatprep.subr.bf16.mxu0 0
        %927 = vmatpush2.bf16.msra.mxu0 0
        %928 = vmatprep.subr.bf16.mxu0 0
        %929 = vmatpush2.bf16.msra.mxu0 0
        %930 = vmatprep.mubr.bf16.mxu0 0
        %931 = vmatmul.mubr.bf16.gmra.mxu0 %v844
        %v932 = vpop.f32.mrf.mxu0
        %v933 = vadd.f32 %v749, %v932
        %v934 = vpop.f32.mrf.mxu0
        %v935 = vpop.f32.mrf.mxu0
        %v936 = vadd.f32 %v749, %v935
        %v937 = vpop.f32.mrf.mxu0
        %938 = vmatprep.mubr.bf16.mxu0 0
        %939 = vmatmul.mubr.bf16.gmra.mxu0 %v847
        %v940 = vpop.f32.mrf.mxu0
        %v941 = vadd.f32 %v749, %v940
        %v942 = vpop.f32.mrf.mxu0
        %v943 = vpop.f32.mrf.mxu0
        %v944 = vadd.f32 %v749, %v943
        %v945 = vpop.f32.mrf.mxu0
        %946 = vmatprep.mubr.bf16.mxu0 0
        %947 = vmatmul.mubr.bf16.gmra.mxu0 %v850
        %v948 = vpop.f32.mrf.mxu0
        %v949 = vadd.f32 %v749, %v948
        %v950 = vpop.f32.mrf.mxu0
        %v951 = vpop.f32.mrf.mxu0
        %v952 = vadd.f32 %v749, %v951
        %v953 = vpop.f32.mrf.mxu0
        %954 = vmatprep.mubr.bf16.mxu0 0
        %955 = vmatmul.mubr.bf16.gmra.mxu0 %v853
        %v956 = vpop.f32.mrf.mxu0
        %v957 = vadd.f32 %v749, %v956
        %v958 = vpop.f32.mrf.mxu0
        %v959 = vpop.f32.mrf.mxu0
        %v960 = vadd.f32 %v749, %v959
        %v961 = vpop.f32.mrf.mxu0
        %962 = vmatprep.mubr.bf16.mxu0 0
        %963 = vmatmul.mubr.bf16.gmra.mxu0 %v856
        %v964 = vpop.f32.mrf.mxu0
        %v965 = vadd.f32 %v749, %v964
        %v966 = vpop.f32.mrf.mxu0
        %v967 = vpop.f32.mrf.mxu0
        %v968 = vadd.f32 %v749, %v967
        %v969 = vpop.f32.mrf.mxu0
        %970 = vmatprep.mubr.bf16.mxu0 0
        %971 = vmatmul.mubr.bf16.gmra.mxu0 %v859
        %v972 = vpop.f32.mrf.mxu0
        %v973 = vadd.f32 %v749, %v972
        %v974 = vpop.f32.mrf.mxu0
        %v975 = vpop.f32.mrf.mxu0
        %v976 = vadd.f32 %v749, %v975
        %v977 = vpop.f32.mrf.mxu0
        %978 = vmatprep.mubr.bf16.mxu0 0
        %979 = vmatmul.mubr.bf16.gmra.mxu0 %v862
        %v980 = vpop.f32.mrf.mxu0
        %v981 = vadd.f32 %v749, %v980
        %v982 = vpop.f32.mrf.mxu0
        %v983 = vpop.f32.mrf.mxu0
        %v984 = vadd.f32 %v749, %v983
        %v985 = vpop.f32.mrf.mxu0
        %986 = vmatprep.mubr.bf16.mxu0 0
        %987 = vmatmul.mubr.bf16.gmra.mxu0 %v865
        %v988 = vpop.f32.mrf.mxu0
        %v989 = vadd.f32 %v749, %v988
        %v990 = vpop.f32.mrf.mxu0
        %v991 = vpop.f32.mrf.mxu0
        %v992 = vadd.f32 %v749, %v991
        %v993 = vpop.f32.mrf.mxu0
        %994 = vmatprep.mubr.bf16.mxu0 0
        %995 = vmatmul.mubr.bf16.gmra.mxu0 %v868
        %v996 = vpop.f32.mrf.mxu0
        %v997 = vadd.f32 %v749, %v996
        %v998 = vpop.f32.mrf.mxu0
        %v999 = vpop.f32.mrf.mxu0
        %v1000 = vadd.f32 %v749, %v999
        %v1001 = vpop.f32.mrf.mxu0
        %1002 = vmatprep.mubr.bf16.mxu0 0
        %1003 = vmatmul.mubr.bf16.gmra.mxu0 %v871
        %v1004 = vpop.f32.mrf.mxu0
        %v1005 = vadd.f32 %v749, %v1004
        %v1006 = vpop.f32.mrf.mxu0
        %v1007 = vpop.f32.mrf.mxu0
        %v1008 = vadd.f32 %v749, %v1007
        %v1009 = vpop.f32.mrf.mxu0
        %1010 = vmatprep.mubr.bf16.mxu0 0
        %1011 = vmatmul.mubr.bf16.gmra.mxu0 %v874
        %v1012 = vpop.f32.mrf.mxu0
        %v1013 = vadd.f32 %v749, %v1012
        %v1014 = vpop.f32.mrf.mxu0
        %v1015 = vpop.f32.mrf.mxu0
        %v1016 = vadd.f32 %v749, %v1015
        %v1017 = vpop.f32.mrf.mxu0
        %1018 = vmatprep.mubr.bf16.mxu0 0
        %1019 = vmatmul.mubr.bf16.gmra.mxu0 %v877
        %v1020 = vpop.f32.mrf.mxu0
        %v1021 = vadd.f32 %v749, %v1020
        %v1022 = vpop.f32.mrf.mxu0
        %v1023 = vpop.f32.mrf.mxu0
        %v1024 = vadd.f32 %v749, %v1023
        %v1025 = vpop.f32.mrf.mxu0
        %1026 = vmatprep.mubr.bf16.mxu0 0
        %1027 = vmatmul.mubr.bf16.gmra.mxu0 %v880
        %v1028 = vpop.f32.mrf.mxu0
        %v1029 = vadd.f32 %v749, %v1028
        %v1030 = vpop.f32.mrf.mxu0
        %v1031 = vpop.f32.mrf.mxu0
        %v1032 = vadd.f32 %v749, %v1031
        %v1033 = vpop.f32.mrf.mxu0
        %1034 = vmatprep.mubr.bf16.mxu0 0
        %1035 = vmatmul.mubr.bf16.gmra.mxu0 %v883
        %v1036 = vpop.f32.mrf.mxu0
        %v1037 = vadd.f32 %v749, %v1036
        %v1038 = vpop.f32.mrf.mxu0
        %v1039 = vpop.f32.mrf.mxu0
        %v1040 = vadd.f32 %v749, %v1039
        %v1041 = vpop.f32.mrf.mxu0
        %1042 = vmatprep.mubr.bf16.mxu0 0
        %1043 = vmatmul.mubr.bf16.gmra.mxu0 %v886
        %v1044 = vpop.f32.mrf.mxu0
        %v1045 = vadd.f32 %v749, %v1044
        %v1046 = vpop.f32.mrf.mxu0
        %v1047 = vpop.f32.mrf.mxu0
        %v1048 = vadd.f32 %v749, %v1047
        %v1049 = vpop.f32.mrf.mxu0
        %1050 = vmatprep.mubr.bf16.mxu0 0
        %1051 = vmatmul.mubr.bf16.gmra.mxu0 %v889
        %v1052 = vpop.f32.mrf.mxu0
        %v1053 = vadd.f32 %v749, %v1052
        %v1054 = vpop.f32.mrf.mxu0
        %v1055 = vpop.f32.mrf.mxu0
        %v1056 = vadd.f32 %v749, %v1055
        %v1057 = vpop.f32.mrf.mxu0
        %1058 = vdwg.mxu0
        %v1059 = vadd.f32 %v933, 3.0
        %v1060 = vadd.f32 %v936, 3.0
        %v1061 = vadd.f32 %v941, 3.0
        %v1062 = vadd.f32 %v944, 3.0
        %v1063 = vadd.f32 %v949, 3.0
        %v1064 = vadd.f32 %v952, 3.0
        %v1065 = vadd.f32 %v957, 3.0
        %v1066 = vadd.f32 %v960, 3.0
        %v1067 = vadd.f32 %v965, 3.0
        %v1068 = vadd.f32 %v968, 3.0
        %v1069 = vadd.f32 %v973, 3.0
        %v1070 = vadd.f32 %v976, 3.0
        %v1071 = vadd.f32 %v981, 3.0
        %v1072 = vadd.f32 %v984, 3.0
        %v1073 = vadd.f32 %v989, 3.0
        %v1074 = vadd.f32 %v992, 3.0
        %v1075 = vadd.f32 %v997, 3.0
        %v1076 = vadd.f32 %v1000, 3.0
        %v1077 = vadd.f32 %v1005, 3.0
        %v1078 = vadd.f32 %v1008, 3.0
        %v1079 = vadd.f32 %v1013, 3.0
        %v1080 = vadd.f32 %v1016, 3.0
        %v1081 = vadd.f32 %v1021, 3.0
        %v1082 = vadd.f32 %v1024, 3.0
        %v1083 = vadd.f32 %v1029, 3.0
        %v1084 = vadd.f32 %v1032, 3.0
        %v1085 = vadd.f32 %v1037, 3.0
        %v1086 = vadd.f32 %v1040, 3.0
        %v1087 = vadd.f32 %v1045, 3.0
        %v1088 = vadd.f32 %v1048, 3.0
        %v1089 = vadd.f32 %v1053, 3.0
        %v1090 = vadd.f32 %v1056, 3.0
        %v1091 = vmax.f32 %v1059, 0.0
        %v1092 = vmax.f32 %v1060, 0.0
        %v1093 = vmax.f32 %v1061, 0.0
        %v1094 = vmax.f32 %v1062, 0.0
        %v1095 = vmax.f32 %v1063, 0.0
        %v1096 = vmax.f32 %v1064, 0.0
        %v1097 = vmax.f32 %v1065, 0.0
        %v1098 = vmax.f32 %v1066, 0.0
        %v1099 = vmax.f32 %v1067, 0.0
        %v1100 = vmax.f32 %v1068, 0.0
        %v1101 = vmax.f32 %v1069, 0.0
        %v1102 = vmax.f32 %v1070, 0.0
        %v1103 = vmax.f32 %v1071, 0.0
        %v1104 = vmax.f32 %v1072, 0.0
        %v1105 = vmax.f32 %v1073, 0.0
        %v1106 = vmax.f32 %v1074, 0.0
        %v1107 = vmax.f32 %v1075, 0.0
        %v1108 = vmax.f32 %v1076, 0.0
        %v1109 = vmax.f32 %v1077, 0.0
        %v1110 = vmax.f32 %v1078, 0.0
        %v1111 = vmax.f32 %v1079, 0.0
        %v1112 = vmax.f32 %v1080, 0.0
        %v1113 = vmax.f32 %v1081, 0.0
        %v1114 = vmax.f32 %v1082, 0.0
        %v1115 = vmax.f32 %v1083, 0.0
        %v1116 = vmax.f32 %v1084, 0.0
        %v1117 = vmax.f32 %v1085, 0.0
        %v1118 = vmax.f32 %v1086, 0.0
        %v1119 = vmax.f32 %v1087, 0.0
        %v1120 = vmax.f32 %v1088, 0.0
        %v1121 = vmax.f32 %v1089, 0.0
        %v1122 = vmax.f32 %v1090, 0.0
        %v1123 = vmin.f32 %v1091, 6.0
        %v1124 = vmin.f32 %v1092, 6.0
        %v1125 = vmin.f32 %v1093, 6.0
        %v1126 = vmin.f32 %v1094, 6.0
        %v1127 = vmin.f32 %v1095, 6.0
        %v1128 = vmin.f32 %v1096, 6.0
        %v1129 = vmin.f32 %v1097, 6.0
        %v1130 = vmin.f32 %v1098, 6.0
        %v1131 = vmin.f32 %v1099, 6.0
        %v1132 = vmin.f32 %v1100, 6.0
        %v1133 = vmin.f32 %v1101, 6.0
        %v1134 = vmin.f32 %v1102, 6.0
        %v1135 = vmin.f32 %v1103, 6.0
        %v1136 = vmin.f32 %v1104, 6.0
        %v1137 = vmin.f32 %v1105, 6.0
        %v1138 = vmin.f32 %v1106, 6.0
        %v1139 = vmin.f32 %v1107, 6.0
        %v1140 = vmin.f32 %v1108, 6.0
        %v1141 = vmin.f32 %v1109, 6.0
        %v1142 = vmin.f32 %v1110, 6.0
        %v1143 = vmin.f32 %v1111, 6.0
        %v1144 = vmin.f32 %v1112, 6.0
        %v1145 = vmin.f32 %v1113, 6.0
        %v1146 = vmin.f32 %v1114, 6.0
        %v1147 = vmin.f32 %v1115, 6.0
        %v1148 = vmin.f32 %v1116, 6.0
        %v1149 = vmin.f32 %v1117, 6.0
        %v1150 = vmin.f32 %v1118, 6.0
        %v1151 = vmin.f32 %v1119, 6.0
        %v1152 = vmin.f32 %v1120, 6.0
        %v1153 = vmin.f32 %v1121, 6.0
        %v1154 = vmin.f32 %v1122, 6.0
        %v1155 = vmul.f32 %v933, %v1123
        %v1156 = vmul.f32 %v936, %v1124
        %v1157 = vmul.f32 %v941, %v1125
        %v1158 = vmul.f32 %v944, %v1126
        %v1159 = vmul.f32 %v949, %v1127
        %v1160 = vmul.f32 %v952, %v1128
        %v1161 = vmul.f32 %v957, %v1129
        %v1162 = vmul.f32 %v960, %v1130
        %v1163 = vmul.f32 %v965, %v1131
        %v1164 = vmul.f32 %v968, %v1132
        %v1165 = vmul.f32 %v973, %v1133
        %v1166 = vmul.f32 %v976, %v1134
        %v1167 = vmul.f32 %v981, %v1135
        %v1168 = vmul.f32 %v984, %v1136
        %v1169 = vmul.f32 %v989, %v1137
        %v1170 = vmul.f32 %v992, %v1138
        %v1171 = vmul.f32 %v997, %v1139
        %v1172 = vmul.f32 %v1000, %v1140
        %v1173 = vmul.f32 %v1005, %v1141
        %v1174 = vmul.f32 %v1008, %v1142
        %v1175 = vmul.f32 %v1013, %v1143
        %v1176 = vmul.f32 %v1016, %v1144
        %v1177 = vmul.f32 %v1021, %v1145
        %v1178 = vmul.f32 %v1024, %v1146
        %v1179 = vmul.f32 %v1029, %v1147
        %v1180 = vmul.f32 %v1032, %v1148
        %v1181 = vmul.f32 %v1037, %v1149
        %v1182 = vmul.f32 %v1040, %v1150
        %v1183 = vmul.f32 %v1045, %v1151
        %v1184 = vmul.f32 %v1048, %v1152
        %v1185 = vmul.f32 %v1053, %v1153
        %v1186 = vmul.f32 %v1056, %v1154
        %v1187 = vmul.f32 %v1155, 0.16666667
        %v1188 = vmul.f32 %v1156, 0.16666667
        %v1189 = vmul.f32 %v1157, 0.16666667
        %v1190 = vmul.f32 %v1158, 0.16666667
        %v1191 = vmul.f32 %v1159, 0.16666667
        %v1192 = vmul.f32 %v1160, 0.16666667
        %v1193 = vmul.f32 %v1161, 0.16666667
        %v1194 = vmul.f32 %v1162, 0.16666667
        %v1195 = vmul.f32 %v1163, 0.16666667
        %v1196 = vmul.f32 %v1164, 0.16666667
        %v1197 = vmul.f32 %v1165, 0.16666667
        %v1198 = vmul.f32 %v1166, 0.16666667
        %v1199 = vmul.f32 %v1167, 0.16666667
        %v1200 = vmul.f32 %v1168, 0.16666667
        %v1201 = vmul.f32 %v1169, 0.16666667
        %v1202 = vmul.f32 %v1170, 0.16666667
        %v1203 = vmul.f32 %v1171, 0.16666667
        %v1204 = vmul.f32 %v1172, 0.16666667
        %v1205 = vmul.f32 %v1173, 0.16666667
        %v1206 = vmul.f32 %v1174, 0.16666667
        %v1207 = vmul.f32 %v1175, 0.16666667
        %v1208 = vmul.f32 %v1176, 0.16666667
        %v1209 = vmul.f32 %v1177, 0.16666667
        %v1210 = vmul.f32 %v1178, 0.16666667
        %v1211 = vmul.f32 %v1179, 0.16666667
        %v1212 = vmul.f32 %v1180, 0.16666667
        %v1213 = vmul.f32 %v1181, 0.16666667
        %v1214 = vmul.f32 %v1182, 0.16666667
        %v1215 = vmul.f32 %v1183, 0.16666667
        %v1216 = vmul.f32 %v1184, 0.16666667
        %v1217 = vmul.f32 %v1185, 0.16666667
        %v1218 = vmul.f32 %v1186, 0.16666667
        %v1219 = vpack.c.bf16 %v1188, %v1187
        %v1220 = vpack.c.bf16 %v1190, %v1189
        %v1221 = vpack.c.bf16 %v1192, %v1191
        %v1222 = vpack.c.bf16 %v1194, %v1193
        %v1223 = vpack.c.bf16 %v1196, %v1195
        %v1224 = vpack.c.bf16 %v1198, %v1197
        %v1225 = vpack.c.bf16 %v1200, %v1199
        %v1226 = vpack.c.bf16 %v1202, %v1201
        %v1227 = vpack.c.bf16 %v1204, %v1203
        %v1228 = vpack.c.bf16 %v1206, %v1205
        %v1229 = vpack.c.bf16 %v1208, %v1207
        %v1230 = vpack.c.bf16 %v1210, %v1209
        %v1231 = vpack.c.bf16 %v1212, %v1211
        %v1232 = vpack.c.bf16 %v1214, %v1213
        %v1233 = vpack.c.bf16 %v1216, %v1215
        %v1234 = vpack.c.bf16 %v1218, %v1217
        %v1235 = vld [vmem:[%s5] sm:$0x1]
        %v1236 = vld [vmem:[%s3] sm:$0xff]
        %v1237 = vld [vmem:[%s3 + $0x8] sm:$0xff]
        %v1238 = vld [vmem:[%s3 + $0x10] sm:$0xff]
        %v1239 = vld [vmem:[%s3 + $0x18] sm:$0xff]
        %v1240 = vld [vmem:[%s3 + $0x20] sm:$0xff]
        %v1241 = vld [vmem:[%s3 + $0x28] sm:$0xff]
        %v1242 = vld [vmem:[%s3 + $0x30] sm:$0xff]
        %v1243 = vld [vmem:[%s3 + $0x38] sm:$0xff]
        %v1252 = vunpack.c.l.b16 %v1236
        %v1253 = vunpack.c.h.b16 %v1236
        %v1254 = vunpack.c.l.b16 %v1237
        %v1255 = vunpack.c.h.b16 %v1237
        %v1256 = vunpack.c.l.b16 %v1238
        %v1257 = vunpack.c.h.b16 %v1238
        %v1258 = vunpack.c.l.b16 %v1239
        %v1259 = vunpack.c.h.b16 %v1239
        %v1260 = vunpack.c.l.b16 %v1240
        %v1261 = vunpack.c.h.b16 %v1240
        %v1262 = vunpack.c.l.b16 %v1241
        %v1263 = vunpack.c.h.b16 %v1241
        %v1264 = vunpack.c.l.b16 %v1242
        %v1265 = vunpack.c.h.b16 %v1242
        %v1266 = vunpack.c.l.b16 %v1243
        %v1267 = vunpack.c.h.b16 %v1243
        %v1268 = vpack.c.b16 %v1254, %v1252
        %v1269 = vpack.c.b16 %v1255, %v1253
        %v1270 = vpack.c.b16 %v1258, %v1256
        %v1271 = vpack.c.b16 %v1259, %v1257
        %v1272 = vpack.c.b16 %v1262, %v1260
        %v1273 = vpack.c.b16 %v1263, %v1261
        %v1274 = vpack.c.b16 %v1266, %v1264
        %v1275 = vpack.c.b16 %v1267, %v1265
        %1284 = vmatprep.subr.bf16.mxu0 0
        %1285 = vmatpush1.bf16.msra.mxu0 %v1226
        %1286 = vmatprep.subr.bf16.mxu0 0
        %1287 = vmatpush1.bf16.msra.mxu0 %v1225
        %1288 = vmatprep.subr.bf16.mxu0 0
        %1289 = vmatpush1.bf16.msra.mxu0 %v1224
        %1290 = vmatprep.subr.bf16.mxu0 0
        %1291 = vmatpush1.bf16.msra.mxu0 %v1223
        %1292 = vmatprep.subr.bf16.mxu0 0
        %1293 = vmatpush1.bf16.msra.mxu0 %v1222
        %1294 = vmatprep.subr.bf16.mxu0 0
        %1295 = vmatpush1.bf16.msra.mxu0 %v1221
        %1296 = vmatprep.subr.bf16.mxu0 0
        %1297 = vmatpush1.bf16.msra.mxu0 %v1220
        %1298 = vmatprep.subr.bf16.mxu0 0
        %1299 = vmatpush1.bf16.msra.mxu0 %v1219
        %1300 = vmatprep.subr.bf16.mxu0 0
        %1301 = vmatpush2.bf16.msra.mxu0 %v1234
        %1302 = vmatprep.subr.bf16.mxu0 0
        %1303 = vmatpush2.bf16.msra.mxu0 %v1233
        %1304 = vmatprep.subr.bf16.mxu0 0
        %1305 = vmatpush2.bf16.msra.mxu0 %v1232
        %1306 = vmatprep.subr.bf16.mxu0 0
        %1307 = vmatpush2.bf16.msra.mxu0 %v1231
        %1308 = vmatprep.subr.bf16.mxu0 0
        %1309 = vmatpush2.bf16.msra.mxu0 %v1230
        %1310 = vmatprep.subr.bf16.mxu0 0
        %1311 = vmatpush2.bf16.msra.mxu0 %v1229
        %1312 = vmatprep.subr.bf16.mxu0 0
        %1313 = vmatpush2.bf16.msra.mxu0 %v1228
        %1314 = vmatprep.subr.bf16.mxu0 0
        %1315 = vmatpush2.bf16.msra.mxu0 %v1227
        %1316 = vmatprep.mubr.bf16.mxu0 %v1269
        %1317 = vmatmul.mubr.bf16.gmra.mxu0 %v1268
        %v1318 = vpop.f32.mrf.mxu0
        %v1319 = vadd.f32 0.0, %v1318
        %v1320 = vpop.f32.mrf.mxu0
        %v1321 = vpop.f32.mrf.mxu0
        %v1322 = vadd.f32 0.0, %v1321
        %v1323 = vpop.f32.mrf.mxu0
        %1324 = vmatprep.mubr.bf16.mxu0 %v1271
        %1325 = vmatmul.mubr.bf16.gmra.mxu0 %v1270
        %v1326 = vpop.f32.mrf.mxu0
        %v1327 = vadd.f32 0.0, %v1326
        %v1328 = vpop.f32.mrf.mxu0
        %v1329 = vpop.f32.mrf.mxu0
        %v1330 = vadd.f32 0.0, %v1329
        %v1331 = vpop.f32.mrf.mxu0
        %1332 = vmatprep.mubr.bf16.mxu0 %v1273
        %1333 = vmatmul.mubr.bf16.gmra.mxu0 %v1272
        %v1334 = vpop.f32.mrf.mxu0
        %v1335 = vadd.f32 0.0, %v1334
        %v1336 = vpop.f32.mrf.mxu0
        %v1337 = vpop.f32.mrf.mxu0
        %v1338 = vadd.f32 0.0, %v1337
        %v1339 = vpop.f32.mrf.mxu0
        %1340 = vmatprep.mubr.bf16.mxu0 %v1275
        %1341 = vmatmul.mubr.bf16.gmra.mxu0 %v1274
        %v1342 = vpop.f32.mrf.mxu0
        %v1343 = vadd.f32 0.0, %v1342
        %v1344 = vpop.f32.mrf.mxu0
        %v1345 = vpop.f32.mrf.mxu0
        %v1346 = vadd.f32 0.0, %v1345
        %v1347 = vpop.f32.mrf.mxu0
        %1348 = vdwg.mxu0
        %v1349 = vpack.c.bf16 %v1322, %v1319
        %v1350 = vpack.c.bf16 %v1330, %v1327
        %v1351 = vpack.c.bf16 %v1338, %v1335
        %v1352 = vpack.c.bf16 %v1346, %v1343
        %v1353 = vld [vmem:[%s4] sm:$0xf]
        %vm1354 = vcmask 64512
        %v1356 = vsel %vm1354, %v1349, 0
        %v1359 = vsel %vm1354, %v1350, 0
        %v1362 = vsel %vm1354, %v1351, 0
        %v1365 = vsel %vm1354, %v1352, 0
        %vm1367 = vcmask 1043456
        %v1369 = vsel %vm1367, %v1353, 0
        %1371 = vmatprep.subr.bf16.mxu0 0
        %1372 = vmatpush1.bf16.msra.mxu0 0
        %1373 = vmatprep.subr.bf16.mxu0 0
        %1374 = vmatpush1.bf16.msra.mxu0 0
        %1375 = vmatprep.subr.bf16.mxu0 0
        %1376 = vmatpush1.bf16.msra.mxu0 0
        %1377 = vmatprep.subr.bf16.mxu0 0
        %1378 = vmatpush1.bf16.msra.mxu0 0
        %1379 = vmatprep.subr.bf16.mxu0 0
        %1380 = vmatpush1.bf16.msra.mxu0 0
        %1381 = vmatprep.subr.bf16.mxu0 0
        %1382 = vmatpush1.bf16.msra.mxu0 0
        %1383 = vmatprep.subr.bf16.mxu0 0
        %1384 = vmatpush1.bf16.msra.mxu0 0
        %1385 = vmatprep.subr.bf16.mxu0 0
        %1386 = vmatpush1.bf16.msra.mxu0 %v1369
        %1387 = vmatprep.subr.bf16.mxu0 0
        %1388 = vmatpush2.bf16.msra.mxu0 0
        %1389 = vmatprep.subr.bf16.mxu0 0
        %1390 = vmatpush2.bf16.msra.mxu0 0
        %1391 = vmatprep.subr.bf16.mxu0 0
        %1392 = vmatpush2.bf16.msra.mxu0 0
        %1393 = vmatprep.subr.bf16.mxu0 0
        %1394 = vmatpush2.bf16.msra.mxu0 0
        %1395 = vmatprep.subr.bf16.mxu0 0
        %1396 = vmatpush2.bf16.msra.mxu0 0
        %1397 = vmatprep.subr.bf16.mxu0 0
        %1398 = vmatpush2.bf16.msra.mxu0 0
        %1399 = vmatprep.subr.bf16.mxu0 0
        %1400 = vmatpush2.bf16.msra.mxu0 0
        %1401 = vmatprep.subr.bf16.mxu0 0
        %1402 = vmatpush2.bf16.msra.mxu0 0
        %1403 = vmatprep.mubr.bf16.mxu0 0
        %1404 = vmatmul.mubr.bf16.gmra.mxu0 %v1356
        %v1405 = vpop.f32.mrf.mxu0
        %v1406 = vadd.f32 0.0, %v1405
        %v1407 = vpop.f32.mrf.mxu0
        %v1408 = vpop.f32.mrf.mxu0
        %v1409 = vadd.f32 0.0, %v1408
        %v1410 = vpop.f32.mrf.mxu0
        %1411 = vmatprep.mubr.bf16.mxu0 0
        %1412 = vmatmul.mubr.bf16.gmra.mxu0 %v1359
        %v1413 = vpop.f32.mrf.mxu0
        %v1414 = vadd.f32 0.0, %v1413
        %v1415 = vpop.f32.mrf.mxu0
        %v1416 = vpop.f32.mrf.mxu0
        %v1417 = vadd.f32 0.0, %v1416
        %v1418 = vpop.f32.mrf.mxu0
        %1419 = vmatprep.mubr.bf16.mxu0 0
        %1420 = vmatmul.mubr.bf16.gmra.mxu0 %v1362
        %v1421 = vpop.f32.mrf.mxu0
        %v1422 = vadd.f32 0.0, %v1421
        %v1423 = vpop.f32.mrf.mxu0
        %v1424 = vpop.f32.mrf.mxu0
        %v1425 = vadd.f32 0.0, %v1424
        %v1426 = vpop.f32.mrf.mxu0
        %1427 = vmatprep.mubr.bf16.mxu0 0
        %1428 = vmatmul.mubr.bf16.gmra.mxu0 %v1365
        %v1429 = vpop.f32.mrf.mxu0
        %v1430 = vadd.f32 0.0, %v1429
        %v1431 = vpop.f32.mrf.mxu0
        %v1432 = vpop.f32.mrf.mxu0
        %v1433 = vadd.f32 0.0, %v1432
        %v1434 = vpop.f32.mrf.mxu0
        %1435 = vdwg.mxu0
        %v1437 = vlaneseq
        %v1438 = vshrl.u32 %v1437, 7
        %v1439 = vsub.s32 0, %v1438
        %v1440 = vrot.slane %v1235, %v1439
        %v1442 = vadd.f32 %v1440, %v1406
        %v1443 = vadd.f32 %v1440, %v1409
        %v1444 = vadd.f32 %v1440, %v1414
        %v1445 = vadd.f32 %v1440, %v1417
        %v1446 = vadd.f32 %v1440, %v1422
        %v1447 = vadd.f32 %v1440, %v1425
        %v1448 = vadd.f32 %v1440, %v1430
        %v1449 = vadd.f32 %v1440, %v1433
        %s1450 = scalar_lea.vmem %s3, 64
        %v1451 = vld [vmem:[%s1450] sm:$0xff]
        %v1452 = vld [vmem:[%s1450 + $0x8] sm:$0xff]
        %v1453 = vld [vmem:[%s1450 + $0x10] sm:$0xff]
        %v1454 = vld [vmem:[%s1450 + $0x18] sm:$0xff]
        %v1455 = vld [vmem:[%s1450 + $0x20] sm:$0xff]
        %v1456 = vld [vmem:[%s1450 + $0x28] sm:$0xff]
        %v1457 = vld [vmem:[%s1450 + $0x30] sm:$0xff]
        %v1458 = vld [vmem:[%s1450 + $0x38] sm:$0xff]
        %v1467 = vunpack.c.l.b16 %v1451
        %v1468 = vunpack.c.h.b16 %v1451
        %v1469 = vunpack.c.l.b16 %v1452
        %v1470 = vunpack.c.h.b16 %v1452
        %v1471 = vunpack.c.l.b16 %v1453
        %v1472 = vunpack.c.h.b16 %v1453
        %v1473 = vunpack.c.l.b16 %v1454
        %v1474 = vunpack.c.h.b16 %v1454
        %v1475 = vunpack.c.l.b16 %v1455
        %v1476 = vunpack.c.h.b16 %v1455
        %v1477 = vunpack.c.l.b16 %v1456
        %v1478 = vunpack.c.h.b16 %v1456
        %v1479 = vunpack.c.l.b16 %v1457
        %v1480 = vunpack.c.h.b16 %v1457
        %v1481 = vunpack.c.l.b16 %v1458
        %v1482 = vunpack.c.h.b16 %v1458
        %v1483 = vpack.c.b16 %v1469, %v1467
        %v1484 = vpack.c.b16 %v1470, %v1468
        %v1485 = vpack.c.b16 %v1473, %v1471
        %v1486 = vpack.c.b16 %v1474, %v1472
        %v1487 = vpack.c.b16 %v1477, %v1475
        %v1488 = vpack.c.b16 %v1478, %v1476
        %v1489 = vpack.c.b16 %v1481, %v1479
        %v1490 = vpack.c.b16 %v1482, %v1480
        %1499 = vmatprep.subr.bf16.mxu0 0
        %1500 = vmatpush1.bf16.msra.mxu0 %v1226
        %1501 = vmatprep.subr.bf16.mxu0 0
        %1502 = vmatpush1.bf16.msra.mxu0 %v1225
        %1503 = vmatprep.subr.bf16.mxu0 0
        %1504 = vmatpush1.bf16.msra.mxu0 %v1224
        %1505 = vmatprep.subr.bf16.mxu0 0
        %1506 = vmatpush1.bf16.msra.mxu0 %v1223
        %1507 = vmatprep.subr.bf16.mxu0 0
        %1508 = vmatpush1.bf16.msra.mxu0 %v1222
        %1509 = vmatprep.subr.bf16.mxu0 0
        %1510 = vmatpush1.bf16.msra.mxu0 %v1221
        %1511 = vmatprep.subr.bf16.mxu0 0
        %1512 = vmatpush1.bf16.msra.mxu0 %v1220
        %1513 = vmatprep.subr.bf16.mxu0 0
        %1514 = vmatpush1.bf16.msra.mxu0 %v1219
        %1515 = vmatprep.subr.bf16.mxu0 0
        %1516 = vmatpush2.bf16.msra.mxu0 %v1234
        %1517 = vmatprep.subr.bf16.mxu0 0
        %1518 = vmatpush2.bf16.msra.mxu0 %v1233
        %1519 = vmatprep.subr.bf16.mxu0 0
        %1520 = vmatpush2.bf16.msra.mxu0 %v1232
        %1521 = vmatprep.subr.bf16.mxu0 0
        %1522 = vmatpush2.bf16.msra.mxu0 %v1231
        %1523 = vmatprep.subr.bf16.mxu0 0
        %1524 = vmatpush2.bf16.msra.mxu0 %v1230
        %1525 = vmatprep.subr.bf16.mxu0 0
        %1526 = vmatpush2.bf16.msra.mxu0 %v1229
        %1527 = vmatprep.subr.bf16.mxu0 0
        %1528 = vmatpush2.bf16.msra.mxu0 %v1228
        %1529 = vmatprep.subr.bf16.mxu0 0
        %1530 = vmatpush2.bf16.msra.mxu0 %v1227
        %1531 = vmatprep.mubr.bf16.mxu0 %v1484
        %1532 = vmatmul.mubr.bf16.gmra.mxu0 %v1483
        %v1533 = vpop.f32.mrf.mxu0
        %v1534 = vadd.f32 0.0, %v1533
        %v1535 = vpop.f32.mrf.mxu0
        %v1536 = vpop.f32.mrf.mxu0
        %v1537 = vadd.f32 0.0, %v1536
        %v1538 = vpop.f32.mrf.mxu0
        %1539 = vmatprep.mubr.bf16.mxu0 %v1486
        %1540 = vmatmul.mubr.bf16.gmra.mxu0 %v1485
        %v1541 = vpop.f32.mrf.mxu0
        %v1542 = vadd.f32 0.0, %v1541
        %v1543 = vpop.f32.mrf.mxu0
        %v1544 = vpop.f32.mrf.mxu0
        %v1545 = vadd.f32 0.0, %v1544
        %v1546 = vpop.f32.mrf.mxu0
        %1547 = vmatprep.mubr.bf16.mxu0 %v1488
        %1548 = vmatmul.mubr.bf16.gmra.mxu0 %v1487
        %v1549 = vpop.f32.mrf.mxu0
        %v1550 = vadd.f32 0.0, %v1549
        %v1551 = vpop.f32.mrf.mxu0
        %v1552 = vpop.f32.mrf.mxu0
        %v1553 = vadd.f32 0.0, %v1552
        %v1554 = vpop.f32.mrf.mxu0
        %1555 = vmatprep.mubr.bf16.mxu0 %v1490
        %1556 = vmatmul.mubr.bf16.gmra.mxu0 %v1489
        %v1557 = vpop.f32.mrf.mxu0
        %v1558 = vadd.f32 0.0, %v1557
        %v1559 = vpop.f32.mrf.mxu0
        %v1560 = vpop.f32.mrf.mxu0
        %v1561 = vadd.f32 0.0, %v1560
        %v1562 = vpop.f32.mrf.mxu0
        %1563 = vdwg.mxu0
        %v1564 = vpack.c.bf16 %v1537, %v1534
        %v1565 = vpack.c.bf16 %v1545, %v1542
        %v1566 = vpack.c.bf16 %v1553, %v1550
        %v1567 = vpack.c.bf16 %v1561, %v1558
        %s1568 = scalar_lea.vmem %s4, 4
        %v1569 = vld [vmem:[%s1568] sm:$0xf]
        %v1571 = vsel %vm1354, %v1564, 0
        %v1574 = vsel %vm1354, %v1565, 0
        %v1577 = vsel %vm1354, %v1566, 0
        %v1580 = vsel %vm1354, %v1567, 0
        %v1583 = vsel %vm1367, %v1569, 0
        %1585 = vmatprep.subr.bf16.mxu0 0
        %1586 = vmatpush1.bf16.msra.mxu0 0
        %1587 = vmatprep.subr.bf16.mxu0 0
        %1588 = vmatpush1.bf16.msra.mxu0 0
        %1589 = vmatprep.subr.bf16.mxu0 0
        %1590 = vmatpush1.bf16.msra.mxu0 0
        %1591 = vmatprep.subr.bf16.mxu0 0
        %1592 = vmatpush1.bf16.msra.mxu0 0
        %1593 = vmatprep.subr.bf16.mxu0 0
        %1594 = vmatpush1.bf16.msra.mxu0 0
        %1595 = vmatprep.subr.bf16.mxu0 0
        %1596 = vmatpush1.bf16.msra.mxu0 0
        %1597 = vmatprep.subr.bf16.mxu0 0
        %1598 = vmatpush1.bf16.msra.mxu0 0
        %1599 = vmatprep.subr.bf16.mxu0 0
        %1600 = vmatpush1.bf16.msra.mxu0 %v1583
        %1601 = vmatprep.subr.bf16.mxu0 0
        %1602 = vmatpush2.bf16.msra.mxu0 0
        %1603 = vmatprep.subr.bf16.mxu0 0
        %1604 = vmatpush2.bf16.msra.mxu0 0
        %1605 = vmatprep.subr.bf16.mxu0 0
        %1606 = vmatpush2.bf16.msra.mxu0 0
        %1607 = vmatprep.subr.bf16.mxu0 0
        %1608 = vmatpush2.bf16.msra.mxu0 0
        %1609 = vmatprep.subr.bf16.mxu0 0
        %1610 = vmatpush2.bf16.msra.mxu0 0
        %1611 = vmatprep.subr.bf16.mxu0 0
        %1612 = vmatpush2.bf16.msra.mxu0 0
        %1613 = vmatprep.subr.bf16.mxu0 0
        %1614 = vmatpush2.bf16.msra.mxu0 0
        %1615 = vmatprep.subr.bf16.mxu0 0
        %1616 = vmatpush2.bf16.msra.mxu0 0
        %1617 = vmatprep.mubr.bf16.mxu0 0
        %1618 = vmatmul.mubr.bf16.gmra.mxu0 %v1571
        %v1619 = vpop.f32.mrf.mxu0
        %v1620 = vadd.f32 0.0, %v1619
        %v1621 = vpop.f32.mrf.mxu0
        %v1622 = vpop.f32.mrf.mxu0
        %v1623 = vadd.f32 0.0, %v1622
        %v1624 = vpop.f32.mrf.mxu0
        %1625 = vmatprep.mubr.bf16.mxu0 0
        %1626 = vmatmul.mubr.bf16.gmra.mxu0 %v1574
        %v1627 = vpop.f32.mrf.mxu0
        %v1628 = vadd.f32 0.0, %v1627
        %v1629 = vpop.f32.mrf.mxu0
        %v1630 = vpop.f32.mrf.mxu0
        %v1631 = vadd.f32 0.0, %v1630
        %v1632 = vpop.f32.mrf.mxu0
        %1633 = vmatprep.mubr.bf16.mxu0 0
        %1634 = vmatmul.mubr.bf16.gmra.mxu0 %v1577
        %v1635 = vpop.f32.mrf.mxu0
        %v1636 = vadd.f32 0.0, %v1635
        %v1637 = vpop.f32.mrf.mxu0
        %v1638 = vpop.f32.mrf.mxu0
        %v1639 = vadd.f32 0.0, %v1638
        %v1640 = vpop.f32.mrf.mxu0
        %1641 = vmatprep.mubr.bf16.mxu0 0
        %1642 = vmatmul.mubr.bf16.gmra.mxu0 %v1580
        %v1643 = vpop.f32.mrf.mxu0
        %v1644 = vadd.f32 0.0, %v1643
        %v1645 = vpop.f32.mrf.mxu0
        %v1646 = vpop.f32.mrf.mxu0
        %v1647 = vadd.f32 0.0, %v1646
        %v1648 = vpop.f32.mrf.mxu0
        %1649 = vdwg.mxu0
        %v1650 = vadd.f32 %v1442, %v1620
        %v1651 = vadd.f32 %v1443, %v1623
        %v1652 = vadd.f32 %v1444, %v1628
        %v1653 = vadd.f32 %v1445, %v1631
        %v1654 = vadd.f32 %v1446, %v1636
        %v1655 = vadd.f32 %v1447, %v1639
        %v1656 = vadd.f32 %v1448, %v1644
        %v1657 = vadd.f32 %v1449, %v1647
        %s1658 = scalar_lea.vmem %s3, 128
        %v1659 = vld [vmem:[%s1658] sm:$0xff]
        %v1660 = vld [vmem:[%s1658 + $0x8] sm:$0xff]
        %v1661 = vld [vmem:[%s1658 + $0x10] sm:$0xff]
        %v1662 = vld [vmem:[%s1658 + $0x18] sm:$0xff]
        %v1663 = vld [vmem:[%s1658 + $0x20] sm:$0xff]
        %v1664 = vld [vmem:[%s1658 + $0x28] sm:$0xff]
        %v1665 = vld [vmem:[%s1658 + $0x30] sm:$0xff]
        %v1666 = vld [vmem:[%s1658 + $0x38] sm:$0xff]
        %v1675 = vunpack.c.l.b16 %v1659
        %v1676 = vunpack.c.h.b16 %v1659
        %v1677 = vunpack.c.l.b16 %v1660
        %v1678 = vunpack.c.h.b16 %v1660
        %v1679 = vunpack.c.l.b16 %v1661
        %v1680 = vunpack.c.h.b16 %v1661
        %v1681 = vunpack.c.l.b16 %v1662
        %v1682 = vunpack.c.h.b16 %v1662
        %v1683 = vunpack.c.l.b16 %v1663
        %v1684 = vunpack.c.h.b16 %v1663
        %v1685 = vunpack.c.l.b16 %v1664
        %v1686 = vunpack.c.h.b16 %v1664
        %v1687 = vunpack.c.l.b16 %v1665
        %v1688 = vunpack.c.h.b16 %v1665
        %v1689 = vunpack.c.l.b16 %v1666
        %v1690 = vunpack.c.h.b16 %v1666
        %v1691 = vpack.c.b16 %v1677, %v1675
        %v1692 = vpack.c.b16 %v1678, %v1676
        %v1693 = vpack.c.b16 %v1681, %v1679
        %v1694 = vpack.c.b16 %v1682, %v1680
        %v1695 = vpack.c.b16 %v1685, %v1683
        %v1696 = vpack.c.b16 %v1686, %v1684
        %v1697 = vpack.c.b16 %v1689, %v1687
        %v1698 = vpack.c.b16 %v1690, %v1688
        %1707 = vmatprep.subr.bf16.mxu0 0
        %1708 = vmatpush1.bf16.msra.mxu0 %v1226
        %1709 = vmatprep.subr.bf16.mxu0 0
        %1710 = vmatpush1.bf16.msra.mxu0 %v1225
        %1711 = vmatprep.subr.bf16.mxu0 0
        %1712 = vmatpush1.bf16.msra.mxu0 %v1224
        %1713 = vmatprep.subr.bf16.mxu0 0
        %1714 = vmatpush1.bf16.msra.mxu0 %v1223
        %1715 = vmatprep.subr.bf16.mxu0 0
        %1716 = vmatpush1.bf16.msra.mxu0 %v1222
        %1717 = vmatprep.subr.bf16.mxu0 0
        %1718 = vmatpush1.bf16.msra.mxu0 %v1221
        %1719 = vmatprep.subr.bf16.mxu0 0
        %1720 = vmatpush1.bf16.msra.mxu0 %v1220
        %1721 = vmatprep.subr.bf16.mxu0 0
        %1722 = vmatpush1.bf16.msra.mxu0 %v1219
        %1723 = vmatprep.subr.bf16.mxu0 0
        %1724 = vmatpush2.bf16.msra.mxu0 %v1234
        %1725 = vmatprep.subr.bf16.mxu0 0
        %1726 = vmatpush2.bf16.msra.mxu0 %v1233
        %1727 = vmatprep.subr.bf16.mxu0 0
        %1728 = vmatpush2.bf16.msra.mxu0 %v1232
        %1729 = vmatprep.subr.bf16.mxu0 0
        %1730 = vmatpush2.bf16.msra.mxu0 %v1231
        %1731 = vmatprep.subr.bf16.mxu0 0
        %1732 = vmatpush2.bf16.msra.mxu0 %v1230
        %1733 = vmatprep.subr.bf16.mxu0 0
        %1734 = vmatpush2.bf16.msra.mxu0 %v1229
        %1735 = vmatprep.subr.bf16.mxu0 0
        %1736 = vmatpush2.bf16.msra.mxu0 %v1228
        %1737 = vmatprep.subr.bf16.mxu0 0
        %1738 = vmatpush2.bf16.msra.mxu0 %v1227
        %1739 = vmatprep.mubr.bf16.mxu0 %v1692
        %1740 = vmatmul.mubr.bf16.gmra.mxu0 %v1691
        %v1741 = vpop.f32.mrf.mxu0
        %v1742 = vadd.f32 0.0, %v1741
        %v1743 = vpop.f32.mrf.mxu0
        %v1744 = vpop.f32.mrf.mxu0
        %v1745 = vadd.f32 0.0, %v1744
        %v1746 = vpop.f32.mrf.mxu0
        %1747 = vmatprep.mubr.bf16.mxu0 %v1694
        %1748 = vmatmul.mubr.bf16.gmra.mxu0 %v1693
        %v1749 = vpop.f32.mrf.mxu0
        %v1750 = vadd.f32 0.0, %v1749
        %v1751 = vpop.f32.mrf.mxu0
        %v1752 = vpop.f32.mrf.mxu0
        %v1753 = vadd.f32 0.0, %v1752
        %v1754 = vpop.f32.mrf.mxu0
        %1755 = vmatprep.mubr.bf16.mxu0 %v1696
        %1756 = vmatmul.mubr.bf16.gmra.mxu0 %v1695
        %v1757 = vpop.f32.mrf.mxu0
        %v1758 = vadd.f32 0.0, %v1757
        %v1759 = vpop.f32.mrf.mxu0
        %v1760 = vpop.f32.mrf.mxu0
        %v1761 = vadd.f32 0.0, %v1760
        %v1762 = vpop.f32.mrf.mxu0
        %1763 = vmatprep.mubr.bf16.mxu0 %v1698
        %1764 = vmatmul.mubr.bf16.gmra.mxu0 %v1697
        %v1765 = vpop.f32.mrf.mxu0
        %v1766 = vadd.f32 0.0, %v1765
        %v1767 = vpop.f32.mrf.mxu0
        %v1768 = vpop.f32.mrf.mxu0
        %v1769 = vadd.f32 0.0, %v1768
        %v1770 = vpop.f32.mrf.mxu0
        %1771 = vdwg.mxu0
        %v1772 = vpack.c.bf16 %v1745, %v1742
        %v1773 = vpack.c.bf16 %v1753, %v1750
        %v1774 = vpack.c.bf16 %v1761, %v1758
        %v1775 = vpack.c.bf16 %v1769, %v1766
        %s1776 = scalar_lea.vmem %s4, 8
        %v1777 = vld [vmem:[%s1776] sm:$0xf]
        %v1779 = vsel %vm1354, %v1772, 0
        %v1782 = vsel %vm1354, %v1773, 0
        %v1785 = vsel %vm1354, %v1774, 0
        %v1788 = vsel %vm1354, %v1775, 0
        %v1791 = vsel %vm1367, %v1777, 0
        %1793 = vmatprep.subr.bf16.mxu0 0
        %1794 = vmatpush1.bf16.msra.mxu0 0
        %1795 = vmatprep.subr.bf16.mxu0 0
        %1796 = vmatpush1.bf16.msra.mxu0 0
        %1797 = vmatprep.subr.bf16.mxu0 0
        %1798 = vmatpush1.bf16.msra.mxu0 0
        %1799 = vmatprep.subr.bf16.mxu0 0
        %1800 = vmatpush1.bf16.msra.mxu0 0
        %1801 = vmatprep.subr.bf16.mxu0 0
        %1802 = vmatpush1.bf16.msra.mxu0 0
        %1803 = vmatprep.subr.bf16.mxu0 0
        %1804 = vmatpush1.bf16.msra.mxu0 0
        %1805 = vmatprep.subr.bf16.mxu0 0
        %1806 = vmatpush1.bf16.msra.mxu0 0
        %1807 = vmatprep.subr.bf16.mxu0 0
        %1808 = vmatpush1.bf16.msra.mxu0 %v1791
        %1809 = vmatprep.subr.bf16.mxu0 0
        %1810 = vmatpush2.bf16.msra.mxu0 0
        %1811 = vmatprep.subr.bf16.mxu0 0
        %1812 = vmatpush2.bf16.msra.mxu0 0
        %1813 = vmatprep.subr.bf16.mxu0 0
        %1814 = vmatpush2.bf16.msra.mxu0 0
        %1815 = vmatprep.subr.bf16.mxu0 0
        %1816 = vmatpush2.bf16.msra.mxu0 0
        %1817 = vmatprep.subr.bf16.mxu0 0
        %1818 = vmatpush2.bf16.msra.mxu0 0
        %1819 = vmatprep.subr.bf16.mxu0 0
        %1820 = vmatpush2.bf16.msra.mxu0 0
        %1821 = vmatprep.subr.bf16.mxu0 0
        %1822 = vmatpush2.bf16.msra.mxu0 0
        %1823 = vmatprep.subr.bf16.mxu0 0
        %1824 = vmatpush2.bf16.msra.mxu0 0
        %1825 = vmatprep.mubr.bf16.mxu0 0
        %1826 = vmatmul.mubr.bf16.gmra.mxu0 %v1779
        %v1827 = vpop.f32.mrf.mxu0
        %v1828 = vadd.f32 0.0, %v1827
        %v1829 = vpop.f32.mrf.mxu0
        %v1830 = vpop.f32.mrf.mxu0
        %v1831 = vadd.f32 0.0, %v1830
        %v1832 = vpop.f32.mrf.mxu0
        %1833 = vmatprep.mubr.bf16.mxu0 0
        %1834 = vmatmul.mubr.bf16.gmra.mxu0 %v1782
        %v1835 = vpop.f32.mrf.mxu0
        %v1836 = vadd.f32 0.0, %v1835
        %v1837 = vpop.f32.mrf.mxu0
        %v1838 = vpop.f32.mrf.mxu0
        %v1839 = vadd.f32 0.0, %v1838
        %v1840 = vpop.f32.mrf.mxu0
        %1841 = vmatprep.mubr.bf16.mxu0 0
        %1842 = vmatmul.mubr.bf16.gmra.mxu0 %v1785
        %v1843 = vpop.f32.mrf.mxu0
        %v1844 = vadd.f32 0.0, %v1843
        %v1845 = vpop.f32.mrf.mxu0
        %v1846 = vpop.f32.mrf.mxu0
        %v1847 = vadd.f32 0.0, %v1846
        %v1848 = vpop.f32.mrf.mxu0
        %1849 = vmatprep.mubr.bf16.mxu0 0
        %1850 = vmatmul.mubr.bf16.gmra.mxu0 %v1788
        %v1851 = vpop.f32.mrf.mxu0
        %v1852 = vadd.f32 0.0, %v1851
        %v1853 = vpop.f32.mrf.mxu0
        %v1854 = vpop.f32.mrf.mxu0
        %v1855 = vadd.f32 0.0, %v1854
        %v1856 = vpop.f32.mrf.mxu0
        %1857 = vdwg.mxu0
        %v1858 = vadd.f32 %v1650, %v1828
        %v1859 = vadd.f32 %v1651, %v1831
        %v1860 = vadd.f32 %v1652, %v1836
        %v1861 = vadd.f32 %v1653, %v1839
        %v1862 = vadd.f32 %v1654, %v1844
        %v1863 = vadd.f32 %v1655, %v1847
        %v1864 = vadd.f32 %v1656, %v1852
        %v1865 = vadd.f32 %v1657, %v1855
        %s1866 = scalar_lea.vmem %s3, 192
        %v1867 = vld [vmem:[%s1866] sm:$0xff]
        %v1868 = vld [vmem:[%s1866 + $0x8] sm:$0xff]
        %v1869 = vld [vmem:[%s1866 + $0x10] sm:$0xff]
        %v1870 = vld [vmem:[%s1866 + $0x18] sm:$0xff]
        %v1871 = vld [vmem:[%s1866 + $0x20] sm:$0xff]
        %v1872 = vld [vmem:[%s1866 + $0x28] sm:$0xff]
        %v1873 = vld [vmem:[%s1866 + $0x30] sm:$0xff]
        %v1874 = vld [vmem:[%s1866 + $0x38] sm:$0xff]
        %v1883 = vunpack.c.l.b16 %v1867
        %v1884 = vunpack.c.h.b16 %v1867
        %v1885 = vunpack.c.l.b16 %v1868
        %v1886 = vunpack.c.h.b16 %v1868
        %v1887 = vunpack.c.l.b16 %v1869
        %v1888 = vunpack.c.h.b16 %v1869
        %v1889 = vunpack.c.l.b16 %v1870
        %v1890 = vunpack.c.h.b16 %v1870
        %v1891 = vunpack.c.l.b16 %v1871
        %v1892 = vunpack.c.h.b16 %v1871
        %v1893 = vunpack.c.l.b16 %v1872
        %v1894 = vunpack.c.h.b16 %v1872
        %v1895 = vunpack.c.l.b16 %v1873
        %v1896 = vunpack.c.h.b16 %v1873
        %v1897 = vunpack.c.l.b16 %v1874
        %v1898 = vunpack.c.h.b16 %v1874
        %v1899 = vpack.c.b16 %v1885, %v1883
        %v1900 = vpack.c.b16 %v1886, %v1884
        %v1901 = vpack.c.b16 %v1889, %v1887
        %v1902 = vpack.c.b16 %v1890, %v1888
        %v1903 = vpack.c.b16 %v1893, %v1891
        %v1904 = vpack.c.b16 %v1894, %v1892
        %v1905 = vpack.c.b16 %v1897, %v1895
        %v1906 = vpack.c.b16 %v1898, %v1896
        %1915 = vmatprep.subr.bf16.mxu0 0
        %1916 = vmatpush1.bf16.msra.mxu0 %v1226
        %1917 = vmatprep.subr.bf16.mxu0 0
        %1918 = vmatpush1.bf16.msra.mxu0 %v1225
        %1919 = vmatprep.subr.bf16.mxu0 0
        %1920 = vmatpush1.bf16.msra.mxu0 %v1224
        %1921 = vmatprep.subr.bf16.mxu0 0
        %1922 = vmatpush1.bf16.msra.mxu0 %v1223
        %1923 = vmatprep.subr.bf16.mxu0 0
        %1924 = vmatpush1.bf16.msra.mxu0 %v1222
        %1925 = vmatprep.subr.bf16.mxu0 0
        %1926 = vmatpush1.bf16.msra.mxu0 %v1221
        %1927 = vmatprep.subr.bf16.mxu0 0
        %1928 = vmatpush1.bf16.msra.mxu0 %v1220
        %1929 = vmatprep.subr.bf16.mxu0 0
        %1930 = vmatpush1.bf16.msra.mxu0 %v1219
        %1931 = vmatprep.subr.bf16.mxu0 0
        %1932 = vmatpush2.bf16.msra.mxu0 %v1234
        %1933 = vmatprep.subr.bf16.mxu0 0
        %1934 = vmatpush2.bf16.msra.mxu0 %v1233
        %1935 = vmatprep.subr.bf16.mxu0 0
        %1936 = vmatpush2.bf16.msra.mxu0 %v1232
        %1937 = vmatprep.subr.bf16.mxu0 0
        %1938 = vmatpush2.bf16.msra.mxu0 %v1231
        %1939 = vmatprep.subr.bf16.mxu0 0
        %1940 = vmatpush2.bf16.msra.mxu0 %v1230
        %1941 = vmatprep.subr.bf16.mxu0 0
        %1942 = vmatpush2.bf16.msra.mxu0 %v1229
        %1943 = vmatprep.subr.bf16.mxu0 0
        %1944 = vmatpush2.bf16.msra.mxu0 %v1228
        %1945 = vmatprep.subr.bf16.mxu0 0
        %1946 = vmatpush2.bf16.msra.mxu0 %v1227
        %1947 = vmatprep.mubr.bf16.mxu0 %v1900
        %1948 = vmatmul.mubr.bf16.gmra.mxu0 %v1899
        %v1949 = vpop.f32.mrf.mxu0
        %v1950 = vadd.f32 0.0, %v1949
        %v1951 = vpop.f32.mrf.mxu0
        %v1952 = vpop.f32.mrf.mxu0
        %v1953 = vadd.f32 0.0, %v1952
        %v1954 = vpop.f32.mrf.mxu0
        %1955 = vmatprep.mubr.bf16.mxu0 %v1902
        %1956 = vmatmul.mubr.bf16.gmra.mxu0 %v1901
        %v1957 = vpop.f32.mrf.mxu0
        %v1958 = vadd.f32 0.0, %v1957
        %v1959 = vpop.f32.mrf.mxu0
        %v1960 = vpop.f32.mrf.mxu0
        %v1961 = vadd.f32 0.0, %v1960
        %v1962 = vpop.f32.mrf.mxu0
        %1963 = vmatprep.mubr.bf16.mxu0 %v1904
        %1964 = vmatmul.mubr.bf16.gmra.mxu0 %v1903
        %v1965 = vpop.f32.mrf.mxu0
        %v1966 = vadd.f32 0.0, %v1965
        %v1967 = vpop.f32.mrf.mxu0
        %v1968 = vpop.f32.mrf.mxu0
        %v1969 = vadd.f32 0.0, %v1968
        %v1970 = vpop.f32.mrf.mxu0
        %1971 = vmatprep.mubr.bf16.mxu0 %v1906
        %1972 = vmatmul.mubr.bf16.gmra.mxu0 %v1905
        %v1973 = vpop.f32.mrf.mxu0
        %v1974 = vadd.f32 0.0, %v1973
        %v1975 = vpop.f32.mrf.mxu0
        %v1976 = vpop.f32.mrf.mxu0
        %v1977 = vadd.f32 0.0, %v1976
        %v1978 = vpop.f32.mrf.mxu0
        %1979 = vdwg.mxu0
        %v1980 = vpack.c.bf16 %v1953, %v1950
        %v1981 = vpack.c.bf16 %v1961, %v1958
        %v1982 = vpack.c.bf16 %v1969, %v1966
        %v1983 = vpack.c.bf16 %v1977, %v1974
        %s1984 = scalar_lea.vmem %s4, 12
        %v1985 = vld [vmem:[%s1984] sm:$0xf]
        %v1987 = vsel %vm1354, %v1980, 0
        %v1990 = vsel %vm1354, %v1981, 0
        %v1993 = vsel %vm1354, %v1982, 0
        %v1996 = vsel %vm1354, %v1983, 0
        %v1999 = vsel %vm1367, %v1985, 0
        %2001 = vmatprep.subr.bf16.mxu0 0
        %2002 = vmatpush1.bf16.msra.mxu0 0
        %2003 = vmatprep.subr.bf16.mxu0 0
        %2004 = vmatpush1.bf16.msra.mxu0 0
        %2005 = vmatprep.subr.bf16.mxu0 0
        %2006 = vmatpush1.bf16.msra.mxu0 0
        %2007 = vmatprep.subr.bf16.mxu0 0
        %2008 = vmatpush1.bf16.msra.mxu0 0
        %2009 = vmatprep.subr.bf16.mxu0 0
        %2010 = vmatpush1.bf16.msra.mxu0 0
        %2011 = vmatprep.subr.bf16.mxu0 0
        %2012 = vmatpush1.bf16.msra.mxu0 0
        %2013 = vmatprep.subr.bf16.mxu0 0
        %2014 = vmatpush1.bf16.msra.mxu0 0
        %2015 = vmatprep.subr.bf16.mxu0 0
        %2016 = vmatpush1.bf16.msra.mxu0 %v1999
        %2017 = vmatprep.subr.bf16.mxu0 0
        %2018 = vmatpush2.bf16.msra.mxu0 0
        %2019 = vmatprep.subr.bf16.mxu0 0
        %2020 = vmatpush2.bf16.msra.mxu0 0
        %2021 = vmatprep.subr.bf16.mxu0 0
        %2022 = vmatpush2.bf16.msra.mxu0 0
        %2023 = vmatprep.subr.bf16.mxu0 0
        %2024 = vmatpush2.bf16.msra.mxu0 0
        %2025 = vmatprep.subr.bf16.mxu0 0
        %2026 = vmatpush2.bf16.msra.mxu0 0
        %2027 = vmatprep.subr.bf16.mxu0 0
        %2028 = vmatpush2.bf16.msra.mxu0 0
        %2029 = vmatprep.subr.bf16.mxu0 0
        %2030 = vmatpush2.bf16.msra.mxu0 0
        %2031 = vmatprep.subr.bf16.mxu0 0
        %2032 = vmatpush2.bf16.msra.mxu0 0
        %2033 = vmatprep.mubr.bf16.mxu0 0
        %2034 = vmatmul.mubr.bf16.gmra.mxu0 %v1987
        %v2035 = vpop.f32.mrf.mxu0
        %v2036 = vadd.f32 0.0, %v2035
        %v2037 = vpop.f32.mrf.mxu0
        %v2038 = vpop.f32.mrf.mxu0
        %v2039 = vadd.f32 0.0, %v2038
        %v2040 = vpop.f32.mrf.mxu0
        %2041 = vmatprep.mubr.bf16.mxu0 0
        %2042 = vmatmul.mubr.bf16.gmra.mxu0 %v1990
        %v2043 = vpop.f32.mrf.mxu0
        %v2044 = vadd.f32 0.0, %v2043
        %v2045 = vpop.f32.mrf.mxu0
        %v2046 = vpop.f32.mrf.mxu0
        %v2047 = vadd.f32 0.0, %v2046
        %v2048 = vpop.f32.mrf.mxu0
        %2049 = vmatprep.mubr.bf16.mxu0 0
        %2050 = vmatmul.mubr.bf16.gmra.mxu0 %v1993
        %v2051 = vpop.f32.mrf.mxu0
        %v2052 = vadd.f32 0.0, %v2051
        %v2053 = vpop.f32.mrf.mxu0
        %v2054 = vpop.f32.mrf.mxu0
        %v2055 = vadd.f32 0.0, %v2054
        %v2056 = vpop.f32.mrf.mxu0
        %2057 = vmatprep.mubr.bf16.mxu0 0
        %2058 = vmatmul.mubr.bf16.gmra.mxu0 %v1996
        %v2059 = vpop.f32.mrf.mxu0
        %v2060 = vadd.f32 0.0, %v2059
        %v2061 = vpop.f32.mrf.mxu0
        %v2062 = vpop.f32.mrf.mxu0
        %v2063 = vadd.f32 0.0, %v2062
        %v2064 = vpop.f32.mrf.mxu0
        %2065 = vdwg.mxu0
        %v2066 = vadd.f32 %v1858, %v2036
        %v2067 = vadd.f32 %v1859, %v2039
        %v2068 = vadd.f32 %v1860, %v2044
        %v2069 = vadd.f32 %v1861, %v2047
        %v2070 = vadd.f32 %v1862, %v2052
        %v2071 = vadd.f32 %v1863, %v2055
        %v2072 = vadd.f32 %v1864, %v2060
        %v2073 = vadd.f32 %v1865, %v2063
        %s2074 = scalar_lea.vmem %s3, 256
        %v2075 = vld [vmem:[%s2074] sm:$0xff]
        %v2076 = vld [vmem:[%s2074 + $0x8] sm:$0xff]
        %v2077 = vld [vmem:[%s2074 + $0x10] sm:$0xff]
        %v2078 = vld [vmem:[%s2074 + $0x18] sm:$0xff]
        %v2079 = vld [vmem:[%s2074 + $0x20] sm:$0xff]
        %v2080 = vld [vmem:[%s2074 + $0x28] sm:$0xff]
        %v2081 = vld [vmem:[%s2074 + $0x30] sm:$0xff]
        %v2082 = vld [vmem:[%s2074 + $0x38] sm:$0xff]
        %v2091 = vunpack.c.l.b16 %v2075
        %v2092 = vunpack.c.h.b16 %v2075
        %v2093 = vunpack.c.l.b16 %v2076
        %v2094 = vunpack.c.h.b16 %v2076
        %v2095 = vunpack.c.l.b16 %v2077
        %v2096 = vunpack.c.h.b16 %v2077
        %v2097 = vunpack.c.l.b16 %v2078
        %v2098 = vunpack.c.h.b16 %v2078
        %v2099 = vunpack.c.l.b16 %v2079
        %v2100 = vunpack.c.h.b16 %v2079
        %v2101 = vunpack.c.l.b16 %v2080
        %v2102 = vunpack.c.h.b16 %v2080
        %v2103 = vunpack.c.l.b16 %v2081
        %v2104 = vunpack.c.h.b16 %v2081
        %v2105 = vunpack.c.l.b16 %v2082
        %v2106 = vunpack.c.h.b16 %v2082
        %v2107 = vpack.c.b16 %v2093, %v2091
        %v2108 = vpack.c.b16 %v2094, %v2092
        %v2109 = vpack.c.b16 %v2097, %v2095
        %v2110 = vpack.c.b16 %v2098, %v2096
        %v2111 = vpack.c.b16 %v2101, %v2099
        %v2112 = vpack.c.b16 %v2102, %v2100
        %v2113 = vpack.c.b16 %v2105, %v2103
        %v2114 = vpack.c.b16 %v2106, %v2104
        %2123 = vmatprep.subr.bf16.mxu0 0
        %2124 = vmatpush1.bf16.msra.mxu0 %v1226
        %2125 = vmatprep.subr.bf16.mxu0 0
        %2126 = vmatpush1.bf16.msra.mxu0 %v1225
        %2127 = vmatprep.subr.bf16.mxu0 0
        %2128 = vmatpush1.bf16.msra.mxu0 %v1224
        %2129 = vmatprep.subr.bf16.mxu0 0
        %2130 = vmatpush1.bf16.msra.mxu0 %v1223
        %2131 = vmatprep.subr.bf16.mxu0 0
        %2132 = vmatpush1.bf16.msra.mxu0 %v1222
        %2133 = vmatprep.subr.bf16.mxu0 0
        %2134 = vmatpush1.bf16.msra.mxu0 %v1221
        %2135 = vmatprep.subr.bf16.mxu0 0
        %2136 = vmatpush1.bf16.msra.mxu0 %v1220
        %2137 = vmatprep.subr.bf16.mxu0 0
        %2138 = vmatpush1.bf16.msra.mxu0 %v1219
        %2139 = vmatprep.subr.bf16.mxu0 0
        %2140 = vmatpush2.bf16.msra.mxu0 %v1234
        %2141 = vmatprep.subr.bf16.mxu0 0
        %2142 = vmatpush2.bf16.msra.mxu0 %v1233
        %2143 = vmatprep.subr.bf16.mxu0 0
        %2144 = vmatpush2.bf16.msra.mxu0 %v1232
        %2145 = vmatprep.subr.bf16.mxu0 0
        %2146 = vmatpush2.bf16.msra.mxu0 %v1231
        %2147 = vmatprep.subr.bf16.mxu0 0
        %2148 = vmatpush2.bf16.msra.mxu0 %v1230
        %2149 = vmatprep.subr.bf16.mxu0 0
        %2150 = vmatpush2.bf16.msra.mxu0 %v1229
        %2151 = vmatprep.subr.bf16.mxu0 0
        %2152 = vmatpush2.bf16.msra.mxu0 %v1228
        %2153 = vmatprep.subr.bf16.mxu0 0
        %2154 = vmatpush2.bf16.msra.mxu0 %v1227
        %2155 = vmatprep.mubr.bf16.mxu0 %v2108
        %2156 = vmatmul.mubr.bf16.gmra.mxu0 %v2107
        %v2157 = vpop.f32.mrf.mxu0
        %v2158 = vadd.f32 0.0, %v2157
        %v2159 = vpop.f32.mrf.mxu0
        %v2160 = vpop.f32.mrf.mxu0
        %v2161 = vadd.f32 0.0, %v2160
        %v2162 = vpop.f32.mrf.mxu0
        %2163 = vmatprep.mubr.bf16.mxu0 %v2110
        %2164 = vmatmul.mubr.bf16.gmra.mxu0 %v2109
        %v2165 = vpop.f32.mrf.mxu0
        %v2166 = vadd.f32 0.0, %v2165
        %v2167 = vpop.f32.mrf.mxu0
        %v2168 = vpop.f32.mrf.mxu0
        %v2169 = vadd.f32 0.0, %v2168
        %v2170 = vpop.f32.mrf.mxu0
        %2171 = vmatprep.mubr.bf16.mxu0 %v2112
        %2172 = vmatmul.mubr.bf16.gmra.mxu0 %v2111
        %v2173 = vpop.f32.mrf.mxu0
        %v2174 = vadd.f32 0.0, %v2173
        %v2175 = vpop.f32.mrf.mxu0
        %v2176 = vpop.f32.mrf.mxu0
        %v2177 = vadd.f32 0.0, %v2176
        %v2178 = vpop.f32.mrf.mxu0
        %2179 = vmatprep.mubr.bf16.mxu0 %v2114
        %2180 = vmatmul.mubr.bf16.gmra.mxu0 %v2113
        %v2181 = vpop.f32.mrf.mxu0
        %v2182 = vadd.f32 0.0, %v2181
        %v2183 = vpop.f32.mrf.mxu0
        %v2184 = vpop.f32.mrf.mxu0
        %v2185 = vadd.f32 0.0, %v2184
        %v2186 = vpop.f32.mrf.mxu0
        %2187 = vdwg.mxu0
        %v2188 = vpack.c.bf16 %v2161, %v2158
        %v2189 = vpack.c.bf16 %v2169, %v2166
        %v2190 = vpack.c.bf16 %v2177, %v2174
        %v2191 = vpack.c.bf16 %v2185, %v2182
        %s2192 = scalar_lea.vmem %s4, 16
        %v2193 = vld [vmem:[%s2192] sm:$0xf]
        %v2195 = vsel %vm1354, %v2188, 0
        %v2198 = vsel %vm1354, %v2189, 0
        %v2201 = vsel %vm1354, %v2190, 0
        %v2204 = vsel %vm1354, %v2191, 0
        %v2207 = vsel %vm1367, %v2193, 0
        %2209 = vmatprep.subr.bf16.mxu0 0
        %2210 = vmatpush1.bf16.msra.mxu0 0
        %2211 = vmatprep.subr.bf16.mxu0 0
        %2212 = vmatpush1.bf16.msra.mxu0 0
        %2213 = vmatprep.subr.bf16.mxu0 0
        %2214 = vmatpush1.bf16.msra.mxu0 0
        %2215 = vmatprep.subr.bf16.mxu0 0
        %2216 = vmatpush1.bf16.msra.mxu0 0
        %2217 = vmatprep.subr.bf16.mxu0 0
        %2218 = vmatpush1.bf16.msra.mxu0 0
        %2219 = vmatprep.subr.bf16.mxu0 0
        %2220 = vmatpush1.bf16.msra.mxu0 0
        %2221 = vmatprep.subr.bf16.mxu0 0
        %2222 = vmatpush1.bf16.msra.mxu0 0
        %2223 = vmatprep.subr.bf16.mxu0 0
        %2224 = vmatpush1.bf16.msra.mxu0 %v2207
        %2225 = vmatprep.subr.bf16.mxu0 0
        %2226 = vmatpush2.bf16.msra.mxu0 0
        %2227 = vmatprep.subr.bf16.mxu0 0
        %2228 = vmatpush2.bf16.msra.mxu0 0
        %2229 = vmatprep.subr.bf16.mxu0 0
        %2230 = vmatpush2.bf16.msra.mxu0 0
        %2231 = vmatprep.subr.bf16.mxu0 0
        %2232 = vmatpush2.bf16.msra.mxu0 0
        %2233 = vmatprep.subr.bf16.mxu0 0
        %2234 = vmatpush2.bf16.msra.mxu0 0
        %2235 = vmatprep.subr.bf16.mxu0 0
        %2236 = vmatpush2.bf16.msra.mxu0 0
        %2237 = vmatprep.subr.bf16.mxu0 0
        %2238 = vmatpush2.bf16.msra.mxu0 0
        %2239 = vmatprep.subr.bf16.mxu0 0
        %2240 = vmatpush2.bf16.msra.mxu0 0
        %2241 = vmatprep.mubr.bf16.mxu0 0
        %2242 = vmatmul.mubr.bf16.gmra.mxu0 %v2195
        %v2243 = vpop.f32.mrf.mxu0
        %v2244 = vadd.f32 0.0, %v2243
        %v2245 = vpop.f32.mrf.mxu0
        %v2246 = vpop.f32.mrf.mxu0
        %v2247 = vadd.f32 0.0, %v2246
        %v2248 = vpop.f32.mrf.mxu0
        %2249 = vmatprep.mubr.bf16.mxu0 0
        %2250 = vmatmul.mubr.bf16.gmra.mxu0 %v2198
        %v2251 = vpop.f32.mrf.mxu0
        %v2252 = vadd.f32 0.0, %v2251
        %v2253 = vpop.f32.mrf.mxu0
        %v2254 = vpop.f32.mrf.mxu0
        %v2255 = vadd.f32 0.0, %v2254
        %v2256 = vpop.f32.mrf.mxu0
        %2257 = vmatprep.mubr.bf16.mxu0 0
        %2258 = vmatmul.mubr.bf16.gmra.mxu0 %v2201
        %v2259 = vpop.f32.mrf.mxu0
        %v2260 = vadd.f32 0.0, %v2259
        %v2261 = vpop.f32.mrf.mxu0
        %v2262 = vpop.f32.mrf.mxu0
        %v2263 = vadd.f32 0.0, %v2262
        %v2264 = vpop.f32.mrf.mxu0
        %2265 = vmatprep.mubr.bf16.mxu0 0
        %2266 = vmatmul.mubr.bf16.gmra.mxu0 %v2204
        %v2267 = vpop.f32.mrf.mxu0
        %v2268 = vadd.f32 0.0, %v2267
        %v2269 = vpop.f32.mrf.mxu0
        %v2270 = vpop.f32.mrf.mxu0
        %v2271 = vadd.f32 0.0, %v2270
        %v2272 = vpop.f32.mrf.mxu0
        %2273 = vdwg.mxu0
        %v2274 = vadd.f32 %v2066, %v2244
        %v2275 = vadd.f32 %v2067, %v2247
        %v2276 = vadd.f32 %v2068, %v2252
        %v2277 = vadd.f32 %v2069, %v2255
        %v2278 = vadd.f32 %v2070, %v2260
        %v2279 = vadd.f32 %v2071, %v2263
        %v2280 = vadd.f32 %v2072, %v2268
        %v2281 = vadd.f32 %v2073, %v2271
        %s2282 = scalar_lea.vmem %s3, 320
        %v2283 = vld [vmem:[%s2282] sm:$0xff]
        %v2284 = vld [vmem:[%s2282 + $0x8] sm:$0xff]
        %v2285 = vld [vmem:[%s2282 + $0x10] sm:$0xff]
        %v2286 = vld [vmem:[%s2282 + $0x18] sm:$0xff]
        %v2287 = vld [vmem:[%s2282 + $0x20] sm:$0xff]
        %v2288 = vld [vmem:[%s2282 + $0x28] sm:$0xff]
        %v2289 = vld [vmem:[%s2282 + $0x30] sm:$0xff]
        %v2290 = vld [vmem:[%s2282 + $0x38] sm:$0xff]
        %v2299 = vunpack.c.l.b16 %v2283
        %v2300 = vunpack.c.h.b16 %v2283
        %v2301 = vunpack.c.l.b16 %v2284
        %v2302 = vunpack.c.h.b16 %v2284
        %v2303 = vunpack.c.l.b16 %v2285
        %v2304 = vunpack.c.h.b16 %v2285
        %v2305 = vunpack.c.l.b16 %v2286
        %v2306 = vunpack.c.h.b16 %v2286
        %v2307 = vunpack.c.l.b16 %v2287
        %v2308 = vunpack.c.h.b16 %v2287
        %v2309 = vunpack.c.l.b16 %v2288
        %v2310 = vunpack.c.h.b16 %v2288
        %v2311 = vunpack.c.l.b16 %v2289
        %v2312 = vunpack.c.h.b16 %v2289
        %v2313 = vunpack.c.l.b16 %v2290
        %v2314 = vunpack.c.h.b16 %v2290
        %v2315 = vpack.c.b16 %v2301, %v2299
        %v2316 = vpack.c.b16 %v2302, %v2300
        %v2317 = vpack.c.b16 %v2305, %v2303
        %v2318 = vpack.c.b16 %v2306, %v2304
        %v2319 = vpack.c.b16 %v2309, %v2307
        %v2320 = vpack.c.b16 %v2310, %v2308
        %v2321 = vpack.c.b16 %v2313, %v2311
        %v2322 = vpack.c.b16 %v2314, %v2312
        %2331 = vmatprep.subr.bf16.mxu0 0
        %2332 = vmatpush1.bf16.msra.mxu0 %v1226
        %2333 = vmatprep.subr.bf16.mxu0 0
        %2334 = vmatpush1.bf16.msra.mxu0 %v1225
        %2335 = vmatprep.subr.bf16.mxu0 0
        %2336 = vmatpush1.bf16.msra.mxu0 %v1224
        %2337 = vmatprep.subr.bf16.mxu0 0
        %2338 = vmatpush1.bf16.msra.mxu0 %v1223
        %2339 = vmatprep.subr.bf16.mxu0 0
        %2340 = vmatpush1.bf16.msra.mxu0 %v1222
        %2341 = vmatprep.subr.bf16.mxu0 0
        %2342 = vmatpush1.bf16.msra.mxu0 %v1221
        %2343 = vmatprep.subr.bf16.mxu0 0
        %2344 = vmatpush1.bf16.msra.mxu0 %v1220
        %2345 = vmatprep.subr.bf16.mxu0 0
        %2346 = vmatpush1.bf16.msra.mxu0 %v1219
        %2347 = vmatprep.subr.bf16.mxu0 0
        %2348 = vmatpush2.bf16.msra.mxu0 %v1234
        %2349 = vmatprep.subr.bf16.mxu0 0
        %2350 = vmatpush2.bf16.msra.mxu0 %v1233
        %2351 = vmatprep.subr.bf16.mxu0 0
        %2352 = vmatpush2.bf16.msra.mxu0 %v1232
        %2353 = vmatprep.subr.bf16.mxu0 0
        %2354 = vmatpush2.bf16.msra.mxu0 %v1231
        %2355 = vmatprep.subr.bf16.mxu0 0
        %2356 = vmatpush2.bf16.msra.mxu0 %v1230
        %2357 = vmatprep.subr.bf16.mxu0 0
        %2358 = vmatpush2.bf16.msra.mxu0 %v1229
        %2359 = vmatprep.subr.bf16.mxu0 0
        %2360 = vmatpush2.bf16.msra.mxu0 %v1228
        %2361 = vmatprep.subr.bf16.mxu0 0
        %2362 = vmatpush2.bf16.msra.mxu0 %v1227
        %2363 = vmatprep.mubr.bf16.mxu0 %v2316
        %2364 = vmatmul.mubr.bf16.gmra.mxu0 %v2315
        %v2365 = vpop.f32.mrf.mxu0
        %v2366 = vadd.f32 0.0, %v2365
        %v2367 = vpop.f32.mrf.mxu0
        %v2368 = vpop.f32.mrf.mxu0
        %v2369 = vadd.f32 0.0, %v2368
        %v2370 = vpop.f32.mrf.mxu0
        %2371 = vmatprep.mubr.bf16.mxu0 %v2318
        %2372 = vmatmul.mubr.bf16.gmra.mxu0 %v2317
        %v2373 = vpop.f32.mrf.mxu0
        %v2374 = vadd.f32 0.0, %v2373
        %v2375 = vpop.f32.mrf.mxu0
        %v2376 = vpop.f32.mrf.mxu0
        %v2377 = vadd.f32 0.0, %v2376
        %v2378 = vpop.f32.mrf.mxu0
        %2379 = vmatprep.mubr.bf16.mxu0 %v2320
        %2380 = vmatmul.mubr.bf16.gmra.mxu0 %v2319
        %v2381 = vpop.f32.mrf.mxu0
        %v2382 = vadd.f32 0.0, %v2381
        %v2383 = vpop.f32.mrf.mxu0
        %v2384 = vpop.f32.mrf.mxu0
        %v2385 = vadd.f32 0.0, %v2384
        %v2386 = vpop.f32.mrf.mxu0
        %2387 = vmatprep.mubr.bf16.mxu0 %v2322
        %2388 = vmatmul.mubr.bf16.gmra.mxu0 %v2321
        %v2389 = vpop.f32.mrf.mxu0
        %v2390 = vadd.f32 0.0, %v2389
        %v2391 = vpop.f32.mrf.mxu0
        %v2392 = vpop.f32.mrf.mxu0
        %v2393 = vadd.f32 0.0, %v2392
        %v2394 = vpop.f32.mrf.mxu0
        %2395 = vdwg.mxu0
        %v2396 = vpack.c.bf16 %v2369, %v2366
        %v2397 = vpack.c.bf16 %v2377, %v2374
        %v2398 = vpack.c.bf16 %v2385, %v2382
        %v2399 = vpack.c.bf16 %v2393, %v2390
        %s2400 = scalar_lea.vmem %s4, 20
        %v2401 = vld [vmem:[%s2400] sm:$0xf]
        %v2403 = vsel %vm1354, %v2396, 0
        %v2406 = vsel %vm1354, %v2397, 0
        %v2409 = vsel %vm1354, %v2398, 0
        %v2412 = vsel %vm1354, %v2399, 0
        %v2415 = vsel %vm1367, %v2401, 0
        %2417 = vmatprep.subr.bf16.mxu0 0
        %2418 = vmatpush1.bf16.msra.mxu0 0
        %2419 = vmatprep.subr.bf16.mxu0 0
        %2420 = vmatpush1.bf16.msra.mxu0 0
        %2421 = vmatprep.subr.bf16.mxu0 0
        %2422 = vmatpush1.bf16.msra.mxu0 0
        %2423 = vmatprep.subr.bf16.mxu0 0
        %2424 = vmatpush1.bf16.msra.mxu0 0
        %2425 = vmatprep.subr.bf16.mxu0 0
        %2426 = vmatpush1.bf16.msra.mxu0 0
        %2427 = vmatprep.subr.bf16.mxu0 0
        %2428 = vmatpush1.bf16.msra.mxu0 0
        %2429 = vmatprep.subr.bf16.mxu0 0
        %2430 = vmatpush1.bf16.msra.mxu0 0
        %2431 = vmatprep.subr.bf16.mxu0 0
        %2432 = vmatpush1.bf16.msra.mxu0 %v2415
        %2433 = vmatprep.subr.bf16.mxu0 0
        %2434 = vmatpush2.bf16.msra.mxu0 0
        %2435 = vmatprep.subr.bf16.mxu0 0
        %2436 = vmatpush2.bf16.msra.mxu0 0
        %2437 = vmatprep.subr.bf16.mxu0 0
        %2438 = vmatpush2.bf16.msra.mxu0 0
        %2439 = vmatprep.subr.bf16.mxu0 0
        %2440 = vmatpush2.bf16.msra.mxu0 0
        %2441 = vmatprep.subr.bf16.mxu0 0
        %2442 = vmatpush2.bf16.msra.mxu0 0
        %2443 = vmatprep.subr.bf16.mxu0 0
        %2444 = vmatpush2.bf16.msra.mxu0 0
        %2445 = vmatprep.subr.bf16.mxu0 0
        %2446 = vmatpush2.bf16.msra.mxu0 0
        %2447 = vmatprep.subr.bf16.mxu0 0
        %2448 = vmatpush2.bf16.msra.mxu0 0
        %2449 = vmatprep.mubr.bf16.mxu0 0
        %2450 = vmatmul.mubr.bf16.gmra.mxu0 %v2403
        %v2451 = vpop.f32.mrf.mxu0
        %v2452 = vadd.f32 0.0, %v2451
        %v2453 = vpop.f32.mrf.mxu0
        %v2454 = vpop.f32.mrf.mxu0
        %v2455 = vadd.f32 0.0, %v2454
        %v2456 = vpop.f32.mrf.mxu0
        %2457 = vmatprep.mubr.bf16.mxu0 0
        %2458 = vmatmul.mubr.bf16.gmra.mxu0 %v2406
        %v2459 = vpop.f32.mrf.mxu0
        %v2460 = vadd.f32 0.0, %v2459
        %v2461 = vpop.f32.mrf.mxu0
        %v2462 = vpop.f32.mrf.mxu0
        %v2463 = vadd.f32 0.0, %v2462
        %v2464 = vpop.f32.mrf.mxu0
        %2465 = vmatprep.mubr.bf16.mxu0 0
        %2466 = vmatmul.mubr.bf16.gmra.mxu0 %v2409
        %v2467 = vpop.f32.mrf.mxu0
        %v2468 = vadd.f32 0.0, %v2467
        %v2469 = vpop.f32.mrf.mxu0
        %v2470 = vpop.f32.mrf.mxu0
        %v2471 = vadd.f32 0.0, %v2470
        %v2472 = vpop.f32.mrf.mxu0
        %2473 = vmatprep.mubr.bf16.mxu0 0
        %2474 = vmatmul.mubr.bf16.gmra.mxu0 %v2412
        %v2475 = vpop.f32.mrf.mxu0
        %v2476 = vadd.f32 0.0, %v2475
        %v2477 = vpop.f32.mrf.mxu0
        %v2478 = vpop.f32.mrf.mxu0
        %v2479 = vadd.f32 0.0, %v2478
        %v2480 = vpop.f32.mrf.mxu0
        %2481 = vdwg.mxu0
        %v2482 = vadd.f32 %v2274, %v2452
        %v2483 = vadd.f32 %v2275, %v2455
        %v2484 = vadd.f32 %v2276, %v2460
        %v2485 = vadd.f32 %v2277, %v2463
        %v2486 = vadd.f32 %v2278, %v2468
        %v2487 = vadd.f32 %v2279, %v2471
        %v2488 = vadd.f32 %v2280, %v2476
        %v2489 = vadd.f32 %v2281, %v2479
        %s2490 = scalar_lea.vmem %s3, 384
        %v2491 = vld [vmem:[%s2490] sm:$0xff]
        %v2492 = vld [vmem:[%s2490 + $0x8] sm:$0xff]
        %v2493 = vld [vmem:[%s2490 + $0x10] sm:$0xff]
        %v2494 = vld [vmem:[%s2490 + $0x18] sm:$0xff]
        %v2495 = vld [vmem:[%s2490 + $0x20] sm:$0xff]
        %v2496 = vld [vmem:[%s2490 + $0x28] sm:$0xff]
        %v2497 = vld [vmem:[%s2490 + $0x30] sm:$0xff]
        %v2498 = vld [vmem:[%s2490 + $0x38] sm:$0xff]
        %v2507 = vunpack.c.l.b16 %v2491
        %v2508 = vunpack.c.h.b16 %v2491
        %v2509 = vunpack.c.l.b16 %v2492
        %v2510 = vunpack.c.h.b16 %v2492
        %v2511 = vunpack.c.l.b16 %v2493
        %v2512 = vunpack.c.h.b16 %v2493
        %v2513 = vunpack.c.l.b16 %v2494
        %v2514 = vunpack.c.h.b16 %v2494
        %v2515 = vunpack.c.l.b16 %v2495
        %v2516 = vunpack.c.h.b16 %v2495
        %v2517 = vunpack.c.l.b16 %v2496
        %v2518 = vunpack.c.h.b16 %v2496
        %v2519 = vunpack.c.l.b16 %v2497
        %v2520 = vunpack.c.h.b16 %v2497
        %v2521 = vunpack.c.l.b16 %v2498
        %v2522 = vunpack.c.h.b16 %v2498
        %v2523 = vpack.c.b16 %v2509, %v2507
        %v2524 = vpack.c.b16 %v2510, %v2508
        %v2525 = vpack.c.b16 %v2513, %v2511
        %v2526 = vpack.c.b16 %v2514, %v2512
        %v2527 = vpack.c.b16 %v2517, %v2515
        %v2528 = vpack.c.b16 %v2518, %v2516
        %v2529 = vpack.c.b16 %v2521, %v2519
        %v2530 = vpack.c.b16 %v2522, %v2520
        %2539 = vmatprep.subr.bf16.mxu0 0
        %2540 = vmatpush1.bf16.msra.mxu0 %v1226
        %2541 = vmatprep.subr.bf16.mxu0 0
        %2542 = vmatpush1.bf16.msra.mxu0 %v1225
        %2543 = vmatprep.subr.bf16.mxu0 0
        %2544 = vmatpush1.bf16.msra.mxu0 %v1224
        %2545 = vmatprep.subr.bf16.mxu0 0
        %2546 = vmatpush1.bf16.msra.mxu0 %v1223
        %2547 = vmatprep.subr.bf16.mxu0 0
        %2548 = vmatpush1.bf16.msra.mxu0 %v1222
        %2549 = vmatprep.subr.bf16.mxu0 0
        %2550 = vmatpush1.bf16.msra.mxu0 %v1221
        %2551 = vmatprep.subr.bf16.mxu0 0
        %2552 = vmatpush1.bf16.msra.mxu0 %v1220
        %2553 = vmatprep.subr.bf16.mxu0 0
        %2554 = vmatpush1.bf16.msra.mxu0 %v1219
        %2555 = vmatprep.subr.bf16.mxu0 0
        %2556 = vmatpush2.bf16.msra.mxu0 %v1234
        %2557 = vmatprep.subr.bf16.mxu0 0
        %2558 = vmatpush2.bf16.msra.mxu0 %v1233
        %2559 = vmatprep.subr.bf16.mxu0 0
        %2560 = vmatpush2.bf16.msra.mxu0 %v1232
        %2561 = vmatprep.subr.bf16.mxu0 0
        %2562 = vmatpush2.bf16.msra.mxu0 %v1231
        %2563 = vmatprep.subr.bf16.mxu0 0
        %2564 = vmatpush2.bf16.msra.mxu0 %v1230
        %2565 = vmatprep.subr.bf16.mxu0 0
        %2566 = vmatpush2.bf16.msra.mxu0 %v1229
        %2567 = vmatprep.subr.bf16.mxu0 0
        %2568 = vmatpush2.bf16.msra.mxu0 %v1228
        %2569 = vmatprep.subr.bf16.mxu0 0
        %2570 = vmatpush2.bf16.msra.mxu0 %v1227
        %2571 = vmatprep.mubr.bf16.mxu0 %v2524
        %2572 = vmatmul.mubr.bf16.gmra.mxu0 %v2523
        %v2573 = vpop.f32.mrf.mxu0
        %v2574 = vadd.f32 0.0, %v2573
        %v2575 = vpop.f32.mrf.mxu0
        %v2576 = vpop.f32.mrf.mxu0
        %v2577 = vadd.f32 0.0, %v2576
        %v2578 = vpop.f32.mrf.mxu0
        %2579 = vmatprep.mubr.bf16.mxu0 %v2526
        %2580 = vmatmul.mubr.bf16.gmra.mxu0 %v2525
        %v2581 = vpop.f32.mrf.mxu0
        %v2582 = vadd.f32 0.0, %v2581
        %v2583 = vpop.f32.mrf.mxu0
        %v2584 = vpop.f32.mrf.mxu0
        %v2585 = vadd.f32 0.0, %v2584
        %v2586 = vpop.f32.mrf.mxu0
        %2587 = vmatprep.mubr.bf16.mxu0 %v2528
        %2588 = vmatmul.mubr.bf16.gmra.mxu0 %v2527
        %v2589 = vpop.f32.mrf.mxu0
        %v2590 = vadd.f32 0.0, %v2589
        %v2591 = vpop.f32.mrf.mxu0
        %v2592 = vpop.f32.mrf.mxu0
        %v2593 = vadd.f32 0.0, %v2592
        %v2594 = vpop.f32.mrf.mxu0
        %2595 = vmatprep.mubr.bf16.mxu0 %v2530
        %2596 = vmatmul.mubr.bf16.gmra.mxu0 %v2529
        %v2597 = vpop.f32.mrf.mxu0
        %v2598 = vadd.f32 0.0, %v2597
        %v2599 = vpop.f32.mrf.mxu0
        %v2600 = vpop.f32.mrf.mxu0
        %v2601 = vadd.f32 0.0, %v2600
        %v2602 = vpop.f32.mrf.mxu0
        %2603 = vdwg.mxu0
        %v2604 = vpack.c.bf16 %v2577, %v2574
        %v2605 = vpack.c.bf16 %v2585, %v2582
        %v2606 = vpack.c.bf16 %v2593, %v2590
        %v2607 = vpack.c.bf16 %v2601, %v2598
        %s2608 = scalar_lea.vmem %s4, 24
        %v2609 = vld [vmem:[%s2608] sm:$0xf]
        %v2611 = vsel %vm1354, %v2604, 0
        %v2614 = vsel %vm1354, %v2605, 0
        %v2617 = vsel %vm1354, %v2606, 0
        %v2620 = vsel %vm1354, %v2607, 0
        %v2623 = vsel %vm1367, %v2609, 0
        %2625 = vmatprep.subr.bf16.mxu0 0
        %2626 = vmatpush1.bf16.msra.mxu0 0
        %2627 = vmatprep.subr.bf16.mxu0 0
        %2628 = vmatpush1.bf16.msra.mxu0 0
        %2629 = vmatprep.subr.bf16.mxu0 0
        %2630 = vmatpush1.bf16.msra.mxu0 0
        %2631 = vmatprep.subr.bf16.mxu0 0
        %2632 = vmatpush1.bf16.msra.mxu0 0
        %2633 = vmatprep.subr.bf16.mxu0 0
        %2634 = vmatpush1.bf16.msra.mxu0 0
        %2635 = vmatprep.subr.bf16.mxu0 0
        %2636 = vmatpush1.bf16.msra.mxu0 0
        %2637 = vmatprep.subr.bf16.mxu0 0
        %2638 = vmatpush1.bf16.msra.mxu0 0
        %2639 = vmatprep.subr.bf16.mxu0 0
        %2640 = vmatpush1.bf16.msra.mxu0 %v2623
        %2641 = vmatprep.subr.bf16.mxu0 0
        %2642 = vmatpush2.bf16.msra.mxu0 0
        %2643 = vmatprep.subr.bf16.mxu0 0
        %2644 = vmatpush2.bf16.msra.mxu0 0
        %2645 = vmatprep.subr.bf16.mxu0 0
        %2646 = vmatpush2.bf16.msra.mxu0 0
        %2647 = vmatprep.subr.bf16.mxu0 0
        %2648 = vmatpush2.bf16.msra.mxu0 0
        %2649 = vmatprep.subr.bf16.mxu0 0
        %2650 = vmatpush2.bf16.msra.mxu0 0
        %2651 = vmatprep.subr.bf16.mxu0 0
        %2652 = vmatpush2.bf16.msra.mxu0 0
        %2653 = vmatprep.subr.bf16.mxu0 0
        %2654 = vmatpush2.bf16.msra.mxu0 0
        %2655 = vmatprep.subr.bf16.mxu0 0
        %2656 = vmatpush2.bf16.msra.mxu0 0
        %2657 = vmatprep.mubr.bf16.mxu0 0
        %2658 = vmatmul.mubr.bf16.gmra.mxu0 %v2611
        %v2659 = vpop.f32.mrf.mxu0
        %v2660 = vadd.f32 0.0, %v2659
        %v2661 = vpop.f32.mrf.mxu0
        %v2662 = vpop.f32.mrf.mxu0
        %v2663 = vadd.f32 0.0, %v2662
        %v2664 = vpop.f32.mrf.mxu0
        %2665 = vmatprep.mubr.bf16.mxu0 0
        %2666 = vmatmul.mubr.bf16.gmra.mxu0 %v2614
        %v2667 = vpop.f32.mrf.mxu0
        %v2668 = vadd.f32 0.0, %v2667
        %v2669 = vpop.f32.mrf.mxu0
        %v2670 = vpop.f32.mrf.mxu0
        %v2671 = vadd.f32 0.0, %v2670
        %v2672 = vpop.f32.mrf.mxu0
        %2673 = vmatprep.mubr.bf16.mxu0 0
        %2674 = vmatmul.mubr.bf16.gmra.mxu0 %v2617
        %v2675 = vpop.f32.mrf.mxu0
        %v2676 = vadd.f32 0.0, %v2675
        %v2677 = vpop.f32.mrf.mxu0
        %v2678 = vpop.f32.mrf.mxu0
        %v2679 = vadd.f32 0.0, %v2678
        %v2680 = vpop.f32.mrf.mxu0
        %2681 = vmatprep.mubr.bf16.mxu0 0
        %2682 = vmatmul.mubr.bf16.gmra.mxu0 %v2620
        %v2683 = vpop.f32.mrf.mxu0
        %v2684 = vadd.f32 0.0, %v2683
        %v2685 = vpop.f32.mrf.mxu0
        %v2686 = vpop.f32.mrf.mxu0
        %v2687 = vadd.f32 0.0, %v2686
        %v2688 = vpop.f32.mrf.mxu0
        %2689 = vdwg.mxu0
        %v2690 = vadd.f32 %v2482, %v2660
        %v2691 = vadd.f32 %v2483, %v2663
        %v2692 = vadd.f32 %v2484, %v2668
        %v2693 = vadd.f32 %v2485, %v2671
        %v2694 = vadd.f32 %v2486, %v2676
        %v2695 = vadd.f32 %v2487, %v2679
        %v2696 = vadd.f32 %v2488, %v2684
        %v2697 = vadd.f32 %v2489, %v2687
        %s2698 = scalar_lea.vmem %s3, 448
        %v2699 = vld [vmem:[%s2698] sm:$0xff]
        %v2700 = vld [vmem:[%s2698 + $0x8] sm:$0xff]
        %v2701 = vld [vmem:[%s2698 + $0x10] sm:$0xff]
        %v2702 = vld [vmem:[%s2698 + $0x18] sm:$0xff]
        %v2703 = vld [vmem:[%s2698 + $0x20] sm:$0xff]
        %v2704 = vld [vmem:[%s2698 + $0x28] sm:$0xff]
        %v2705 = vld [vmem:[%s2698 + $0x30] sm:$0xff]
        %v2706 = vld [vmem:[%s2698 + $0x38] sm:$0xff]
        %v2715 = vunpack.c.l.b16 %v2699
        %v2716 = vunpack.c.h.b16 %v2699
        %v2717 = vunpack.c.l.b16 %v2700
        %v2718 = vunpack.c.h.b16 %v2700
        %v2719 = vunpack.c.l.b16 %v2701
        %v2720 = vunpack.c.h.b16 %v2701
        %v2721 = vunpack.c.l.b16 %v2702
        %v2722 = vunpack.c.h.b16 %v2702
        %v2723 = vunpack.c.l.b16 %v2703
        %v2724 = vunpack.c.h.b16 %v2703
        %v2725 = vunpack.c.l.b16 %v2704
        %v2726 = vunpack.c.h.b16 %v2704
        %v2727 = vunpack.c.l.b16 %v2705
        %v2728 = vunpack.c.h.b16 %v2705
        %v2729 = vunpack.c.l.b16 %v2706
        %v2730 = vunpack.c.h.b16 %v2706
        %v2731 = vpack.c.b16 %v2717, %v2715
        %v2732 = vpack.c.b16 %v2718, %v2716
        %v2733 = vpack.c.b16 %v2721, %v2719
        %v2734 = vpack.c.b16 %v2722, %v2720
        %v2735 = vpack.c.b16 %v2725, %v2723
        %v2736 = vpack.c.b16 %v2726, %v2724
        %v2737 = vpack.c.b16 %v2729, %v2727
        %v2738 = vpack.c.b16 %v2730, %v2728
        %2747 = vmatprep.subr.bf16.mxu0 0
        %2748 = vmatpush1.bf16.msra.mxu0 %v1226
        %2749 = vmatprep.subr.bf16.mxu0 0
        %2750 = vmatpush1.bf16.msra.mxu0 %v1225
        %2751 = vmatprep.subr.bf16.mxu0 0
        %2752 = vmatpush1.bf16.msra.mxu0 %v1224
        %2753 = vmatprep.subr.bf16.mxu0 0
        %2754 = vmatpush1.bf16.msra.mxu0 %v1223
        %2755 = vmatprep.subr.bf16.mxu0 0
        %2756 = vmatpush1.bf16.msra.mxu0 %v1222
        %2757 = vmatprep.subr.bf16.mxu0 0
        %2758 = vmatpush1.bf16.msra.mxu0 %v1221
        %2759 = vmatprep.subr.bf16.mxu0 0
        %2760 = vmatpush1.bf16.msra.mxu0 %v1220
        %2761 = vmatprep.subr.bf16.mxu0 0
        %2762 = vmatpush1.bf16.msra.mxu0 %v1219
        %2763 = vmatprep.subr.bf16.mxu0 0
        %2764 = vmatpush2.bf16.msra.mxu0 %v1234
        %2765 = vmatprep.subr.bf16.mxu0 0
        %2766 = vmatpush2.bf16.msra.mxu0 %v1233
        %2767 = vmatprep.subr.bf16.mxu0 0
        %2768 = vmatpush2.bf16.msra.mxu0 %v1232
        %2769 = vmatprep.subr.bf16.mxu0 0
        %2770 = vmatpush2.bf16.msra.mxu0 %v1231
        %2771 = vmatprep.subr.bf16.mxu0 0
        %2772 = vmatpush2.bf16.msra.mxu0 %v1230
        %2773 = vmatprep.subr.bf16.mxu0 0
        %2774 = vmatpush2.bf16.msra.mxu0 %v1229
        %2775 = vmatprep.subr.bf16.mxu0 0
        %2776 = vmatpush2.bf16.msra.mxu0 %v1228
        %2777 = vmatprep.subr.bf16.mxu0 0
        %2778 = vmatpush2.bf16.msra.mxu0 %v1227
        %2779 = vmatprep.mubr.bf16.mxu0 %v2732
        %2780 = vmatmul.mubr.bf16.gmra.mxu0 %v2731
        %v2781 = vpop.f32.mrf.mxu0
        %v2782 = vadd.f32 0.0, %v2781
        %v2783 = vpop.f32.mrf.mxu0
        %v2784 = vpop.f32.mrf.mxu0
        %v2785 = vadd.f32 0.0, %v2784
        %v2786 = vpop.f32.mrf.mxu0
        %2787 = vmatprep.mubr.bf16.mxu0 %v2734
        %2788 = vmatmul.mubr.bf16.gmra.mxu0 %v2733
        %v2789 = vpop.f32.mrf.mxu0
        %v2790 = vadd.f32 0.0, %v2789
        %v2791 = vpop.f32.mrf.mxu0
        %v2792 = vpop.f32.mrf.mxu0
        %v2793 = vadd.f32 0.0, %v2792
        %v2794 = vpop.f32.mrf.mxu0
        %2795 = vmatprep.mubr.bf16.mxu0 %v2736
        %2796 = vmatmul.mubr.bf16.gmra.mxu0 %v2735
        %v2797 = vpop.f32.mrf.mxu0
        %v2798 = vadd.f32 0.0, %v2797
        %v2799 = vpop.f32.mrf.mxu0
        %v2800 = vpop.f32.mrf.mxu0
        %v2801 = vadd.f32 0.0, %v2800
        %v2802 = vpop.f32.mrf.mxu0
        %2803 = vmatprep.mubr.bf16.mxu0 %v2738
        %2804 = vmatmul.mubr.bf16.gmra.mxu0 %v2737
        %v2805 = vpop.f32.mrf.mxu0
        %v2806 = vadd.f32 0.0, %v2805
        %v2807 = vpop.f32.mrf.mxu0
        %v2808 = vpop.f32.mrf.mxu0
        %v2809 = vadd.f32 0.0, %v2808
        %v2810 = vpop.f32.mrf.mxu0
        %2811 = vdwg.mxu0
        %v2812 = vpack.c.bf16 %v2785, %v2782
        %v2813 = vpack.c.bf16 %v2793, %v2790
        %v2814 = vpack.c.bf16 %v2801, %v2798
        %v2815 = vpack.c.bf16 %v2809, %v2806
        %s2816 = scalar_lea.vmem %s4, 28
        %v2817 = vld [vmem:[%s2816] sm:$0xf]
        %v2819 = vsel %vm1354, %v2812, 0
        %v2822 = vsel %vm1354, %v2813, 0
        %v2825 = vsel %vm1354, %v2814, 0
        %v2828 = vsel %vm1354, %v2815, 0
        %v2831 = vsel %vm1367, %v2817, 0
        %2833 = vmatprep.subr.bf16.mxu0 0
        %2834 = vmatpush1.bf16.msra.mxu0 0
        %2835 = vmatprep.subr.bf16.mxu0 0
        %2836 = vmatpush1.bf16.msra.mxu0 0
        %2837 = vmatprep.subr.bf16.mxu0 0
        %2838 = vmatpush1.bf16.msra.mxu0 0
        %2839 = vmatprep.subr.bf16.mxu0 0
        %2840 = vmatpush1.bf16.msra.mxu0 0
        %2841 = vmatprep.subr.bf16.mxu0 0
        %2842 = vmatpush1.bf16.msra.mxu0 0
        %2843 = vmatprep.subr.bf16.mxu0 0
        %2844 = vmatpush1.bf16.msra.mxu0 0
        %2845 = vmatprep.subr.bf16.mxu0 0
        %2846 = vmatpush1.bf16.msra.mxu0 0
        %2847 = vmatprep.subr.bf16.mxu0 0
        %2848 = vmatpush1.bf16.msra.mxu0 %v2831
        %2849 = vmatprep.subr.bf16.mxu0 0
        %2850 = vmatpush2.bf16.msra.mxu0 0
        %2851 = vmatprep.subr.bf16.mxu0 0
        %2852 = vmatpush2.bf16.msra.mxu0 0
        %2853 = vmatprep.subr.bf16.mxu0 0
        %2854 = vmatpush2.bf16.msra.mxu0 0
        %2855 = vmatprep.subr.bf16.mxu0 0
        %2856 = vmatpush2.bf16.msra.mxu0 0
        %2857 = vmatprep.subr.bf16.mxu0 0
        %2858 = vmatpush2.bf16.msra.mxu0 0
        %2859 = vmatprep.subr.bf16.mxu0 0
        %2860 = vmatpush2.bf16.msra.mxu0 0
        %2861 = vmatprep.subr.bf16.mxu0 0
        %2862 = vmatpush2.bf16.msra.mxu0 0
        %2863 = vmatprep.subr.bf16.mxu0 0
        %2864 = vmatpush2.bf16.msra.mxu0 0
        %2865 = vmatprep.mubr.bf16.mxu0 0
        %2866 = vmatmul.mubr.bf16.gmra.mxu0 %v2819
        %v2867 = vpop.f32.mrf.mxu0
        %v2868 = vadd.f32 0.0, %v2867
        %v2869 = vpop.f32.mrf.mxu0
        %v2870 = vpop.f32.mrf.mxu0
        %v2871 = vadd.f32 0.0, %v2870
        %v2872 = vpop.f32.mrf.mxu0
        %2873 = vmatprep.mubr.bf16.mxu0 0
        %2874 = vmatmul.mubr.bf16.gmra.mxu0 %v2822
        %v2875 = vpop.f32.mrf.mxu0
        %v2876 = vadd.f32 0.0, %v2875
        %v2877 = vpop.f32.mrf.mxu0
        %v2878 = vpop.f32.mrf.mxu0
        %v2879 = vadd.f32 0.0, %v2878
        %v2880 = vpop.f32.mrf.mxu0
        %2881 = vmatprep.mubr.bf16.mxu0 0
        %2882 = vmatmul.mubr.bf16.gmra.mxu0 %v2825
        %v2883 = vpop.f32.mrf.mxu0
        %v2884 = vadd.f32 0.0, %v2883
        %v2885 = vpop.f32.mrf.mxu0
        %v2886 = vpop.f32.mrf.mxu0
        %v2887 = vadd.f32 0.0, %v2886
        %v2888 = vpop.f32.mrf.mxu0
        %2889 = vmatprep.mubr.bf16.mxu0 0
        %2890 = vmatmul.mubr.bf16.gmra.mxu0 %v2828
        %v2891 = vpop.f32.mrf.mxu0
        %v2892 = vadd.f32 0.0, %v2891
        %v2893 = vpop.f32.mrf.mxu0
        %v2894 = vpop.f32.mrf.mxu0
        %v2895 = vadd.f32 0.0, %v2894
        %v2896 = vpop.f32.mrf.mxu0
        %2897 = vdwg.mxu0
        %v2898 = vadd.f32 %v2690, %v2868
        %v2899 = vadd.f32 %v2691, %v2871
        %v2900 = vadd.f32 %v2692, %v2876
        %v2901 = vadd.f32 %v2693, %v2879
        %v2902 = vadd.f32 %v2694, %v2884
        %v2903 = vadd.f32 %v2695, %v2887
        %v2904 = vadd.f32 %v2696, %v2892
        %v2905 = vadd.f32 %v2697, %v2895
        %s2906 = scalar_lea.vmem %s3, 512
        %v2907 = vld [vmem:[%s2906] sm:$0xff]
        %v2908 = vld [vmem:[%s2906 + $0x8] sm:$0xff]
        %v2909 = vld [vmem:[%s2906 + $0x10] sm:$0xff]
        %v2910 = vld [vmem:[%s2906 + $0x18] sm:$0xff]
        %v2911 = vld [vmem:[%s2906 + $0x20] sm:$0xff]
        %v2912 = vld [vmem:[%s2906 + $0x28] sm:$0xff]
        %v2913 = vld [vmem:[%s2906 + $0x30] sm:$0xff]
        %v2914 = vld [vmem:[%s2906 + $0x38] sm:$0xff]
        %v2923 = vunpack.c.l.b16 %v2907
        %v2924 = vunpack.c.h.b16 %v2907
        %v2925 = vunpack.c.l.b16 %v2908
        %v2926 = vunpack.c.h.b16 %v2908
        %v2927 = vunpack.c.l.b16 %v2909
        %v2928 = vunpack.c.h.b16 %v2909
        %v2929 = vunpack.c.l.b16 %v2910
        %v2930 = vunpack.c.h.b16 %v2910
        %v2931 = vunpack.c.l.b16 %v2911
        %v2932 = vunpack.c.h.b16 %v2911
        %v2933 = vunpack.c.l.b16 %v2912
        %v2934 = vunpack.c.h.b16 %v2912
        %v2935 = vunpack.c.l.b16 %v2913
        %v2936 = vunpack.c.h.b16 %v2913
        %v2937 = vunpack.c.l.b16 %v2914
        %v2938 = vunpack.c.h.b16 %v2914
        %v2939 = vpack.c.b16 %v2925, %v2923
        %v2940 = vpack.c.b16 %v2926, %v2924
        %v2941 = vpack.c.b16 %v2929, %v2927
        %v2942 = vpack.c.b16 %v2930, %v2928
        %v2943 = vpack.c.b16 %v2933, %v2931
        %v2944 = vpack.c.b16 %v2934, %v2932
        %v2945 = vpack.c.b16 %v2937, %v2935
        %v2946 = vpack.c.b16 %v2938, %v2936
        %2955 = vmatprep.subr.bf16.mxu0 0
        %2956 = vmatpush1.bf16.msra.mxu0 %v1226
        %2957 = vmatprep.subr.bf16.mxu0 0
        %2958 = vmatpush1.bf16.msra.mxu0 %v1225
        %2959 = vmatprep.subr.bf16.mxu0 0
        %2960 = vmatpush1.bf16.msra.mxu0 %v1224
        %2961 = vmatprep.subr.bf16.mxu0 0
        %2962 = vmatpush1.bf16.msra.mxu0 %v1223
        %2963 = vmatprep.subr.bf16.mxu0 0
        %2964 = vmatpush1.bf16.msra.mxu0 %v1222
        %2965 = vmatprep.subr.bf16.mxu0 0
        %2966 = vmatpush1.bf16.msra.mxu0 %v1221
        %2967 = vmatprep.subr.bf16.mxu0 0
        %2968 = vmatpush1.bf16.msra.mxu0 %v1220
        %2969 = vmatprep.subr.bf16.mxu0 0
        %2970 = vmatpush1.bf16.msra.mxu0 %v1219
        %2971 = vmatprep.subr.bf16.mxu0 0
        %2972 = vmatpush2.bf16.msra.mxu0 %v1234
        %2973 = vmatprep.subr.bf16.mxu0 0
        %2974 = vmatpush2.bf16.msra.mxu0 %v1233
        %2975 = vmatprep.subr.bf16.mxu0 0
        %2976 = vmatpush2.bf16.msra.mxu0 %v1232
        %2977 = vmatprep.subr.bf16.mxu0 0
        %2978 = vmatpush2.bf16.msra.mxu0 %v1231
        %2979 = vmatprep.subr.bf16.mxu0 0
        %2980 = vmatpush2.bf16.msra.mxu0 %v1230
        %2981 = vmatprep.subr.bf16.mxu0 0
        %2982 = vmatpush2.bf16.msra.mxu0 %v1229
        %2983 = vmatprep.subr.bf16.mxu0 0
        %2984 = vmatpush2.bf16.msra.mxu0 %v1228
        %2985 = vmatprep.subr.bf16.mxu0 0
        %2986 = vmatpush2.bf16.msra.mxu0 %v1227
        %2987 = vmatprep.mubr.bf16.mxu0 %v2940
        %2988 = vmatmul.mubr.bf16.gmra.mxu0 %v2939
        %v2989 = vpop.f32.mrf.mxu0
        %v2990 = vadd.f32 0.0, %v2989
        %v2991 = vpop.f32.mrf.mxu0
        %v2992 = vpop.f32.mrf.mxu0
        %v2993 = vadd.f32 0.0, %v2992
        %v2994 = vpop.f32.mrf.mxu0
        %2995 = vmatprep.mubr.bf16.mxu0 %v2942
        %2996 = vmatmul.mubr.bf16.gmra.mxu0 %v2941
        %v2997 = vpop.f32.mrf.mxu0
        %v2998 = vadd.f32 0.0, %v2997
        %v2999 = vpop.f32.mrf.mxu0
        %v3000 = vpop.f32.mrf.mxu0
        %v3001 = vadd.f32 0.0, %v3000
        %v3002 = vpop.f32.mrf.mxu0
        %3003 = vmatprep.mubr.bf16.mxu0 %v2944
        %3004 = vmatmul.mubr.bf16.gmra.mxu0 %v2943
        %v3005 = vpop.f32.mrf.mxu0
        %v3006 = vadd.f32 0.0, %v3005
        %v3007 = vpop.f32.mrf.mxu0
        %v3008 = vpop.f32.mrf.mxu0
        %v3009 = vadd.f32 0.0, %v3008
        %v3010 = vpop.f32.mrf.mxu0
        %3011 = vmatprep.mubr.bf16.mxu0 %v2946
        %3012 = vmatmul.mubr.bf16.gmra.mxu0 %v2945
        %v3013 = vpop.f32.mrf.mxu0
        %v3014 = vadd.f32 0.0, %v3013
        %v3015 = vpop.f32.mrf.mxu0
        %v3016 = vpop.f32.mrf.mxu0
        %v3017 = vadd.f32 0.0, %v3016
        %v3018 = vpop.f32.mrf.mxu0
        %3019 = vdwg.mxu0
        %v3020 = vpack.c.bf16 %v2993, %v2990
        %v3021 = vpack.c.bf16 %v3001, %v2998
        %v3022 = vpack.c.bf16 %v3009, %v3006
        %v3023 = vpack.c.bf16 %v3017, %v3014
        %s3024 = scalar_lea.vmem %s4, 32
        %v3025 = vld [vmem:[%s3024] sm:$0xf]
        %v3027 = vsel %vm1354, %v3020, 0
        %v3030 = vsel %vm1354, %v3021, 0
        %v3033 = vsel %vm1354, %v3022, 0
        %v3036 = vsel %vm1354, %v3023, 0
        %v3039 = vsel %vm1367, %v3025, 0
        %3041 = vmatprep.subr.bf16.mxu0 0
        %3042 = vmatpush1.bf16.msra.mxu0 0
        %3043 = vmatprep.subr.bf16.mxu0 0
        %3044 = vmatpush1.bf16.msra.mxu0 0
        %3045 = vmatprep.subr.bf16.mxu0 0
        %3046 = vmatpush1.bf16.msra.mxu0 0
        %3047 = vmatprep.subr.bf16.mxu0 0
        %3048 = vmatpush1.bf16.msra.mxu0 0
        %3049 = vmatprep.subr.bf16.mxu0 0
        %3050 = vmatpush1.bf16.msra.mxu0 0
        %3051 = vmatprep.subr.bf16.mxu0 0
        %3052 = vmatpush1.bf16.msra.mxu0 0
        %3053 = vmatprep.subr.bf16.mxu0 0
        %3054 = vmatpush1.bf16.msra.mxu0 0
        %3055 = vmatprep.subr.bf16.mxu0 0
        %3056 = vmatpush1.bf16.msra.mxu0 %v3039
        %3057 = vmatprep.subr.bf16.mxu0 0
        %3058 = vmatpush2.bf16.msra.mxu0 0
        %3059 = vmatprep.subr.bf16.mxu0 0
        %3060 = vmatpush2.bf16.msra.mxu0 0
        %3061 = vmatprep.subr.bf16.mxu0 0
        %3062 = vmatpush2.bf16.msra.mxu0 0
        %3063 = vmatprep.subr.bf16.mxu0 0
        %3064 = vmatpush2.bf16.msra.mxu0 0
        %3065 = vmatprep.subr.bf16.mxu0 0
        %3066 = vmatpush2.bf16.msra.mxu0 0
        %3067 = vmatprep.subr.bf16.mxu0 0
        %3068 = vmatpush2.bf16.msra.mxu0 0
        %3069 = vmatprep.subr.bf16.mxu0 0
        %3070 = vmatpush2.bf16.msra.mxu0 0
        %3071 = vmatprep.subr.bf16.mxu0 0
        %3072 = vmatpush2.bf16.msra.mxu0 0
        %3073 = vmatprep.mubr.bf16.mxu0 0
        %3074 = vmatmul.mubr.bf16.gmra.mxu0 %v3027
        %v3075 = vpop.f32.mrf.mxu0
        %v3076 = vadd.f32 0.0, %v3075
        %v3077 = vpop.f32.mrf.mxu0
        %v3078 = vpop.f32.mrf.mxu0
        %v3079 = vadd.f32 0.0, %v3078
        %v3080 = vpop.f32.mrf.mxu0
        %3081 = vmatprep.mubr.bf16.mxu0 0
        %3082 = vmatmul.mubr.bf16.gmra.mxu0 %v3030
        %v3083 = vpop.f32.mrf.mxu0
        %v3084 = vadd.f32 0.0, %v3083
        %v3085 = vpop.f32.mrf.mxu0
        %v3086 = vpop.f32.mrf.mxu0
        %v3087 = vadd.f32 0.0, %v3086
        %v3088 = vpop.f32.mrf.mxu0
        %3089 = vmatprep.mubr.bf16.mxu0 0
        %3090 = vmatmul.mubr.bf16.gmra.mxu0 %v3033
        %v3091 = vpop.f32.mrf.mxu0
        %v3092 = vadd.f32 0.0, %v3091
        %v3093 = vpop.f32.mrf.mxu0
        %v3094 = vpop.f32.mrf.mxu0
        %v3095 = vadd.f32 0.0, %v3094
        %v3096 = vpop.f32.mrf.mxu0
        %3097 = vmatprep.mubr.bf16.mxu0 0
        %3098 = vmatmul.mubr.bf16.gmra.mxu0 %v3036
        %v3099 = vpop.f32.mrf.mxu0
        %v3100 = vadd.f32 0.0, %v3099
        %v3101 = vpop.f32.mrf.mxu0
        %v3102 = vpop.f32.mrf.mxu0
        %v3103 = vadd.f32 0.0, %v3102
        %v3104 = vpop.f32.mrf.mxu0
        %3105 = vdwg.mxu0
        %v3106 = vadd.f32 %v2898, %v3076
        %v3107 = vadd.f32 %v2899, %v3079
        %v3108 = vadd.f32 %v2900, %v3084
        %v3109 = vadd.f32 %v2901, %v3087
        %v3110 = vadd.f32 %v2902, %v3092
        %v3111 = vadd.f32 %v2903, %v3095
        %v3112 = vadd.f32 %v2904, %v3100
        %v3113 = vadd.f32 %v2905, %v3103
        %v3114 = vadd.f32 %v3106, 3.0
        %v3115 = vadd.f32 %v3107, 3.0
        %v3116 = vadd.f32 %v3108, 3.0
        %v3117 = vadd.f32 %v3109, 3.0
        %v3118 = vadd.f32 %v3110, 3.0
        %v3119 = vadd.f32 %v3111, 3.0
        %v3120 = vadd.f32 %v3112, 3.0
        %v3121 = vadd.f32 %v3113, 3.0
        %v3122 = vmax.f32 %v3114, 0.0
        %v3123 = vmax.f32 %v3115, 0.0
        %v3124 = vmax.f32 %v3116, 0.0
        %v3125 = vmax.f32 %v3117, 0.0
        %v3126 = vmax.f32 %v3118, 0.0
        %v3127 = vmax.f32 %v3119, 0.0
        %v3128 = vmax.f32 %v3120, 0.0
        %v3129 = vmax.f32 %v3121, 0.0
        %v3130 = vmin.f32 %v3122, 6.0
        %v3131 = vmin.f32 %v3123, 6.0
        %v3132 = vmin.f32 %v3124, 6.0
        %v3133 = vmin.f32 %v3125, 6.0
        %v3134 = vmin.f32 %v3126, 6.0
        %v3135 = vmin.f32 %v3127, 6.0
        %v3136 = vmin.f32 %v3128, 6.0
        %v3137 = vmin.f32 %v3129, 6.0
        %v3138 = vmul.f32 %v3106, %v3130
        %v3139 = vmul.f32 %v3107, %v3131
        %v3140 = vmul.f32 %v3108, %v3132
        %v3141 = vmul.f32 %v3109, %v3133
        %v3142 = vmul.f32 %v3110, %v3134
        %v3143 = vmul.f32 %v3111, %v3135
        %v3144 = vmul.f32 %v3112, %v3136
        %v3145 = vmul.f32 %v3113, %v3137
        %v3146 = vmul.f32 %v3138, 0.16666667
        %v3147 = vmul.f32 %v3139, 0.16666667
        %v3148 = vmul.f32 %v3140, 0.16666667
        %v3149 = vmul.f32 %v3141, 0.16666667
        %v3150 = vmul.f32 %v3142, 0.16666667
        %v3151 = vmul.f32 %v3143, 0.16666667
        %v3152 = vmul.f32 %v3144, 0.16666667
        %v3153 = vmul.f32 %v3145, 0.16666667
        %v3154 = vpack.c.bf16 %v3147, %v3146
        %v3155 = vpack.c.bf16 %v3149, %v3148
        %v3156 = vpack.c.bf16 %v3151, %v3150
        %v3157 = vpack.c.bf16 %v3153, %v3152
        %v3158 = vld [vmem:[%s6] sm:$0xf]
        %v3159 = vld [vmem:[%s6 + $0x4] sm:$0xf]
        %v3160 = vld [vmem:[%s7] sm:$0x1]
        %v3162 = vlaneseq
        %v3163 = vshrl.u32 %v3162, 7
        %v3164 = vsub.s32 0, %v3163
        %v3165 = vrot.slane %v3160, %v3164
        %v3169 = vunpack.c.l.b16 %v3158
        %v3170 = vunpack.c.l.b16 %v3159
        %v3171 = vpack.c.b16 %v3170, %v3169
        %vm3173 = vcmask 130048
        %v3175 = vsel %vm3173, %v3154, 0
        %v3178 = vsel %vm3173, %v3155, 0
        %v3181 = vsel %vm3173, %v3156, 0
        %v3184 = vsel %vm3173, %v3157, 0
        %3186 = vmatprep.subr.bf16.mxu0 0
        %3187 = vmatpush1.bf16.msra.mxu0 0
        %3188 = vmatprep.subr.bf16.mxu0 0
        %3189 = vmatpush1.bf16.msra.mxu0 0
        %3190 = vmatprep.subr.bf16.mxu0 0
        %3191 = vmatpush1.bf16.msra.mxu0 0
        %3192 = vmatprep.subr.bf16.mxu0 0
        %3193 = vmatpush1.bf16.msra.mxu0 0
        %3194 = vmatprep.subr.bf16.mxu0 0
        %3195 = vmatpush1.bf16.msra.mxu0 0
        %3196 = vmatprep.subr.bf16.mxu0 0
        %3197 = vmatpush1.bf16.msra.mxu0 0
        %3198 = vmatprep.subr.bf16.mxu0 0
        %3199 = vmatpush1.bf16.msra.mxu0 0
        %3200 = vmatprep.subr.bf16.mxu0 0
        %3201 = vmatpush1.bf16.msra.mxu0 %v3171
        %3202 = vmatprep.subr.bf16.mxu0 0
        %3203 = vmatpush2.bf16.msra.mxu0 0
        %3204 = vmatprep.subr.bf16.mxu0 0
        %3205 = vmatpush2.bf16.msra.mxu0 0
        %3206 = vmatprep.subr.bf16.mxu0 0
        %3207 = vmatpush2.bf16.msra.mxu0 0
        %3208 = vmatprep.subr.bf16.mxu0 0
        %3209 = vmatpush2.bf16.msra.mxu0 0
        %3210 = vmatprep.subr.bf16.mxu0 0
        %3211 = vmatpush2.bf16.msra.mxu0 0
        %3212 = vmatprep.subr.bf16.mxu0 0
        %3213 = vmatpush2.bf16.msra.mxu0 0
        %3214 = vmatprep.subr.bf16.mxu0 0
        %3215 = vmatpush2.bf16.msra.mxu0 0
        %3216 = vmatprep.subr.bf16.mxu0 0
        %3217 = vmatpush2.bf16.msra.mxu0 0
        %3218 = vmatprep.mubr.bf16.mxu0 0
        %3219 = vmatmul.mubr.bf16.gmra.mxu0 %v3175
        %v3220 = vpop.f32.mrf.mxu0
        %v3221 = vadd.f32 %v3165, %v3220
        %v3222 = vpop.f32.mrf.mxu0
        %v3223 = vpop.f32.mrf.mxu0
        %v3224 = vadd.f32 %v3165, %v3223
        %v3225 = vpop.f32.mrf.mxu0
        %3226 = vmatprep.mubr.bf16.mxu0 0
        %3227 = vmatmul.mubr.bf16.gmra.mxu0 %v3178
        %v3228 = vpop.f32.mrf.mxu0
        %v3229 = vadd.f32 %v3165, %v3228
        %v3230 = vpop.f32.mrf.mxu0
        %v3231 = vpop.f32.mrf.mxu0
        %v3232 = vadd.f32 %v3165, %v3231
        %v3233 = vpop.f32.mrf.mxu0
        %3234 = vmatprep.mubr.bf16.mxu0 0
        %3235 = vmatmul.mubr.bf16.gmra.mxu0 %v3181
        %v3236 = vpop.f32.mrf.mxu0
        %v3237 = vadd.f32 %v3165, %v3236
        %v3238 = vpop.f32.mrf.mxu0
        %v3239 = vpop.f32.mrf.mxu0
        %v3240 = vadd.f32 %v3165, %v3239
        %v3241 = vpop.f32.mrf.mxu0
        %3242 = vmatprep.mubr.bf16.mxu0 0
        %3243 = vmatmul.mubr.bf16.gmra.mxu0 %v3184
        %v3244 = vpop.f32.mrf.mxu0
        %v3245 = vadd.f32 %v3165, %v3244
        %v3246 = vpop.f32.mrf.mxu0
        %v3247 = vpop.f32.mrf.mxu0
        %v3248 = vadd.f32 %v3165, %v3247
        %v3249 = vpop.f32.mrf.mxu0
        %3250 = vdwg.mxu0
        %v3251 = vadd.f32 %v3221, 3.0
        %v3252 = vadd.f32 %v3224, 3.0
        %v3253 = vadd.f32 %v3229, 3.0
        %v3254 = vadd.f32 %v3232, 3.0
        %v3255 = vadd.f32 %v3237, 3.0
        %v3256 = vadd.f32 %v3240, 3.0
        %v3257 = vadd.f32 %v3245, 3.0
        %v3258 = vadd.f32 %v3248, 3.0
        %v3259 = vmax.f32 %v3251, 0.0
        %v3260 = vmax.f32 %v3252, 0.0
        %v3261 = vmax.f32 %v3253, 0.0
        %v3262 = vmax.f32 %v3254, 0.0
        %v3263 = vmax.f32 %v3255, 0.0
        %v3264 = vmax.f32 %v3256, 0.0
        %v3265 = vmax.f32 %v3257, 0.0
        %v3266 = vmax.f32 %v3258, 0.0
        %v3267 = vmin.f32 %v3259, 6.0
        %v3268 = vmin.f32 %v3260, 6.0
        %v3269 = vmin.f32 %v3261, 6.0
        %v3270 = vmin.f32 %v3262, 6.0
        %v3271 = vmin.f32 %v3263, 6.0
        %v3272 = vmin.f32 %v3264, 6.0
        %v3273 = vmin.f32 %v3265, 6.0
        %v3274 = vmin.f32 %v3266, 6.0
        %v3275 = vmul.f32 %v3221, %v3267
        %v3276 = vmul.f32 %v3224, %v3268
        %v3277 = vmul.f32 %v3229, %v3269
        %v3278 = vmul.f32 %v3232, %v3270
        %v3279 = vmul.f32 %v3237, %v3271
        %v3280 = vmul.f32 %v3240, %v3272
        %v3281 = vmul.f32 %v3245, %v3273
        %v3282 = vmul.f32 %v3248, %v3274
        %v3283 = vmul.f32 %v3275, 0.16666667
        %v3284 = vmul.f32 %v3276, 0.16666667
        %v3285 = vmul.f32 %v3277, 0.16666667
        %v3286 = vmul.f32 %v3278, 0.16666667
        %v3287 = vmul.f32 %v3279, 0.16666667
        %v3288 = vmul.f32 %v3280, 0.16666667
        %v3289 = vmul.f32 %v3281, 0.16666667
        %v3290 = vmul.f32 %v3282, 0.16666667
        %v3291 = vpack.c.bf16 %v3284, %v3283
        %v3292 = vpack.c.bf16 %v3286, %v3285
        %v3293 = vpack.c.bf16 %v3288, %v3287
        %v3294 = vpack.c.bf16 %v3290, %v3289
        %v3295 = vld [vmem:[%s10] sm:$0x1]
        %v3296 = vld [vmem:[%s8] sm:$0xf]
        %v3297 = vld [vmem:[%s8 + $0x4] sm:$0xf]
        %v3300 = vunpack.c.l.b16 %v3296
        %v3301 = vunpack.c.l.b16 %v3297
        %v3302 = vpack.c.b16 %v3301, %v3300
        %vm3303 = vcmask 523264
        %v3305 = vsel %vm3303, %v3302, 0
        %3307 = vmatprep.subr.bf16.mxu0 0
        %3308 = vmatpush1.bf16.msra.mxu0 0
        %3309 = vmatprep.subr.bf16.mxu0 0
        %3310 = vmatpush1.bf16.msra.mxu0 0
        %3311 = vmatprep.subr.bf16.mxu0 0
        %3312 = vmatpush1.bf16.msra.mxu0 0
        %3313 = vmatprep.subr.bf16.mxu0 0
        %3314 = vmatpush1.bf16.msra.mxu0 0
        %3315 = vmatprep.subr.bf16.mxu0 0
        %3316 = vmatpush1.bf16.msra.mxu0 %v3294
        %3317 = vmatprep.subr.bf16.mxu0 0
        %3318 = vmatpush1.bf16.msra.mxu0 %v3293
        %3319 = vmatprep.subr.bf16.mxu0 0
        %3320 = vmatpush1.bf16.msra.mxu0 %v3292
        %3321 = vmatprep.subr.bf16.mxu0 0
        %3322 = vmatpush1.bf16.msra.mxu0 %v3291
        %3323 = vmatprep.subr.bf16.mxu0 0
        %3324 = vmatpush2.bf16.msra.mxu0 0
        %3325 = vmatprep.subr.bf16.mxu0 0
        %3326 = vmatpush2.bf16.msra.mxu0 0
        %3327 = vmatprep.subr.bf16.mxu0 0
        %3328 = vmatpush2.bf16.msra.mxu0 0
        %3329 = vmatprep.subr.bf16.mxu0 0
        %3330 = vmatpush2.bf16.msra.mxu0 0
        %3331 = vmatprep.subr.bf16.mxu0 0
        %3332 = vmatpush2.bf16.msra.mxu0 0
        %3333 = vmatprep.subr.bf16.mxu0 0
        %3334 = vmatpush2.bf16.msra.mxu0 0
        %3335 = vmatprep.subr.bf16.mxu0 0
        %3336 = vmatpush2.bf16.msra.mxu0 0
        %3337 = vmatprep.subr.bf16.mxu0 0
        %3338 = vmatpush2.bf16.msra.mxu0 0
        %3339 = vmatprep.mubr.bf16.mxu0 0
        %3340 = vmatmul.mubr.bf16.gmra.mxu0 %v3305
        %v3341 = vpop.f32.mrf.mxu0
        %v3342 = vadd.f32 0.0, %v3341
        %v3343 = vpop.f32.mrf.mxu0
        %v3344 = vpop.f32.mrf.mxu0
        %v3345 = vadd.f32 0.0, %v3344
        %v3346 = vpop.f32.mrf.mxu0
        %3347 = vdwg.mxu0
        %v3348 = vpack.c.bf16 %v3345, %v3342
        %v3349 = vld [vmem:[%s9] sm:$0xf]
        %v3350 = vld [vmem:[%s9 + $0x4] sm:$0xf]
        %v3353 = vunpack.c.l.b16 %v3349
        %v3354 = vunpack.c.l.b16 %v3350
        %v3355 = vpack.c.b16 %v3354, %v3353
        %v3358 = vsel %vm3173, %v3348, 0
        %3360 = vmatprep.subr.bf16.mxu0 0
        %3361 = vmatpush1.bf16.msra.mxu0 0
        %3362 = vmatprep.subr.bf16.mxu0 0
        %3363 = vmatpush1.bf16.msra.mxu0 0
        %3364 = vmatprep.subr.bf16.mxu0 0
        %3365 = vmatpush1.bf16.msra.mxu0 0
        %3366 = vmatprep.subr.bf16.mxu0 0
        %3367 = vmatpush1.bf16.msra.mxu0 0
        %3368 = vmatprep.subr.bf16.mxu0 0
        %3369 = vmatpush1.bf16.msra.mxu0 0
        %3370 = vmatprep.subr.bf16.mxu0 0
        %3371 = vmatpush1.bf16.msra.mxu0 0
        %3372 = vmatprep.subr.bf16.mxu0 0
        %3373 = vmatpush1.bf16.msra.mxu0 0
        %3374 = vmatprep.subr.bf16.mxu0 0
        %3375 = vmatpush1.bf16.msra.mxu0 %v3355
        %3376 = vmatprep.subr.bf16.mxu0 0
        %3377 = vmatpush2.bf16.msra.mxu0 0
        %3378 = vmatprep.subr.bf16.mxu0 0
        %3379 = vmatpush2.bf16.msra.mxu0 0
        %3380 = vmatprep.subr.bf16.mxu0 0
        %3381 = vmatpush2.bf16.msra.mxu0 0
        %3382 = vmatprep.subr.bf16.mxu0 0
        %3383 = vmatpush2.bf16.msra.mxu0 0
        %3384 = vmatprep.subr.bf16.mxu0 0
        %3385 = vmatpush2.bf16.msra.mxu0 0
        %3386 = vmatprep.subr.bf16.mxu0 0
        %3387 = vmatpush2.bf16.msra.mxu0 0
        %3388 = vmatprep.subr.bf16.mxu0 0
        %3389 = vmatpush2.bf16.msra.mxu0 0
        %3390 = vmatprep.subr.bf16.mxu0 0
        %3391 = vmatpush2.bf16.msra.mxu0 0
        %3392 = vmatprep.mubr.bf16.mxu0 0
        %3393 = vmatmul.mubr.bf16.gmra.mxu0 %v3358
        %v3394 = vpop.f32.mrf.mxu0
        %v3395 = vadd.f32 0.0, %v3394
        %v3396 = vpop.f32.mrf.mxu0
        %v3397 = vpop.f32.mrf.mxu0
        %v3398 = vadd.f32 0.0, %v3397
        %v3399 = vpop.f32.mrf.mxu0
        %3400 = vdwg.mxu0
        %v3402 = vlaneseq
        %v3403 = vshrl.u32 %v3402, 7
        %v3404 = vsub.s32 0, %v3403
        %v3405 = vrot.slane %v3295, %v3404
        %v3407 = vadd.f32 %v3405, %v3395
        %v3408 = vadd.f32 %v3405, %v3398
        %s3409 = scalar_lea.vmem %s8, 8
        %v3410 = vld [vmem:[%s3409] sm:$0xf]
        %v3411 = vld [vmem:[%s3409 + $0x4] sm:$0xf]
        %v3414 = vunpack.c.l.b16 %v3410
        %v3415 = vunpack.c.l.b16 %v3411
        %v3416 = vpack.c.b16 %v3415, %v3414
        %v3418 = vsel %vm3303, %v3416, 0
        %3420 = vmatprep.subr.bf16.mxu0 0
        %3421 = vmatpush1.bf16.msra.mxu0 0
        %3422 = vmatprep.subr.bf16.mxu0 0
        %3423 = vmatpush1.bf16.msra.mxu0 0
        %3424 = vmatprep.subr.bf16.mxu0 0
        %3425 = vmatpush1.bf16.msra.mxu0 0
        %3426 = vmatprep.subr.bf16.mxu0 0
        %3427 = vmatpush1.bf16.msra.mxu0 0
        %3428 = vmatprep.subr.bf16.mxu0 0
        %3429 = vmatpush1.bf16.msra.mxu0 %v3294
        %3430 = vmatprep.subr.bf16.mxu0 0
        %3431 = vmatpush1.bf16.msra.mxu0 %v3293
        %3432 = vmatprep.subr.bf16.mxu0 0
        %3433 = vmatpush1.bf16.msra.mxu0 %v3292
        %3434 = vmatprep.subr.bf16.mxu0 0
        %3435 = vmatpush1.bf16.msra.mxu0 %v3291
        %3436 = vmatprep.subr.bf16.mxu0 0
        %3437 = vmatpush2.bf16.msra.mxu0 0
        %3438 = vmatprep.subr.bf16.mxu0 0
        %3439 = vmatpush2.bf16.msra.mxu0 0
        %3440 = vmatprep.subr.bf16.mxu0 0
        %3441 = vmatpush2.bf16.msra.mxu0 0
        %3442 = vmatprep.subr.bf16.mxu0 0
        %3443 = vmatpush2.bf16.msra.mxu0 0
        %3444 = vmatprep.subr.bf16.mxu0 0
        %3445 = vmatpush2.bf16.msra.mxu0 0
        %3446 = vmatprep.subr.bf16.mxu0 0
        %3447 = vmatpush2.bf16.msra.mxu0 0
        %3448 = vmatprep.subr.bf16.mxu0 0
        %3449 = vmatpush2.bf16.msra.mxu0 0
        %3450 = vmatprep.subr.bf16.mxu0 0
        %3451 = vmatpush2.bf16.msra.mxu0 0
        %3452 = vmatprep.mubr.bf16.mxu0 0
        %3453 = vmatmul.mubr.bf16.gmra.mxu0 %v3418
        %v3454 = vpop.f32.mrf.mxu0
        %v3455 = vadd.f32 0.0, %v3454
        %v3456 = vpop.f32.mrf.mxu0
        %v3457 = vpop.f32.mrf.mxu0
        %v3458 = vadd.f32 0.0, %v3457
        %v3459 = vpop.f32.mrf.mxu0
        %3460 = vdwg.mxu0
        %v3461 = vpack.c.bf16 %v3458, %v3455
        %s3462 = scalar_lea.vmem %s9, 8
        %v3463 = vld [vmem:[%s3462] sm:$0xf]
        %v3464 = vld [vmem:[%s3462 + $0x4] sm:$0xf]
        %v3467 = vunpack.c.l.b16 %v3463
        %v3468 = vunpack.c.l.b16 %v3464
        %v3469 = vpack.c.b16 %v3468, %v3467
        %v3472 = vsel %vm3173, %v3461, 0
        %3474 = vmatprep.subr.bf16.mxu0 0
        %3475 = vmatpush1.bf16.msra.mxu0 0
        %3476 = vmatprep.subr.bf16.mxu0 0
        %3477 = vmatpush1.bf16.msra.mxu0 0
        %3478 = vmatprep.subr.bf16.mxu0 0
        %3479 = vmatpush1.bf16.msra.mxu0 0
        %3480 = vmatprep.subr.bf16.mxu0 0
        %3481 = vmatpush1.bf16.msra.mxu0 0
        %3482 = vmatprep.subr.bf16.mxu0 0
        %3483 = vmatpush1.bf16.msra.mxu0 0
        %3484 = vmatprep.subr.bf16.mxu0 0
        %3485 = vmatpush1.bf16.msra.mxu0 0
        %3486 = vmatprep.subr.bf16.mxu0 0
        %3487 = vmatpush1.bf16.msra.mxu0 0
        %3488 = vmatprep.subr.bf16.mxu0 0
        %3489 = vmatpush1.bf16.msra.mxu0 %v3469
        %3490 = vmatprep.subr.bf16.mxu0 0
        %3491 = vmatpush2.bf16.msra.mxu0 0
        %3492 = vmatprep.subr.bf16.mxu0 0
        %3493 = vmatpush2.bf16.msra.mxu0 0
        %3494 = vmatprep.subr.bf16.mxu0 0
        %3495 = vmatpush2.bf16.msra.mxu0 0
        %3496 = vmatprep.subr.bf16.mxu0 0
        %3497 = vmatpush2.bf16.msra.mxu0 0
        %3498 = vmatprep.subr.bf16.mxu0 0
        %3499 = vmatpush2.bf16.msra.mxu0 0
        %3500 = vmatprep.subr.bf16.mxu0 0
        %3501 = vmatpush2.bf16.msra.mxu0 0
        %3502 = vmatprep.subr.bf16.mxu0 0
        %3503 = vmatpush2.bf16.msra.mxu0 0
        %3504 = vmatprep.subr.bf16.mxu0 0
        %3505 = vmatpush2.bf16.msra.mxu0 0
        %3506 = vmatprep.mubr.bf16.mxu0 0
        %3507 = vmatmul.mubr.bf16.gmra.mxu0 %v3472
        %v3508 = vpop.f32.mrf.mxu0
        %v3509 = vadd.f32 0.0, %v3508
        %v3510 = vpop.f32.mrf.mxu0
        %v3511 = vpop.f32.mrf.mxu0
        %v3512 = vadd.f32 0.0, %v3511
        %v3513 = vpop.f32.mrf.mxu0
        %3514 = vdwg.mxu0
        %v3515 = vadd.f32 %v3407, %v3509
        %v3516 = vadd.f32 %v3408, %v3512
        %s3517 = scalar_lea.vmem %s8, 16
        %v3518 = vld [vmem:[%s3517] sm:$0xf]
        %v3519 = vld [vmem:[%s3517 + $0x4] sm:$0xf]
        %v3522 = vunpack.c.l.b16 %v3518
        %v3523 = vunpack.c.l.b16 %v3519
        %v3524 = vpack.c.b16 %v3523, %v3522
        %v3526 = vsel %vm3303, %v3524, 0
        %3528 = vmatprep.subr.bf16.mxu0 0
        %3529 = vmatpush1.bf16.msra.mxu0 0
        %3530 = vmatprep.subr.bf16.mxu0 0
        %3531 = vmatpush1.bf16.msra.mxu0 0
        %3532 = vmatprep.subr.bf16.mxu0 0
        %3533 = vmatpush1.bf16.msra.mxu0 0
        %3534 = vmatprep.subr.bf16.mxu0 0
        %3535 = vmatpush1.bf16.msra.mxu0 0
        %3536 = vmatprep.subr.bf16.mxu0 0
        %3537 = vmatpush1.bf16.msra.mxu0 %v3294
        %3538 = vmatprep.subr.bf16.mxu0 0
        %3539 = vmatpush1.bf16.msra.mxu0 %v3293
        %3540 = vmatprep.subr.bf16.mxu0 0
        %3541 = vmatpush1.bf16.msra.mxu0 %v3292
        %3542 = vmatprep.subr.bf16.mxu0 0
        %3543 = vmatpush1.bf16.msra.mxu0 %v3291
        %3544 = vmatprep.subr.bf16.mxu0 0
        %3545 = vmatpush2.bf16.msra.mxu0 0
        %3546 = vmatprep.subr.bf16.mxu0 0
        %3547 = vmatpush2.bf16.msra.mxu0 0
        %3548 = vmatprep.subr.bf16.mxu0 0
        %3549 = vmatpush2.bf16.msra.mxu0 0
        %3550 = vmatprep.subr.bf16.mxu0 0
        %3551 = vmatpush2.bf16.msra.mxu0 0
        %3552 = vmatprep.subr.bf16.mxu0 0
        %3553 = vmatpush2.bf16.msra.mxu0 0
        %3554 = vmatprep.subr.bf16.mxu0 0
        %3555 = vmatpush2.bf16.msra.mxu0 0
        %3556 = vmatprep.subr.bf16.mxu0 0
        %3557 = vmatpush2.bf16.msra.mxu0 0
        %3558 = vmatprep.subr.bf16.mxu0 0
        %3559 = vmatpush2.bf16.msra.mxu0 0
        %3560 = vmatprep.mubr.bf16.mxu0 0
        %3561 = vmatmul.mubr.bf16.gmra.mxu0 %v3526
        %v3562 = vpop.f32.mrf.mxu0
        %v3563 = vadd.f32 0.0, %v3562
        %v3564 = vpop.f32.mrf.mxu0
        %v3565 = vpop.f32.mrf.mxu0
        %v3566 = vadd.f32 0.0, %v3565
        %v3567 = vpop.f32.mrf.mxu0
        %3568 = vdwg.mxu0
        %v3569 = vpack.c.bf16 %v3566, %v3563
        %s3570 = scalar_lea.vmem %s9, 16
        %v3571 = vld [vmem:[%s3570] sm:$0xf]
        %v3572 = vld [vmem:[%s3570 + $0x4] sm:$0xf]
        %v3575 = vunpack.c.l.b16 %v3571
        %v3576 = vunpack.c.l.b16 %v3572
        %v3577 = vpack.c.b16 %v3576, %v3575
        %v3580 = vsel %vm3173, %v3569, 0
        %3582 = vmatprep.subr.bf16.mxu0 0
        %3583 = vmatpush1.bf16.msra.mxu0 0
        %3584 = vmatprep.subr.bf16.mxu0 0
        %3585 = vmatpush1.bf16.msra.mxu0 0
        %3586 = vmatprep.subr.bf16.mxu0 0
        %3587 = vmatpush1.bf16.msra.mxu0 0
        %3588 = vmatprep.subr.bf16.mxu0 0
        %3589 = vmatpush1.bf16.msra.mxu0 0
        %3590 = vmatprep.subr.bf16.mxu0 0
        %3591 = vmatpush1.bf16.msra.mxu0 0
        %3592 = vmatprep.subr.bf16.mxu0 0
        %3593 = vmatpush1.bf16.msra.mxu0 0
        %3594 = vmatprep.subr.bf16.mxu0 0
        %3595 = vmatpush1.bf16.msra.mxu0 0
        %3596 = vmatprep.subr.bf16.mxu0 0
        %3597 = vmatpush1.bf16.msra.mxu0 %v3577
        %3598 = vmatprep.subr.bf16.mxu0 0
        %3599 = vmatpush2.bf16.msra.mxu0 0
        %3600 = vmatprep.subr.bf16.mxu0 0
        %3601 = vmatpush2.bf16.msra.mxu0 0
        %3602 = vmatprep.subr.bf16.mxu0 0
        %3603 = vmatpush2.bf16.msra.mxu0 0
        %3604 = vmatprep.subr.bf16.mxu0 0
        %3605 = vmatpush2.bf16.msra.mxu0 0
        %3606 = vmatprep.subr.bf16.mxu0 0
        %3607 = vmatpush2.bf16.msra.mxu0 0
        %3608 = vmatprep.subr.bf16.mxu0 0
        %3609 = vmatpush2.bf16.msra.mxu0 0
        %3610 = vmatprep.subr.bf16.mxu0 0
        %3611 = vmatpush2.bf16.msra.mxu0 0
        %3612 = vmatprep.subr.bf16.mxu0 0
        %3613 = vmatpush2.bf16.msra.mxu0 0
        %3614 = vmatprep.mubr.bf16.mxu0 0
        %3615 = vmatmul.mubr.bf16.gmra.mxu0 %v3580
        %v3616 = vpop.f32.mrf.mxu0
        %v3617 = vadd.f32 0.0, %v3616
        %v3618 = vpop.f32.mrf.mxu0
        %v3619 = vpop.f32.mrf.mxu0
        %v3620 = vadd.f32 0.0, %v3619
        %v3621 = vpop.f32.mrf.mxu0
        %3622 = vdwg.mxu0
        %v3623 = vadd.f32 %v3515, %v3617
        %v3624 = vadd.f32 %v3516, %v3620
        %s3625 = scalar_lea.vmem %s8, 24
        %v3626 = vld [vmem:[%s3625] sm:$0xf]
        %v3627 = vld [vmem:[%s3625 + $0x4] sm:$0xf]
        %v3630 = vunpack.c.l.b16 %v3626
        %v3631 = vunpack.c.l.b16 %v3627
        %v3632 = vpack.c.b16 %v3631, %v3630
        %v3634 = vsel %vm3303, %v3632, 0
        %3636 = vmatprep.subr.bf16.mxu0 0
        %3637 = vmatpush1.bf16.msra.mxu0 0
        %3638 = vmatprep.subr.bf16.mxu0 0
        %3639 = vmatpush1.bf16.msra.mxu0 0
        %3640 = vmatprep.subr.bf16.mxu0 0
        %3641 = vmatpush1.bf16.msra.mxu0 0
        %3642 = vmatprep.subr.bf16.mxu0 0
        %3643 = vmatpush1.bf16.msra.mxu0 0
        %3644 = vmatprep.subr.bf16.mxu0 0
        %3645 = vmatpush1.bf16.msra.mxu0 %v3294
        %3646 = vmatprep.subr.bf16.mxu0 0
        %3647 = vmatpush1.bf16.msra.mxu0 %v3293
        %3648 = vmatprep.subr.bf16.mxu0 0
        %3649 = vmatpush1.bf16.msra.mxu0 %v3292
        %3650 = vmatprep.subr.bf16.mxu0 0
        %3651 = vmatpush1.bf16.msra.mxu0 %v3291
        %3652 = vmatprep.subr.bf16.mxu0 0
        %3653 = vmatpush2.bf16.msra.mxu0 0
        %3654 = vmatprep.subr.bf16.mxu0 0
        %3655 = vmatpush2.bf16.msra.mxu0 0
        %3656 = vmatprep.subr.bf16.mxu0 0
        %3657 = vmatpush2.bf16.msra.mxu0 0
        %3658 = vmatprep.subr.bf16.mxu0 0
        %3659 = vmatpush2.bf16.msra.mxu0 0
        %3660 = vmatprep.subr.bf16.mxu0 0
        %3661 = vmatpush2.bf16.msra.mxu0 0
        %3662 = vmatprep.subr.bf16.mxu0 0
        %3663 = vmatpush2.bf16.msra.mxu0 0
        %3664 = vmatprep.subr.bf16.mxu0 0
        %3665 = vmatpush2.bf16.msra.mxu0 0
        %3666 = vmatprep.subr.bf16.mxu0 0
        %3667 = vmatpush2.bf16.msra.mxu0 0
        %3668 = vmatprep.mubr.bf16.mxu0 0
        %3669 = vmatmul.mubr.bf16.gmra.mxu0 %v3634
        %v3670 = vpop.f32.mrf.mxu0
        %v3671 = vadd.f32 0.0, %v3670
        %v3672 = vpop.f32.mrf.mxu0
        %v3673 = vpop.f32.mrf.mxu0
        %v3674 = vadd.f32 0.0, %v3673
        %v3675 = vpop.f32.mrf.mxu0
        %3676 = vdwg.mxu0
        %v3677 = vpack.c.bf16 %v3674, %v3671
        %s3678 = scalar_lea.vmem %s9, 24
        %v3679 = vld [vmem:[%s3678] sm:$0xf]
        %v3680 = vld [vmem:[%s3678 + $0x4] sm:$0xf]
        %v3683 = vunpack.c.l.b16 %v3679
        %v3684 = vunpack.c.l.b16 %v3680
        %v3685 = vpack.c.b16 %v3684, %v3683
        %v3688 = vsel %vm3173, %v3677, 0
        %3690 = vmatprep.subr.bf16.mxu0 0
        %3691 = vmatpush1.bf16.msra.mxu0 0
        %3692 = vmatprep.subr.bf16.mxu0 0
        %3693 = vmatpush1.bf16.msra.mxu0 0
        %3694 = vmatprep.subr.bf16.mxu0 0
        %3695 = vmatpush1.bf16.msra.mxu0 0
        %3696 = vmatprep.subr.bf16.mxu0 0
        %3697 = vmatpush1.bf16.msra.mxu0 0
        %3698 = vmatprep.subr.bf16.mxu0 0
        %3699 = vmatpush1.bf16.msra.mxu0 0
        %3700 = vmatprep.subr.bf16.mxu0 0
        %3701 = vmatpush1.bf16.msra.mxu0 0
        %3702 = vmatprep.subr.bf16.mxu0 0
        %3703 = vmatpush1.bf16.msra.mxu0 0
        %3704 = vmatprep.subr.bf16.mxu0 0
        %3705 = vmatpush1.bf16.msra.mxu0 %v3685
        %3706 = vmatprep.subr.bf16.mxu0 0
        %3707 = vmatpush2.bf16.msra.mxu0 0
        %3708 = vmatprep.subr.bf16.mxu0 0
        %3709 = vmatpush2.bf16.msra.mxu0 0
        %3710 = vmatprep.subr.bf16.mxu0 0
        %3711 = vmatpush2.bf16.msra.mxu0 0
        %3712 = vmatprep.subr.bf16.mxu0 0
        %3713 = vmatpush2.bf16.msra.mxu0 0
        %3714 = vmatprep.subr.bf16.mxu0 0
        %3715 = vmatpush2.bf16.msra.mxu0 0
        %3716 = vmatprep.subr.bf16.mxu0 0
        %3717 = vmatpush2.bf16.msra.mxu0 0
        %3718 = vmatprep.subr.bf16.mxu0 0
        %3719 = vmatpush2.bf16.msra.mxu0 0
        %3720 = vmatprep.subr.bf16.mxu0 0
        %3721 = vmatpush2.bf16.msra.mxu0 0
        %3722 = vmatprep.mubr.bf16.mxu0 0
        %3723 = vmatmul.mubr.bf16.gmra.mxu0 %v3688
        %v3724 = vpop.f32.mrf.mxu0
        %v3725 = vadd.f32 0.0, %v3724
        %v3726 = vpop.f32.mrf.mxu0
        %v3727 = vpop.f32.mrf.mxu0
        %v3728 = vadd.f32 0.0, %v3727
        %v3729 = vpop.f32.mrf.mxu0
        %3730 = vdwg.mxu0
        %v3731 = vadd.f32 %v3623, %v3725
        %v3732 = vadd.f32 %v3624, %v3728
        %s3733 = scalar_lea.vmem %s8, 32
        %v3734 = vld [vmem:[%s3733] sm:$0xf]
        %v3735 = vld [vmem:[%s3733 + $0x4] sm:$0xf]
        %v3738 = vunpack.c.l.b16 %v3734
        %v3739 = vunpack.c.l.b16 %v3735
        %v3740 = vpack.c.b16 %v3739, %v3738
        %v3742 = vsel %vm3303, %v3740, 0
        %3744 = vmatprep.subr.bf16.mxu0 0
        %3745 = vmatpush1.bf16.msra.mxu0 0
        %3746 = vmatprep.subr.bf16.mxu0 0
        %3747 = vmatpush1.bf16.msra.mxu0 0
        %3748 = vmatprep.subr.bf16.mxu0 0
        %3749 = vmatpush1.bf16.msra.mxu0 0
        %3750 = vmatprep.subr.bf16.mxu0 0
        %3751 = vmatpush1.bf16.msra.mxu0 0
        %3752 = vmatprep.subr.bf16.mxu0 0
        %3753 = vmatpush1.bf16.msra.mxu0 %v3294
        %3754 = vmatprep.subr.bf16.mxu0 0
        %3755 = vmatpush1.bf16.msra.mxu0 %v3293
        %3756 = vmatprep.subr.bf16.mxu0 0
        %3757 = vmatpush1.bf16.msra.mxu0 %v3292
        %3758 = vmatprep.subr.bf16.mxu0 0
        %3759 = vmatpush1.bf16.msra.mxu0 %v3291
        %3760 = vmatprep.subr.bf16.mxu0 0
        %3761 = vmatpush2.bf16.msra.mxu0 0
        %3762 = vmatprep.subr.bf16.mxu0 0
        %3763 = vmatpush2.bf16.msra.mxu0 0
        %3764 = vmatprep.subr.bf16.mxu0 0
        %3765 = vmatpush2.bf16.msra.mxu0 0
        %3766 = vmatprep.subr.bf16.mxu0 0
        %3767 = vmatpush2.bf16.msra.mxu0 0
        %3768 = vmatprep.subr.bf16.mxu0 0
        %3769 = vmatpush2.bf16.msra.mxu0 0
        %3770 = vmatprep.subr.bf16.mxu0 0
        %3771 = vmatpush2.bf16.msra.mxu0 0
        %3772 = vmatprep.subr.bf16.mxu0 0
        %3773 = vmatpush2.bf16.msra.mxu0 0
        %3774 = vmatprep.subr.bf16.mxu0 0
        %3775 = vmatpush2.bf16.msra.mxu0 0
        %3776 = vmatprep.mubr.bf16.mxu0 0
        %3777 = vmatmul.mubr.bf16.gmra.mxu0 %v3742
        %v3778 = vpop.f32.mrf.mxu0
        %v3779 = vadd.f32 0.0, %v3778
        %v3780 = vpop.f32.mrf.mxu0
        %v3781 = vpop.f32.mrf.mxu0
        %v3782 = vadd.f32 0.0, %v3781
        %v3783 = vpop.f32.mrf.mxu0
        %3784 = vdwg.mxu0
        %v3785 = vpack.c.bf16 %v3782, %v3779
        %s3786 = scalar_lea.vmem %s9, 32
        %v3787 = vld [vmem:[%s3786] sm:$0xf]
        %v3788 = vld [vmem:[%s3786 + $0x4] sm:$0xf]
        %v3791 = vunpack.c.l.b16 %v3787
        %v3792 = vunpack.c.l.b16 %v3788
        %v3793 = vpack.c.b16 %v3792, %v3791
        %v3796 = vsel %vm3173, %v3785, 0
        %3798 = vmatprep.subr.bf16.mxu0 0
        %3799 = vmatpush1.bf16.msra.mxu0 0
        %3800 = vmatprep.subr.bf16.mxu0 0
        %3801 = vmatpush1.bf16.msra.mxu0 0
        %3802 = vmatprep.subr.bf16.mxu0 0
        %3803 = vmatpush1.bf16.msra.mxu0 0
        %3804 = vmatprep.subr.bf16.mxu0 0
        %3805 = vmatpush1.bf16.msra.mxu0 0
        %3806 = vmatprep.subr.bf16.mxu0 0
        %3807 = vmatpush1.bf16.msra.mxu0 0
        %3808 = vmatprep.subr.bf16.mxu0 0
        %3809 = vmatpush1.bf16.msra.mxu0 0
        %3810 = vmatprep.subr.bf16.mxu0 0
        %3811 = vmatpush1.bf16.msra.mxu0 0
        %3812 = vmatprep.subr.bf16.mxu0 0
        %3813 = vmatpush1.bf16.msra.mxu0 %v3793
        %3814 = vmatprep.subr.bf16.mxu0 0
        %3815 = vmatpush2.bf16.msra.mxu0 0
        %3816 = vmatprep.subr.bf16.mxu0 0
        %3817 = vmatpush2.bf16.msra.mxu0 0
        %3818 = vmatprep.subr.bf16.mxu0 0
        %3819 = vmatpush2.bf16.msra.mxu0 0
        %3820 = vmatprep.subr.bf16.mxu0 0
        %3821 = vmatpush2.bf16.msra.mxu0 0
        %3822 = vmatprep.subr.bf16.mxu0 0
        %3823 = vmatpush2.bf16.msra.mxu0 0
        %3824 = vmatprep.subr.bf16.mxu0 0
        %3825 = vmatpush2.bf16.msra.mxu0 0
        %3826 = vmatprep.subr.bf16.mxu0 0
        %3827 = vmatpush2.bf16.msra.mxu0 0
        %3828 = vmatprep.subr.bf16.mxu0 0
        %3829 = vmatpush2.bf16.msra.mxu0 0
        %3830 = vmatprep.mubr.bf16.mxu0 0
        %3831 = vmatmul.mubr.bf16.gmra.mxu0 %v3796
        %v3832 = vpop.f32.mrf.mxu0
        %v3833 = vadd.f32 0.0, %v3832
        %v3834 = vpop.f32.mrf.mxu0
        %v3835 = vpop.f32.mrf.mxu0
        %v3836 = vadd.f32 0.0, %v3835
        %v3837 = vpop.f32.mrf.mxu0
        %3838 = vdwg.mxu0
        %v3839 = vadd.f32 %v3731, %v3833
        %v3840 = vadd.f32 %v3732, %v3836
        %s3841 = scalar_lea.vmem %s8, 40
        %v3842 = vld [vmem:[%s3841] sm:$0xf]
        %v3843 = vld [vmem:[%s3841 + $0x4] sm:$0xf]
        %v3846 = vunpack.c.l.b16 %v3842
        %v3847 = vunpack.c.l.b16 %v3843
        %v3848 = vpack.c.b16 %v3847, %v3846
        %v3850 = vsel %vm3303, %v3848, 0
        %3852 = vmatprep.subr.bf16.mxu0 0
        %3853 = vmatpush1.bf16.msra.mxu0 0
        %3854 = vmatprep.subr.bf16.mxu0 0
        %3855 = vmatpush1.bf16.msra.mxu0 0
        %3856 = vmatprep.subr.bf16.mxu0 0
        %3857 = vmatpush1.bf16.msra.mxu0 0
        %3858 = vmatprep.subr.bf16.mxu0 0
        %3859 = vmatpush1.bf16.msra.mxu0 0
        %3860 = vmatprep.subr.bf16.mxu0 0
        %3861 = vmatpush1.bf16.msra.mxu0 %v3294
        %3862 = vmatprep.subr.bf16.mxu0 0
        %3863 = vmatpush1.bf16.msra.mxu0 %v3293
        %3864 = vmatprep.subr.bf16.mxu0 0
        %3865 = vmatpush1.bf16.msra.mxu0 %v3292
        %3866 = vmatprep.subr.bf16.mxu0 0
        %3867 = vmatpush1.bf16.msra.mxu0 %v3291
        %3868 = vmatprep.subr.bf16.mxu0 0
        %3869 = vmatpush2.bf16.msra.mxu0 0
        %3870 = vmatprep.subr.bf16.mxu0 0
        %3871 = vmatpush2.bf16.msra.mxu0 0
        %3872 = vmatprep.subr.bf16.mxu0 0
        %3873 = vmatpush2.bf16.msra.mxu0 0
        %3874 = vmatprep.subr.bf16.mxu0 0
        %3875 = vmatpush2.bf16.msra.mxu0 0
        %3876 = vmatprep.subr.bf16.mxu0 0
        %3877 = vmatpush2.bf16.msra.mxu0 0
        %3878 = vmatprep.subr.bf16.mxu0 0
        %3879 = vmatpush2.bf16.msra.mxu0 0
        %3880 = vmatprep.subr.bf16.mxu0 0
        %3881 = vmatpush2.bf16.msra.mxu0 0
        %3882 = vmatprep.subr.bf16.mxu0 0
        %3883 = vmatpush2.bf16.msra.mxu0 0
        %3884 = vmatprep.mubr.bf16.mxu0 0
        %3885 = vmatmul.mubr.bf16.gmra.mxu0 %v3850
        %v3886 = vpop.f32.mrf.mxu0
        %v3887 = vadd.f32 0.0, %v3886
        %v3888 = vpop.f32.mrf.mxu0
        %v3889 = vpop.f32.mrf.mxu0
        %v3890 = vadd.f32 0.0, %v3889
        %v3891 = vpop.f32.mrf.mxu0
        %3892 = vdwg.mxu0
        %v3893 = vpack.c.bf16 %v3890, %v3887
        %s3894 = scalar_lea.vmem %s9, 40
        %v3895 = vld [vmem:[%s3894] sm:$0xf]
        %v3896 = vld [vmem:[%s3894 + $0x4] sm:$0xf]
        %v3899 = vunpack.c.l.b16 %v3895
        %v3900 = vunpack.c.l.b16 %v3896
        %v3901 = vpack.c.b16 %v3900, %v3899
        %v3904 = vsel %vm3173, %v3893, 0
        %3906 = vmatprep.subr.bf16.mxu0 0
        %3907 = vmatpush1.bf16.msra.mxu0 0
        %3908 = vmatprep.subr.bf16.mxu0 0
        %3909 = vmatpush1.bf16.msra.mxu0 0
        %3910 = vmatprep.subr.bf16.mxu0 0
        %3911 = vmatpush1.bf16.msra.mxu0 0
        %3912 = vmatprep.subr.bf16.mxu0 0
        %3913 = vmatpush1.bf16.msra.mxu0 0
        %3914 = vmatprep.subr.bf16.mxu0 0
        %3915 = vmatpush1.bf16.msra.mxu0 0
        %3916 = vmatprep.subr.bf16.mxu0 0
        %3917 = vmatpush1.bf16.msra.mxu0 0
        %3918 = vmatprep.subr.bf16.mxu0 0
        %3919 = vmatpush1.bf16.msra.mxu0 0
        %3920 = vmatprep.subr.bf16.mxu0 0
        %3921 = vmatpush1.bf16.msra.mxu0 %v3901
        %3922 = vmatprep.subr.bf16.mxu0 0
        %3923 = vmatpush2.bf16.msra.mxu0 0
        %3924 = vmatprep.subr.bf16.mxu0 0
        %3925 = vmatpush2.bf16.msra.mxu0 0
        %3926 = vmatprep.subr.bf16.mxu0 0
        %3927 = vmatpush2.bf16.msra.mxu0 0
        %3928 = vmatprep.subr.bf16.mxu0 0
        %3929 = vmatpush2.bf16.msra.mxu0 0
        %3930 = vmatprep.subr.bf16.mxu0 0
        %3931 = vmatpush2.bf16.msra.mxu0 0
        %3932 = vmatprep.subr.bf16.mxu0 0
        %3933 = vmatpush2.bf16.msra.mxu0 0
        %3934 = vmatprep.subr.bf16.mxu0 0
        %3935 = vmatpush2.bf16.msra.mxu0 0
        %3936 = vmatprep.subr.bf16.mxu0 0
        %3937 = vmatpush2.bf16.msra.mxu0 0
        %3938 = vmatprep.mubr.bf16.mxu0 0
        %3939 = vmatmul.mubr.bf16.gmra.mxu0 %v3904
        %v3940 = vpop.f32.mrf.mxu0
        %v3941 = vadd.f32 0.0, %v3940
        %v3942 = vpop.f32.mrf.mxu0
        %v3943 = vpop.f32.mrf.mxu0
        %v3944 = vadd.f32 0.0, %v3943
        %v3945 = vpop.f32.mrf.mxu0
        %3946 = vdwg.mxu0
        %v3947 = vadd.f32 %v3839, %v3941
        %v3948 = vadd.f32 %v3840, %v3944
        %s3949 = scalar_lea.vmem %s8, 48
        %v3950 = vld [vmem:[%s3949] sm:$0xf]
        %v3951 = vld [vmem:[%s3949 + $0x4] sm:$0xf]
        %v3954 = vunpack.c.l.b16 %v3950
        %v3955 = vunpack.c.l.b16 %v3951
        %v3956 = vpack.c.b16 %v3955, %v3954
        %v3958 = vsel %vm3303, %v3956, 0
        %3960 = vmatprep.subr.bf16.mxu0 0
        %3961 = vmatpush1.bf16.msra.mxu0 0
        %3962 = vmatprep.subr.bf16.mxu0 0
        %3963 = vmatpush1.bf16.msra.mxu0 0
        %3964 = vmatprep.subr.bf16.mxu0 0
        %3965 = vmatpush1.bf16.msra.mxu0 0
        %3966 = vmatprep.subr.bf16.mxu0 0
        %3967 = vmatpush1.bf16.msra.mxu0 0
        %3968 = vmatprep.subr.bf16.mxu0 0
        %3969 = vmatpush1.bf16.msra.mxu0 %v3294
        %3970 = vmatprep.subr.bf16.mxu0 0
        %3971 = vmatpush1.bf16.msra.mxu0 %v3293
        %3972 = vmatprep.subr.bf16.mxu0 0
        %3973 = vmatpush1.bf16.msra.mxu0 %v3292
        %3974 = vmatprep.subr.bf16.mxu0 0
        %3975 = vmatpush1.bf16.msra.mxu0 %v3291
        %3976 = vmatprep.subr.bf16.mxu0 0
        %3977 = vmatpush2.bf16.msra.mxu0 0
        %3978 = vmatprep.subr.bf16.mxu0 0
        %3979 = vmatpush2.bf16.msra.mxu0 0
        %3980 = vmatprep.subr.bf16.mxu0 0
        %3981 = vmatpush2.bf16.msra.mxu0 0
        %3982 = vmatprep.subr.bf16.mxu0 0
        %3983 = vmatpush2.bf16.msra.mxu0 0
        %3984 = vmatprep.subr.bf16.mxu0 0
        %3985 = vmatpush2.bf16.msra.mxu0 0
        %3986 = vmatprep.subr.bf16.mxu0 0
        %3987 = vmatpush2.bf16.msra.mxu0 0
        %3988 = vmatprep.subr.bf16.mxu0 0
        %3989 = vmatpush2.bf16.msra.mxu0 0
        %3990 = vmatprep.subr.bf16.mxu0 0
        %3991 = vmatpush2.bf16.msra.mxu0 0
        %3992 = vmatprep.mubr.bf16.mxu0 0
        %3993 = vmatmul.mubr.bf16.gmra.mxu0 %v3958
        %v3994 = vpop.f32.mrf.mxu0
        %v3995 = vadd.f32 0.0, %v3994
        %v3996 = vpop.f32.mrf.mxu0
        %v3997 = vpop.f32.mrf.mxu0
        %v3998 = vadd.f32 0.0, %v3997
        %v3999 = vpop.f32.mrf.mxu0
        %4000 = vdwg.mxu0
        %v4001 = vpack.c.bf16 %v3998, %v3995
        %s4002 = scalar_lea.vmem %s9, 48
        %v4003 = vld [vmem:[%s4002] sm:$0xf]
        %v4004 = vld [vmem:[%s4002 + $0x4] sm:$0xf]
        %v4007 = vunpack.c.l.b16 %v4003
        %v4008 = vunpack.c.l.b16 %v4004
        %v4009 = vpack.c.b16 %v4008, %v4007
        %v4012 = vsel %vm3173, %v4001, 0
        %4014 = vmatprep.subr.bf16.mxu0 0
        %4015 = vmatpush1.bf16.msra.mxu0 0
        %4016 = vmatprep.subr.bf16.mxu0 0
        %4017 = vmatpush1.bf16.msra.mxu0 0
        %4018 = vmatprep.subr.bf16.mxu0 0
        %4019 = vmatpush1.bf16.msra.mxu0 0
        %4020 = vmatprep.subr.bf16.mxu0 0
        %4021 = vmatpush1.bf16.msra.mxu0 0
        %4022 = vmatprep.subr.bf16.mxu0 0
        %4023 = vmatpush1.bf16.msra.mxu0 0
        %4024 = vmatprep.subr.bf16.mxu0 0
        %4025 = vmatpush1.bf16.msra.mxu0 0
        %4026 = vmatprep.subr.bf16.mxu0 0
        %4027 = vmatpush1.bf16.msra.mxu0 0
        %4028 = vmatprep.subr.bf16.mxu0 0
        %4029 = vmatpush1.bf16.msra.mxu0 %v4009
        %4030 = vmatprep.subr.bf16.mxu0 0
        %4031 = vmatpush2.bf16.msra.mxu0 0
        %4032 = vmatprep.subr.bf16.mxu0 0
        %4033 = vmatpush2.bf16.msra.mxu0 0
        %4034 = vmatprep.subr.bf16.mxu0 0
        %4035 = vmatpush2.bf16.msra.mxu0 0
        %4036 = vmatprep.subr.bf16.mxu0 0
        %4037 = vmatpush2.bf16.msra.mxu0 0
        %4038 = vmatprep.subr.bf16.mxu0 0
        %4039 = vmatpush2.bf16.msra.mxu0 0
        %4040 = vmatprep.subr.bf16.mxu0 0
        %4041 = vmatpush2.bf16.msra.mxu0 0
        %4042 = vmatprep.subr.bf16.mxu0 0
        %4043 = vmatpush2.bf16.msra.mxu0 0
        %4044 = vmatprep.subr.bf16.mxu0 0
        %4045 = vmatpush2.bf16.msra.mxu0 0
        %4046 = vmatprep.mubr.bf16.mxu0 0
        %4047 = vmatmul.mubr.bf16.gmra.mxu0 %v4012
        %v4048 = vpop.f32.mrf.mxu0
        %v4049 = vadd.f32 0.0, %v4048
        %v4050 = vpop.f32.mrf.mxu0
        %v4051 = vpop.f32.mrf.mxu0
        %v4052 = vadd.f32 0.0, %v4051
        %v4053 = vpop.f32.mrf.mxu0
        %4054 = vdwg.mxu0
        %v4055 = vadd.f32 %v3947, %v4049
        %v4056 = vadd.f32 %v3948, %v4052
        %s4057 = scalar_lea.vmem %s8, 56
        %v4058 = vld [vmem:[%s4057] sm:$0xf]
        %v4059 = vld [vmem:[%s4057 + $0x4] sm:$0xf]
        %v4062 = vunpack.c.l.b16 %v4058
        %v4063 = vunpack.c.l.b16 %v4059
        %v4064 = vpack.c.b16 %v4063, %v4062
        %v4066 = vsel %vm3303, %v4064, 0
        %4068 = vmatprep.subr.bf16.mxu0 0
        %4069 = vmatpush1.bf16.msra.mxu0 0
        %4070 = vmatprep.subr.bf16.mxu0 0
        %4071 = vmatpush1.bf16.msra.mxu0 0
        %4072 = vmatprep.subr.bf16.mxu0 0
        %4073 = vmatpush1.bf16.msra.mxu0 0
        %4074 = vmatprep.subr.bf16.mxu0 0
        %4075 = vmatpush1.bf16.msra.mxu0 0
        %4076 = vmatprep.subr.bf16.mxu0 0
        %4077 = vmatpush1.bf16.msra.mxu0 %v3294
        %4078 = vmatprep.subr.bf16.mxu0 0
        %4079 = vmatpush1.bf16.msra.mxu0 %v3293
        %4080 = vmatprep.subr.bf16.mxu0 0
        %4081 = vmatpush1.bf16.msra.mxu0 %v3292
        %4082 = vmatprep.subr.bf16.mxu0 0
        %4083 = vmatpush1.bf16.msra.mxu0 %v3291
        %4084 = vmatprep.subr.bf16.mxu0 0
        %4085 = vmatpush2.bf16.msra.mxu0 0
        %4086 = vmatprep.subr.bf16.mxu0 0
        %4087 = vmatpush2.bf16.msra.mxu0 0
        %4088 = vmatprep.subr.bf16.mxu0 0
        %4089 = vmatpush2.bf16.msra.mxu0 0
        %4090 = vmatprep.subr.bf16.mxu0 0
        %4091 = vmatpush2.bf16.msra.mxu0 0
        %4092 = vmatprep.subr.bf16.mxu0 0
        %4093 = vmatpush2.bf16.msra.mxu0 0
        %4094 = vmatprep.subr.bf16.mxu0 0
        %4095 = vmatpush2.bf16.msra.mxu0 0
        %4096 = vmatprep.subr.bf16.mxu0 0
        %4097 = vmatpush2.bf16.msra.mxu0 0
        %4098 = vmatprep.subr.bf16.mxu0 0
        %4099 = vmatpush2.bf16.msra.mxu0 0
        %4100 = vmatprep.mubr.bf16.mxu0 0
        %4101 = vmatmul.mubr.bf16.gmra.mxu0 %v4066
        %v4102 = vpop.f32.mrf.mxu0
        %v4103 = vadd.f32 0.0, %v4102
        %v4104 = vpop.f32.mrf.mxu0
        %v4105 = vpop.f32.mrf.mxu0
        %v4106 = vadd.f32 0.0, %v4105
        %v4107 = vpop.f32.mrf.mxu0
        %4108 = vdwg.mxu0
        %v4109 = vpack.c.bf16 %v4106, %v4103
        %s4110 = scalar_lea.vmem %s9, 56
        %v4111 = vld [vmem:[%s4110] sm:$0xf]
        %v4112 = vld [vmem:[%s4110 + $0x4] sm:$0xf]
        %v4115 = vunpack.c.l.b16 %v4111
        %v4116 = vunpack.c.l.b16 %v4112
        %v4117 = vpack.c.b16 %v4116, %v4115
        %v4120 = vsel %vm3173, %v4109, 0
        %4122 = vmatprep.subr.bf16.mxu0 0
        %4123 = vmatpush1.bf16.msra.mxu0 0
        %4124 = vmatprep.subr.bf16.mxu0 0
        %4125 = vmatpush1.bf16.msra.mxu0 0
        %4126 = vmatprep.subr.bf16.mxu0 0
        %4127 = vmatpush1.bf16.msra.mxu0 0
        %4128 = vmatprep.subr.bf16.mxu0 0
        %4129 = vmatpush1.bf16.msra.mxu0 0
        %4130 = vmatprep.subr.bf16.mxu0 0
        %4131 = vmatpush1.bf16.msra.mxu0 0
        %4132 = vmatprep.subr.bf16.mxu0 0
        %4133 = vmatpush1.bf16.msra.mxu0 0
        %4134 = vmatprep.subr.bf16.mxu0 0
        %4135 = vmatpush1.bf16.msra.mxu0 0
        %4136 = vmatprep.subr.bf16.mxu0 0
        %4137 = vmatpush1.bf16.msra.mxu0 %v4117
        %4138 = vmatprep.subr.bf16.mxu0 0
        %4139 = vmatpush2.bf16.msra.mxu0 0
        %4140 = vmatprep.subr.bf16.mxu0 0
        %4141 = vmatpush2.bf16.msra.mxu0 0
        %4142 = vmatprep.subr.bf16.mxu0 0
        %4143 = vmatpush2.bf16.msra.mxu0 0
        %4144 = vmatprep.subr.bf16.mxu0 0
        %4145 = vmatpush2.bf16.msra.mxu0 0
        %4146 = vmatprep.subr.bf16.mxu0 0
        %4147 = vmatpush2.bf16.msra.mxu0 0
        %4148 = vmatprep.subr.bf16.mxu0 0
        %4149 = vmatpush2.bf16.msra.mxu0 0
        %4150 = vmatprep.subr.bf16.mxu0 0
        %4151 = vmatpush2.bf16.msra.mxu0 0
        %4152 = vmatprep.subr.bf16.mxu0 0
        %4153 = vmatpush2.bf16.msra.mxu0 0
        %4154 = vmatprep.mubr.bf16.mxu0 0
        %4155 = vmatmul.mubr.bf16.gmra.mxu0 %v4120
        %v4156 = vpop.f32.mrf.mxu0
        %v4157 = vadd.f32 0.0, %v4156
        %v4158 = vpop.f32.mrf.mxu0
        %v4159 = vpop.f32.mrf.mxu0
        %v4160 = vadd.f32 0.0, %v4159
        %v4161 = vpop.f32.mrf.mxu0
        %4162 = vdwg.mxu0
        %v4163 = vadd.f32 %v4055, %v4157
        %v4164 = vadd.f32 %v4056, %v4160
        %s4165 = scalar_lea.vmem %s8, 64
        %v4166 = vld [vmem:[%s4165] sm:$0xf]
        %v4167 = vld [vmem:[%s4165 + $0x4] sm:$0xf]
        %v4170 = vunpack.c.l.b16 %v4166
        %v4171 = vunpack.c.l.b16 %v4167
        %v4172 = vpack.c.b16 %v4171, %v4170
        %v4174 = vsel %vm3303, %v4172, 0
        %4176 = vmatprep.subr.bf16.mxu0 0
        %4177 = vmatpush1.bf16.msra.mxu0 0
        %4178 = vmatprep.subr.bf16.mxu0 0
        %4179 = vmatpush1.bf16.msra.mxu0 0
        %4180 = vmatprep.subr.bf16.mxu0 0
        %4181 = vmatpush1.bf16.msra.mxu0 0
        %4182 = vmatprep.subr.bf16.mxu0 0
        %4183 = vmatpush1.bf16.msra.mxu0 0
        %4184 = vmatprep.subr.bf16.mxu0 0
        %4185 = vmatpush1.bf16.msra.mxu0 %v3294
        %4186 = vmatprep.subr.bf16.mxu0 0
        %4187 = vmatpush1.bf16.msra.mxu0 %v3293
        %4188 = vmatprep.subr.bf16.mxu0 0
        %4189 = vmatpush1.bf16.msra.mxu0 %v3292
        %4190 = vmatprep.subr.bf16.mxu0 0
        %4191 = vmatpush1.bf16.msra.mxu0 %v3291
        %4192 = vmatprep.subr.bf16.mxu0 0
        %4193 = vmatpush2.bf16.msra.mxu0 0
        %4194 = vmatprep.subr.bf16.mxu0 0
        %4195 = vmatpush2.bf16.msra.mxu0 0
        %4196 = vmatprep.subr.bf16.mxu0 0
        %4197 = vmatpush2.bf16.msra.mxu0 0
        %4198 = vmatprep.subr.bf16.mxu0 0
        %4199 = vmatpush2.bf16.msra.mxu0 0
        %4200 = vmatprep.subr.bf16.mxu0 0
        %4201 = vmatpush2.bf16.msra.mxu0 0
        %4202 = vmatprep.subr.bf16.mxu0 0
        %4203 = vmatpush2.bf16.msra.mxu0 0
        %4204 = vmatprep.subr.bf16.mxu0 0
        %4205 = vmatpush2.bf16.msra.mxu0 0
        %4206 = vmatprep.subr.bf16.mxu0 0
        %4207 = vmatpush2.bf16.msra.mxu0 0
        %4208 = vmatprep.mubr.bf16.mxu0 0
        %4209 = vmatmul.mubr.bf16.gmra.mxu0 %v4174
        %v4210 = vpop.f32.mrf.mxu0
        %v4211 = vadd.f32 0.0, %v4210
        %v4212 = vpop.f32.mrf.mxu0
        %v4213 = vpop.f32.mrf.mxu0
        %v4214 = vadd.f32 0.0, %v4213
        %v4215 = vpop.f32.mrf.mxu0
        %4216 = vdwg.mxu0
        %v4217 = vpack.c.bf16 %v4214, %v4211
        %s4218 = scalar_lea.vmem %s9, 64
        %v4219 = vld [vmem:[%s4218] sm:$0xf]
        %v4220 = vld [vmem:[%s4218 + $0x4] sm:$0xf]
        %v4223 = vunpack.c.l.b16 %v4219
        %v4224 = vunpack.c.l.b16 %v4220
        %v4225 = vpack.c.b16 %v4224, %v4223
        %v4228 = vsel %vm3173, %v4217, 0
        %4230 = vmatprep.subr.bf16.mxu0 0
        %4231 = vmatpush1.bf16.msra.mxu0 0
        %4232 = vmatprep.subr.bf16.mxu0 0
        %4233 = vmatpush1.bf16.msra.mxu0 0
        %4234 = vmatprep.subr.bf16.mxu0 0
        %4235 = vmatpush1.bf16.msra.mxu0 0
        %4236 = vmatprep.subr.bf16.mxu0 0
        %4237 = vmatpush1.bf16.msra.mxu0 0
        %4238 = vmatprep.subr.bf16.mxu0 0
        %4239 = vmatpush1.bf16.msra.mxu0 0
        %4240 = vmatprep.subr.bf16.mxu0 0
        %4241 = vmatpush1.bf16.msra.mxu0 0
        %4242 = vmatprep.subr.bf16.mxu0 0
        %4243 = vmatpush1.bf16.msra.mxu0 0
        %4244 = vmatprep.subr.bf16.mxu0 0
        %4245 = vmatpush1.bf16.msra.mxu0 %v4225
        %4246 = vmatprep.subr.bf16.mxu0 0
        %4247 = vmatpush2.bf16.msra.mxu0 0
        %4248 = vmatprep.subr.bf16.mxu0 0
        %4249 = vmatpush2.bf16.msra.mxu0 0
        %4250 = vmatprep.subr.bf16.mxu0 0
        %4251 = vmatpush2.bf16.msra.mxu0 0
        %4252 = vmatprep.subr.bf16.mxu0 0
        %4253 = vmatpush2.bf16.msra.mxu0 0
        %4254 = vmatprep.subr.bf16.mxu0 0
        %4255 = vmatpush2.bf16.msra.mxu0 0
        %4256 = vmatprep.subr.bf16.mxu0 0
        %4257 = vmatpush2.bf16.msra.mxu0 0
        %4258 = vmatprep.subr.bf16.mxu0 0
        %4259 = vmatpush2.bf16.msra.mxu0 0
        %4260 = vmatprep.subr.bf16.mxu0 0
        %4261 = vmatpush2.bf16.msra.mxu0 0
        %4262 = vmatprep.mubr.bf16.mxu0 0
        %4263 = vmatmul.mubr.bf16.gmra.mxu0 %v4228
        %v4264 = vpop.f32.mrf.mxu0
        %v4265 = vadd.f32 0.0, %v4264
        %v4266 = vpop.f32.mrf.mxu0
        %v4267 = vpop.f32.mrf.mxu0
        %v4268 = vadd.f32 0.0, %v4267
        %v4269 = vpop.f32.mrf.mxu0
        %4270 = vdwg.mxu0
        %v4271 = vadd.f32 %v4163, %v4265
        %v4272 = vadd.f32 %v4164, %v4268
        %v4273 = vadd.f32 %v4271, 3.0
        %v4274 = vadd.f32 %v4272, 3.0
        %v4275 = vmax.f32 %v4273, 0.0
        %v4276 = vmax.f32 %v4274, 0.0
        %v4277 = vmin.f32 %v4275, 6.0
        %v4278 = vmin.f32 %v4276, 6.0
        %v4279 = vmul.f32 %v4271, %v4277
        %v4280 = vmul.f32 %v4272, %v4278
        %v4281 = vmul.f32 %v4279, 0.16666667
        %v4282 = vmul.f32 %v4280, 0.16666667
        %v4283 = vpack.c.bf16 %v4282, %v4281
        %v4284 = vld [vmem:[%s11] sm:$0xf]
        %v4285 = vld [vmem:[%s11 + $0x4] sm:$0xf]
        %v4286 = vld [vmem:[%s12] sm:$0x1]
        %v4288 = vlaneseq
        %v4289 = vshrl.u32 %v4288, 7
        %v4290 = vsub.s32 0, %v4289
        %v4291 = vrot.slane %v4286, %v4290
        %v4295 = vunpack.c.l.b16 %v4284
        %v4296 = vunpack.c.l.b16 %v4285
        %v4297 = vpack.c.b16 %v4296, %v4295
        %v4300 = vsel %vm3173, %v4283, 0
        %4302 = vmatprep.subr.bf16.mxu0 0
        %4303 = vmatpush1.bf16.msra.mxu0 0
        %4304 = vmatprep.subr.bf16.mxu0 0
        %4305 = vmatpush1.bf16.msra.mxu0 0
        %4306 = vmatprep.subr.bf16.mxu0 0
        %4307 = vmatpush1.bf16.msra.mxu0 0
        %4308 = vmatprep.subr.bf16.mxu0 0
        %4309 = vmatpush1.bf16.msra.mxu0 0
        %4310 = vmatprep.subr.bf16.mxu0 0
        %4311 = vmatpush1.bf16.msra.mxu0 0
        %4312 = vmatprep.subr.bf16.mxu0 0
        %4313 = vmatpush1.bf16.msra.mxu0 0
        %4314 = vmatprep.subr.bf16.mxu0 0
        %4315 = vmatpush1.bf16.msra.mxu0 0
        %4316 = vmatprep.subr.bf16.mxu0 0
        %4317 = vmatpush1.bf16.msra.mxu0 %v4297
        %4318 = vmatprep.subr.bf16.mxu0 0
        %4319 = vmatpush2.bf16.msra.mxu0 0
        %4320 = vmatprep.subr.bf16.mxu0 0
        %4321 = vmatpush2.bf16.msra.mxu0 0
        %4322 = vmatprep.subr.bf16.mxu0 0
        %4323 = vmatpush2.bf16.msra.mxu0 0
        %4324 = vmatprep.subr.bf16.mxu0 0
        %4325 = vmatpush2.bf16.msra.mxu0 0
        %4326 = vmatprep.subr.bf16.mxu0 0
        %4327 = vmatpush2.bf16.msra.mxu0 0
        %4328 = vmatprep.subr.bf16.mxu0 0
        %4329 = vmatpush2.bf16.msra.mxu0 0
        %4330 = vmatprep.subr.bf16.mxu0 0
        %4331 = vmatpush2.bf16.msra.mxu0 0
        %4332 = vmatprep.subr.bf16.mxu0 0
        %4333 = vmatpush2.bf16.msra.mxu0 0
        %4334 = vmatprep.mubr.bf16.mxu0 0
        %4335 = vmatmul.mubr.bf16.gmra.mxu0 %v4300
        %v4336 = vpop.f32.mrf.mxu0
        %v4337 = vadd.f32 %v4291, %v4336
        %v4338 = vpop.f32.mrf.mxu0
        %v4339 = vpop.f32.mrf.mxu0
        %v4340 = vadd.f32 %v4291, %v4339
        %v4341 = vpop.f32.mrf.mxu0
        %4342 = vdwg.mxu0
        %vm4343 = vcmask 105472
        %4344 = vst.msk [vmem:[%s677] sm:$0xff] %vm4343, %v4337
        %4345 = vst.msk [vmem:[%s677 + $0x8] sm:$0xff] %vm4343, %v4340
        %s4346 = scalar_lea.vmem %s11, 8
        %v4347 = vld [vmem:[%s4346] sm:$0xf]
        %v4348 = vld [vmem:[%s4346 + $0x4] sm:$0xf]
        %s4349 = scalar_lea.vmem %s12, 1
        %v4350 = vld [vmem:[%s4349] sm:$0x1]
        %v4352 = vlaneseq
        %v4353 = vshrl.u32 %v4352, 7
        %v4354 = vsub.s32 0, %v4353
        %v4355 = vrot.slane %v4350, %v4354
        %v4359 = vunpack.c.l.b16 %v4347
        %v4360 = vunpack.c.l.b16 %v4348
        %v4361 = vpack.c.b16 %v4360, %v4359
        %4363 = vmatprep.subr.bf16.mxu0 0
        %4364 = vmatpush1.bf16.msra.mxu0 0
        %4365 = vmatprep.subr.bf16.mxu0 0
        %4366 = vmatpush1.bf16.msra.mxu0 0
        %4367 = vmatprep.subr.bf16.mxu0 0
        %4368 = vmatpush1.bf16.msra.mxu0 0
        %4369 = vmatprep.subr.bf16.mxu0 0
        %4370 = vmatpush1.bf16.msra.mxu0 0
        %4371 = vmatprep.subr.bf16.mxu0 0
        %4372 = vmatpush1.bf16.msra.mxu0 0
        %4373 = vmatprep.subr.bf16.mxu0 0
        %4374 = vmatpush1.bf16.msra.mxu0 0
        %4375 = vmatprep.subr.bf16.mxu0 0
        %4376 = vmatpush1.bf16.msra.mxu0 0
        %4377 = vmatprep.subr.bf16.mxu0 0
        %4378 = vmatpush1.bf16.msra.mxu0 %v4361
        %4379 = vmatprep.subr.bf16.mxu0 0
        %4380 = vmatpush2.bf16.msra.mxu0 0
        %4381 = vmatprep.subr.bf16.mxu0 0
        %4382 = vmatpush2.bf16.msra.mxu0 0
        %4383 = vmatprep.subr.bf16.mxu0 0
        %4384 = vmatpush2.bf16.msra.mxu0 0
        %4385 = vmatprep.subr.bf16.mxu0 0
        %4386 = vmatpush2.bf16.msra.mxu0 0
        %4387 = vmatprep.subr.bf16.mxu0 0
        %4388 = vmatpush2.bf16.msra.mxu0 0
        %4389 = vmatprep.subr.bf16.mxu0 0
        %4390 = vmatpush2.bf16.msra.mxu0 0
        %4391 = vmatprep.subr.bf16.mxu0 0
        %4392 = vmatpush2.bf16.msra.mxu0 0
        %4393 = vmatprep.subr.bf16.mxu0 0
        %4394 = vmatpush2.bf16.msra.mxu0 0
        %4395 = vmatprep.mubr.bf16.mxu0 0
        %4396 = vmatmul.mubr.bf16.gmra.mxu0 %v4300
        %v4397 = vpop.f32.mrf.mxu0
        %v4398 = vadd.f32 %v4355, %v4397
        %v4399 = vpop.f32.mrf.mxu0
        %v4400 = vpop.f32.mrf.mxu0
        %v4401 = vadd.f32 %v4355, %v4400
        %v4402 = vpop.f32.mrf.mxu0
        %4403 = vdwg.mxu0
        %s4404 = scalar_lea.vmem %s677, 16 [#allocation2]
        %4405 = vst.msk [vmem:[%s4404] sm:$0xff] %vm4343, %v4398
        %4406 = vst.msk [vmem:[%s4404 + $0x8] sm:$0xff] %vm4343, %v4401
        %s4407 = scalar_lea.vmem %s11, 16
        %v4408 = vld [vmem:[%s4407] sm:$0xf]
        %v4409 = vld [vmem:[%s4407 + $0x4] sm:$0xf]
        %s4410 = scalar_lea.vmem %s12, 2
        %v4411 = vld [vmem:[%s4410] sm:$0x1]
        %v4413 = vlaneseq
        %v4414 = vshrl.u32 %v4413, 7
        %v4415 = vsub.s32 0, %v4414
        %v4416 = vrot.slane %v4411, %v4415
        %v4420 = vunpack.c.l.b16 %v4408
        %v4421 = vunpack.c.l.b16 %v4409
        %v4422 = vpack.c.b16 %v4421, %v4420
        %4424 = vmatprep.subr.bf16.mxu0 0
        %4425 = vmatpush1.bf16.msra.mxu0 0
        %4426 = vmatprep.subr.bf16.mxu0 0
        %4427 = vmatpush1.bf16.msra.mxu0 0
        %4428 = vmatprep.subr.bf16.mxu0 0
        %4429 = vmatpush1.bf16.msra.mxu0 0
        %4430 = vmatprep.subr.bf16.mxu0 0
        %4431 = vmatpush1.bf16.msra.mxu0 0
        %4432 = vmatprep.subr.bf16.mxu0 0
        %4433 = vmatpush1.bf16.msra.mxu0 0
        %4434 = vmatprep.subr.bf16.mxu0 0
        %4435 = vmatpush1.bf16.msra.mxu0 0
        %4436 = vmatprep.subr.bf16.mxu0 0
        %4437 = vmatpush1.bf16.msra.mxu0 0
        %4438 = vmatprep.subr.bf16.mxu0 0
        %4439 = vmatpush1.bf16.msra.mxu0 %v4422
        %4440 = vmatprep.subr.bf16.mxu0 0
        %4441 = vmatpush2.bf16.msra.mxu0 0
        %4442 = vmatprep.subr.bf16.mxu0 0
        %4443 = vmatpush2.bf16.msra.mxu0 0
        %4444 = vmatprep.subr.bf16.mxu0 0
        %4445 = vmatpush2.bf16.msra.mxu0 0
        %4446 = vmatprep.subr.bf16.mxu0 0
        %4447 = vmatpush2.bf16.msra.mxu0 0
        %4448 = vmatprep.subr.bf16.mxu0 0
        %4449 = vmatpush2.bf16.msra.mxu0 0
        %4450 = vmatprep.subr.bf16.mxu0 0
        %4451 = vmatpush2.bf16.msra.mxu0 0
        %4452 = vmatprep.subr.bf16.mxu0 0
        %4453 = vmatpush2.bf16.msra.mxu0 0
        %4454 = vmatprep.subr.bf16.mxu0 0
        %4455 = vmatpush2.bf16.msra.mxu0 0
        %4456 = vmatprep.mubr.bf16.mxu0 0
        %4457 = vmatmul.mubr.bf16.gmra.mxu0 %v4300
        %v4458 = vpop.f32.mrf.mxu0
        %v4459 = vadd.f32 %v4416, %v4458
        %v4460 = vpop.f32.mrf.mxu0
        %v4461 = vpop.f32.mrf.mxu0
        %v4462 = vadd.f32 %v4416, %v4461
        %v4463 = vpop.f32.mrf.mxu0
        %4464 = vdwg.mxu0
        %s4465 = scalar_lea.vmem %s677, 32 [#allocation2]
        %4466 = vst.msk [vmem:[%s4465] sm:$0xff] %vm4343, %v4459
        %4467 = vst.msk [vmem:[%s4465 + $0x8] sm:$0xff] %vm4343, %v4462
        %v4468 = vld [vmem:[%s15] sm:$0x1]
        %v4469 = vld [vmem:[%s13] sm:$0xf]
        %v4470 = vld [vmem:[%s13 + $0x4] sm:$0xf]
        %v4471 = vld [vmem:[%s13 + $0x8] sm:$0xf]
        %v4472 = vld [vmem:[%s13 + $0xc] sm:$0xf]
        %v4473 = vld [vmem:[%s13 + $0x10] sm:$0xf]
        %v4474 = vld [vmem:[%s13 + $0x14] sm:$0xf]
        %v4475 = vld [vmem:[%s13 + $0x18] sm:$0xf]
        %v4476 = vld [vmem:[%s13 + $0x1c] sm:$0xf]
        %v4485 = vunpack.c.l.b16 %v4469
        %v4486 = vunpack.c.l.b16 %v4470
        %v4487 = vunpack.c.l.b16 %v4471
        %v4488 = vunpack.c.l.b16 %v4472
        %v4489 = vunpack.c.l.b16 %v4473
        %v4490 = vunpack.c.l.b16 %v4474
        %v4491 = vunpack.c.l.b16 %v4475
        %v4492 = vunpack.c.l.b16 %v4476
        %v4493 = vpack.c.b16 %v4486, %v4485
        %v4494 = vpack.c.b16 %v4488, %v4487
        %v4495 = vpack.c.b16 %v4490, %v4489
        %v4496 = vpack.c.b16 %v4492, %v4491
        %v4498 = vsel %vm3303, %v4493, 0
        %v4501 = vsel %vm3303, %v4494, 0
        %v4504 = vsel %vm3303, %v4495, 0
        %v4507 = vsel %vm3303, %v4496, 0
        %4509 = vmatprep.subr.bf16.mxu0 0
        %4510 = vmatpush1.bf16.msra.mxu0 0
        %4511 = vmatprep.subr.bf16.mxu0 0
        %4512 = vmatpush1.bf16.msra.mxu0 0
        %4513 = vmatprep.subr.bf16.mxu0 0
        %4514 = vmatpush1.bf16.msra.mxu0 0
        %4515 = vmatprep.subr.bf16.mxu0 0
        %4516 = vmatpush1.bf16.msra.mxu0 0
        %4517 = vmatprep.subr.bf16.mxu0 0
        %4518 = vmatpush1.bf16.msra.mxu0 %v3294
        %4519 = vmatprep.subr.bf16.mxu0 0
        %4520 = vmatpush1.bf16.msra.mxu0 %v3293
        %4521 = vmatprep.subr.bf16.mxu0 0
        %4522 = vmatpush1.bf16.msra.mxu0 %v3292
        %4523 = vmatprep.subr.bf16.mxu0 0
        %4524 = vmatpush1.bf16.msra.mxu0 %v3291
        %4525 = vmatprep.subr.bf16.mxu0 0
        %4526 = vmatpush2.bf16.msra.mxu0 0
        %4527 = vmatprep.subr.bf16.mxu0 0
        %4528 = vmatpush2.bf16.msra.mxu0 0
        %4529 = vmatprep.subr.bf16.mxu0 0
        %4530 = vmatpush2.bf16.msra.mxu0 0
        %4531 = vmatprep.subr.bf16.mxu0 0
        %4532 = vmatpush2.bf16.msra.mxu0 0
        %4533 = vmatprep.subr.bf16.mxu0 0
        %4534 = vmatpush2.bf16.msra.mxu0 0
        %4535 = vmatprep.subr.bf16.mxu0 0
        %4536 = vmatpush2.bf16.msra.mxu0 0
        %4537 = vmatprep.subr.bf16.mxu0 0
        %4538 = vmatpush2.bf16.msra.mxu0 0
        %4539 = vmatprep.subr.bf16.mxu0 0
        %4540 = vmatpush2.bf16.msra.mxu0 0
        %4541 = vmatprep.mubr.bf16.mxu0 0
        %4542 = vmatmul.mubr.bf16.gmra.mxu0 %v4498
        %v4543 = vpop.f32.mrf.mxu0
        %v4544 = vadd.f32 0.0, %v4543
        %v4545 = vpop.f32.mrf.mxu0
        %v4546 = vpop.f32.mrf.mxu0
        %v4547 = vadd.f32 0.0, %v4546
        %v4548 = vpop.f32.mrf.mxu0
        %4549 = vmatprep.mubr.bf16.mxu0 0
        %4550 = vmatmul.mubr.bf16.gmra.mxu0 %v4501
        %v4551 = vpop.f32.mrf.mxu0
        %v4552 = vadd.f32 0.0, %v4551
        %v4553 = vpop.f32.mrf.mxu0
        %v4554 = vpop.f32.mrf.mxu0
        %v4555 = vadd.f32 0.0, %v4554
        %v4556 = vpop.f32.mrf.mxu0
        %4557 = vmatprep.mubr.bf16.mxu0 0
        %4558 = vmatmul.mubr.bf16.gmra.mxu0 %v4504
        %v4559 = vpop.f32.mrf.mxu0
        %v4560 = vadd.f32 0.0, %v4559
        %v4561 = vpop.f32.mrf.mxu0
        %v4562 = vpop.f32.mrf.mxu0
        %v4563 = vadd.f32 0.0, %v4562
        %v4564 = vpop.f32.mrf.mxu0
        %4565 = vmatprep.mubr.bf16.mxu0 0
        %4566 = vmatmul.mubr.bf16.gmra.mxu0 %v4507
        %v4567 = vpop.f32.mrf.mxu0
        %v4568 = vadd.f32 0.0, %v4567
        %v4569 = vpop.f32.mrf.mxu0
        %v4570 = vpop.f32.mrf.mxu0
        %v4571 = vadd.f32 0.0, %v4570
        %v4572 = vpop.f32.mrf.mxu0
        %4573 = vdwg.mxu0
        %v4574 = vpack.c.bf16 %v4547, %v4544
        %v4575 = vpack.c.bf16 %v4555, %v4552
        %v4576 = vpack.c.bf16 %v4563, %v4560
        %v4577 = vpack.c.bf16 %v4571, %v4568
        %v4578 = vld [vmem:[%s14] sm:$0xf]
        %v4579 = vld [vmem:[%s14 + $0x4] sm:$0xf]
        %v4582 = vunpack.c.l.b16 %v4578
        %v4583 = vunpack.c.l.b16 %v4579
        %v4584 = vpack.c.b16 %v4583, %v4582
        %v4587 = vsel %vm3173, %v4574, 0
        %v4590 = vsel %vm3173, %v4575, 0
        %v4593 = vsel %vm3173, %v4576, 0
        %v4596 = vsel %vm3173, %v4577, 0
        %4598 = vmatprep.subr.bf16.mxu0 0
        %4599 = vmatpush1.bf16.msra.mxu0 0
        %4600 = vmatprep.subr.bf16.mxu0 0
        %4601 = vmatpush1.bf16.msra.mxu0 0
        %4602 = vmatprep.subr.bf16.mxu0 0
        %4603 = vmatpush1.bf16.msra.mxu0 0
        %4604 = vmatprep.subr.bf16.mxu0 0
        %4605 = vmatpush1.bf16.msra.mxu0 0
        %4606 = vmatprep.subr.bf16.mxu0 0
        %4607 = vmatpush1.bf16.msra.mxu0 0
        %4608 = vmatprep.subr.bf16.mxu0 0
        %4609 = vmatpush1.bf16.msra.mxu0 0
        %4610 = vmatprep.subr.bf16.mxu0 0
        %4611 = vmatpush1.bf16.msra.mxu0 0
        %4612 = vmatprep.subr.bf16.mxu0 0
        %4613 = vmatpush1.bf16.msra.mxu0 %v4584
        %4614 = vmatprep.subr.bf16.mxu0 0
        %4615 = vmatpush2.bf16.msra.mxu0 0
        %4616 = vmatprep.subr.bf16.mxu0 0
        %4617 = vmatpush2.bf16.msra.mxu0 0
        %4618 = vmatprep.subr.bf16.mxu0 0
        %4619 = vmatpush2.bf16.msra.mxu0 0
        %4620 = vmatprep.subr.bf16.mxu0 0
        %4621 = vmatpush2.bf16.msra.mxu0 0
        %4622 = vmatprep.subr.bf16.mxu0 0
        %4623 = vmatpush2.bf16.msra.mxu0 0
        %4624 = vmatprep.subr.bf16.mxu0 0
        %4625 = vmatpush2.bf16.msra.mxu0 0
        %4626 = vmatprep.subr.bf16.mxu0 0
        %4627 = vmatpush2.bf16.msra.mxu0 0
        %4628 = vmatprep.subr.bf16.mxu0 0
        %4629 = vmatpush2.bf16.msra.mxu0 0
        %4630 = vmatprep.mubr.bf16.mxu0 0
        %4631 = vmatmul.mubr.bf16.gmra.mxu0 %v4587
        %v4632 = vpop.f32.mrf.mxu0
        %v4633 = vadd.f32 0.0, %v4632
        %v4634 = vpop.f32.mrf.mxu0
        %v4635 = vpop.f32.mrf.mxu0
        %v4636 = vadd.f32 0.0, %v4635
        %v4637 = vpop.f32.mrf.mxu0
        %4638 = vmatprep.mubr.bf16.mxu0 0
        %4639 = vmatmul.mubr.bf16.gmra.mxu0 %v4590
        %v4640 = vpop.f32.mrf.mxu0
        %v4641 = vadd.f32 0.0, %v4640
        %v4642 = vpop.f32.mrf.mxu0
        %v4643 = vpop.f32.mrf.mxu0
        %v4644 = vadd.f32 0.0, %v4643
        %v4645 = vpop.f32.mrf.mxu0
        %4646 = vmatprep.mubr.bf16.mxu0 0
        %4647 = vmatmul.mubr.bf16.gmra.mxu0 %v4593
        %v4648 = vpop.f32.mrf.mxu0
        %v4649 = vadd.f32 0.0, %v4648
        %v4650 = vpop.f32.mrf.mxu0
        %v4651 = vpop.f32.mrf.mxu0
        %v4652 = vadd.f32 0.0, %v4651
        %v4653 = vpop.f32.mrf.mxu0
        %4654 = vmatprep.mubr.bf16.mxu0 0
        %4655 = vmatmul.mubr.bf16.gmra.mxu0 %v4596
        %v4656 = vpop.f32.mrf.mxu0
        %v4657 = vadd.f32 0.0, %v4656
        %v4658 = vpop.f32.mrf.mxu0
        %v4659 = vpop.f32.mrf.mxu0
        %v4660 = vadd.f32 0.0, %v4659
        %v4661 = vpop.f32.mrf.mxu0
        %4662 = vdwg.mxu0
        %v4664 = vlaneseq
        %v4665 = vshrl.u32 %v4664, 7
        %v4666 = vsub.s32 0, %v4665
        %v4667 = vrot.slane %v4468, %v4666
        %v4669 = vadd.f32 %v4667, %v4633
        %v4670 = vadd.f32 %v4667, %v4636
        %v4671 = vadd.f32 %v4667, %v4641
        %v4672 = vadd.f32 %v4667, %v4644
        %v4673 = vadd.f32 %v4667, %v4649
        %v4674 = vadd.f32 %v4667, %v4652
        %v4675 = vadd.f32 %v4667, %v4657
        %v4676 = vadd.f32 %v4667, %v4660
        %s4677 = scalar_lea.vmem %s13, 32
        %v4678 = vld [vmem:[%s4677] sm:$0xf]
        %v4679 = vld [vmem:[%s4677 + $0x4] sm:$0xf]
        %v4680 = vld [vmem:[%s4677 + $0x8] sm:$0xf]
        %v4681 = vld [vmem:[%s4677 + $0xc] sm:$0xf]
        %v4682 = vld [vmem:[%s4677 + $0x10] sm:$0xf]
        %v4683 = vld [vmem:[%s4677 + $0x14] sm:$0xf]
        %v4684 = vld [vmem:[%s4677 + $0x18] sm:$0xf]
        %v4685 = vld [vmem:[%s4677 + $0x1c] sm:$0xf]
        %v4694 = vunpack.c.l.b16 %v4678
        %v4695 = vunpack.c.l.b16 %v4679
        %v4696 = vunpack.c.l.b16 %v4680
        %v4697 = vunpack.c.l.b16 %v4681
        %v4698 = vunpack.c.l.b16 %v4682
        %v4699 = vunpack.c.l.b16 %v4683
        %v4700 = vunpack.c.l.b16 %v4684
        %v4701 = vunpack.c.l.b16 %v4685
        %v4702 = vpack.c.b16 %v4695, %v4694
        %v4703 = vpack.c.b16 %v4697, %v4696
        %v4704 = vpack.c.b16 %v4699, %v4698
        %v4705 = vpack.c.b16 %v4701, %v4700
        %v4707 = vsel %vm3303, %v4702, 0
        %v4710 = vsel %vm3303, %v4703, 0
        %v4713 = vsel %vm3303, %v4704, 0
        %v4716 = vsel %vm3303, %v4705, 0
        %4718 = vmatprep.subr.bf16.mxu0 0
        %4719 = vmatpush1.bf16.msra.mxu0 0
        %4720 = vmatprep.subr.bf16.mxu0 0
        %4721 = vmatpush1.bf16.msra.mxu0 0
        %4722 = vmatprep.subr.bf16.mxu0 0
        %4723 = vmatpush1.bf16.msra.mxu0 0
        %4724 = vmatprep.subr.bf16.mxu0 0
        %4725 = vmatpush1.bf16.msra.mxu0 0
        %4726 = vmatprep.subr.bf16.mxu0 0
        %4727 = vmatpush1.bf16.msra.mxu0 %v3294
        %4728 = vmatprep.subr.bf16.mxu0 0
        %4729 = vmatpush1.bf16.msra.mxu0 %v3293
        %4730 = vmatprep.subr.bf16.mxu0 0
        %4731 = vmatpush1.bf16.msra.mxu0 %v3292
        %4732 = vmatprep.subr.bf16.mxu0 0
        %4733 = vmatpush1.bf16.msra.mxu0 %v3291
        %4734 = vmatprep.subr.bf16.mxu0 0
        %4735 = vmatpush2.bf16.msra.mxu0 0
        %4736 = vmatprep.subr.bf16.mxu0 0
        %4737 = vmatpush2.bf16.msra.mxu0 0
        %4738 = vmatprep.subr.bf16.mxu0 0
        %4739 = vmatpush2.bf16.msra.mxu0 0
        %4740 = vmatprep.subr.bf16.mxu0 0
        %4741 = vmatpush2.bf16.msra.mxu0 0
        %4742 = vmatprep.subr.bf16.mxu0 0
        %4743 = vmatpush2.bf16.msra.mxu0 0
        %4744 = vmatprep.subr.bf16.mxu0 0
        %4745 = vmatpush2.bf16.msra.mxu0 0
        %4746 = vmatprep.subr.bf16.mxu0 0
        %4747 = vmatpush2.bf16.msra.mxu0 0
        %4748 = vmatprep.subr.bf16.mxu0 0
        %4749 = vmatpush2.bf16.msra.mxu0 0
        %4750 = vmatprep.mubr.bf16.mxu0 0
        %4751 = vmatmul.mubr.bf16.gmra.mxu0 %v4707
        %v4752 = vpop.f32.mrf.mxu0
        %v4753 = vadd.f32 0.0, %v4752
        %v4754 = vpop.f32.mrf.mxu0
        %v4755 = vpop.f32.mrf.mxu0
        %v4756 = vadd.f32 0.0, %v4755
        %v4757 = vpop.f32.mrf.mxu0
        %4758 = vmatprep.mubr.bf16.mxu0 0
        %4759 = vmatmul.mubr.bf16.gmra.mxu0 %v4710
        %v4760 = vpop.f32.mrf.mxu0
        %v4761 = vadd.f32 0.0, %v4760
        %v4762 = vpop.f32.mrf.mxu0
        %v4763 = vpop.f32.mrf.mxu0
        %v4764 = vadd.f32 0.0, %v4763
        %v4765 = vpop.f32.mrf.mxu0
        %4766 = vmatprep.mubr.bf16.mxu0 0
        %4767 = vmatmul.mubr.bf16.gmra.mxu0 %v4713
        %v4768 = vpop.f32.mrf.mxu0
        %v4769 = vadd.f32 0.0, %v4768
        %v4770 = vpop.f32.mrf.mxu0
        %v4771 = vpop.f32.mrf.mxu0
        %v4772 = vadd.f32 0.0, %v4771
        %v4773 = vpop.f32.mrf.mxu0
        %4774 = vmatprep.mubr.bf16.mxu0 0
        %4775 = vmatmul.mubr.bf16.gmra.mxu0 %v4716
        %v4776 = vpop.f32.mrf.mxu0
        %v4777 = vadd.f32 0.0, %v4776
        %v4778 = vpop.f32.mrf.mxu0
        %v4779 = vpop.f32.mrf.mxu0
        %v4780 = vadd.f32 0.0, %v4779
        %v4781 = vpop.f32.mrf.mxu0
        %4782 = vdwg.mxu0
        %v4783 = vpack.c.bf16 %v4756, %v4753
        %v4784 = vpack.c.bf16 %v4764, %v4761
        %v4785 = vpack.c.bf16 %v4772, %v4769
        %v4786 = vpack.c.bf16 %v4780, %v4777
        %s4787 = scalar_lea.vmem %s14, 8
        %v4788 = vld [vmem:[%s4787] sm:$0xf]
        %v4789 = vld [vmem:[%s4787 + $0x4] sm:$0xf]
        %v4792 = vunpack.c.l.b16 %v4788
        %v4793 = vunpack.c.l.b16 %v4789
        %v4794 = vpack.c.b16 %v4793, %v4792
        %v4797 = vsel %vm3173, %v4783, 0
        %v4800 = vsel %vm3173, %v4784, 0
        %v4803 = vsel %vm3173, %v4785, 0
        %v4806 = vsel %vm3173, %v4786, 0
        %4808 = vmatprep.subr.bf16.mxu0 0
        %4809 = vmatpush1.bf16.msra.mxu0 0
        %4810 = vmatprep.subr.bf16.mxu0 0
        %4811 = vmatpush1.bf16.msra.mxu0 0
        %4812 = vmatprep.subr.bf16.mxu0 0
        %4813 = vmatpush1.bf16.msra.mxu0 0
        %4814 = vmatprep.subr.bf16.mxu0 0
        %4815 = vmatpush1.bf16.msra.mxu0 0
        %4816 = vmatprep.subr.bf16.mxu0 0
        %4817 = vmatpush1.bf16.msra.mxu0 0
        %4818 = vmatprep.subr.bf16.mxu0 0
        %4819 = vmatpush1.bf16.msra.mxu0 0
        %4820 = vmatprep.subr.bf16.mxu0 0
        %4821 = vmatpush1.bf16.msra.mxu0 0
        %4822 = vmatprep.subr.bf16.mxu0 0
        %4823 = vmatpush1.bf16.msra.mxu0 %v4794
        %4824 = vmatprep.subr.bf16.mxu0 0
        %4825 = vmatpush2.bf16.msra.mxu0 0
        %4826 = vmatprep.subr.bf16.mxu0 0
        %4827 = vmatpush2.bf16.msra.mxu0 0
        %4828 = vmatprep.subr.bf16.mxu0 0
        %4829 = vmatpush2.bf16.msra.mxu0 0
        %4830 = vmatprep.subr.bf16.mxu0 0
        %4831 = vmatpush2.bf16.msra.mxu0 0
        %4832 = vmatprep.subr.bf16.mxu0 0
        %4833 = vmatpush2.bf16.msra.mxu0 0
        %4834 = vmatprep.subr.bf16.mxu0 0
        %4835 = vmatpush2.bf16.msra.mxu0 0
        %4836 = vmatprep.subr.bf16.mxu0 0
        %4837 = vmatpush2.bf16.msra.mxu0 0
        %4838 = vmatprep.subr.bf16.mxu0 0
        %4839 = vmatpush2.bf16.msra.mxu0 0
        %4840 = vmatprep.mubr.bf16.mxu0 0
        %4841 = vmatmul.mubr.bf16.gmra.mxu0 %v4797
        %v4842 = vpop.f32.mrf.mxu0
        %v4843 = vadd.f32 0.0, %v4842
        %v4844 = vpop.f32.mrf.mxu0
        %v4845 = vpop.f32.mrf.mxu0
        %v4846 = vadd.f32 0.0, %v4845
        %v4847 = vpop.f32.mrf.mxu0
        %4848 = vmatprep.mubr.bf16.mxu0 0
        %4849 = vmatmul.mubr.bf16.gmra.mxu0 %v4800
        %v4850 = vpop.f32.mrf.mxu0
        %v4851 = vadd.f32 0.0, %v4850
        %v4852 = vpop.f32.mrf.mxu0
        %v4853 = vpop.f32.mrf.mxu0
        %v4854 = vadd.f32 0.0, %v4853
        %v4855 = vpop.f32.mrf.mxu0
        %4856 = vmatprep.mubr.bf16.mxu0 0
        %4857 = vmatmul.mubr.bf16.gmra.mxu0 %v4803
        %v4858 = vpop.f32.mrf.mxu0
        %v4859 = vadd.f32 0.0, %v4858
        %v4860 = vpop.f32.mrf.mxu0
        %v4861 = vpop.f32.mrf.mxu0
        %v4862 = vadd.f32 0.0, %v4861
        %v4863 = vpop.f32.mrf.mxu0
        %4864 = vmatprep.mubr.bf16.mxu0 0
        %4865 = vmatmul.mubr.bf16.gmra.mxu0 %v4806
        %v4866 = vpop.f32.mrf.mxu0
        %v4867 = vadd.f32 0.0, %v4866
        %v4868 = vpop.f32.mrf.mxu0
        %v4869 = vpop.f32.mrf.mxu0
        %v4870 = vadd.f32 0.0, %v4869
        %v4871 = vpop.f32.mrf.mxu0
        %4872 = vdwg.mxu0
        %v4873 = vadd.f32 %v4669, %v4843
        %v4874 = vadd.f32 %v4670, %v4846
        %v4875 = vadd.f32 %v4671, %v4851
        %v4876 = vadd.f32 %v4672, %v4854
        %v4877 = vadd.f32 %v4673, %v4859
        %v4878 = vadd.f32 %v4674, %v4862
        %v4879 = vadd.f32 %v4675, %v4867
        %v4880 = vadd.f32 %v4676, %v4870
        %s4881 = scalar_lea.vmem %s13, 64
        %v4882 = vld [vmem:[%s4881] sm:$0xf]
        %v4883 = vld [vmem:[%s4881 + $0x4] sm:$0xf]
        %v4884 = vld [vmem:[%s4881 + $0x8] sm:$0xf]
        %v4885 = vld [vmem:[%s4881 + $0xc] sm:$0xf]
        %v4886 = vld [vmem:[%s4881 + $0x10] sm:$0xf]
        %v4887 = vld [vmem:[%s4881 + $0x14] sm:$0xf]
        %v4888 = vld [vmem:[%s4881 + $0x18] sm:$0xf]
        %v4889 = vld [vmem:[%s4881 + $0x1c] sm:$0xf]
        %v4898 = vunpack.c.l.b16 %v4882
        %v4899 = vunpack.c.l.b16 %v4883
        %v4900 = vunpack.c.l.b16 %v4884
        %v4901 = vunpack.c.l.b16 %v4885
        %v4902 = vunpack.c.l.b16 %v4886
        %v4903 = vunpack.c.l.b16 %v4887
        %v4904 = vunpack.c.l.b16 %v4888
        %v4905 = vunpack.c.l.b16 %v4889
        %v4906 = vpack.c.b16 %v4899, %v4898
        %v4907 = vpack.c.b16 %v4901, %v4900
        %v4908 = vpack.c.b16 %v4903, %v4902
        %v4909 = vpack.c.b16 %v4905, %v4904
        %v4911 = vsel %vm3303, %v4906, 0
        %v4914 = vsel %vm3303, %v4907, 0
        %v4917 = vsel %vm3303, %v4908, 0
        %v4920 = vsel %vm3303, %v4909, 0
        %4922 = vmatprep.subr.bf16.mxu0 0
        %4923 = vmatpush1.bf16.msra.mxu0 0
        %4924 = vmatprep.subr.bf16.mxu0 0
        %4925 = vmatpush1.bf16.msra.mxu0 0
        %4926 = vmatprep.subr.bf16.mxu0 0
        %4927 = vmatpush1.bf16.msra.mxu0 0
        %4928 = vmatprep.subr.bf16.mxu0 0
        %4929 = vmatpush1.bf16.msra.mxu0 0
        %4930 = vmatprep.subr.bf16.mxu0 0
        %4931 = vmatpush1.bf16.msra.mxu0 %v3294
        %4932 = vmatprep.subr.bf16.mxu0 0
        %4933 = vmatpush1.bf16.msra.mxu0 %v3293
        %4934 = vmatprep.subr.bf16.mxu0 0
        %4935 = vmatpush1.bf16.msra.mxu0 %v3292
        %4936 = vmatprep.subr.bf16.mxu0 0
        %4937 = vmatpush1.bf16.msra.mxu0 %v3291
        %4938 = vmatprep.subr.bf16.mxu0 0
        %4939 = vmatpush2.bf16.msra.mxu0 0
        %4940 = vmatprep.subr.bf16.mxu0 0
        %4941 = vmatpush2.bf16.msra.mxu0 0
        %4942 = vmatprep.subr.bf16.mxu0 0
        %4943 = vmatpush2.bf16.msra.mxu0 0
        %4944 = vmatprep.subr.bf16.mxu0 0
        %4945 = vmatpush2.bf16.msra.mxu0 0
        %4946 = vmatprep.subr.bf16.mxu0 0
        %4947 = vmatpush2.bf16.msra.mxu0 0
        %4948 = vmatprep.subr.bf16.mxu0 0
        %4949 = vmatpush2.bf16.msra.mxu0 0
        %4950 = vmatprep.subr.bf16.mxu0 0
        %4951 = vmatpush2.bf16.msra.mxu0 0
        %4952 = vmatprep.subr.bf16.mxu0 0
        %4953 = vmatpush2.bf16.msra.mxu0 0
        %4954 = vmatprep.mubr.bf16.mxu0 0
        %4955 = vmatmul.mubr.bf16.gmra.mxu0 %v4911
        %v4956 = vpop.f32.mrf.mxu0
        %v4957 = vadd.f32 0.0, %v4956
        %v4958 = vpop.f32.mrf.mxu0
        %v4959 = vpop.f32.mrf.mxu0
        %v4960 = vadd.f32 0.0, %v4959
        %v4961 = vpop.f32.mrf.mxu0
        %4962 = vmatprep.mubr.bf16.mxu0 0
        %4963 = vmatmul.mubr.bf16.gmra.mxu0 %v4914
        %v4964 = vpop.f32.mrf.mxu0
        %v4965 = vadd.f32 0.0, %v4964
        %v4966 = vpop.f32.mrf.mxu0
        %v4967 = vpop.f32.mrf.mxu0
        %v4968 = vadd.f32 0.0, %v4967
        %v4969 = vpop.f32.mrf.mxu0
        %4970 = vmatprep.mubr.bf16.mxu0 0
        %4971 = vmatmul.mubr.bf16.gmra.mxu0 %v4917
        %v4972 = vpop.f32.mrf.mxu0
        %v4973 = vadd.f32 0.0, %v4972
        %v4974 = vpop.f32.mrf.mxu0
        %v4975 = vpop.f32.mrf.mxu0
        %v4976 = vadd.f32 0.0, %v4975
        %v4977 = vpop.f32.mrf.mxu0
        %4978 = vmatprep.mubr.bf16.mxu0 0
        %4979 = vmatmul.mubr.bf16.gmra.mxu0 %v4920
        %v4980 = vpop.f32.mrf.mxu0
        %v4981 = vadd.f32 0.0, %v4980
        %v4982 = vpop.f32.mrf.mxu0
        %v4983 = vpop.f32.mrf.mxu0
        %v4984 = vadd.f32 0.0, %v4983
        %v4985 = vpop.f32.mrf.mxu0
        %4986 = vdwg.mxu0
        %v4987 = vpack.c.bf16 %v4960, %v4957
        %v4988 = vpack.c.bf16 %v4968, %v4965
        %v4989 = vpack.c.bf16 %v4976, %v4973
        %v4990 = vpack.c.bf16 %v4984, %v4981
        %s4991 = scalar_lea.vmem %s14, 16
        %v4992 = vld [vmem:[%s4991] sm:$0xf]
        %v4993 = vld [vmem:[%s4991 + $0x4] sm:$0xf]
        %v4996 = vunpack.c.l.b16 %v4992
        %v4997 = vunpack.c.l.b16 %v4993
        %v4998 = vpack.c.b16 %v4997, %v4996
        %v5001 = vsel %vm3173, %v4987, 0
        %v5004 = vsel %vm3173, %v4988, 0
        %v5007 = vsel %vm3173, %v4989, 0
        %v5010 = vsel %vm3173, %v4990, 0
        %5012 = vmatprep.subr.bf16.mxu0 0
        %5013 = vmatpush1.bf16.msra.mxu0 0
        %5014 = vmatprep.subr.bf16.mxu0 0
        %5015 = vmatpush1.bf16.msra.mxu0 0
        %5016 = vmatprep.subr.bf16.mxu0 0
        %5017 = vmatpush1.bf16.msra.mxu0 0
        %5018 = vmatprep.subr.bf16.mxu0 0
        %5019 = vmatpush1.bf16.msra.mxu0 0
        %5020 = vmatprep.subr.bf16.mxu0 0
        %5021 = vmatpush1.bf16.msra.mxu0 0
        %5022 = vmatprep.subr.bf16.mxu0 0
        %5023 = vmatpush1.bf16.msra.mxu0 0
        %5024 = vmatprep.subr.bf16.mxu0 0
        %5025 = vmatpush1.bf16.msra.mxu0 0
        %5026 = vmatprep.subr.bf16.mxu0 0
        %5027 = vmatpush1.bf16.msra.mxu0 %v4998
        %5028 = vmatprep.subr.bf16.mxu0 0
        %5029 = vmatpush2.bf16.msra.mxu0 0
        %5030 = vmatprep.subr.bf16.mxu0 0
        %5031 = vmatpush2.bf16.msra.mxu0 0
        %5032 = vmatprep.subr.bf16.mxu0 0
        %5033 = vmatpush2.bf16.msra.mxu0 0
        %5034 = vmatprep.subr.bf16.mxu0 0
        %5035 = vmatpush2.bf16.msra.mxu0 0
        %5036 = vmatprep.subr.bf16.mxu0 0
        %5037 = vmatpush2.bf16.msra.mxu0 0
        %5038 = vmatprep.subr.bf16.mxu0 0
        %5039 = vmatpush2.bf16.msra.mxu0 0
        %5040 = vmatprep.subr.bf16.mxu0 0
        %5041 = vmatpush2.bf16.msra.mxu0 0
        %5042 = vmatprep.subr.bf16.mxu0 0
        %5043 = vmatpush2.bf16.msra.mxu0 0
        %5044 = vmatprep.mubr.bf16.mxu0 0
        %5045 = vmatmul.mubr.bf16.gmra.mxu0 %v5001
        %v5046 = vpop.f32.mrf.mxu0
        %v5047 = vadd.f32 0.0, %v5046
        %v5048 = vpop.f32.mrf.mxu0
        %v5049 = vpop.f32.mrf.mxu0
        %v5050 = vadd.f32 0.0, %v5049
        %v5051 = vpop.f32.mrf.mxu0
        %5052 = vmatprep.mubr.bf16.mxu0 0
        %5053 = vmatmul.mubr.bf16.gmra.mxu0 %v5004
        %v5054 = vpop.f32.mrf.mxu0
        %v5055 = vadd.f32 0.0, %v5054
        %v5056 = vpop.f32.mrf.mxu0
        %v5057 = vpop.f32.mrf.mxu0
        %v5058 = vadd.f32 0.0, %v5057
        %v5059 = vpop.f32.mrf.mxu0
        %5060 = vmatprep.mubr.bf16.mxu0 0
        %5061 = vmatmul.mubr.bf16.gmra.mxu0 %v5007
        %v5062 = vpop.f32.mrf.mxu0
        %v5063 = vadd.f32 0.0, %v5062
        %v5064 = vpop.f32.mrf.mxu0
        %v5065 = vpop.f32.mrf.mxu0
        %v5066 = vadd.f32 0.0, %v5065
        %v5067 = vpop.f32.mrf.mxu0
        %5068 = vmatprep.mubr.bf16.mxu0 0
        %5069 = vmatmul.mubr.bf16.gmra.mxu0 %v5010
        %v5070 = vpop.f32.mrf.mxu0
        %v5071 = vadd.f32 0.0, %v5070
        %v5072 = vpop.f32.mrf.mxu0
        %v5073 = vpop.f32.mrf.mxu0
        %v5074 = vadd.f32 0.0, %v5073
        %v5075 = vpop.f32.mrf.mxu0
        %5076 = vdwg.mxu0
        %v5077 = vadd.f32 %v4873, %v5047
        %v5078 = vadd.f32 %v4874, %v5050
        %v5079 = vadd.f32 %v4875, %v5055
        %v5080 = vadd.f32 %v4876, %v5058
        %v5081 = vadd.f32 %v4877, %v5063
        %v5082 = vadd.f32 %v4878, %v5066
        %v5083 = vadd.f32 %v4879, %v5071
        %v5084 = vadd.f32 %v4880, %v5074
        %s5085 = scalar_lea.vmem %s13, 96
        %v5086 = vld [vmem:[%s5085] sm:$0xf]
        %v5087 = vld [vmem:[%s5085 + $0x4] sm:$0xf]
        %v5088 = vld [vmem:[%s5085 + $0x8] sm:$0xf]
        %v5089 = vld [vmem:[%s5085 + $0xc] sm:$0xf]
        %v5090 = vld [vmem:[%s5085 + $0x10] sm:$0xf]
        %v5091 = vld [vmem:[%s5085 + $0x14] sm:$0xf]
        %v5092 = vld [vmem:[%s5085 + $0x18] sm:$0xf]
        %v5093 = vld [vmem:[%s5085 + $0x1c] sm:$0xf]
        %v5102 = vunpack.c.l.b16 %v5086
        %v5103 = vunpack.c.l.b16 %v5087
        %v5104 = vunpack.c.l.b16 %v5088
        %v5105 = vunpack.c.l.b16 %v5089
        %v5106 = vunpack.c.l.b16 %v5090
        %v5107 = vunpack.c.l.b16 %v5091
        %v5108 = vunpack.c.l.b16 %v5092
        %v5109 = vunpack.c.l.b16 %v5093
        %v5110 = vpack.c.b16 %v5103, %v5102
        %v5111 = vpack.c.b16 %v5105, %v5104
        %v5112 = vpack.c.b16 %v5107, %v5106
        %v5113 = vpack.c.b16 %v5109, %v5108
        %v5115 = vsel %vm3303, %v5110, 0
        %v5118 = vsel %vm3303, %v5111, 0
        %v5121 = vsel %vm3303, %v5112, 0
        %v5124 = vsel %vm3303, %v5113, 0
        %5126 = vmatprep.subr.bf16.mxu0 0
        %5127 = vmatpush1.bf16.msra.mxu0 0
        %5128 = vmatprep.subr.bf16.mxu0 0
        %5129 = vmatpush1.bf16.msra.mxu0 0
        %5130 = vmatprep.subr.bf16.mxu0 0
        %5131 = vmatpush1.bf16.msra.mxu0 0
        %5132 = vmatprep.subr.bf16.mxu0 0
        %5133 = vmatpush1.bf16.msra.mxu0 0
        %5134 = vmatprep.subr.bf16.mxu0 0
        %5135 = vmatpush1.bf16.msra.mxu0 %v3294
        %5136 = vmatprep.subr.bf16.mxu0 0
        %5137 = vmatpush1.bf16.msra.mxu0 %v3293
        %5138 = vmatprep.subr.bf16.mxu0 0
        %5139 = vmatpush1.bf16.msra.mxu0 %v3292
        %5140 = vmatprep.subr.bf16.mxu0 0
        %5141 = vmatpush1.bf16.msra.mxu0 %v3291
        %5142 = vmatprep.subr.bf16.mxu0 0
        %5143 = vmatpush2.bf16.msra.mxu0 0
        %5144 = vmatprep.subr.bf16.mxu0 0
        %5145 = vmatpush2.bf16.msra.mxu0 0
        %5146 = vmatprep.subr.bf16.mxu0 0
        %5147 = vmatpush2.bf16.msra.mxu0 0
        %5148 = vmatprep.subr.bf16.mxu0 0
        %5149 = vmatpush2.bf16.msra.mxu0 0
        %5150 = vmatprep.subr.bf16.mxu0 0
        %5151 = vmatpush2.bf16.msra.mxu0 0
        %5152 = vmatprep.subr.bf16.mxu0 0
        %5153 = vmatpush2.bf16.msra.mxu0 0
        %5154 = vmatprep.subr.bf16.mxu0 0
        %5155 = vmatpush2.bf16.msra.mxu0 0
        %5156 = vmatprep.subr.bf16.mxu0 0
        %5157 = vmatpush2.bf16.msra.mxu0 0
        %5158 = vmatprep.mubr.bf16.mxu0 0
        %5159 = vmatmul.mubr.bf16.gmra.mxu0 %v5115
        %v5160 = vpop.f32.mrf.mxu0
        %v5161 = vadd.f32 0.0, %v5160
        %v5162 = vpop.f32.mrf.mxu0
        %v5163 = vpop.f32.mrf.mxu0
        %v5164 = vadd.f32 0.0, %v5163
        %v5165 = vpop.f32.mrf.mxu0
        %5166 = vmatprep.mubr.bf16.mxu0 0
        %5167 = vmatmul.mubr.bf16.gmra.mxu0 %v5118
        %v5168 = vpop.f32.mrf.mxu0
        %v5169 = vadd.f32 0.0, %v5168
        %v5170 = vpop.f32.mrf.mxu0
        %v5171 = vpop.f32.mrf.mxu0
        %v5172 = vadd.f32 0.0, %v5171
        %v5173 = vpop.f32.mrf.mxu0
        %5174 = vmatprep.mubr.bf16.mxu0 0
        %5175 = vmatmul.mubr.bf16.gmra.mxu0 %v5121
        %v5176 = vpop.f32.mrf.mxu0
        %v5177 = vadd.f32 0.0, %v5176
        %v5178 = vpop.f32.mrf.mxu0
        %v5179 = vpop.f32.mrf.mxu0
        %v5180 = vadd.f32 0.0, %v5179
        %v5181 = vpop.f32.mrf.mxu0
        %5182 = vmatprep.mubr.bf16.mxu0 0
        %5183 = vmatmul.mubr.bf16.gmra.mxu0 %v5124
        %v5184 = vpop.f32.mrf.mxu0
        %v5185 = vadd.f32 0.0, %v5184
        %v5186 = vpop.f32.mrf.mxu0
        %v5187 = vpop.f32.mrf.mxu0
        %v5188 = vadd.f32 0.0, %v5187
        %v5189 = vpop.f32.mrf.mxu0
        %5190 = vdwg.mxu0
        %v5191 = vpack.c.bf16 %v5164, %v5161
        %v5192 = vpack.c.bf16 %v5172, %v5169
        %v5193 = vpack.c.bf16 %v5180, %v5177
        %v5194 = vpack.c.bf16 %v5188, %v5185
        %s5195 = scalar_lea.vmem %s14, 24
        %v5196 = vld [vmem:[%s5195] sm:$0xf]
        %v5197 = vld [vmem:[%s5195 + $0x4] sm:$0xf]
        %v5200 = vunpack.c.l.b16 %v5196
        %v5201 = vunpack.c.l.b16 %v5197
        %v5202 = vpack.c.b16 %v5201, %v5200
        %v5205 = vsel %vm3173, %v5191, 0
        %v5208 = vsel %vm3173, %v5192, 0
        %v5211 = vsel %vm3173, %v5193, 0
        %v5214 = vsel %vm3173, %v5194, 0
        %5216 = vmatprep.subr.bf16.mxu0 0
        %5217 = vmatpush1.bf16.msra.mxu0 0
        %5218 = vmatprep.subr.bf16.mxu0 0
        %5219 = vmatpush1.bf16.msra.mxu0 0
        %5220 = vmatprep.subr.bf16.mxu0 0
        %5221 = vmatpush1.bf16.msra.mxu0 0
        %5222 = vmatprep.subr.bf16.mxu0 0
        %5223 = vmatpush1.bf16.msra.mxu0 0
        %5224 = vmatprep.subr.bf16.mxu0 0
        %5225 = vmatpush1.bf16.msra.mxu0 0
        %5226 = vmatprep.subr.bf16.mxu0 0
        %5227 = vmatpush1.bf16.msra.mxu0 0
        %5228 = vmatprep.subr.bf16.mxu0 0
        %5229 = vmatpush1.bf16.msra.mxu0 0
        %5230 = vmatprep.subr.bf16.mxu0 0
        %5231 = vmatpush1.bf16.msra.mxu0 %v5202
        %5232 = vmatprep.subr.bf16.mxu0 0
        %5233 = vmatpush2.bf16.msra.mxu0 0
        %5234 = vmatprep.subr.bf16.mxu0 0
        %5235 = vmatpush2.bf16.msra.mxu0 0
        %5236 = vmatprep.subr.bf16.mxu0 0
        %5237 = vmatpush2.bf16.msra.mxu0 0
        %5238 = vmatprep.subr.bf16.mxu0 0
        %5239 = vmatpush2.bf16.msra.mxu0 0
        %5240 = vmatprep.subr.bf16.mxu0 0
        %5241 = vmatpush2.bf16.msra.mxu0 0
        %5242 = vmatprep.subr.bf16.mxu0 0
        %5243 = vmatpush2.bf16.msra.mxu0 0
        %5244 = vmatprep.subr.bf16.mxu0 0
        %5245 = vmatpush2.bf16.msra.mxu0 0
        %5246 = vmatprep.subr.bf16.mxu0 0
        %5247 = vmatpush2.bf16.msra.mxu0 0
        %5248 = vmatprep.mubr.bf16.mxu0 0
        %5249 = vmatmul.mubr.bf16.gmra.mxu0 %v5205
        %v5250 = vpop.f32.mrf.mxu0
        %v5251 = vadd.f32 0.0, %v5250
        %v5252 = vpop.f32.mrf.mxu0
        %v5253 = vpop.f32.mrf.mxu0
        %v5254 = vadd.f32 0.0, %v5253
        %v5255 = vpop.f32.mrf.mxu0
        %5256 = vmatprep.mubr.bf16.mxu0 0
        %5257 = vmatmul.mubr.bf16.gmra.mxu0 %v5208
        %v5258 = vpop.f32.mrf.mxu0
        %v5259 = vadd.f32 0.0, %v5258
        %v5260 = vpop.f32.mrf.mxu0
        %v5261 = vpop.f32.mrf.mxu0
        %v5262 = vadd.f32 0.0, %v5261
        %v5263 = vpop.f32.mrf.mxu0
        %5264 = vmatprep.mubr.bf16.mxu0 0
        %5265 = vmatmul.mubr.bf16.gmra.mxu0 %v5211
        %v5266 = vpop.f32.mrf.mxu0
        %v5267 = vadd.f32 0.0, %v5266
        %v5268 = vpop.f32.mrf.mxu0
        %v5269 = vpop.f32.mrf.mxu0
        %v5270 = vadd.f32 0.0, %v5269
        %v5271 = vpop.f32.mrf.mxu0
        %5272 = vmatprep.mubr.bf16.mxu0 0
        %5273 = vmatmul.mubr.bf16.gmra.mxu0 %v5214
        %v5274 = vpop.f32.mrf.mxu0
        %v5275 = vadd.f32 0.0, %v5274
        %v5276 = vpop.f32.mrf.mxu0
        %v5277 = vpop.f32.mrf.mxu0
        %v5278 = vadd.f32 0.0, %v5277
        %v5279 = vpop.f32.mrf.mxu0
        %5280 = vdwg.mxu0
        %v5281 = vadd.f32 %v5077, %v5251
        %v5282 = vadd.f32 %v5078, %v5254
        %v5283 = vadd.f32 %v5079, %v5259
        %v5284 = vadd.f32 %v5080, %v5262
        %v5285 = vadd.f32 %v5081, %v5267
        %v5286 = vadd.f32 %v5082, %v5270
        %v5287 = vadd.f32 %v5083, %v5275
        %v5288 = vadd.f32 %v5084, %v5278
        %s5289 = scalar_lea.vmem %s13, 128
        %v5290 = vld [vmem:[%s5289] sm:$0xf]
        %v5291 = vld [vmem:[%s5289 + $0x4] sm:$0xf]
        %v5292 = vld [vmem:[%s5289 + $0x8] sm:$0xf]
        %v5293 = vld [vmem:[%s5289 + $0xc] sm:$0xf]
        %v5294 = vld [vmem:[%s5289 + $0x10] sm:$0xf]
        %v5295 = vld [vmem:[%s5289 + $0x14] sm:$0xf]
        %v5296 = vld [vmem:[%s5289 + $0x18] sm:$0xf]
        %v5297 = vld [vmem:[%s5289 + $0x1c] sm:$0xf]
        %v5306 = vunpack.c.l.b16 %v5290
        %v5307 = vunpack.c.l.b16 %v5291
        %v5308 = vunpack.c.l.b16 %v5292
        %v5309 = vunpack.c.l.b16 %v5293
        %v5310 = vunpack.c.l.b16 %v5294
        %v5311 = vunpack.c.l.b16 %v5295
        %v5312 = vunpack.c.l.b16 %v5296
        %v5313 = vunpack.c.l.b16 %v5297
        %v5314 = vpack.c.b16 %v5307, %v5306
        %v5315 = vpack.c.b16 %v5309, %v5308
        %v5316 = vpack.c.b16 %v5311, %v5310
        %v5317 = vpack.c.b16 %v5313, %v5312
        %v5319 = vsel %vm3303, %v5314, 0
        %v5322 = vsel %vm3303, %v5315, 0
        %v5325 = vsel %vm3303, %v5316, 0
        %v5328 = vsel %vm3303, %v5317, 0
        %5330 = vmatprep.subr.bf16.mxu0 0
        %5331 = vmatpush1.bf16.msra.mxu0 0
        %5332 = vmatprep.subr.bf16.mxu0 0
        %5333 = vmatpush1.bf16.msra.mxu0 0
        %5334 = vmatprep.subr.bf16.mxu0 0
        %5335 = vmatpush1.bf16.msra.mxu0 0
        %5336 = vmatprep.subr.bf16.mxu0 0
        %5337 = vmatpush1.bf16.msra.mxu0 0
        %5338 = vmatprep.subr.bf16.mxu0 0
        %5339 = vmatpush1.bf16.msra.mxu0 %v3294
        %5340 = vmatprep.subr.bf16.mxu0 0
        %5341 = vmatpush1.bf16.msra.mxu0 %v3293
        %5342 = vmatprep.subr.bf16.mxu0 0
        %5343 = vmatpush1.bf16.msra.mxu0 %v3292
        %5344 = vmatprep.subr.bf16.mxu0 0
        %5345 = vmatpush1.bf16.msra.mxu0 %v3291
        %5346 = vmatprep.subr.bf16.mxu0 0
        %5347 = vmatpush2.bf16.msra.mxu0 0
        %5348 = vmatprep.subr.bf16.mxu0 0
        %5349 = vmatpush2.bf16.msra.mxu0 0
        %5350 = vmatprep.subr.bf16.mxu0 0
        %5351 = vmatpush2.bf16.msra.mxu0 0
        %5352 = vmatprep.subr.bf16.mxu0 0
        %5353 = vmatpush2.bf16.msra.mxu0 0
        %5354 = vmatprep.subr.bf16.mxu0 0
        %5355 = vmatpush2.bf16.msra.mxu0 0
        %5356 = vmatprep.subr.bf16.mxu0 0
        %5357 = vmatpush2.bf16.msra.mxu0 0
        %5358 = vmatprep.subr.bf16.mxu0 0
        %5359 = vmatpush2.bf16.msra.mxu0 0
        %5360 = vmatprep.subr.bf16.mxu0 0
        %5361 = vmatpush2.bf16.msra.mxu0 0
        %5362 = vmatprep.mubr.bf16.mxu0 0
        %5363 = vmatmul.mubr.bf16.gmra.mxu0 %v5319
        %v5364 = vpop.f32.mrf.mxu0
        %v5365 = vadd.f32 0.0, %v5364
        %v5366 = vpop.f32.mrf.mxu0
        %v5367 = vpop.f32.mrf.mxu0
        %v5368 = vadd.f32 0.0, %v5367
        %v5369 = vpop.f32.mrf.mxu0
        %5370 = vmatprep.mubr.bf16.mxu0 0
        %5371 = vmatmul.mubr.bf16.gmra.mxu0 %v5322
        %v5372 = vpop.f32.mrf.mxu0
        %v5373 = vadd.f32 0.0, %v5372
        %v5374 = vpop.f32.mrf.mxu0
        %v5375 = vpop.f32.mrf.mxu0
        %v5376 = vadd.f32 0.0, %v5375
        %v5377 = vpop.f32.mrf.mxu0
        %5378 = vmatprep.mubr.bf16.mxu0 0
        %5379 = vmatmul.mubr.bf16.gmra.mxu0 %v5325
        %v5380 = vpop.f32.mrf.mxu0
        %v5381 = vadd.f32 0.0, %v5380
        %v5382 = vpop.f32.mrf.mxu0
        %v5383 = vpop.f32.mrf.mxu0
        %v5384 = vadd.f32 0.0, %v5383
        %v5385 = vpop.f32.mrf.mxu0
        %5386 = vmatprep.mubr.bf16.mxu0 0
        %5387 = vmatmul.mubr.bf16.gmra.mxu0 %v5328
        %v5388 = vpop.f32.mrf.mxu0
        %v5389 = vadd.f32 0.0, %v5388
        %v5390 = vpop.f32.mrf.mxu0
        %v5391 = vpop.f32.mrf.mxu0
        %v5392 = vadd.f32 0.0, %v5391
        %v5393 = vpop.f32.mrf.mxu0
        %5394 = vdwg.mxu0
        %v5395 = vpack.c.bf16 %v5368, %v5365
        %v5396 = vpack.c.bf16 %v5376, %v5373
        %v5397 = vpack.c.bf16 %v5384, %v5381
        %v5398 = vpack.c.bf16 %v5392, %v5389
        %s5399 = scalar_lea.vmem %s14, 32
        %v5400 = vld [vmem:[%s5399] sm:$0xf]
        %v5401 = vld [vmem:[%s5399 + $0x4] sm:$0xf]
        %v5404 = vunpack.c.l.b16 %v5400
        %v5405 = vunpack.c.l.b16 %v5401
        %v5406 = vpack.c.b16 %v5405, %v5404
        %v5409 = vsel %vm3173, %v5395, 0
        %v5412 = vsel %vm3173, %v5396, 0
        %v5415 = vsel %vm3173, %v5397, 0
        %v5418 = vsel %vm3173, %v5398, 0
        %5420 = vmatprep.subr.bf16.mxu0 0
        %5421 = vmatpush1.bf16.msra.mxu0 0
        %5422 = vmatprep.subr.bf16.mxu0 0
        %5423 = vmatpush1.bf16.msra.mxu0 0
        %5424 = vmatprep.subr.bf16.mxu0 0
        %5425 = vmatpush1.bf16.msra.mxu0 0
        %5426 = vmatprep.subr.bf16.mxu0 0
        %5427 = vmatpush1.bf16.msra.mxu0 0
        %5428 = vmatprep.subr.bf16.mxu0 0
        %5429 = vmatpush1.bf16.msra.mxu0 0
        %5430 = vmatprep.subr.bf16.mxu0 0
        %5431 = vmatpush1.bf16.msra.mxu0 0
        %5432 = vmatprep.subr.bf16.mxu0 0
        %5433 = vmatpush1.bf16.msra.mxu0 0
        %5434 = vmatprep.subr.bf16.mxu0 0
        %5435 = vmatpush1.bf16.msra.mxu0 %v5406
        %5436 = vmatprep.subr.bf16.mxu0 0
        %5437 = vmatpush2.bf16.msra.mxu0 0
        %5438 = vmatprep.subr.bf16.mxu0 0
        %5439 = vmatpush2.bf16.msra.mxu0 0
        %5440 = vmatprep.subr.bf16.mxu0 0
        %5441 = vmatpush2.bf16.msra.mxu0 0
        %5442 = vmatprep.subr.bf16.mxu0 0
        %5443 = vmatpush2.bf16.msra.mxu0 0
        %5444 = vmatprep.subr.bf16.mxu0 0
        %5445 = vmatpush2.bf16.msra.mxu0 0
        %5446 = vmatprep.subr.bf16.mxu0 0
        %5447 = vmatpush2.bf16.msra.mxu0 0
        %5448 = vmatprep.subr.bf16.mxu0 0
        %5449 = vmatpush2.bf16.msra.mxu0 0
        %5450 = vmatprep.subr.bf16.mxu0 0
        %5451 = vmatpush2.bf16.msra.mxu0 0
        %5452 = vmatprep.mubr.bf16.mxu0 0
        %5453 = vmatmul.mubr.bf16.gmra.mxu0 %v5409
        %v5454 = vpop.f32.mrf.mxu0
        %v5455 = vadd.f32 0.0, %v5454
        %v5456 = vpop.f32.mrf.mxu0
        %v5457 = vpop.f32.mrf.mxu0
        %v5458 = vadd.f32 0.0, %v5457
        %v5459 = vpop.f32.mrf.mxu0
        %5460 = vmatprep.mubr.bf16.mxu0 0
        %5461 = vmatmul.mubr.bf16.gmra.mxu0 %v5412
        %v5462 = vpop.f32.mrf.mxu0
        %v5463 = vadd.f32 0.0, %v5462
        %v5464 = vpop.f32.mrf.mxu0
        %v5465 = vpop.f32.mrf.mxu0
        %v5466 = vadd.f32 0.0, %v5465
        %v5467 = vpop.f32.mrf.mxu0
        %5468 = vmatprep.mubr.bf16.mxu0 0
        %5469 = vmatmul.mubr.bf16.gmra.mxu0 %v5415
        %v5470 = vpop.f32.mrf.mxu0
        %v5471 = vadd.f32 0.0, %v5470
        %v5472 = vpop.f32.mrf.mxu0
        %v5473 = vpop.f32.mrf.mxu0
        %v5474 = vadd.f32 0.0, %v5473
        %v5475 = vpop.f32.mrf.mxu0
        %5476 = vmatprep.mubr.bf16.mxu0 0
        %5477 = vmatmul.mubr.bf16.gmra.mxu0 %v5418
        %v5478 = vpop.f32.mrf.mxu0
        %v5479 = vadd.f32 0.0, %v5478
        %v5480 = vpop.f32.mrf.mxu0
        %v5481 = vpop.f32.mrf.mxu0
        %v5482 = vadd.f32 0.0, %v5481
        %v5483 = vpop.f32.mrf.mxu0
        %5484 = vdwg.mxu0
        %v5485 = vadd.f32 %v5281, %v5455
        %v5486 = vadd.f32 %v5282, %v5458
        %v5487 = vadd.f32 %v5283, %v5463
        %v5488 = vadd.f32 %v5284, %v5466
        %v5489 = vadd.f32 %v5285, %v5471
        %v5490 = vadd.f32 %v5286, %v5474
        %v5491 = vadd.f32 %v5287, %v5479
        %v5492 = vadd.f32 %v5288, %v5482
        %s5493 = scalar_lea.vmem %s13, 160
        %v5494 = vld [vmem:[%s5493] sm:$0xf]
        %v5495 = vld [vmem:[%s5493 + $0x4] sm:$0xf]
        %v5496 = vld [vmem:[%s5493 + $0x8] sm:$0xf]
        %v5497 = vld [vmem:[%s5493 + $0xc] sm:$0xf]
        %v5498 = vld [vmem:[%s5493 + $0x10] sm:$0xf]
        %v5499 = vld [vmem:[%s5493 + $0x14] sm:$0xf]
        %v5500 = vld [vmem:[%s5493 + $0x18] sm:$0xf]
        %v5501 = vld [vmem:[%s5493 + $0x1c] sm:$0xf]
        %v5510 = vunpack.c.l.b16 %v5494
        %v5511 = vunpack.c.l.b16 %v5495
        %v5512 = vunpack.c.l.b16 %v5496
        %v5513 = vunpack.c.l.b16 %v5497
        %v5514 = vunpack.c.l.b16 %v5498
        %v5515 = vunpack.c.l.b16 %v5499
        %v5516 = vunpack.c.l.b16 %v5500
        %v5517 = vunpack.c.l.b16 %v5501
        %v5518 = vpack.c.b16 %v5511, %v5510
        %v5519 = vpack.c.b16 %v5513, %v5512
        %v5520 = vpack.c.b16 %v5515, %v5514
        %v5521 = vpack.c.b16 %v5517, %v5516
        %v5523 = vsel %vm3303, %v5518, 0
        %v5526 = vsel %vm3303, %v5519, 0
        %v5529 = vsel %vm3303, %v5520, 0
        %v5532 = vsel %vm3303, %v5521, 0
        %5534 = vmatprep.subr.bf16.mxu0 0
        %5535 = vmatpush1.bf16.msra.mxu0 0
        %5536 = vmatprep.subr.bf16.mxu0 0
        %5537 = vmatpush1.bf16.msra.mxu0 0
        %5538 = vmatprep.subr.bf16.mxu0 0
        %5539 = vmatpush1.bf16.msra.mxu0 0
        %5540 = vmatprep.subr.bf16.mxu0 0
        %5541 = vmatpush1.bf16.msra.mxu0 0
        %5542 = vmatprep.subr.bf16.mxu0 0
        %5543 = vmatpush1.bf16.msra.mxu0 %v3294
        %5544 = vmatprep.subr.bf16.mxu0 0
        %5545 = vmatpush1.bf16.msra.mxu0 %v3293
        %5546 = vmatprep.subr.bf16.mxu0 0
        %5547 = vmatpush1.bf16.msra.mxu0 %v3292
        %5548 = vmatprep.subr.bf16.mxu0 0
        %5549 = vmatpush1.bf16.msra.mxu0 %v3291
        %5550 = vmatprep.subr.bf16.mxu0 0
        %5551 = vmatpush2.bf16.msra.mxu0 0
        %5552 = vmatprep.subr.bf16.mxu0 0
        %5553 = vmatpush2.bf16.msra.mxu0 0
        %5554 = vmatprep.subr.bf16.mxu0 0
        %5555 = vmatpush2.bf16.msra.mxu0 0
        %5556 = vmatprep.subr.bf16.mxu0 0
        %5557 = vmatpush2.bf16.msra.mxu0 0
        %5558 = vmatprep.subr.bf16.mxu0 0
        %5559 = vmatpush2.bf16.msra.mxu0 0
        %5560 = vmatprep.subr.bf16.mxu0 0
        %5561 = vmatpush2.bf16.msra.mxu0 0
        %5562 = vmatprep.subr.bf16.mxu0 0
        %5563 = vmatpush2.bf16.msra.mxu0 0
        %5564 = vmatprep.subr.bf16.mxu0 0
        %5565 = vmatpush2.bf16.msra.mxu0 0
        %5566 = vmatprep.mubr.bf16.mxu0 0
        %5567 = vmatmul.mubr.bf16.gmra.mxu0 %v5523
        %v5568 = vpop.f32.mrf.mxu0
        %v5569 = vadd.f32 0.0, %v5568
        %v5570 = vpop.f32.mrf.mxu0
        %v5571 = vpop.f32.mrf.mxu0
        %v5572 = vadd.f32 0.0, %v5571
        %v5573 = vpop.f32.mrf.mxu0
        %5574 = vmatprep.mubr.bf16.mxu0 0
        %5575 = vmatmul.mubr.bf16.gmra.mxu0 %v5526
        %v5576 = vpop.f32.mrf.mxu0
        %v5577 = vadd.f32 0.0, %v5576
        %v5578 = vpop.f32.mrf.mxu0
        %v5579 = vpop.f32.mrf.mxu0
        %v5580 = vadd.f32 0.0, %v5579
        %v5581 = vpop.f32.mrf.mxu0
        %5582 = vmatprep.mubr.bf16.mxu0 0
        %5583 = vmatmul.mubr.bf16.gmra.mxu0 %v5529
        %v5584 = vpop.f32.mrf.mxu0
        %v5585 = vadd.f32 0.0, %v5584
        %v5586 = vpop.f32.mrf.mxu0
        %v5587 = vpop.f32.mrf.mxu0
        %v5588 = vadd.f32 0.0, %v5587
        %v5589 = vpop.f32.mrf.mxu0
        %5590 = vmatprep.mubr.bf16.mxu0 0
        %5591 = vmatmul.mubr.bf16.gmra.mxu0 %v5532
        %v5592 = vpop.f32.mrf.mxu0
        %v5593 = vadd.f32 0.0, %v5592
        %v5594 = vpop.f32.mrf.mxu0
        %v5595 = vpop.f32.mrf.mxu0
        %v5596 = vadd.f32 0.0, %v5595
        %v5597 = vpop.f32.mrf.mxu0
        %5598 = vdwg.mxu0
        %v5599 = vpack.c.bf16 %v5572, %v5569
        %v5600 = vpack.c.bf16 %v5580, %v5577
        %v5601 = vpack.c.bf16 %v5588, %v5585
        %v5602 = vpack.c.bf16 %v5596, %v5593
        %s5603 = scalar_lea.vmem %s14, 40
        %v5604 = vld [vmem:[%s5603] sm:$0xf]
        %v5605 = vld [vmem:[%s5603 + $0x4] sm:$0xf]
        %v5608 = vunpack.c.l.b16 %v5604
        %v5609 = vunpack.c.l.b16 %v5605
        %v5610 = vpack.c.b16 %v5609, %v5608
        %v5613 = vsel %vm3173, %v5599, 0
        %v5616 = vsel %vm3173, %v5600, 0
        %v5619 = vsel %vm3173, %v5601, 0
        %v5622 = vsel %vm3173, %v5602, 0
        %5624 = vmatprep.subr.bf16.mxu0 0
        %5625 = vmatpush1.bf16.msra.mxu0 0
        %5626 = vmatprep.subr.bf16.mxu0 0
        %5627 = vmatpush1.bf16.msra.mxu0 0
        %5628 = vmatprep.subr.bf16.mxu0 0
        %5629 = vmatpush1.bf16.msra.mxu0 0
        %5630 = vmatprep.subr.bf16.mxu0 0
        %5631 = vmatpush1.bf16.msra.mxu0 0
        %5632 = vmatprep.subr.bf16.mxu0 0
        %5633 = vmatpush1.bf16.msra.mxu0 0
        %5634 = vmatprep.subr.bf16.mxu0 0
        %5635 = vmatpush1.bf16.msra.mxu0 0
        %5636 = vmatprep.subr.bf16.mxu0 0
        %5637 = vmatpush1.bf16.msra.mxu0 0
        %5638 = vmatprep.subr.bf16.mxu0 0
        %5639 = vmatpush1.bf16.msra.mxu0 %v5610
        %5640 = vmatprep.subr.bf16.mxu0 0
        %5641 = vmatpush2.bf16.msra.mxu0 0
        %5642 = vmatprep.subr.bf16.mxu0 0
        %5643 = vmatpush2.bf16.msra.mxu0 0
        %5644 = vmatprep.subr.bf16.mxu0 0
        %5645 = vmatpush2.bf16.msra.mxu0 0
        %5646 = vmatprep.subr.bf16.mxu0 0
        %5647 = vmatpush2.bf16.msra.mxu0 0
        %5648 = vmatprep.subr.bf16.mxu0 0
        %5649 = vmatpush2.bf16.msra.mxu0 0
        %5650 = vmatprep.subr.bf16.mxu0 0
        %5651 = vmatpush2.bf16.msra.mxu0 0
        %5652 = vmatprep.subr.bf16.mxu0 0
        %5653 = vmatpush2.bf16.msra.mxu0 0
        %5654 = vmatprep.subr.bf16.mxu0 0
        %5655 = vmatpush2.bf16.msra.mxu0 0
        %5656 = vmatprep.mubr.bf16.mxu0 0
        %5657 = vmatmul.mubr.bf16.gmra.mxu0 %v5613
        %v5658 = vpop.f32.mrf.mxu0
        %v5659 = vadd.f32 0.0, %v5658
        %v5660 = vpop.f32.mrf.mxu0
        %v5661 = vpop.f32.mrf.mxu0
        %v5662 = vadd.f32 0.0, %v5661
        %v5663 = vpop.f32.mrf.mxu0
        %5664 = vmatprep.mubr.bf16.mxu0 0
        %5665 = vmatmul.mubr.bf16.gmra.mxu0 %v5616
        %v5666 = vpop.f32.mrf.mxu0
        %v5667 = vadd.f32 0.0, %v5666
        %v5668 = vpop.f32.mrf.mxu0
        %v5669 = vpop.f32.mrf.mxu0
        %v5670 = vadd.f32 0.0, %v5669
        %v5671 = vpop.f32.mrf.mxu0
        %5672 = vmatprep.mubr.bf16.mxu0 0
        %5673 = vmatmul.mubr.bf16.gmra.mxu0 %v5619
        %v5674 = vpop.f32.mrf.mxu0
        %v5675 = vadd.f32 0.0, %v5674
        %v5676 = vpop.f32.mrf.mxu0
        %v5677 = vpop.f32.mrf.mxu0
        %v5678 = vadd.f32 0.0, %v5677
        %v5679 = vpop.f32.mrf.mxu0
        %5680 = vmatprep.mubr.bf16.mxu0 0
        %5681 = vmatmul.mubr.bf16.gmra.mxu0 %v5622
        %v5682 = vpop.f32.mrf.mxu0
        %v5683 = vadd.f32 0.0, %v5682
        %v5684 = vpop.f32.mrf.mxu0
        %v5685 = vpop.f32.mrf.mxu0
        %v5686 = vadd.f32 0.0, %v5685
        %v5687 = vpop.f32.mrf.mxu0
        %5688 = vdwg.mxu0
        %v5689 = vadd.f32 %v5485, %v5659
        %v5690 = vadd.f32 %v5486, %v5662
        %v5691 = vadd.f32 %v5487, %v5667
        %v5692 = vadd.f32 %v5488, %v5670
        %v5693 = vadd.f32 %v5489, %v5675
        %v5694 = vadd.f32 %v5490, %v5678
        %v5695 = vadd.f32 %v5491, %v5683
        %v5696 = vadd.f32 %v5492, %v5686
        %s5697 = scalar_lea.vmem %s13, 192
        %v5698 = vld [vmem:[%s5697] sm:$0xf]
        %v5699 = vld [vmem:[%s5697 + $0x4] sm:$0xf]
        %v5700 = vld [vmem:[%s5697 + $0x8] sm:$0xf]
        %v5701 = vld [vmem:[%s5697 + $0xc] sm:$0xf]
        %v5702 = vld [vmem:[%s5697 + $0x10] sm:$0xf]
        %v5703 = vld [vmem:[%s5697 + $0x14] sm:$0xf]
        %v5704 = vld [vmem:[%s5697 + $0x18] sm:$0xf]
        %v5705 = vld [vmem:[%s5697 + $0x1c] sm:$0xf]
        %v5714 = vunpack.c.l.b16 %v5698
        %v5715 = vunpack.c.l.b16 %v5699
        %v5716 = vunpack.c.l.b16 %v5700
        %v5717 = vunpack.c.l.b16 %v5701
        %v5718 = vunpack.c.l.b16 %v5702
        %v5719 = vunpack.c.l.b16 %v5703
        %v5720 = vunpack.c.l.b16 %v5704
        %v5721 = vunpack.c.l.b16 %v5705
        %v5722 = vpack.c.b16 %v5715, %v5714
        %v5723 = vpack.c.b16 %v5717, %v5716
        %v5724 = vpack.c.b16 %v5719, %v5718
        %v5725 = vpack.c.b16 %v5721, %v5720
        %v5727 = vsel %vm3303, %v5722, 0
        %v5730 = vsel %vm3303, %v5723, 0
        %v5733 = vsel %vm3303, %v5724, 0
        %v5736 = vsel %vm3303, %v5725, 0
        %5738 = vmatprep.subr.bf16.mxu0 0
        %5739 = vmatpush1.bf16.msra.mxu0 0
        %5740 = vmatprep.subr.bf16.mxu0 0
        %5741 = vmatpush1.bf16.msra.mxu0 0
        %5742 = vmatprep.subr.bf16.mxu0 0
        %5743 = vmatpush1.bf16.msra.mxu0 0
        %5744 = vmatprep.subr.bf16.mxu0 0
        %5745 = vmatpush1.bf16.msra.mxu0 0
        %5746 = vmatprep.subr.bf16.mxu0 0
        %5747 = vmatpush1.bf16.msra.mxu0 %v3294
        %5748 = vmatprep.subr.bf16.mxu0 0
        %5749 = vmatpush1.bf16.msra.mxu0 %v3293
        %5750 = vmatprep.subr.bf16.mxu0 0
        %5751 = vmatpush1.bf16.msra.mxu0 %v3292
        %5752 = vmatprep.subr.bf16.mxu0 0
        %5753 = vmatpush1.bf16.msra.mxu0 %v3291
        %5754 = vmatprep.subr.bf16.mxu0 0
        %5755 = vmatpush2.bf16.msra.mxu0 0
        %5756 = vmatprep.subr.bf16.mxu0 0
        %5757 = vmatpush2.bf16.msra.mxu0 0
        %5758 = vmatprep.subr.bf16.mxu0 0
        %5759 = vmatpush2.bf16.msra.mxu0 0
        %5760 = vmatprep.subr.bf16.mxu0 0
        %5761 = vmatpush2.bf16.msra.mxu0 0
        %5762 = vmatprep.subr.bf16.mxu0 0
        %5763 = vmatpush2.bf16.msra.mxu0 0
        %5764 = vmatprep.subr.bf16.mxu0 0
        %5765 = vmatpush2.bf16.msra.mxu0 0
        %5766 = vmatprep.subr.bf16.mxu0 0
        %5767 = vmatpush2.bf16.msra.mxu0 0
        %5768 = vmatprep.subr.bf16.mxu0 0
        %5769 = vmatpush2.bf16.msra.mxu0 0
        %5770 = vmatprep.mubr.bf16.mxu0 0
        %5771 = vmatmul.mubr.bf16.gmra.mxu0 %v5727
        %v5772 = vpop.f32.mrf.mxu0
        %v5773 = vadd.f32 0.0, %v5772
        %v5774 = vpop.f32.mrf.mxu0
        %v5775 = vpop.f32.mrf.mxu0
        %v5776 = vadd.f32 0.0, %v5775
        %v5777 = vpop.f32.mrf.mxu0
        %5778 = vmatprep.mubr.bf16.mxu0 0
        %5779 = vmatmul.mubr.bf16.gmra.mxu0 %v5730
        %v5780 = vpop.f32.mrf.mxu0
        %v5781 = vadd.f32 0.0, %v5780
        %v5782 = vpop.f32.mrf.mxu0
        %v5783 = vpop.f32.mrf.mxu0
        %v5784 = vadd.f32 0.0, %v5783
        %v5785 = vpop.f32.mrf.mxu0
        %5786 = vmatprep.mubr.bf16.mxu0 0
        %5787 = vmatmul.mubr.bf16.gmra.mxu0 %v5733
        %v5788 = vpop.f32.mrf.mxu0
        %v5789 = vadd.f32 0.0, %v5788
        %v5790 = vpop.f32.mrf.mxu0
        %v5791 = vpop.f32.mrf.mxu0
        %v5792 = vadd.f32 0.0, %v5791
        %v5793 = vpop.f32.mrf.mxu0
        %5794 = vmatprep.mubr.bf16.mxu0 0
        %5795 = vmatmul.mubr.bf16.gmra.mxu0 %v5736
        %v5796 = vpop.f32.mrf.mxu0
        %v5797 = vadd.f32 0.0, %v5796
        %v5798 = vpop.f32.mrf.mxu0
        %v5799 = vpop.f32.mrf.mxu0
        %v5800 = vadd.f32 0.0, %v5799
        %v5801 = vpop.f32.mrf.mxu0
        %5802 = vdwg.mxu0
        %v5803 = vpack.c.bf16 %v5776, %v5773
        %v5804 = vpack.c.bf16 %v5784, %v5781
        %v5805 = vpack.c.bf16 %v5792, %v5789
        %v5806 = vpack.c.bf16 %v5800, %v5797
        %s5807 = scalar_lea.vmem %s14, 48
        %v5808 = vld [vmem:[%s5807] sm:$0xf]
        %v5809 = vld [vmem:[%s5807 + $0x4] sm:$0xf]
        %v5812 = vunpack.c.l.b16 %v5808
        %v5813 = vunpack.c.l.b16 %v5809
        %v5814 = vpack.c.b16 %v5813, %v5812
        %v5817 = vsel %vm3173, %v5803, 0
        %v5820 = vsel %vm3173, %v5804, 0
        %v5823 = vsel %vm3173, %v5805, 0
        %v5826 = vsel %vm3173, %v5806, 0
        %5828 = vmatprep.subr.bf16.mxu0 0
        %5829 = vmatpush1.bf16.msra.mxu0 0
        %5830 = vmatprep.subr.bf16.mxu0 0
        %5831 = vmatpush1.bf16.msra.mxu0 0
        %5832 = vmatprep.subr.bf16.mxu0 0
        %5833 = vmatpush1.bf16.msra.mxu0 0
        %5834 = vmatprep.subr.bf16.mxu0 0
        %5835 = vmatpush1.bf16.msra.mxu0 0
        %5836 = vmatprep.subr.bf16.mxu0 0
        %5837 = vmatpush1.bf16.msra.mxu0 0
        %5838 = vmatprep.subr.bf16.mxu0 0
        %5839 = vmatpush1.bf16.msra.mxu0 0
        %5840 = vmatprep.subr.bf16.mxu0 0
        %5841 = vmatpush1.bf16.msra.mxu0 0
        %5842 = vmatprep.subr.bf16.mxu0 0
        %5843 = vmatpush1.bf16.msra.mxu0 %v5814
        %5844 = vmatprep.subr.bf16.mxu0 0
        %5845 = vmatpush2.bf16.msra.mxu0 0
        %5846 = vmatprep.subr.bf16.mxu0 0
        %5847 = vmatpush2.bf16.msra.mxu0 0
        %5848 = vmatprep.subr.bf16.mxu0 0
        %5849 = vmatpush2.bf16.msra.mxu0 0
        %5850 = vmatprep.subr.bf16.mxu0 0
        %5851 = vmatpush2.bf16.msra.mxu0 0
        %5852 = vmatprep.subr.bf16.mxu0 0
        %5853 = vmatpush2.bf16.msra.mxu0 0
        %5854 = vmatprep.subr.bf16.mxu0 0
        %5855 = vmatpush2.bf16.msra.mxu0 0
        %5856 = vmatprep.subr.bf16.mxu0 0
        %5857 = vmatpush2.bf16.msra.mxu0 0
        %5858 = vmatprep.subr.bf16.mxu0 0
        %5859 = vmatpush2.bf16.msra.mxu0 0
        %5860 = vmatprep.mubr.bf16.mxu0 0
        %5861 = vmatmul.mubr.bf16.gmra.mxu0 %v5817
        %v5862 = vpop.f32.mrf.mxu0
        %v5863 = vadd.f32 0.0, %v5862
        %v5864 = vpop.f32.mrf.mxu0
        %v5865 = vpop.f32.mrf.mxu0
        %v5866 = vadd.f32 0.0, %v5865
        %v5867 = vpop.f32.mrf.mxu0
        %5868 = vmatprep.mubr.bf16.mxu0 0
        %5869 = vmatmul.mubr.bf16.gmra.mxu0 %v5820
        %v5870 = vpop.f32.mrf.mxu0
        %v5871 = vadd.f32 0.0, %v5870
        %v5872 = vpop.f32.mrf.mxu0
        %v5873 = vpop.f32.mrf.mxu0
        %v5874 = vadd.f32 0.0, %v5873
        %v5875 = vpop.f32.mrf.mxu0
        %5876 = vmatprep.mubr.bf16.mxu0 0
        %5877 = vmatmul.mubr.bf16.gmra.mxu0 %v5823
        %v5878 = vpop.f32.mrf.mxu0
        %v5879 = vadd.f32 0.0, %v5878
        %v5880 = vpop.f32.mrf.mxu0
        %v5881 = vpop.f32.mrf.mxu0
        %v5882 = vadd.f32 0.0, %v5881
        %v5883 = vpop.f32.mrf.mxu0
        %5884 = vmatprep.mubr.bf16.mxu0 0
        %5885 = vmatmul.mubr.bf16.gmra.mxu0 %v5826
        %v5886 = vpop.f32.mrf.mxu0
        %v5887 = vadd.f32 0.0, %v5886
        %v5888 = vpop.f32.mrf.mxu0
        %v5889 = vpop.f32.mrf.mxu0
        %v5890 = vadd.f32 0.0, %v5889
        %v5891 = vpop.f32.mrf.mxu0
        %5892 = vdwg.mxu0
        %v5893 = vadd.f32 %v5689, %v5863
        %v5894 = vadd.f32 %v5690, %v5866
        %v5895 = vadd.f32 %v5691, %v5871
        %v5896 = vadd.f32 %v5692, %v5874
        %v5897 = vadd.f32 %v5693, %v5879
        %v5898 = vadd.f32 %v5694, %v5882
        %v5899 = vadd.f32 %v5695, %v5887
        %v5900 = vadd.f32 %v5696, %v5890
        %s5901 = scalar_lea.vmem %s13, 224
        %v5902 = vld [vmem:[%s5901] sm:$0xf]
        %v5903 = vld [vmem:[%s5901 + $0x4] sm:$0xf]
        %v5904 = vld [vmem:[%s5901 + $0x8] sm:$0xf]
        %v5905 = vld [vmem:[%s5901 + $0xc] sm:$0xf]
        %v5906 = vld [vmem:[%s5901 + $0x10] sm:$0xf]
        %v5907 = vld [vmem:[%s5901 + $0x14] sm:$0xf]
        %v5908 = vld [vmem:[%s5901 + $0x18] sm:$0xf]
        %v5909 = vld [vmem:[%s5901 + $0x1c] sm:$0xf]
        %v5918 = vunpack.c.l.b16 %v5902
        %v5919 = vunpack.c.l.b16 %v5903
        %v5920 = vunpack.c.l.b16 %v5904
        %v5921 = vunpack.c.l.b16 %v5905
        %v5922 = vunpack.c.l.b16 %v5906
        %v5923 = vunpack.c.l.b16 %v5907
        %v5924 = vunpack.c.l.b16 %v5908
        %v5925 = vunpack.c.l.b16 %v5909
        %v5926 = vpack.c.b16 %v5919, %v5918
        %v5927 = vpack.c.b16 %v5921, %v5920
        %v5928 = vpack.c.b16 %v5923, %v5922
        %v5929 = vpack.c.b16 %v5925, %v5924
        %v5931 = vsel %vm3303, %v5926, 0
        %v5934 = vsel %vm3303, %v5927, 0
        %v5937 = vsel %vm3303, %v5928, 0
        %v5940 = vsel %vm3303, %v5929, 0
        %5942 = vmatprep.subr.bf16.mxu0 0
        %5943 = vmatpush1.bf16.msra.mxu0 0
        %5944 = vmatprep.subr.bf16.mxu0 0
        %5945 = vmatpush1.bf16.msra.mxu0 0
        %5946 = vmatprep.subr.bf16.mxu0 0
        %5947 = vmatpush1.bf16.msra.mxu0 0
        %5948 = vmatprep.subr.bf16.mxu0 0
        %5949 = vmatpush1.bf16.msra.mxu0 0
        %5950 = vmatprep.subr.bf16.mxu0 0
        %5951 = vmatpush1.bf16.msra.mxu0 %v3294
        %5952 = vmatprep.subr.bf16.mxu0 0
        %5953 = vmatpush1.bf16.msra.mxu0 %v3293
        %5954 = vmatprep.subr.bf16.mxu0 0
        %5955 = vmatpush1.bf16.msra.mxu0 %v3292
        %5956 = vmatprep.subr.bf16.mxu0 0
        %5957 = vmatpush1.bf16.msra.mxu0 %v3291
        %5958 = vmatprep.subr.bf16.mxu0 0
        %5959 = vmatpush2.bf16.msra.mxu0 0
        %5960 = vmatprep.subr.bf16.mxu0 0
        %5961 = vmatpush2.bf16.msra.mxu0 0
        %5962 = vmatprep.subr.bf16.mxu0 0
        %5963 = vmatpush2.bf16.msra.mxu0 0
        %5964 = vmatprep.subr.bf16.mxu0 0
        %5965 = vmatpush2.bf16.msra.mxu0 0
        %5966 = vmatprep.subr.bf16.mxu0 0
        %5967 = vmatpush2.bf16.msra.mxu0 0
        %5968 = vmatprep.subr.bf16.mxu0 0
        %5969 = vmatpush2.bf16.msra.mxu0 0
        %5970 = vmatprep.subr.bf16.mxu0 0
        %5971 = vmatpush2.bf16.msra.mxu0 0
        %5972 = vmatprep.subr.bf16.mxu0 0
        %5973 = vmatpush2.bf16.msra.mxu0 0
        %5974 = vmatprep.mubr.bf16.mxu0 0
        %5975 = vmatmul.mubr.bf16.gmra.mxu0 %v5931
        %v5976 = vpop.f32.mrf.mxu0
        %v5977 = vadd.f32 0.0, %v5976
        %v5978 = vpop.f32.mrf.mxu0
        %v5979 = vpop.f32.mrf.mxu0
        %v5980 = vadd.f32 0.0, %v5979
        %v5981 = vpop.f32.mrf.mxu0
        %5982 = vmatprep.mubr.bf16.mxu0 0
        %5983 = vmatmul.mubr.bf16.gmra.mxu0 %v5934
        %v5984 = vpop.f32.mrf.mxu0
        %v5985 = vadd.f32 0.0, %v5984
        %v5986 = vpop.f32.mrf.mxu0
        %v5987 = vpop.f32.mrf.mxu0
        %v5988 = vadd.f32 0.0, %v5987
        %v5989 = vpop.f32.mrf.mxu0
        %5990 = vmatprep.mubr.bf16.mxu0 0
        %5991 = vmatmul.mubr.bf16.gmra.mxu0 %v5937
        %v5992 = vpop.f32.mrf.mxu0
        %v5993 = vadd.f32 0.0, %v5992
        %v5994 = vpop.f32.mrf.mxu0
        %v5995 = vpop.f32.mrf.mxu0
        %v5996 = vadd.f32 0.0, %v5995
        %v5997 = vpop.f32.mrf.mxu0
        %5998 = vmatprep.mubr.bf16.mxu0 0
        %5999 = vmatmul.mubr.bf16.gmra.mxu0 %v5940
        %v6000 = vpop.f32.mrf.mxu0
        %v6001 = vadd.f32 0.0, %v6000
        %v6002 = vpop.f32.mrf.mxu0
        %v6003 = vpop.f32.mrf.mxu0
        %v6004 = vadd.f32 0.0, %v6003
        %v6005 = vpop.f32.mrf.mxu0
        %6006 = vdwg.mxu0
        %v6007 = vpack.c.bf16 %v5980, %v5977
        %v6008 = vpack.c.bf16 %v5988, %v5985
        %v6009 = vpack.c.bf16 %v5996, %v5993
        %v6010 = vpack.c.bf16 %v6004, %v6001
        %s6011 = scalar_lea.vmem %s14, 56
        %v6012 = vld [vmem:[%s6011] sm:$0xf]
        %v6013 = vld [vmem:[%s6011 + $0x4] sm:$0xf]
        %v6016 = vunpack.c.l.b16 %v6012
        %v6017 = vunpack.c.l.b16 %v6013
        %v6018 = vpack.c.b16 %v6017, %v6016
        %v6021 = vsel %vm3173, %v6007, 0
        %v6024 = vsel %vm3173, %v6008, 0
        %v6027 = vsel %vm3173, %v6009, 0
        %v6030 = vsel %vm3173, %v6010, 0
        %6032 = vmatprep.subr.bf16.mxu0 0
        %6033 = vmatpush1.bf16.msra.mxu0 0
        %6034 = vmatprep.subr.bf16.mxu0 0
        %6035 = vmatpush1.bf16.msra.mxu0 0
        %6036 = vmatprep.subr.bf16.mxu0 0
        %6037 = vmatpush1.bf16.msra.mxu0 0
        %6038 = vmatprep.subr.bf16.mxu0 0
        %6039 = vmatpush1.bf16.msra.mxu0 0
        %6040 = vmatprep.subr.bf16.mxu0 0
        %6041 = vmatpush1.bf16.msra.mxu0 0
        %6042 = vmatprep.subr.bf16.mxu0 0
        %6043 = vmatpush1.bf16.msra.mxu0 0
        %6044 = vmatprep.subr.bf16.mxu0 0
        %6045 = vmatpush1.bf16.msra.mxu0 0
        %6046 = vmatprep.subr.bf16.mxu0 0
        %6047 = vmatpush1.bf16.msra.mxu0 %v6018
        %6048 = vmatprep.subr.bf16.mxu0 0
        %6049 = vmatpush2.bf16.msra.mxu0 0
        %6050 = vmatprep.subr.bf16.mxu0 0
        %6051 = vmatpush2.bf16.msra.mxu0 0
        %6052 = vmatprep.subr.bf16.mxu0 0
        %6053 = vmatpush2.bf16.msra.mxu0 0
        %6054 = vmatprep.subr.bf16.mxu0 0
        %6055 = vmatpush2.bf16.msra.mxu0 0
        %6056 = vmatprep.subr.bf16.mxu0 0
        %6057 = vmatpush2.bf16.msra.mxu0 0
        %6058 = vmatprep.subr.bf16.mxu0 0
        %6059 = vmatpush2.bf16.msra.mxu0 0
        %6060 = vmatprep.subr.bf16.mxu0 0
        %6061 = vmatpush2.bf16.msra.mxu0 0
        %6062 = vmatprep.subr.bf16.mxu0 0
        %6063 = vmatpush2.bf16.msra.mxu0 0
        %6064 = vmatprep.mubr.bf16.mxu0 0
        %6065 = vmatmul.mubr.bf16.gmra.mxu0 %v6021
        %v6066 = vpop.f32.mrf.mxu0
        %v6067 = vadd.f32 0.0, %v6066
        %v6068 = vpop.f32.mrf.mxu0
        %v6069 = vpop.f32.mrf.mxu0
        %v6070 = vadd.f32 0.0, %v6069
        %v6071 = vpop.f32.mrf.mxu0
        %6072 = vmatprep.mubr.bf16.mxu0 0
        %6073 = vmatmul.mubr.bf16.gmra.mxu0 %v6024
        %v6074 = vpop.f32.mrf.mxu0
        %v6075 = vadd.f32 0.0, %v6074
        %v6076 = vpop.f32.mrf.mxu0
        %v6077 = vpop.f32.mrf.mxu0
        %v6078 = vadd.f32 0.0, %v6077
        %v6079 = vpop.f32.mrf.mxu0
        %6080 = vmatprep.mubr.bf16.mxu0 0
        %6081 = vmatmul.mubr.bf16.gmra.mxu0 %v6027
        %v6082 = vpop.f32.mrf.mxu0
        %v6083 = vadd.f32 0.0, %v6082
        %v6084 = vpop.f32.mrf.mxu0
        %v6085 = vpop.f32.mrf.mxu0
        %v6086 = vadd.f32 0.0, %v6085
        %v6087 = vpop.f32.mrf.mxu0
        %6088 = vmatprep.mubr.bf16.mxu0 0
        %6089 = vmatmul.mubr.bf16.gmra.mxu0 %v6030
        %v6090 = vpop.f32.mrf.mxu0
        %v6091 = vadd.f32 0.0, %v6090
        %v6092 = vpop.f32.mrf.mxu0
        %v6093 = vpop.f32.mrf.mxu0
        %v6094 = vadd.f32 0.0, %v6093
        %v6095 = vpop.f32.mrf.mxu0
        %6096 = vdwg.mxu0
        %v6097 = vadd.f32 %v5893, %v6067
        %v6098 = vadd.f32 %v5894, %v6070
        %v6099 = vadd.f32 %v5895, %v6075
        %v6100 = vadd.f32 %v5896, %v6078
        %v6101 = vadd.f32 %v5897, %v6083
        %v6102 = vadd.f32 %v5898, %v6086
        %v6103 = vadd.f32 %v5899, %v6091
        %v6104 = vadd.f32 %v5900, %v6094
        %s6105 = scalar_lea.vmem %s13, 256
        %v6106 = vld [vmem:[%s6105] sm:$0xf]
        %v6107 = vld [vmem:[%s6105 + $0x4] sm:$0xf]
        %v6108 = vld [vmem:[%s6105 + $0x8] sm:$0xf]
        %v6109 = vld [vmem:[%s6105 + $0xc] sm:$0xf]
        %v6110 = vld [vmem:[%s6105 + $0x10] sm:$0xf]
        %v6111 = vld [vmem:[%s6105 + $0x14] sm:$0xf]
        %v6112 = vld [vmem:[%s6105 + $0x18] sm:$0xf]
        %v6113 = vld [vmem:[%s6105 + $0x1c] sm:$0xf]
        %v6122 = vunpack.c.l.b16 %v6106
        %v6123 = vunpack.c.l.b16 %v6107
        %v6124 = vunpack.c.l.b16 %v6108
        %v6125 = vunpack.c.l.b16 %v6109
        %v6126 = vunpack.c.l.b16 %v6110
        %v6127 = vunpack.c.l.b16 %v6111
        %v6128 = vunpack.c.l.b16 %v6112
        %v6129 = vunpack.c.l.b16 %v6113
        %v6130 = vpack.c.b16 %v6123, %v6122
        %v6131 = vpack.c.b16 %v6125, %v6124
        %v6132 = vpack.c.b16 %v6127, %v6126
        %v6133 = vpack.c.b16 %v6129, %v6128
        %v6135 = vsel %vm3303, %v6130, 0
        %v6138 = vsel %vm3303, %v6131, 0
        %v6141 = vsel %vm3303, %v6132, 0
        %v6144 = vsel %vm3303, %v6133, 0
        %6146 = vmatprep.subr.bf16.mxu0 0
        %6147 = vmatpush1.bf16.msra.mxu0 0
        %6148 = vmatprep.subr.bf16.mxu0 0
        %6149 = vmatpush1.bf16.msra.mxu0 0
        %6150 = vmatprep.subr.bf16.mxu0 0
        %6151 = vmatpush1.bf16.msra.mxu0 0
        %6152 = vmatprep.subr.bf16.mxu0 0
        %6153 = vmatpush1.bf16.msra.mxu0 0
        %6154 = vmatprep.subr.bf16.mxu0 0
        %6155 = vmatpush1.bf16.msra.mxu0 %v3294
        %6156 = vmatprep.subr.bf16.mxu0 0
        %6157 = vmatpush1.bf16.msra.mxu0 %v3293
        %6158 = vmatprep.subr.bf16.mxu0 0
        %6159 = vmatpush1.bf16.msra.mxu0 %v3292
        %6160 = vmatprep.subr.bf16.mxu0 0
        %6161 = vmatpush1.bf16.msra.mxu0 %v3291
        %6162 = vmatprep.subr.bf16.mxu0 0
        %6163 = vmatpush2.bf16.msra.mxu0 0
        %6164 = vmatprep.subr.bf16.mxu0 0
        %6165 = vmatpush2.bf16.msra.mxu0 0
        %6166 = vmatprep.subr.bf16.mxu0 0
        %6167 = vmatpush2.bf16.msra.mxu0 0
        %6168 = vmatprep.subr.bf16.mxu0 0
        %6169 = vmatpush2.bf16.msra.mxu0 0
        %6170 = vmatprep.subr.bf16.mxu0 0
        %6171 = vmatpush2.bf16.msra.mxu0 0
        %6172 = vmatprep.subr.bf16.mxu0 0
        %6173 = vmatpush2.bf16.msra.mxu0 0
        %6174 = vmatprep.subr.bf16.mxu0 0
        %6175 = vmatpush2.bf16.msra.mxu0 0
        %6176 = vmatprep.subr.bf16.mxu0 0
        %6177 = vmatpush2.bf16.msra.mxu0 0
        %6178 = vmatprep.mubr.bf16.mxu0 0
        %6179 = vmatmul.mubr.bf16.gmra.mxu0 %v6135
        %v6180 = vpop.f32.mrf.mxu0
        %v6181 = vadd.f32 0.0, %v6180
        %v6182 = vpop.f32.mrf.mxu0
        %v6183 = vpop.f32.mrf.mxu0
        %v6184 = vadd.f32 0.0, %v6183
        %v6185 = vpop.f32.mrf.mxu0
        %6186 = vmatprep.mubr.bf16.mxu0 0
        %6187 = vmatmul.mubr.bf16.gmra.mxu0 %v6138
        %v6188 = vpop.f32.mrf.mxu0
        %v6189 = vadd.f32 0.0, %v6188
        %v6190 = vpop.f32.mrf.mxu0
        %v6191 = vpop.f32.mrf.mxu0
        %v6192 = vadd.f32 0.0, %v6191
        %v6193 = vpop.f32.mrf.mxu0
        %6194 = vmatprep.mubr.bf16.mxu0 0
        %6195 = vmatmul.mubr.bf16.gmra.mxu0 %v6141
        %v6196 = vpop.f32.mrf.mxu0
        %v6197 = vadd.f32 0.0, %v6196
        %v6198 = vpop.f32.mrf.mxu0
        %v6199 = vpop.f32.mrf.mxu0
        %v6200 = vadd.f32 0.0, %v6199
        %v6201 = vpop.f32.mrf.mxu0
        %6202 = vmatprep.mubr.bf16.mxu0 0
        %6203 = vmatmul.mubr.bf16.gmra.mxu0 %v6144
        %v6204 = vpop.f32.mrf.mxu0
        %v6205 = vadd.f32 0.0, %v6204
        %v6206 = vpop.f32.mrf.mxu0
        %v6207 = vpop.f32.mrf.mxu0
        %v6208 = vadd.f32 0.0, %v6207
        %v6209 = vpop.f32.mrf.mxu0
        %6210 = vdwg.mxu0
        %v6211 = vpack.c.bf16 %v6184, %v6181
        %v6212 = vpack.c.bf16 %v6192, %v6189
        %v6213 = vpack.c.bf16 %v6200, %v6197
        %v6214 = vpack.c.bf16 %v6208, %v6205
        %s6215 = scalar_lea.vmem %s14, 64
        %v6216 = vld [vmem:[%s6215] sm:$0xf]
        %v6217 = vld [vmem:[%s6215 + $0x4] sm:$0xf]
        %v6220 = vunpack.c.l.b16 %v6216
        %v6221 = vunpack.c.l.b16 %v6217
        %v6222 = vpack.c.b16 %v6221, %v6220
        %v6225 = vsel %vm3173, %v6211, 0
        %v6228 = vsel %vm3173, %v6212, 0
        %v6231 = vsel %vm3173, %v6213, 0
        %v6234 = vsel %vm3173, %v6214, 0
        %6236 = vmatprep.subr.bf16.mxu0 0
        %6237 = vmatpush1.bf16.msra.mxu0 0
        %6238 = vmatprep.subr.bf16.mxu0 0
        %6239 = vmatpush1.bf16.msra.mxu0 0
        %6240 = vmatprep.subr.bf16.mxu0 0
        %6241 = vmatpush1.bf16.msra.mxu0 0
        %6242 = vmatprep.subr.bf16.mxu0 0
        %6243 = vmatpush1.bf16.msra.mxu0 0
        %6244 = vmatprep.subr.bf16.mxu0 0
        %6245 = vmatpush1.bf16.msra.mxu0 0
        %6246 = vmatprep.subr.bf16.mxu0 0
        %6247 = vmatpush1.bf16.msra.mxu0 0
        %6248 = vmatprep.subr.bf16.mxu0 0
        %6249 = vmatpush1.bf16.msra.mxu0 0
        %6250 = vmatprep.subr.bf16.mxu0 0
        %6251 = vmatpush1.bf16.msra.mxu0 %v6222
        %6252 = vmatprep.subr.bf16.mxu0 0
        %6253 = vmatpush2.bf16.msra.mxu0 0
        %6254 = vmatprep.subr.bf16.mxu0 0
        %6255 = vmatpush2.bf16.msra.mxu0 0
        %6256 = vmatprep.subr.bf16.mxu0 0
        %6257 = vmatpush2.bf16.msra.mxu0 0
        %6258 = vmatprep.subr.bf16.mxu0 0
        %6259 = vmatpush2.bf16.msra.mxu0 0
        %6260 = vmatprep.subr.bf16.mxu0 0
        %6261 = vmatpush2.bf16.msra.mxu0 0
        %6262 = vmatprep.subr.bf16.mxu0 0
        %6263 = vmatpush2.bf16.msra.mxu0 0
        %6264 = vmatprep.subr.bf16.mxu0 0
        %6265 = vmatpush2.bf16.msra.mxu0 0
        %6266 = vmatprep.subr.bf16.mxu0 0
        %6267 = vmatpush2.bf16.msra.mxu0 0
        %6268 = vmatprep.mubr.bf16.mxu0 0
        %6269 = vmatmul.mubr.bf16.gmra.mxu0 %v6225
        %v6270 = vpop.f32.mrf.mxu0
        %v6271 = vadd.f32 0.0, %v6270
        %v6272 = vpop.f32.mrf.mxu0
        %v6273 = vpop.f32.mrf.mxu0
        %v6274 = vadd.f32 0.0, %v6273
        %v6275 = vpop.f32.mrf.mxu0
        %6276 = vmatprep.mubr.bf16.mxu0 0
        %6277 = vmatmul.mubr.bf16.gmra.mxu0 %v6228
        %v6278 = vpop.f32.mrf.mxu0
        %v6279 = vadd.f32 0.0, %v6278
        %v6280 = vpop.f32.mrf.mxu0
        %v6281 = vpop.f32.mrf.mxu0
        %v6282 = vadd.f32 0.0, %v6281
        %v6283 = vpop.f32.mrf.mxu0
        %6284 = vmatprep.mubr.bf16.mxu0 0
        %6285 = vmatmul.mubr.bf16.gmra.mxu0 %v6231
        %v6286 = vpop.f32.mrf.mxu0
        %v6287 = vadd.f32 0.0, %v6286
        %v6288 = vpop.f32.mrf.mxu0
        %v6289 = vpop.f32.mrf.mxu0
        %v6290 = vadd.f32 0.0, %v6289
        %v6291 = vpop.f32.mrf.mxu0
        %6292 = vmatprep.mubr.bf16.mxu0 0
        %6293 = vmatmul.mubr.bf16.gmra.mxu0 %v6234
        %v6294 = vpop.f32.mrf.mxu0
        %v6295 = vadd.f32 0.0, %v6294
        %v6296 = vpop.f32.mrf.mxu0
        %v6297 = vpop.f32.mrf.mxu0
        %v6298 = vadd.f32 0.0, %v6297
        %v6299 = vpop.f32.mrf.mxu0
        %6300 = vdwg.mxu0
        %v6301 = vadd.f32 %v6097, %v6271
        %v6302 = vadd.f32 %v6098, %v6274
        %v6303 = vadd.f32 %v6099, %v6279
        %v6304 = vadd.f32 %v6100, %v6282
        %v6305 = vadd.f32 %v6101, %v6287
        %v6306 = vadd.f32 %v6102, %v6290
        %v6307 = vadd.f32 %v6103, %v6295
        %v6308 = vadd.f32 %v6104, %v6298
        %v6309 = vadd.f32 %v6301, 3.0
        %v6310 = vadd.f32 %v6302, 3.0
        %v6311 = vadd.f32 %v6303, 3.0
        %v6312 = vadd.f32 %v6304, 3.0
        %v6313 = vadd.f32 %v6305, 3.0
        %v6314 = vadd.f32 %v6306, 3.0
        %v6315 = vadd.f32 %v6307, 3.0
        %v6316 = vadd.f32 %v6308, 3.0
        %v6317 = vmax.f32 %v6309, 0.0
        %v6318 = vmax.f32 %v6310, 0.0
        %v6319 = vmax.f32 %v6311, 0.0
        %v6320 = vmax.f32 %v6312, 0.0
        %v6321 = vmax.f32 %v6313, 0.0
        %v6322 = vmax.f32 %v6314, 0.0
        %v6323 = vmax.f32 %v6315, 0.0
        %v6324 = vmax.f32 %v6316, 0.0
        %v6325 = vmin.f32 %v6317, 6.0
        %v6326 = vmin.f32 %v6318, 6.0
        %v6327 = vmin.f32 %v6319, 6.0
        %v6328 = vmin.f32 %v6320, 6.0
        %v6329 = vmin.f32 %v6321, 6.0
        %v6330 = vmin.f32 %v6322, 6.0
        %v6331 = vmin.f32 %v6323, 6.0
        %v6332 = vmin.f32 %v6324, 6.0
        %v6333 = vmul.f32 %v6301, %v6325
        %v6334 = vmul.f32 %v6302, %v6326
        %v6335 = vmul.f32 %v6303, %v6327
        %v6336 = vmul.f32 %v6304, %v6328
        %v6337 = vmul.f32 %v6305, %v6329
        %v6338 = vmul.f32 %v6306, %v6330
        %v6339 = vmul.f32 %v6307, %v6331
        %v6340 = vmul.f32 %v6308, %v6332
        %v6341 = vmul.f32 %v6333, 0.16666667
        %v6342 = vmul.f32 %v6334, 0.16666667
        %v6343 = vmul.f32 %v6335, 0.16666667
        %v6344 = vmul.f32 %v6336, 0.16666667
        %v6345 = vmul.f32 %v6337, 0.16666667
        %v6346 = vmul.f32 %v6338, 0.16666667
        %v6347 = vmul.f32 %v6339, 0.16666667
        %v6348 = vmul.f32 %v6340, 0.16666667
        %v6349 = vpack.c.bf16 %v6342, %v6341
        %v6350 = vpack.c.bf16 %v6344, %v6343
        %v6351 = vpack.c.bf16 %v6346, %v6345
        %v6352 = vpack.c.bf16 %v6348, %v6347
        %v6353 = vld [vmem:[%s16] sm:$0xf]
        %v6354 = vld [vmem:[%s16 + $0x4] sm:$0xf]
        %v6355 = vld [vmem:[%s17] sm:$0x1]
        %v6357 = vlaneseq
        %v6358 = vshrl.u32 %v6357, 7
        %v6359 = vsub.s32 0, %v6358
        %v6360 = vrot.slane %v6355, %v6359
        %v6364 = vunpack.c.l.b16 %v6353
        %v6365 = vunpack.c.l.b16 %v6354
        %v6366 = vpack.c.b16 %v6365, %v6364
        %v6369 = vsel %vm3173, %v6349, 0
        %v6372 = vsel %vm3173, %v6350, 0
        %v6375 = vsel %vm3173, %v6351, 0
        %v6378 = vsel %vm3173, %v6352, 0
        %6380 = vmatprep.subr.bf16.mxu0 0
        %6381 = vmatpush1.bf16.msra.mxu0 0
        %6382 = vmatprep.subr.bf16.mxu0 0
        %6383 = vmatpush1.bf16.msra.mxu0 0
        %6384 = vmatprep.subr.bf16.mxu0 0
        %6385 = vmatpush1.bf16.msra.mxu0 0
        %6386 = vmatprep.subr.bf16.mxu0 0
        %6387 = vmatpush1.bf16.msra.mxu0 0
        %6388 = vmatprep.subr.bf16.mxu0 0
        %6389 = vmatpush1.bf16.msra.mxu0 0
        %6390 = vmatprep.subr.bf16.mxu0 0
        %6391 = vmatpush1.bf16.msra.mxu0 0
        %6392 = vmatprep.subr.bf16.mxu0 0
        %6393 = vmatpush1.bf16.msra.mxu0 0
        %6394 = vmatprep.subr.bf16.mxu0 0
        %6395 = vmatpush1.bf16.msra.mxu0 %v6366
        %6396 = vmatprep.subr.bf16.mxu0 0
        %6397 = vmatpush2.bf16.msra.mxu0 0
        %6398 = vmatprep.subr.bf16.mxu0 0
        %6399 = vmatpush2.bf16.msra.mxu0 0
        %6400 = vmatprep.subr.bf16.mxu0 0
        %6401 = vmatpush2.bf16.msra.mxu0 0
        %6402 = vmatprep.subr.bf16.mxu0 0
        %6403 = vmatpush2.bf16.msra.mxu0 0
        %6404 = vmatprep.subr.bf16.mxu0 0
        %6405 = vmatpush2.bf16.msra.mxu0 0
        %6406 = vmatprep.subr.bf16.mxu0 0
        %6407 = vmatpush2.bf16.msra.mxu0 0
        %6408 = vmatprep.subr.bf16.mxu0 0
        %6409 = vmatpush2.bf16.msra.mxu0 0
        %6410 = vmatprep.subr.bf16.mxu0 0
        %6411 = vmatpush2.bf16.msra.mxu0 0
        %6412 = vmatprep.mubr.bf16.mxu0 0
        %6413 = vmatmul.mubr.bf16.gmra.mxu0 %v6369
        %v6414 = vpop.f32.mrf.mxu0
        %v6415 = vadd.f32 %v6360, %v6414
        %v6416 = vpop.f32.mrf.mxu0
        %v6417 = vpop.f32.mrf.mxu0
        %v6418 = vadd.f32 %v6360, %v6417
        %v6419 = vpop.f32.mrf.mxu0
        %6420 = vmatprep.mubr.bf16.mxu0 0
        %6421 = vmatmul.mubr.bf16.gmra.mxu0 %v6372
        %v6422 = vpop.f32.mrf.mxu0
        %v6423 = vadd.f32 %v6360, %v6422
        %v6424 = vpop.f32.mrf.mxu0
        %v6425 = vpop.f32.mrf.mxu0
        %v6426 = vadd.f32 %v6360, %v6425
        %v6427 = vpop.f32.mrf.mxu0
        %6428 = vmatprep.mubr.bf16.mxu0 0
        %6429 = vmatmul.mubr.bf16.gmra.mxu0 %v6375
        %v6430 = vpop.f32.mrf.mxu0
        %v6431 = vadd.f32 %v6360, %v6430
        %v6432 = vpop.f32.mrf.mxu0
        %v6433 = vpop.f32.mrf.mxu0
        %v6434 = vadd.f32 %v6360, %v6433
        %v6435 = vpop.f32.mrf.mxu0
        %6436 = vmatprep.mubr.bf16.mxu0 0
        %6437 = vmatmul.mubr.bf16.gmra.mxu0 %v6378
        %v6438 = vpop.f32.mrf.mxu0
        %v6439 = vadd.f32 %v6360, %v6438
        %v6440 = vpop.f32.mrf.mxu0
        %v6441 = vpop.f32.mrf.mxu0
        %v6442 = vadd.f32 %v6360, %v6441
        %v6443 = vpop.f32.mrf.mxu0
        %6444 = vdwg.mxu0
        %v6445 = vld [vmem:[%s18] sm:$0xf]
        %v6446 = vld [vmem:[%s18 + $0x4] sm:$0xf]
        %v6447 = vld [vmem:[%s19] sm:$0x1]
        %v6449 = vlaneseq
        %v6450 = vshrl.u32 %v6449, 7
        %v6451 = vsub.s32 0, %v6450
        %v6452 = vrot.slane %v6447, %v6451
        %v6456 = vunpack.c.l.b16 %v6445
        %v6457 = vunpack.c.l.b16 %v6446
        %v6458 = vpack.c.b16 %v6457, %v6456
        %6460 = vmatprep.subr.bf16.mxu0 0
        %6461 = vmatpush1.bf16.msra.mxu0 0
        %6462 = vmatprep.subr.bf16.mxu0 0
        %6463 = vmatpush1.bf16.msra.mxu0 0
        %6464 = vmatprep.subr.bf16.mxu0 0
        %6465 = vmatpush1.bf16.msra.mxu0 0
        %6466 = vmatprep.subr.bf16.mxu0 0
        %6467 = vmatpush1.bf16.msra.mxu0 0
        %6468 = vmatprep.subr.bf16.mxu0 0
        %6469 = vmatpush1.bf16.msra.mxu0 0
        %6470 = vmatprep.subr.bf16.mxu0 0
        %6471 = vmatpush1.bf16.msra.mxu0 0
        %6472 = vmatprep.subr.bf16.mxu0 0
        %6473 = vmatpush1.bf16.msra.mxu0 0
        %6474 = vmatprep.subr.bf16.mxu0 0
        %6475 = vmatpush1.bf16.msra.mxu0 %v6458
        %6476 = vmatprep.subr.bf16.mxu0 0
        %6477 = vmatpush2.bf16.msra.mxu0 0
        %6478 = vmatprep.subr.bf16.mxu0 0
        %6479 = vmatpush2.bf16.msra.mxu0 0
        %6480 = vmatprep.subr.bf16.mxu0 0
        %6481 = vmatpush2.bf16.msra.mxu0 0
        %6482 = vmatprep.subr.bf16.mxu0 0
        %6483 = vmatpush2.bf16.msra.mxu0 0
        %6484 = vmatprep.subr.bf16.mxu0 0
        %6485 = vmatpush2.bf16.msra.mxu0 0
        %6486 = vmatprep.subr.bf16.mxu0 0
        %6487 = vmatpush2.bf16.msra.mxu0 0
        %6488 = vmatprep.subr.bf16.mxu0 0
        %6489 = vmatpush2.bf16.msra.mxu0 0
        %6490 = vmatprep.subr.bf16.mxu0 0
        %6491 = vmatpush2.bf16.msra.mxu0 0
        %6492 = vmatprep.mubr.bf16.mxu0 0
        %6493 = vmatmul.mubr.bf16.gmra.mxu0 %v6369
        %v6494 = vpop.f32.mrf.mxu0
        %v6495 = vadd.f32 %v6452, %v6494
        %v6496 = vpop.f32.mrf.mxu0
        %v6497 = vpop.f32.mrf.mxu0
        %v6498 = vadd.f32 %v6452, %v6497
        %v6499 = vpop.f32.mrf.mxu0
        %6500 = vmatprep.mubr.bf16.mxu0 0
        %6501 = vmatmul.mubr.bf16.gmra.mxu0 %v6372
        %v6502 = vpop.f32.mrf.mxu0
        %v6503 = vadd.f32 %v6452, %v6502
        %v6504 = vpop.f32.mrf.mxu0
        %v6505 = vpop.f32.mrf.mxu0
        %v6506 = vadd.f32 %v6452, %v6505
        %v6507 = vpop.f32.mrf.mxu0
        %6508 = vmatprep.mubr.bf16.mxu0 0
        %6509 = vmatmul.mubr.bf16.gmra.mxu0 %v6375
        %v6510 = vpop.f32.mrf.mxu0
        %v6511 = vadd.f32 %v6452, %v6510
        %v6512 = vpop.f32.mrf.mxu0
        %v6513 = vpop.f32.mrf.mxu0
        %v6514 = vadd.f32 %v6452, %v6513
        %v6515 = vpop.f32.mrf.mxu0
        %6516 = vmatprep.mubr.bf16.mxu0 0
        %6517 = vmatmul.mubr.bf16.gmra.mxu0 %v6378
        %v6518 = vpop.f32.mrf.mxu0
        %v6519 = vadd.f32 %v6452, %v6518
        %v6520 = vpop.f32.mrf.mxu0
        %v6521 = vpop.f32.mrf.mxu0
        %v6522 = vadd.f32 %v6452, %v6521
        %v6523 = vpop.f32.mrf.mxu0
        %6524 = vdwg.mxu0
        %v6525 = vsub.f32 0.0, %v6415
        %v6526 = vsub.f32 0.0, %v6418
        %v6527 = vsub.f32 0.0, %v6423
        %v6528 = vsub.f32 0.0, %v6426
        %v6529 = vsub.f32 0.0, %v6431
        %v6530 = vsub.f32 0.0, %v6434
        %v6531 = vsub.f32 0.0, %v6439
        %v6532 = vsub.f32 0.0, %v6442
        %v6533 = vmul.f32 %v6525, 1.442695
        %v6534 = vpow.pop %v6533
        %v6535 = vmul.f32 %v6526, 1.442695
        %v6536 = vpow.pop %v6535
        %v6537 = vmul.f32 %v6527, 1.442695
        %v6538 = vpow.pop %v6537
        %v6539 = vmul.f32 %v6528, 1.442695
        %v6540 = vpow.pop %v6539
        %v6541 = vmul.f32 %v6529, 1.442695
        %v6542 = vpow.pop %v6541
        %v6543 = vmul.f32 %v6530, 1.442695
        %v6544 = vpow.pop %v6543
        %v6545 = vmul.f32 %v6531, 1.442695
        %v6546 = vpow.pop %v6545
        %v6547 = vmul.f32 %v6532, 1.442695
        %v6548 = vpow.pop %v6547
        %v6549 = vadd.f32 %v6534, 1.0
        %v6550 = vadd.f32 %v6536, 1.0
        %v6551 = vadd.f32 %v6538, 1.0
        %v6552 = vadd.f32 %v6540, 1.0
        %v6553 = vadd.f32 %v6542, 1.0
        %v6554 = vadd.f32 %v6544, 1.0
        %v6555 = vadd.f32 %v6546, 1.0
        %v6556 = vadd.f32 %v6548, 1.0
        %v6557 = vrcp.pop %v6549
        %v6558 = vrcp.pop %v6550
        %v6559 = vrcp.pop %v6551
        %v6560 = vrcp.pop %v6552
        %v6561 = vrcp.pop %v6553
        %v6562 = vrcp.pop %v6554
        %v6563 = vrcp.pop %v6555
        %v6564 = vrcp.pop %v6556
        %vm6565 = vcmask 15360
        %6566 = vst.msk [vmem:[%s701] sm:$0xff] %vm6565, %v6557
        %6567 = vst.msk [vmem:[%s701 + $0x8] sm:$0xff] %vm6565, %v6558
        %6568 = vst.msk [vmem:[%s701 + $0x10] sm:$0xff] %vm6565, %v6559
        %6569 = vst.msk [vmem:[%s701 + $0x18] sm:$0xff] %vm6565, %v6560
        %6570 = vst.msk [vmem:[%s701 + $0x20] sm:$0xff] %vm6565, %v6561
        %6571 = vst.msk [vmem:[%s701 + $0x28] sm:$0xff] %vm6565, %v6562
        %6572 = vst.msk [vmem:[%s701 + $0x30] sm:$0xff] %vm6565, %v6563
        %6573 = vst.msk [vmem:[%s701 + $0x38] sm:$0xff] %vm6565, %v6564
        %6574 = vst.msk [vmem:[%s706] sm:$0xff] %vm6565, %v6495
        %6575 = vst.msk [vmem:[%s706 + $0x8] sm:$0xff] %vm6565, %v6498
        %6576 = vst.msk [vmem:[%s706 + $0x10] sm:$0xff] %vm6565, %v6503
        %6577 = vst.msk [vmem:[%s706 + $0x18] sm:$0xff] %vm6565, %v6506
        %6578 = vst.msk [vmem:[%s706 + $0x20] sm:$0xff] %vm6565, %v6511
        %6579 = vst.msk [vmem:[%s706 + $0x28] sm:$0xff] %vm6565, %v6514
        %6580 = vst.msk [vmem:[%s706 + $0x30] sm:$0xff] %vm6565, %v6519
        %6581 = vst.msk [vmem:[%s706 + $0x38] sm:$0xff] %vm6565, %v6522
        %s6582 = sand.u32 %s470, 1
        %s6583 = scalar_lea.sflag [#allocation3], %s6582
        %s6584 = sand.u32 %s470, 1
        %s6585 = smul.addr %s6584, 48
        %s6586 = scalar_lea.vmem [#allocation2], %s6585
        %p6587 = scmp.lt.s32.totalorder %s37, 1
        %s6588 = scalar_select %p6587, %s37, 1
        %s6589 = smul.addr %s6588, 8
        %s6590 = smul.addr %s6589, 8
        %s6591 = scalar_lea.vmem %s21, %s6590
        %p6592 = scmp.lt.s32.totalorder %s37, 1
        %s6593 = scalar_select %p6592, %s37, 1
        %s6594 = smul.addr %s6593, 8
        %s6595 = smul.addr %s6594, 8
        %s6596 = scalar_lea.vmem %s22, %s6595
        // Predicated region
        $region101: #{mcnet_forward.1} parent=99 // pred_check
          %p6597 = pneg %p480
        $region102: #{mcnet_forward.1} parent=99 // pred_check_branch
          %6599 = sbr.rel (%p6597) target = $region104
        $region103: #{mcnet_forward.1} parent=99 // pred_region
          %s6601 = ssub.s32 768, 768
          %6602 = vsyncadd %s6583, %s6601
          %s6603 = smul.addr %s37, 6
          %s6604 = smul.addr %s6603, 128
          %s6605 = scalar_lea.hbm %s20, %s6604
          %s6606 = sshll.u32 %s6586, 4
          %s6607 = int_to_ptr.vmem [resolvable:$true] %s6606
          %6612 = dma.vmem_to_hbm [thread:$0]  %s6607, 768, %s6605, %s6583, 128, 128, 8
        $region104: #{mcnet_forward.1} parent=99 // pred_fallthru
          _
        // Predicated region
        $region105: #{mcnet_forward.1} parent=99 // pred_check
          %p6613 = pneg %p506
        $region106: #{mcnet_forward.1} parent=99 // pred_check_branch
          %6615 = sbr.rel (%p6613) target = $region108
        $region107: #{mcnet_forward.1} parent=99 // pred_region
          _
        $region108: #{mcnet_forward.1} parent=99 // pred_fallthru
          _
        // Predicated region
        $region109: #{mcnet_forward.1} parent=99 // pred_check
          %p6616 = pneg %p532
        $region110: #{mcnet_forward.1} parent=99 // pred_check_branch
          %6618 = sbr.rel (%p6616) target = $region112
        $region111: #{mcnet_forward.1} parent=99 // pred_region
          _
        $region112: #{mcnet_forward.1} parent=99 // pred_fallthru
          _
      $region100: #{mcnet_forward.1} parent=5 // pred_fallthru
        _
      %p6619 = scmp.le.s32.totalorder 2, %s32
      // Predicated region
      $region113: #{mcnet_forward.1} parent=5 // pred_check
        %p6620 = pneg %p6619
      $region114: #{mcnet_forward.1} parent=5 // pred_check_branch
        %6622 = sbr.rel (%p6620) target = $region116
      $region115: #{mcnet_forward.1} parent=5 // pred_region
        %s6623 = ssub.s32 %s32, 2
        // Predicated region
        $region117: #{mcnet_forward.1} parent=115 // pred_check
          %p6624 = pneg %p486
        $region118: #{mcnet_forward.1} parent=115 // pred_check_branch
          %6626 = sbr.rel (%p6624) target = $region120
        $region119: #{mcnet_forward.1} parent=115 // pred_region
          %s6627 = sand.u32 %s471, 1
          %s6628 = scalar_lea.sflag [#allocation3], %s6627
          %s6629 = sand.u32 %s471, 1
          %s6630 = smul.addr %s6629, 48
          %s6631 = scalar_lea.vmem [#allocation2], %s6630
          %6632 = dma.done %s6628, 768
        $region120: #{mcnet_forward.1} parent=115 // pred_fallthru
          _
        // Predicated region
        $region121: #{mcnet_forward.1} parent=115 // pred_check
          %p6633 = pneg %p512
        $region122: #{mcnet_forward.1} parent=115 // pred_check_branch
          %6635 = sbr.rel (%p6633) target = $region124
        $region123: #{mcnet_forward.1} parent=115 // pred_region
          %p6636 = scmp.lt.s32.totalorder %s38, 1
          %s6637 = scalar_select %p6636, %s38, 1
          %s6638 = smul.addr %s6637, 8
          %s6639 = smul.addr %s6638, 8
          %s6640 = scalar_lea.vmem %s21, %s6639
        $region124: #{mcnet_forward.1} parent=115 // pred_fallthru
          _
        // Predicated region
        $region125: #{mcnet_forward.1} parent=115 // pred_check
          %p6641 = pneg %p538
        $region126: #{mcnet_forward.1} parent=115 // pred_check_branch
          %6643 = sbr.rel (%p6641) target = $region128
        $region127: #{mcnet_forward.1} parent=115 // pred_region
          %p6644 = scmp.lt.s32.totalorder %s38, 1
          %s6645 = scalar_select %p6644, %s38, 1
          %s6646 = smul.addr %s6645, 8
          %s6647 = smul.addr %s6646, 8
          %s6648 = scalar_lea.vmem %s22, %s6647
        $region128: #{mcnet_forward.1} parent=115 // pred_fallthru
          _
      $region116: #{mcnet_forward.1} parent=5 // pred_fallthru
        _
    $region6: #{mcnet_forward.1} parent=1 // loop_footer
      %s36 = sadd.s32 1, %s32
    $region7: #{mcnet_forward.1} parent=1 // loop_footer_branch
      %31 = sbr.rel target = $region3
    $region8: #{mcnet_forward.1} parent=1 // loop_exit
      _
    %6649 = vsyncpa [#allocation3], 1
    %s6650 = scalar_lea.sflag [#allocation3], 1
    %6651 = vsyncpa %s6650, 1

</llo_original>
